<compile_context>
chip_gen: v7x
topology: tpu7x:2x2x1
jax: 0.10.0
libtpu: 0.0.40
codegen_flags: <defaults>
</compile_context>

<pallas_src>
import functools

import numpy as np
import jax
import jax.numpy as jnp
from jax import lax
from jax.experimental import pallas as pl
from jax.experimental.pallas import tpu as pltpu

KSIZE = 4
STRIDE = 2


# --------------------------------------------------------------------------
# In-kernel conv(k=4, s=2, VALID) + bias + ReLU, writing to a VMEM scratch.
# --------------------------------------------------------------------------
def _conv_relu_layer(x_ref, w_ref, b_ref, y_ref, *, OH, OW, Cin, Cout):
    # x_ref: (H, W, Cin) f32      input activation (VMEM)
    # w_ref: (K*K*Cin, Cout) bf16 pre-reordered weights (VMEM)
    # b_ref: (1, Cout) f32
    # y_ref: (OH, OW, Cout) f32   output activation (VMEM scratch)
    bias = jnp.broadcast_to(b_ref[...], (OW, Cout))   # hoisted out of the row loop

    def row(oh, carry):
        acc = bias
        for kh in range(KSIZE):
            for kw in range(KSIZE):
                # stride-2 sublane gather of one (kh, kw) tap: (OW, Cin)
                piece = x_ref[STRIDE * oh + kh, pl.ds(kw, OW, stride=STRIDE), :]
                k_off = (kh * KSIZE + kw) * Cin
                wk = w_ref[k_off:k_off + Cin, :]       # (Cin, Cout) bf16
                acc = acc + jnp.dot(piece.astype(jnp.bfloat16), wk,
                                    preferred_element_type=jnp.float32)
        y_ref[oh] = jnp.maximum(acc, 0.0)              # bias + ReLU in f32
        return carry

    lax.fori_loop(0, OH, row, 0)


# --------------------------------------------------------------------------
# Fused encoder kernel: conv1..conv4 (+ReLU) + FC, one batch element per step.
# --------------------------------------------------------------------------
def _encoder_kernel(x_ref,
                    w1_ref, b1_ref, w2_ref, b2_ref,
                    w3_ref, b3_ref, w4_ref, b4_ref,
                    wf_ref, bf_ref,
                    out_ref,
                    act1_ref, act2_ref, act3_ref, act4_ref,
                    *, layer_dims):
    conv_ws = (w1_ref, w2_ref, w3_ref, w4_ref)
    conv_bs = (b1_ref, b2_ref, b3_ref, b4_ref)
    acts = (act1_ref, act2_ref, act3_ref, act4_ref)

    src = x_ref
    for li, (OH, OW, Cin, Cout) in enumerate(layer_dims):
        _conv_relu_layer(src, conv_ws[li], conv_bs[li], acts[li],
                         OH=OH, OW=OW, Cin=Cin, Cout=Cout)
        src = acts[li]

    # FC (no activation). fc weights were pre-permuted to the NHWC flatten order.
    OH4, OW4, _, C4 = layer_dims[-1]
    flat = act4_ref[...].reshape(1, OH4 * OW4 * C4)
    logits = jnp.dot(flat.astype(jnp.bfloat16), wf_ref[...],
                     preferred_element_type=jnp.float32) + bf_ref[...]
    out_ref[...] = logits


# --------------------------------------------------------------------------
# One-time parameter re-layout (outside the hot path).
# --------------------------------------------------------------------------
def prepare_params(conv_params, fc_w, fc_b, *, conv_out_hw):
    packed_convs = []
    for (w, b) in conv_params:                       # w: (Cout, Cin, KH, KW)
        cout, cin, kh, kw = w.shape
        w_r = jnp.transpose(w, (2, 3, 1, 0))         # (KH, KW, Cin, Cout)
        cin_pad = ((cin + 7) // 8) * 8               # sublane-align each tap slice
        if cin_pad != cin:
            w_r = jnp.pad(w_r, ((0, 0), (0, 0), (0, cin_pad - cin), (0, 0)))
        w_r = w_r.reshape(kh * kw * cin_pad, cout).astype(jnp.bfloat16)
        packed_convs.append((w_r, b.reshape(1, cout).astype(jnp.float32)))

    # FC: PyTorch flattens NCHW (c, h, w); the kernel flattens NHWC (h, w, c).
    oh, ow = conv_out_hw
    c_last = conv_params[-1][0].shape[0]
    hh, ww, cc = np.meshgrid(np.arange(oh), np.arange(ow), np.arange(c_last),
                             indexing="ij")
    nchw_index = (cc * oh * ow + hh * ow + ww).reshape(-1)
    wf = jnp.asarray(fc_w).T[nchw_index, :].astype(jnp.bfloat16)   # (n_flat, latent)
    bf = jnp.asarray(fc_b).reshape(1, -1).astype(jnp.float32)
    return {"convs": packed_convs, "fc": (wf, bf)}


# --------------------------------------------------------------------------
# Forward wrapper: one transpose + one fused pallas_call.
# --------------------------------------------------------------------------
@jax.jit
def conv_encoder_forward(x_nchw, packed):
    wf, bf = packed["fc"]
    latent = wf.shape[1]

    x = jnp.transpose(x_nchw, (0, 2, 3, 1)).astype(jnp.float32)    # NCHW -> NHWC
    n, h, w, cin = x.shape
    cin1 = packed["convs"][0][0].shape[0] // (KSIZE * KSIZE)
    if cin1 != cin:                                                # pad conv1 channels
        x = jnp.pad(x, ((0, 0), (0, 0), (0, 0), (0, cin1 - cin)))
        cin = cin1

    # Static per-layer geometry.
    layer_dims = []
    ch, cw, cc = h, w, cin
    for (wc, _) in packed["convs"]:
        cout = wc.shape[1]
        oh = (ch - KSIZE) // STRIDE + 1
        ow = (cw - KSIZE) // STRIDE + 1
        layer_dims.append((oh, ow, cc, cout))
        ch, cw, cc = oh, ow, cout
    layer_dims = tuple(layer_dims)
    oh4, ow4, _, c4 = layer_dims[-1]

    flops = sum(2 * oh * ow * KSIZE * KSIZE * ci * co
                for (oh, ow, ci, co) in layer_dims)
    flops = n * (flops + 2 * oh4 * ow4 * c4 * latent)
    bytes_accessed = int(
        x.size * 4
        + sum(a.size * a.dtype.itemsize for t in packed["convs"] for a in t)
        + wf.size * wf.dtype.itemsize + bf.size * 4 + n * latent * 4)

    in_specs = [pl.BlockSpec((None, h, w, cin), lambda i: (i, 0, 0, 0))]
    weight_args = []
    for (wc, bc) in packed["convs"]:
        in_specs.append(pl.BlockSpec(wc.shape, lambda i: (0, 0)))
        in_specs.append(pl.BlockSpec(bc.shape, lambda i: (0, 0)))
        weight_args += [wc, bc]
    in_specs.append(pl.BlockSpec(wf.shape, lambda i: (0, 0)))
    in_specs.append(pl.BlockSpec(bf.shape, lambda i: (0, 0)))
    weight_args += [wf, bf]

    scratch_shapes = [pltpu.VMEM((oh, ow, co), jnp.float32)
                      for (oh, ow, _, co) in layer_dims]

    out = pl.pallas_call(
        functools.partial(_encoder_kernel, layer_dims=layer_dims),
        out_shape=jax.ShapeDtypeStruct((n, 1, latent), jnp.float32),
        grid_spec=pltpu.PrefetchScalarGridSpec(
            num_scalar_prefetch=0,
            grid=(n,),
            in_specs=in_specs,
            out_specs=pl.BlockSpec((None, 1, latent), lambda i: (i, 0, 0)),
            scratch_shapes=scratch_shapes),
        compiler_params=pltpu.CompilerParams(
            dimension_semantics=("parallel",),
            vmem_limit_bytes=32 * 1024 * 1024),
        cost_estimate=pl.CostEstimate(flops=flops, transcendentals=0,
                                      bytes_accessed=bytes_accessed),
    )(x, *weight_args)
    return out.reshape(n, latent)


# --------------------------------------------------------------------------
# Deterministic parameter init (PyTorch-default-like uniform bounds)
# --------------------------------------------------------------------------
def init_conv(key, cout, cin, k):
    kw_, kb = jax.random.split(key)
    bound = 1.0 / (cin * k * k) ** 0.5
    w = jax.random.uniform(kw_, (cout, cin, k, k), jnp.float32, -bound, bound)
    b = jax.random.uniform(kb, (cout,), jnp.float32, -bound, bound)
    return w, b


if __name__ == "__main__":
    # Small shapes consistent with the module: 4 stride-2 k=4 convs need H,W >= 46.
    in_channels, H, W, latent_dim = 3, 48, 48, 32
    batch = 2

    key = jax.random.PRNGKey(0)
    keys = jax.random.split(key, 6)

    chans = [in_channels, 32, 64, 128, 256]
    convs = [init_conv(keys[i], chans[i + 1], chans[i], 4) for i in range(4)]

    # n_flat from the conv arithmetic (as the PyTorch dummy pass does)
    h, w = H, W
    for _ in range(4):
        h = (h - 4) // 2 + 1
        w = (w - 4) // 2 + 1
    n_flat = 256 * h * w

    bound = 1.0 / n_flat ** 0.5
    kf1, kf2 = jax.random.split(keys[4])
    fc_w = jax.random.uniform(kf1, (latent_dim, n_flat), jnp.float32, -bound, bound)
    fc_b = jax.random.uniform(kf2, (latent_dim,), jnp.float32, -bound, bound)

    packed = prepare_params(convs, fc_w, fc_b, conv_out_hw=(h, w))

    x = jax.random.normal(keys[5], (batch, in_channels, H, W), jnp.float32)

    out = conv_encoder_forward(x, packed)
    out = jax.block_until_ready(out)
    assert out.shape == (batch, latent_dim)

    # Silent reference check against f32 XLA convs. The kernel feeds bf16 into
    # the MXU (f32 accumulation), so allow a small numerical tolerance.
    def ref(xi):
        y = xi
        for (wc, bc) in convs:
            y = lax.conv_general_dilated(
                y, wc, window_strides=(2, 2), padding="VALID",
                dimension_numbers=("NCHW", "OIHW", "NCHW"))
            y = jax.nn.relu(y + bc.reshape(1, -1, 1, 1))
        y = y.reshape(y.shape[0], -1)
        return y @ fc_w.T + fc_b

    expected = ref(x)
    assert jnp.allclose(out, expected, atol=3e-3, rtol=2e-2), \
        float(jnp.max(jnp.abs(out - expected)))

    print("KERNEL_OK")
</pallas_src>

<mosaic_0001>
module attributes {stable_mosaic.version = 11 : i64} {
  func.func @_encoder_kernel(%arg0: i32, %arg1: memref<1x48x48x8xf32, #tpu.memory_space<vmem>>, %arg2: memref<128x32xbf16, #tpu.memory_space<vmem>>, %arg3: memref<1x32xf32, #tpu.memory_space<vmem>>, %arg4: memref<512x64xbf16, #tpu.memory_space<vmem>>, %arg5: memref<1x64xf32, #tpu.memory_space<vmem>>, %arg6: memref<1024x128xbf16, #tpu.memory_space<vmem>>, %arg7: memref<1x128xf32, #tpu.memory_space<vmem>>, %arg8: memref<2048x256xbf16, #tpu.memory_space<vmem>>, %arg9: memref<1x256xf32, #tpu.memory_space<vmem>>, %arg10: memref<256x32xbf16, #tpu.memory_space<vmem>>, %arg11: memref<1x32xf32, #tpu.memory_space<vmem>>, %arg12: memref<1x1x32xf32, #tpu.memory_space<vmem>>, %arg13: memref<23x23x32xf32, #tpu.memory_space<vmem>>, %arg14: memref<10x10x64xf32, #tpu.memory_space<vmem>>, %arg15: memref<4x4x128xf32, #tpu.memory_space<vmem>>, %arg16: memref<1x1x256xf32, #tpu.memory_space<vmem>>) attributes {dimension_semantics = [#tpu.dimension_semantics<parallel>], iteration_bounds = array<i64: 2>, scalar_prefetch = 0 : i64, scratch_operands = 4 : i64, tpu.core_type = #tpu.core_type<tc>, window_params = [{transform_indices = @transform_0, window_bounds = array<i64: 1, 48, 48, 8>}, {pipeline_mode = #tpu.pipeline_mode<synchronous>, transform_indices = @transform_1, window_bounds = array<i64: 128, 32>}, {pipeline_mode = #tpu.pipeline_mode<synchronous>, transform_indices = @transform_2, window_bounds = array<i64: 1, 32>}, {pipeline_mode = #tpu.pipeline_mode<synchronous>, transform_indices = @transform_3, window_bounds = array<i64: 512, 64>}, {pipeline_mode = #tpu.pipeline_mode<synchronous>, transform_indices = @transform_4, window_bounds = array<i64: 1, 64>}, {pipeline_mode = #tpu.pipeline_mode<synchronous>, transform_indices = @transform_5, window_bounds = array<i64: 1024, 128>}, {pipeline_mode = #tpu.pipeline_mode<synchronous>, transform_indices = @transform_6, window_bounds = array<i64: 1, 128>}, {pipeline_mode = #tpu.pipeline_mode<synchronous>, transform_indices = @transform_7, window_bounds = array<i64: 2048, 256>}, {pipeline_mode = #tpu.pipeline_mode<synchronous>, transform_indices = @transform_8, window_bounds = array<i64: 1, 256>}, {pipeline_mode = #tpu.pipeline_mode<synchronous>, transform_indices = @transform_9, window_bounds = array<i64: 256, 32>}, {pipeline_mode = #tpu.pipeline_mode<synchronous>, transform_indices = @transform_10, window_bounds = array<i64: 1, 32>}, {transform_indices = @transform_11, window_bounds = array<i64: 1, 1, 32>}]} {
    %c0 = arith.constant 0 : index
    %c0_0 = arith.constant 0 : index
    %0 = vector.load %arg3[%c0, %c0_0] : memref<1x32xf32, #tpu.memory_space<vmem>>, vector<1x32xf32>
    %1 = vector.shape_cast %0 : vector<1x32xf32> to vector<1x32xf32>
    %2 = vector.broadcast %1 : vector<1x32xf32> to vector<23x32xf32>
    %c0_i32 = arith.constant 0 : i32
    %c23_i32 = arith.constant 23 : i32
    %3 = arith.addi %c0_i32, %c23_i32 : i32
    %c1_i32 = arith.constant 1 : i32
    scf.for %arg17 = %c0_i32 to %3 step %c1_i32  : i32 {
      %c2_i32_121 = arith.constant 2 : i32
      %173 = arith.muli %c2_i32_121, %arg17 : i32
      %c0_i32_122 = arith.constant 0 : i32
      %174 = arith.addi %173, %c0_i32_122 : i32
      %c0_123 = arith.constant 0 : index
      %175 = arith.index_cast %174 : i32 to index
      %c0_124 = arith.constant 0 : index
      %c0_125 = arith.constant 0 : index
      %176 = tpu.strided_load %arg1[%c0_123, %175, %c0_124, %c0_125] {strides = array<i32: 1, 1, 2, 1>} : memref<1x48x48x8xf32, #tpu.memory_space<vmem>>, vector<1x1x23x8xf32>
      %177 = vector.shape_cast %176 : vector<1x1x23x8xf32> to vector<23x8xf32>
      %c0_126 = arith.constant 0 : index
      %c0_127 = arith.constant 0 : index
      %178 = vector.load %arg2[%c0_126, %c0_127] : memref<128x32xbf16, #tpu.memory_space<vmem>>, vector<8x32xbf16>
      %179 = arith.truncf %177 : vector<23x8xf32> to vector<23x8xbf16>
      %cst_128 = arith.constant dense<0.000000e+00> : vector<23x32xf32>
      %180 = tpu.matmul %179, %178, %cst_128 {dimension_numbers = #tpu.dot_dimension_numbers<[1], [0], [0], [1], [0, 0, 1, 1], [], []>} : vector<23x8xbf16>, vector<8x32xbf16>, vector<23x32xf32> -> vector<23x32xf32>
      %181 = arith.addf %2, %180 : vector<23x32xf32>
      %c2_i32_129 = arith.constant 2 : i32
      %182 = arith.muli %c2_i32_129, %arg17 : i32
      %c0_i32_130 = arith.constant 0 : i32
      %183 = arith.addi %182, %c0_i32_130 : i32
      %c0_131 = arith.constant 0 : index
      %184 = arith.index_cast %183 : i32 to index
      %c1_132 = arith.constant 1 : index
      %c0_133 = arith.constant 0 : index
      %185 = tpu.strided_load %arg1[%c0_131, %184, %c1_132, %c0_133] {strides = array<i32: 1, 1, 2, 1>} : memref<1x48x48x8xf32, #tpu.memory_space<vmem>>, vector<1x1x23x8xf32>
      %186 = vector.shape_cast %185 : vector<1x1x23x8xf32> to vector<23x8xf32>
      %c8 = arith.constant 8 : index
      %c0_134 = arith.constant 0 : index
      %187 = vector.load %arg2[%c8, %c0_134] : memref<128x32xbf16, #tpu.memory_space<vmem>>, vector<8x32xbf16>
      %188 = arith.truncf %186 : vector<23x8xf32> to vector<23x8xbf16>
      %cst_135 = arith.constant dense<0.000000e+00> : vector<23x32xf32>
      %189 = tpu.matmul %188, %187, %cst_135 {dimension_numbers = #tpu.dot_dimension_numbers<[1], [0], [0], [1], [0, 0, 1, 1], [], []>} : vector<23x8xbf16>, vector<8x32xbf16>, vector<23x32xf32> -> vector<23x32xf32>
      %190 = arith.addf %181, %189 : vector<23x32xf32>
      %c2_i32_136 = arith.constant 2 : i32
      %191 = arith.muli %c2_i32_136, %arg17 : i32
      %c0_i32_137 = arith.constant 0 : i32
      %192 = arith.addi %191, %c0_i32_137 : i32
      %c0_138 = arith.constant 0 : index
      %193 = arith.index_cast %192 : i32 to index
      %c2_139 = arith.constant 2 : index
      %c0_140 = arith.constant 0 : index
      %194 = tpu.strided_load %arg1[%c0_138, %193, %c2_139, %c0_140] {strides = array<i32: 1, 1, 2, 1>} : memref<1x48x48x8xf32, #tpu.memory_space<vmem>>, vector<1x1x23x8xf32>
      %195 = vector.shape_cast %194 : vector<1x1x23x8xf32> to vector<23x8xf32>
      %c16 = arith.constant 16 : index
      %c0_141 = arith.constant 0 : index
      %196 = vector.load %arg2[%c16, %c0_141] : memref<128x32xbf16, #tpu.memory_space<vmem>>, vector<8x32xbf16>
      %197 = arith.truncf %195 : vector<23x8xf32> to vector<23x8xbf16>
      %cst_142 = arith.constant dense<0.000000e+00> : vector<23x32xf32>
      %198 = tpu.matmul %197, %196, %cst_142 {dimension_numbers = #tpu.dot_dimension_numbers<[1], [0], [0], [1], [0, 0, 1, 1], [], []>} : vector<23x8xbf16>, vector<8x32xbf16>, vector<23x32xf32> -> vector<23x32xf32>
      %199 = arith.addf %190, %198 : vector<23x32xf32>
      %c2_i32_143 = arith.constant 2 : i32
      %200 = arith.muli %c2_i32_143, %arg17 : i32
      %c0_i32_144 = arith.constant 0 : i32
      %201 = arith.addi %200, %c0_i32_144 : i32
      %c0_145 = arith.constant 0 : index
      %202 = arith.index_cast %201 : i32 to index
      %c3_146 = arith.constant 3 : index
      %c0_147 = arith.constant 0 : index
      %203 = tpu.strided_load %arg1[%c0_145, %202, %c3_146, %c0_147] {strides = array<i32: 1, 1, 2, 1>} : memref<1x48x48x8xf32, #tpu.memory_space<vmem>>, vector<1x1x23x8xf32>
      %204 = vector.shape_cast %203 : vector<1x1x23x8xf32> to vector<23x8xf32>
      %c24 = arith.constant 24 : index
      %c0_148 = arith.constant 0 : index
      %205 = vector.load %arg2[%c24, %c0_148] : memref<128x32xbf16, #tpu.memory_space<vmem>>, vector<8x32xbf16>
      %206 = arith.truncf %204 : vector<23x8xf32> to vector<23x8xbf16>
      %cst_149 = arith.constant dense<0.000000e+00> : vector<23x32xf32>
      %207 = tpu.matmul %206, %205, %cst_149 {dimension_numbers = #tpu.dot_dimension_numbers<[1], [0], [0], [1], [0, 0, 1, 1], [], []>} : vector<23x8xbf16>, vector<8x32xbf16>, vector<23x32xf32> -> vector<23x32xf32>
      %208 = arith.addf %199, %207 : vector<23x32xf32>
      %c2_i32_150 = arith.constant 2 : i32
      %209 = arith.muli %c2_i32_150, %arg17 : i32
      %c1_i32_151 = arith.constant 1 : i32
      %210 = arith.addi %209, %c1_i32_151 : i32
      %c0_152 = arith.constant 0 : index
      %211 = arith.index_cast %210 : i32 to index
      %c0_153 = arith.constant 0 : index
      %c0_154 = arith.constant 0 : index
      %212 = tpu.strided_load %arg1[%c0_152, %211, %c0_153, %c0_154] {strides = array<i32: 1, 1, 2, 1>} : memref<1x48x48x8xf32, #tpu.memory_space<vmem>>, vector<1x1x23x8xf32>
      %213 = vector.shape_cast %212 : vector<1x1x23x8xf32> to vector<23x8xf32>
      %c32 = arith.constant 32 : index
      %c0_155 = arith.constant 0 : index
      %214 = vector.load %arg2[%c32, %c0_155] : memref<128x32xbf16, #tpu.memory_space<vmem>>, vector<8x32xbf16>
      %215 = arith.truncf %213 : vector<23x8xf32> to vector<23x8xbf16>
      %cst_156 = arith.constant dense<0.000000e+00> : vector<23x32xf32>
      %216 = tpu.matmul %215, %214, %cst_156 {dimension_numbers = #tpu.dot_dimension_numbers<[1], [0], [0], [1], [0, 0, 1, 1], [], []>} : vector<23x8xbf16>, vector<8x32xbf16>, vector<23x32xf32> -> vector<23x32xf32>
      %217 = arith.addf %208, %216 : vector<23x32xf32>
      %c2_i32_157 = arith.constant 2 : i32
      %218 = arith.muli %c2_i32_157, %arg17 : i32
      %c1_i32_158 = arith.constant 1 : i32
      %219 = arith.addi %218, %c1_i32_158 : i32
      %c0_159 = arith.constant 0 : index
      %220 = arith.index_cast %219 : i32 to index
      %c1_160 = arith.constant 1 : index
      %c0_161 = arith.constant 0 : index
      %221 = tpu.strided_load %arg1[%c0_159, %220, %c1_160, %c0_161] {strides = array<i32: 1, 1, 2, 1>} : memref<1x48x48x8xf32, #tpu.memory_space<vmem>>, vector<1x1x23x8xf32>
      %222 = vector.shape_cast %221 : vector<1x1x23x8xf32> to vector<23x8xf32>
      %c40 = arith.constant 40 : index
      %c0_162 = arith.constant 0 : index
      %223 = vector.load %arg2[%c40, %c0_162] : memref<128x32xbf16, #tpu.memory_space<vmem>>, vector<8x32xbf16>
      %224 = arith.truncf %222 : vector<23x8xf32> to vector<23x8xbf16>
      %cst_163 = arith.constant dense<0.000000e+00> : vector<23x32xf32>
      %225 = tpu.matmul %224, %223, %cst_163 {dimension_numbers = #tpu.dot_dimension_numbers<[1], [0], [0], [1], [0, 0, 1, 1], [], []>} : vector<23x8xbf16>, vector<8x32xbf16>, vector<23x32xf32> -> vector<23x32xf32>
      %226 = arith.addf %217, %225 : vector<23x32xf32>
      %c2_i32_164 = arith.constant 2 : i32
      %227 = arith.muli %c2_i32_164, %arg17 : i32
      %c1_i32_165 = arith.constant 1 : i32
      %228 = arith.addi %227, %c1_i32_165 : i32
      %c0_166 = arith.constant 0 : index
      %229 = arith.index_cast %228 : i32 to index
      %c2_167 = arith.constant 2 : index
      %c0_168 = arith.constant 0 : index
      %230 = tpu.strided_load %arg1[%c0_166, %229, %c2_167, %c0_168] {strides = array<i32: 1, 1, 2, 1>} : memref<1x48x48x8xf32, #tpu.memory_space<vmem>>, vector<1x1x23x8xf32>
      %231 = vector.shape_cast %230 : vector<1x1x23x8xf32> to vector<23x8xf32>
      %c48 = arith.constant 48 : index
      %c0_169 = arith.constant 0 : index
      %232 = vector.load %arg2[%c48, %c0_169] : memref<128x32xbf16, #tpu.memory_space<vmem>>, vector<8x32xbf16>
      %233 = arith.truncf %231 : vector<23x8xf32> to vector<23x8xbf16>
      %cst_170 = arith.constant dense<0.000000e+00> : vector<23x32xf32>
      %234 = tpu.matmul %233, %232, %cst_170 {dimension_numbers = #tpu.dot_dimension_numbers<[1], [0], [0], [1], [0, 0, 1, 1], [], []>} : vector<23x8xbf16>, vector<8x32xbf16>, vector<23x32xf32> -> vector<23x32xf32>
      %235 = arith.addf %226, %234 : vector<23x32xf32>
      %c2_i32_171 = arith.constant 2 : i32
      %236 = arith.muli %c2_i32_171, %arg17 : i32
      %c1_i32_172 = arith.constant 1 : i32
      %237 = arith.addi %236, %c1_i32_172 : i32
      %c0_173 = arith.constant 0 : index
      %238 = arith.index_cast %237 : i32 to index
      %c3_174 = arith.constant 3 : index
      %c0_175 = arith.constant 0 : index
      %239 = tpu.strided_load %arg1[%c0_173, %238, %c3_174, %c0_175] {strides = array<i32: 1, 1, 2, 1>} : memref<1x48x48x8xf32, #tpu.memory_space<vmem>>, vector<1x1x23x8xf32>
      %240 = vector.shape_cast %239 : vector<1x1x23x8xf32> to vector<23x8xf32>
      %c56 = arith.constant 56 : index
      %c0_176 = arith.constant 0 : index
      %241 = vector.load %arg2[%c56, %c0_176] : memref<128x32xbf16, #tpu.memory_space<vmem>>, vector<8x32xbf16>
      %242 = arith.truncf %240 : vector<23x8xf32> to vector<23x8xbf16>
      %cst_177 = arith.constant dense<0.000000e+00> : vector<23x32xf32>
      %243 = tpu.matmul %242, %241, %cst_177 {dimension_numbers = #tpu.dot_dimension_numbers<[1], [0], [0], [1], [0, 0, 1, 1], [], []>} : vector<23x8xbf16>, vector<8x32xbf16>, vector<23x32xf32> -> vector<23x32xf32>
      %244 = arith.addf %235, %243 : vector<23x32xf32>
      %c2_i32_178 = arith.constant 2 : i32
      %245 = arith.muli %c2_i32_178, %arg17 : i32
      %c2_i32_179 = arith.constant 2 : i32
      %246 = arith.addi %245, %c2_i32_179 : i32
      %c0_180 = arith.constant 0 : index
      %247 = arith.index_cast %246 : i32 to index
      %c0_181 = arith.constant 0 : index
      %c0_182 = arith.constant 0 : index
      %248 = tpu.strided_load %arg1[%c0_180, %247, %c0_181, %c0_182] {strides = array<i32: 1, 1, 2, 1>} : memref<1x48x48x8xf32, #tpu.memory_space<vmem>>, vector<1x1x23x8xf32>
      %249 = vector.shape_cast %248 : vector<1x1x23x8xf32> to vector<23x8xf32>
      %c64 = arith.constant 64 : index
      %c0_183 = arith.constant 0 : index
      %250 = vector.load %arg2[%c64, %c0_183] : memref<128x32xbf16, #tpu.memory_space<vmem>>, vector<8x32xbf16>
      %251 = arith.truncf %249 : vector<23x8xf32> to vector<23x8xbf16>
      %cst_184 = arith.constant dense<0.000000e+00> : vector<23x32xf32>
      %252 = tpu.matmul %251, %250, %cst_184 {dimension_numbers = #tpu.dot_dimension_numbers<[1], [0], [0], [1], [0, 0, 1, 1], [], []>} : vector<23x8xbf16>, vector<8x32xbf16>, vector<23x32xf32> -> vector<23x32xf32>
      %253 = arith.addf %244, %252 : vector<23x32xf32>
      %c2_i32_185 = arith.constant 2 : i32
      %254 = arith.muli %c2_i32_185, %arg17 : i32
      %c2_i32_186 = arith.constant 2 : i32
      %255 = arith.addi %254, %c2_i32_186 : i32
      %c0_187 = arith.constant 0 : index
      %256 = arith.index_cast %255 : i32 to index
      %c1_188 = arith.constant 1 : index
      %c0_189 = arith.constant 0 : index
      %257 = tpu.strided_load %arg1[%c0_187, %256, %c1_188, %c0_189] {strides = array<i32: 1, 1, 2, 1>} : memref<1x48x48x8xf32, #tpu.memory_space<vmem>>, vector<1x1x23x8xf32>
      %258 = vector.shape_cast %257 : vector<1x1x23x8xf32> to vector<23x8xf32>
      %c72 = arith.constant 72 : index
      %c0_190 = arith.constant 0 : index
      %259 = vector.load %arg2[%c72, %c0_190] : memref<128x32xbf16, #tpu.memory_space<vmem>>, vector<8x32xbf16>
      %260 = arith.truncf %258 : vector<23x8xf32> to vector<23x8xbf16>
      %cst_191 = arith.constant dense<0.000000e+00> : vector<23x32xf32>
      %261 = tpu.matmul %260, %259, %cst_191 {dimension_numbers = #tpu.dot_dimension_numbers<[1], [0], [0], [1], [0, 0, 1, 1], [], []>} : vector<23x8xbf16>, vector<8x32xbf16>, vector<23x32xf32> -> vector<23x32xf32>
      %262 = arith.addf %253, %261 : vector<23x32xf32>
      %c2_i32_192 = arith.constant 2 : i32
      %263 = arith.muli %c2_i32_192, %arg17 : i32
      %c2_i32_193 = arith.constant 2 : i32
      %264 = arith.addi %263, %c2_i32_193 : i32
      %c0_194 = arith.constant 0 : index
      %265 = arith.index_cast %264 : i32 to index
      %c2_195 = arith.constant 2 : index
      %c0_196 = arith.constant 0 : index
      %266 = tpu.strided_load %arg1[%c0_194, %265, %c2_195, %c0_196] {strides = array<i32: 1, 1, 2, 1>} : memref<1x48x48x8xf32, #tpu.memory_space<vmem>>, vector<1x1x23x8xf32>
      %267 = vector.shape_cast %266 : vector<1x1x23x8xf32> to vector<23x8xf32>
      %c80 = arith.constant 80 : index
      %c0_197 = arith.constant 0 : index
      %268 = vector.load %arg2[%c80, %c0_197] : memref<128x32xbf16, #tpu.memory_space<vmem>>, vector<8x32xbf16>
      %269 = arith.truncf %267 : vector<23x8xf32> to vector<23x8xbf16>
      %cst_198 = arith.constant dense<0.000000e+00> : vector<23x32xf32>
      %270 = tpu.matmul %269, %268, %cst_198 {dimension_numbers = #tpu.dot_dimension_numbers<[1], [0], [0], [1], [0, 0, 1, 1], [], []>} : vector<23x8xbf16>, vector<8x32xbf16>, vector<23x32xf32> -> vector<23x32xf32>
      %271 = arith.addf %262, %270 : vector<23x32xf32>
      %c2_i32_199 = arith.constant 2 : i32
      %272 = arith.muli %c2_i32_199, %arg17 : i32
      %c2_i32_200 = arith.constant 2 : i32
      %273 = arith.addi %272, %c2_i32_200 : i32
      %c0_201 = arith.constant 0 : index
      %274 = arith.index_cast %273 : i32 to index
      %c3_202 = arith.constant 3 : index
      %c0_203 = arith.constant 0 : index
      %275 = tpu.strided_load %arg1[%c0_201, %274, %c3_202, %c0_203] {strides = array<i32: 1, 1, 2, 1>} : memref<1x48x48x8xf32, #tpu.memory_space<vmem>>, vector<1x1x23x8xf32>
      %276 = vector.shape_cast %275 : vector<1x1x23x8xf32> to vector<23x8xf32>
      %c88 = arith.constant 88 : index
      %c0_204 = arith.constant 0 : index
      %277 = vector.load %arg2[%c88, %c0_204] : memref<128x32xbf16, #tpu.memory_space<vmem>>, vector<8x32xbf16>
      %278 = arith.truncf %276 : vector<23x8xf32> to vector<23x8xbf16>
      %cst_205 = arith.constant dense<0.000000e+00> : vector<23x32xf32>
      %279 = tpu.matmul %278, %277, %cst_205 {dimension_numbers = #tpu.dot_dimension_numbers<[1], [0], [0], [1], [0, 0, 1, 1], [], []>} : vector<23x8xbf16>, vector<8x32xbf16>, vector<23x32xf32> -> vector<23x32xf32>
      %280 = arith.addf %271, %279 : vector<23x32xf32>
      %c2_i32_206 = arith.constant 2 : i32
      %281 = arith.muli %c2_i32_206, %arg17 : i32
      %c3_i32_207 = arith.constant 3 : i32
      %282 = arith.addi %281, %c3_i32_207 : i32
      %c0_208 = arith.constant 0 : index
      %283 = arith.index_cast %282 : i32 to index
      %c0_209 = arith.constant 0 : index
      %c0_210 = arith.constant 0 : index
      %284 = tpu.strided_load %arg1[%c0_208, %283, %c0_209, %c0_210] {strides = array<i32: 1, 1, 2, 1>} : memref<1x48x48x8xf32, #tpu.memory_space<vmem>>, vector<1x1x23x8xf32>
      %285 = vector.shape_cast %284 : vector<1x1x23x8xf32> to vector<23x8xf32>
      %c96 = arith.constant 96 : index
      %c0_211 = arith.constant 0 : index
      %286 = vector.load %arg2[%c96, %c0_211] : memref<128x32xbf16, #tpu.memory_space<vmem>>, vector<8x32xbf16>
      %287 = arith.truncf %285 : vector<23x8xf32> to vector<23x8xbf16>
      %cst_212 = arith.constant dense<0.000000e+00> : vector<23x32xf32>
      %288 = tpu.matmul %287, %286, %cst_212 {dimension_numbers = #tpu.dot_dimension_numbers<[1], [0], [0], [1], [0, 0, 1, 1], [], []>} : vector<23x8xbf16>, vector<8x32xbf16>, vector<23x32xf32> -> vector<23x32xf32>
      %289 = arith.addf %280, %288 : vector<23x32xf32>
      %c2_i32_213 = arith.constant 2 : i32
      %290 = arith.muli %c2_i32_213, %arg17 : i32
      %c3_i32_214 = arith.constant 3 : i32
      %291 = arith.addi %290, %c3_i32_214 : i32
      %c0_215 = arith.constant 0 : index
      %292 = arith.index_cast %291 : i32 to index
      %c1_216 = arith.constant 1 : index
      %c0_217 = arith.constant 0 : index
      %293 = tpu.strided_load %arg1[%c0_215, %292, %c1_216, %c0_217] {strides = array<i32: 1, 1, 2, 1>} : memref<1x48x48x8xf32, #tpu.memory_space<vmem>>, vector<1x1x23x8xf32>
      %294 = vector.shape_cast %293 : vector<1x1x23x8xf32> to vector<23x8xf32>
      %c104 = arith.constant 104 : index
      %c0_218 = arith.constant 0 : index
      %295 = vector.load %arg2[%c104, %c0_218] : memref<128x32xbf16, #tpu.memory_space<vmem>>, vector<8x32xbf16>
      %296 = arith.truncf %294 : vector<23x8xf32> to vector<23x8xbf16>
      %cst_219 = arith.constant dense<0.000000e+00> : vector<23x32xf32>
      %297 = tpu.matmul %296, %295, %cst_219 {dimension_numbers = #tpu.dot_dimension_numbers<[1], [0], [0], [1], [0, 0, 1, 1], [], []>} : vector<23x8xbf16>, vector<8x32xbf16>, vector<23x32xf32> -> vector<23x32xf32>
      %298 = arith.addf %289, %297 : vector<23x32xf32>
      %c2_i32_220 = arith.constant 2 : i32
      %299 = arith.muli %c2_i32_220, %arg17 : i32
      %c3_i32_221 = arith.constant 3 : i32
      %300 = arith.addi %299, %c3_i32_221 : i32
      %c0_222 = arith.constant 0 : index
      %301 = arith.index_cast %300 : i32 to index
      %c2_223 = arith.constant 2 : index
      %c0_224 = arith.constant 0 : index
      %302 = tpu.strided_load %arg1[%c0_222, %301, %c2_223, %c0_224] {strides = array<i32: 1, 1, 2, 1>} : memref<1x48x48x8xf32, #tpu.memory_space<vmem>>, vector<1x1x23x8xf32>
      %303 = vector.shape_cast %302 : vector<1x1x23x8xf32> to vector<23x8xf32>
      %c112 = arith.constant 112 : index
      %c0_225 = arith.constant 0 : index
      %304 = vector.load %arg2[%c112, %c0_225] : memref<128x32xbf16, #tpu.memory_space<vmem>>, vector<8x32xbf16>
      %305 = arith.truncf %303 : vector<23x8xf32> to vector<23x8xbf16>
      %cst_226 = arith.constant dense<0.000000e+00> : vector<23x32xf32>
      %306 = tpu.matmul %305, %304, %cst_226 {dimension_numbers = #tpu.dot_dimension_numbers<[1], [0], [0], [1], [0, 0, 1, 1], [], []>} : vector<23x8xbf16>, vector<8x32xbf16>, vector<23x32xf32> -> vector<23x32xf32>
      %307 = arith.addf %298, %306 : vector<23x32xf32>
      %c2_i32_227 = arith.constant 2 : i32
      %308 = arith.muli %c2_i32_227, %arg17 : i32
      %c3_i32_228 = arith.constant 3 : i32
      %309 = arith.addi %308, %c3_i32_228 : i32
      %c0_229 = arith.constant 0 : index
      %310 = arith.index_cast %309 : i32 to index
      %c3_230 = arith.constant 3 : index
      %c0_231 = arith.constant 0 : index
      %311 = tpu.strided_load %arg1[%c0_229, %310, %c3_230, %c0_231] {strides = array<i32: 1, 1, 2, 1>} : memref<1x48x48x8xf32, #tpu.memory_space<vmem>>, vector<1x1x23x8xf32>
      %312 = vector.shape_cast %311 : vector<1x1x23x8xf32> to vector<23x8xf32>
      %c120 = arith.constant 120 : index
      %c0_232 = arith.constant 0 : index
      %313 = vector.load %arg2[%c120, %c0_232] : memref<128x32xbf16, #tpu.memory_space<vmem>>, vector<8x32xbf16>
      %314 = arith.truncf %312 : vector<23x8xf32> to vector<23x8xbf16>
      %cst_233 = arith.constant dense<0.000000e+00> : vector<23x32xf32>
      %315 = tpu.matmul %314, %313, %cst_233 {dimension_numbers = #tpu.dot_dimension_numbers<[1], [0], [0], [1], [0, 0, 1, 1], [], []>} : vector<23x8xbf16>, vector<8x32xbf16>, vector<23x32xf32> -> vector<23x32xf32>
      %316 = arith.addf %307, %315 : vector<23x32xf32>
      %cst_234 = arith.constant 0.000000e+00 : f32
      %317 = vector.broadcast %cst_234 : f32 to vector<23x32xf32>
      %318 = arith.maximumf %316, %317 : vector<23x32xf32>
      %319 = arith.index_cast %arg17 : i32 to index
      %c0_235 = arith.constant 0 : index
      %c0_236 = arith.constant 0 : index
      %320 = vector.load %arg13[%319, %c0_235, %c0_236] : memref<23x23x32xf32, #tpu.memory_space<vmem>>, vector<1x23x32xf32>
      %321 = vector.shape_cast %320 : vector<1x23x32xf32> to vector<23x32xf32>
      %322 = vector.shape_cast %318 : vector<23x32xf32> to vector<1x23x32xf32>
      tpu.vector_store %arg13[%319, %c0_235, %c0_236], %322 {strides = array<i32>} : memref<23x23x32xf32, #tpu.memory_space<vmem>>, vector<1x23x32xf32>,
    }
    %c23_i32_1 = arith.constant 23 : i32
    %c0_2 = arith.constant 0 : index
    %c0_3 = arith.constant 0 : index
    %4 = vector.load %arg5[%c0_2, %c0_3] : memref<1x64xf32, #tpu.memory_space<vmem>>, vector<1x64xf32>
    %5 = vector.shape_cast %4 : vector<1x64xf32> to vector<1x64xf32>
    %6 = vector.broadcast %5 : vector<1x64xf32> to vector<10x64xf32>
    %c0_i32_4 = arith.constant 0 : i32
    %c10_i32 = arith.constant 10 : i32
    %7 = arith.addi %c0_i32_4, %c10_i32 : i32
    %c1_i32_5 = arith.constant 1 : i32
    scf.for %arg17 = %c0_i32_4 to %7 step %c1_i32_5  : i32 {
      %c2_i32_121 = arith.constant 2 : i32
      %173 = arith.muli %c2_i32_121, %arg17 : i32
      %c0_i32_122 = arith.constant 0 : i32
      %174 = arith.addi %173, %c0_i32_122 : i32
      %175 = arith.index_cast %174 : i32 to index
      %c0_123 = arith.constant 0 : index
      %c0_124 = arith.constant 0 : index
      %176 = tpu.strided_load %arg13[%175, %c0_123, %c0_124] {strides = array<i32: 1, 2, 1>} : memref<23x23x32xf32, #tpu.memory_space<vmem>>, vector<1x10x32xf32>
      %177 = vector.shape_cast %176 : vector<1x10x32xf32> to vector<10x32xf32>
      %c0_125 = arith.constant 0 : index
      %c0_126 = arith.constant 0 : index
      %178 = vector.load %arg4[%c0_125, %c0_126] : memref<512x64xbf16, #tpu.memory_space<vmem>>, vector<32x64xbf16>
      %179 = arith.truncf %177 : vector<10x32xf32> to vector<10x32xbf16>
      %cst_127 = arith.constant dense<0.000000e+00> : vector<10x64xf32>
      %180 = tpu.matmul %179, %178, %cst_127 {dimension_numbers = #tpu.dot_dimension_numbers<[1], [0], [0], [1], [0, 0, 1, 1], [], []>} : vector<10x32xbf16>, vector<32x64xbf16>, vector<10x64xf32> -> vector<10x64xf32>
      %181 = arith.addf %6, %180 : vector<10x64xf32>
      %c2_i32_128 = arith.constant 2 : i32
      %182 = arith.muli %c2_i32_128, %arg17 : i32
      %c0_i32_129 = arith.constant 0 : i32
      %183 = arith.addi %182, %c0_i32_129 : i32
      %184 = arith.index_cast %183 : i32 to index
      %c1_130 = arith.constant 1 : index
      %c0_131 = arith.constant 0 : index
      %185 = tpu.strided_load %arg13[%184, %c1_130, %c0_131] {strides = array<i32: 1, 2, 1>} : memref<23x23x32xf32, #tpu.memory_space<vmem>>, vector<1x10x32xf32>
      %186 = vector.shape_cast %185 : vector<1x10x32xf32> to vector<10x32xf32>
      %c32 = arith.constant 32 : index
      %c0_132 = arith.constant 0 : index
      %187 = vector.load %arg4[%c32, %c0_132] : memref<512x64xbf16, #tpu.memory_space<vmem>>, vector<32x64xbf16>
      %188 = arith.truncf %186 : vector<10x32xf32> to vector<10x32xbf16>
      %cst_133 = arith.constant dense<0.000000e+00> : vector<10x64xf32>
      %189 = tpu.matmul %188, %187, %cst_133 {dimension_numbers = #tpu.dot_dimension_numbers<[1], [0], [0], [1], [0, 0, 1, 1], [], []>} : vector<10x32xbf16>, vector<32x64xbf16>, vector<10x64xf32> -> vector<10x64xf32>
      %190 = arith.addf %181, %189 : vector<10x64xf32>
      %c2_i32_134 = arith.constant 2 : i32
      %191 = arith.muli %c2_i32_134, %arg17 : i32
      %c0_i32_135 = arith.constant 0 : i32
      %192 = arith.addi %191, %c0_i32_135 : i32
      %193 = arith.index_cast %192 : i32 to index
      %c2_136 = arith.constant 2 : index
      %c0_137 = arith.constant 0 : index
      %194 = tpu.strided_load %arg13[%193, %c2_136, %c0_137] {strides = array<i32: 1, 2, 1>} : memref<23x23x32xf32, #tpu.memory_space<vmem>>, vector<1x10x32xf32>
      %195 = vector.shape_cast %194 : vector<1x10x32xf32> to vector<10x32xf32>
      %c64 = arith.constant 64 : index
      %c0_138 = arith.constant 0 : index
      %196 = vector.load %arg4[%c64, %c0_138] : memref<512x64xbf16, #tpu.memory_space<vmem>>, vector<32x64xbf16>
      %197 = arith.truncf %195 : vector<10x32xf32> to vector<10x32xbf16>
      %cst_139 = arith.constant dense<0.000000e+00> : vector<10x64xf32>
      %198 = tpu.matmul %197, %196, %cst_139 {dimension_numbers = #tpu.dot_dimension_numbers<[1], [0], [0], [1], [0, 0, 1, 1], [], []>} : vector<10x32xbf16>, vector<32x64xbf16>, vector<10x64xf32> -> vector<10x64xf32>
      %199 = arith.addf %190, %198 : vector<10x64xf32>
      %c2_i32_140 = arith.constant 2 : i32
      %200 = arith.muli %c2_i32_140, %arg17 : i32
      %c0_i32_141 = arith.constant 0 : i32
      %201 = arith.addi %200, %c0_i32_141 : i32
      %202 = arith.index_cast %201 : i32 to index
      %c3_142 = arith.constant 3 : index
      %c0_143 = arith.constant 0 : index
      %203 = tpu.strided_load %arg13[%202, %c3_142, %c0_143] {strides = array<i32: 1, 2, 1>} : memref<23x23x32xf32, #tpu.memory_space<vmem>>, vector<1x10x32xf32>
      %204 = vector.shape_cast %203 : vector<1x10x32xf32> to vector<10x32xf32>
      %c96 = arith.constant 96 : index
      %c0_144 = arith.constant 0 : index
      %205 = vector.load %arg4[%c96, %c0_144] : memref<512x64xbf16, #tpu.memory_space<vmem>>, vector<32x64xbf16>
      %206 = arith.truncf %204 : vector<10x32xf32> to vector<10x32xbf16>
      %cst_145 = arith.constant dense<0.000000e+00> : vector<10x64xf32>
      %207 = tpu.matmul %206, %205, %cst_145 {dimension_numbers = #tpu.dot_dimension_numbers<[1], [0], [0], [1], [0, 0, 1, 1], [], []>} : vector<10x32xbf16>, vector<32x64xbf16>, vector<10x64xf32> -> vector<10x64xf32>
      %208 = arith.addf %199, %207 : vector<10x64xf32>
      %c2_i32_146 = arith.constant 2 : i32
      %209 = arith.muli %c2_i32_146, %arg17 : i32
      %c1_i32_147 = arith.constant 1 : i32
      %210 = arith.addi %209, %c1_i32_147 : i32
      %211 = arith.index_cast %210 : i32 to index
      %c0_148 = arith.constant 0 : index
      %c0_149 = arith.constant 0 : index
      %212 = tpu.strided_load %arg13[%211, %c0_148, %c0_149] {strides = array<i32: 1, 2, 1>} : memref<23x23x32xf32, #tpu.memory_space<vmem>>, vector<1x10x32xf32>
      %213 = vector.shape_cast %212 : vector<1x10x32xf32> to vector<10x32xf32>
      %c128_150 = arith.constant 128 : index
      %c0_151 = arith.constant 0 : index
      %214 = vector.load %arg4[%c128_150, %c0_151] : memref<512x64xbf16, #tpu.memory_space<vmem>>, vector<32x64xbf16>
      %215 = arith.truncf %213 : vector<10x32xf32> to vector<10x32xbf16>
      %cst_152 = arith.constant dense<0.000000e+00> : vector<10x64xf32>
      %216 = tpu.matmul %215, %214, %cst_152 {dimension_numbers = #tpu.dot_dimension_numbers<[1], [0], [0], [1], [0, 0, 1, 1], [], []>} : vector<10x32xbf16>, vector<32x64xbf16>, vector<10x64xf32> -> vector<10x64xf32>
      %217 = arith.addf %208, %216 : vector<10x64xf32>
      %c2_i32_153 = arith.constant 2 : i32
      %218 = arith.muli %c2_i32_153, %arg17 : i32
      %c1_i32_154 = arith.constant 1 : i32
      %219 = arith.addi %218, %c1_i32_154 : i32
      %220 = arith.index_cast %219 : i32 to index
      %c1_155 = arith.constant 1 : index
      %c0_156 = arith.constant 0 : index
      %221 = tpu.strided_load %arg13[%220, %c1_155, %c0_156] {strides = array<i32: 1, 2, 1>} : memref<23x23x32xf32, #tpu.memory_space<vmem>>, vector<1x10x32xf32>
      %222 = vector.shape_cast %221 : vector<1x10x32xf32> to vector<10x32xf32>
      %c160 = arith.constant 160 : index
      %c0_157 = arith.constant 0 : index
      %223 = vector.load %arg4[%c160, %c0_157] : memref<512x64xbf16, #tpu.memory_space<vmem>>, vector<32x64xbf16>
      %224 = arith.truncf %222 : vector<10x32xf32> to vector<10x32xbf16>
      %cst_158 = arith.constant dense<0.000000e+00> : vector<10x64xf32>
      %225 = tpu.matmul %224, %223, %cst_158 {dimension_numbers = #tpu.dot_dimension_numbers<[1], [0], [0], [1], [0, 0, 1, 1], [], []>} : vector<10x32xbf16>, vector<32x64xbf16>, vector<10x64xf32> -> vector<10x64xf32>
      %226 = arith.addf %217, %225 : vector<10x64xf32>
      %c2_i32_159 = arith.constant 2 : i32
      %227 = arith.muli %c2_i32_159, %arg17 : i32
      %c1_i32_160 = arith.constant 1 : i32
      %228 = arith.addi %227, %c1_i32_160 : i32
      %229 = arith.index_cast %228 : i32 to index
      %c2_161 = arith.constant 2 : index
      %c0_162 = arith.constant 0 : index
      %230 = tpu.strided_load %arg13[%229, %c2_161, %c0_162] {strides = array<i32: 1, 2, 1>} : memref<23x23x32xf32, #tpu.memory_space<vmem>>, vector<1x10x32xf32>
      %231 = vector.shape_cast %230 : vector<1x10x32xf32> to vector<10x32xf32>
      %c192 = arith.constant 192 : index
      %c0_163 = arith.constant 0 : index
      %232 = vector.load %arg4[%c192, %c0_163] : memref<512x64xbf16, #tpu.memory_space<vmem>>, vector<32x64xbf16>
      %233 = arith.truncf %231 : vector<10x32xf32> to vector<10x32xbf16>
      %cst_164 = arith.constant dense<0.000000e+00> : vector<10x64xf32>
      %234 = tpu.matmul %233, %232, %cst_164 {dimension_numbers = #tpu.dot_dimension_numbers<[1], [0], [0], [1], [0, 0, 1, 1], [], []>} : vector<10x32xbf16>, vector<32x64xbf16>, vector<10x64xf32> -> vector<10x64xf32>
      %235 = arith.addf %226, %234 : vector<10x64xf32>
      %c2_i32_165 = arith.constant 2 : i32
      %236 = arith.muli %c2_i32_165, %arg17 : i32
      %c1_i32_166 = arith.constant 1 : i32
      %237 = arith.addi %236, %c1_i32_166 : i32
      %238 = arith.index_cast %237 : i32 to index
      %c3_167 = arith.constant 3 : index
      %c0_168 = arith.constant 0 : index
      %239 = tpu.strided_load %arg13[%238, %c3_167, %c0_168] {strides = array<i32: 1, 2, 1>} : memref<23x23x32xf32, #tpu.memory_space<vmem>>, vector<1x10x32xf32>
      %240 = vector.shape_cast %239 : vector<1x10x32xf32> to vector<10x32xf32>
      %c224 = arith.constant 224 : index
      %c0_169 = arith.constant 0 : index
      %241 = vector.load %arg4[%c224, %c0_169] : memref<512x64xbf16, #tpu.memory_space<vmem>>, vector<32x64xbf16>
      %242 = arith.truncf %240 : vector<10x32xf32> to vector<10x32xbf16>
      %cst_170 = arith.constant dense<0.000000e+00> : vector<10x64xf32>
      %243 = tpu.matmul %242, %241, %cst_170 {dimension_numbers = #tpu.dot_dimension_numbers<[1], [0], [0], [1], [0, 0, 1, 1], [], []>} : vector<10x32xbf16>, vector<32x64xbf16>, vector<10x64xf32> -> vector<10x64xf32>
      %244 = arith.addf %235, %243 : vector<10x64xf32>
      %c2_i32_171 = arith.constant 2 : i32
      %245 = arith.muli %c2_i32_171, %arg17 : i32
      %c2_i32_172 = arith.constant 2 : i32
      %246 = arith.addi %245, %c2_i32_172 : i32
      %247 = arith.index_cast %246 : i32 to index
      %c0_173 = arith.constant 0 : index
      %c0_174 = arith.constant 0 : index
      %248 = tpu.strided_load %arg13[%247, %c0_173, %c0_174] {strides = array<i32: 1, 2, 1>} : memref<23x23x32xf32, #tpu.memory_space<vmem>>, vector<1x10x32xf32>
      %249 = vector.shape_cast %248 : vector<1x10x32xf32> to vector<10x32xf32>
      %c256_175 = arith.constant 256 : index
      %c0_176 = arith.constant 0 : index
      %250 = vector.load %arg4[%c256_175, %c0_176] : memref<512x64xbf16, #tpu.memory_space<vmem>>, vector<32x64xbf16>
      %251 = arith.truncf %249 : vector<10x32xf32> to vector<10x32xbf16>
      %cst_177 = arith.constant dense<0.000000e+00> : vector<10x64xf32>
      %252 = tpu.matmul %251, %250, %cst_177 {dimension_numbers = #tpu.dot_dimension_numbers<[1], [0], [0], [1], [0, 0, 1, 1], [], []>} : vector<10x32xbf16>, vector<32x64xbf16>, vector<10x64xf32> -> vector<10x64xf32>
      %253 = arith.addf %244, %252 : vector<10x64xf32>
      %c2_i32_178 = arith.constant 2 : i32
      %254 = arith.muli %c2_i32_178, %arg17 : i32
      %c2_i32_179 = arith.constant 2 : i32
      %255 = arith.addi %254, %c2_i32_179 : i32
      %256 = arith.index_cast %255 : i32 to index
      %c1_180 = arith.constant 1 : index
      %c0_181 = arith.constant 0 : index
      %257 = tpu.strided_load %arg13[%256, %c1_180, %c0_181] {strides = array<i32: 1, 2, 1>} : memref<23x23x32xf32, #tpu.memory_space<vmem>>, vector<1x10x32xf32>
      %258 = vector.shape_cast %257 : vector<1x10x32xf32> to vector<10x32xf32>
      %c288 = arith.constant 288 : index
      %c0_182 = arith.constant 0 : index
      %259 = vector.load %arg4[%c288, %c0_182] : memref<512x64xbf16, #tpu.memory_space<vmem>>, vector<32x64xbf16>
      %260 = arith.truncf %258 : vector<10x32xf32> to vector<10x32xbf16>
      %cst_183 = arith.constant dense<0.000000e+00> : vector<10x64xf32>
      %261 = tpu.matmul %260, %259, %cst_183 {dimension_numbers = #tpu.dot_dimension_numbers<[1], [0], [0], [1], [0, 0, 1, 1], [], []>} : vector<10x32xbf16>, vector<32x64xbf16>, vector<10x64xf32> -> vector<10x64xf32>
      %262 = arith.addf %253, %261 : vector<10x64xf32>
      %c2_i32_184 = arith.constant 2 : i32
      %263 = arith.muli %c2_i32_184, %arg17 : i32
      %c2_i32_185 = arith.constant 2 : i32
      %264 = arith.addi %263, %c2_i32_185 : i32
      %265 = arith.index_cast %264 : i32 to index
      %c2_186 = arith.constant 2 : index
      %c0_187 = arith.constant 0 : index
      %266 = tpu.strided_load %arg13[%265, %c2_186, %c0_187] {strides = array<i32: 1, 2, 1>} : memref<23x23x32xf32, #tpu.memory_space<vmem>>, vector<1x10x32xf32>
      %267 = vector.shape_cast %266 : vector<1x10x32xf32> to vector<10x32xf32>
      %c320 = arith.constant 320 : index
      %c0_188 = arith.constant 0 : index
      %268 = vector.load %arg4[%c320, %c0_188] : memref<512x64xbf16, #tpu.memory_space<vmem>>, vector<32x64xbf16>
      %269 = arith.truncf %267 : vector<10x32xf32> to vector<10x32xbf16>
      %cst_189 = arith.constant dense<0.000000e+00> : vector<10x64xf32>
      %270 = tpu.matmul %269, %268, %cst_189 {dimension_numbers = #tpu.dot_dimension_numbers<[1], [0], [0], [1], [0, 0, 1, 1], [], []>} : vector<10x32xbf16>, vector<32x64xbf16>, vector<10x64xf32> -> vector<10x64xf32>
      %271 = arith.addf %262, %270 : vector<10x64xf32>
      %c2_i32_190 = arith.constant 2 : i32
      %272 = arith.muli %c2_i32_190, %arg17 : i32
      %c2_i32_191 = arith.constant 2 : i32
      %273 = arith.addi %272, %c2_i32_191 : i32
      %274 = arith.index_cast %273 : i32 to index
      %c3_192 = arith.constant 3 : index
      %c0_193 = arith.constant 0 : index
      %275 = tpu.strided_load %arg13[%274, %c3_192, %c0_193] {strides = array<i32: 1, 2, 1>} : memref<23x23x32xf32, #tpu.memory_space<vmem>>, vector<1x10x32xf32>
      %276 = vector.shape_cast %275 : vector<1x10x32xf32> to vector<10x32xf32>
      %c352 = arith.constant 352 : index
      %c0_194 = arith.constant 0 : index
      %277 = vector.load %arg4[%c352, %c0_194] : memref<512x64xbf16, #tpu.memory_space<vmem>>, vector<32x64xbf16>
      %278 = arith.truncf %276 : vector<10x32xf32> to vector<10x32xbf16>
      %cst_195 = arith.constant dense<0.000000e+00> : vector<10x64xf32>
      %279 = tpu.matmul %278, %277, %cst_195 {dimension_numbers = #tpu.dot_dimension_numbers<[1], [0], [0], [1], [0, 0, 1, 1], [], []>} : vector<10x32xbf16>, vector<32x64xbf16>, vector<10x64xf32> -> vector<10x64xf32>
      %280 = arith.addf %271, %279 : vector<10x64xf32>
      %c2_i32_196 = arith.constant 2 : i32
      %281 = arith.muli %c2_i32_196, %arg17 : i32
      %c3_i32_197 = arith.constant 3 : i32
      %282 = arith.addi %281, %c3_i32_197 : i32
      %283 = arith.index_cast %282 : i32 to index
      %c0_198 = arith.constant 0 : index
      %c0_199 = arith.constant 0 : index
      %284 = tpu.strided_load %arg13[%283, %c0_198, %c0_199] {strides = array<i32: 1, 2, 1>} : memref<23x23x32xf32, #tpu.memory_space<vmem>>, vector<1x10x32xf32>
      %285 = vector.shape_cast %284 : vector<1x10x32xf32> to vector<10x32xf32>
      %c384_200 = arith.constant 384 : index
      %c0_201 = arith.constant 0 : index
      %286 = vector.load %arg4[%c384_200, %c0_201] : memref<512x64xbf16, #tpu.memory_space<vmem>>, vector<32x64xbf16>
      %287 = arith.truncf %285 : vector<10x32xf32> to vector<10x32xbf16>
      %cst_202 = arith.constant dense<0.000000e+00> : vector<10x64xf32>
      %288 = tpu.matmul %287, %286, %cst_202 {dimension_numbers = #tpu.dot_dimension_numbers<[1], [0], [0], [1], [0, 0, 1, 1], [], []>} : vector<10x32xbf16>, vector<32x64xbf16>, vector<10x64xf32> -> vector<10x64xf32>
      %289 = arith.addf %280, %288 : vector<10x64xf32>
      %c2_i32_203 = arith.constant 2 : i32
      %290 = arith.muli %c2_i32_203, %arg17 : i32
      %c3_i32_204 = arith.constant 3 : i32
      %291 = arith.addi %290, %c3_i32_204 : i32
      %292 = arith.index_cast %291 : i32 to index
      %c1_205 = arith.constant 1 : index
      %c0_206 = arith.constant 0 : index
      %293 = tpu.strided_load %arg13[%292, %c1_205, %c0_206] {strides = array<i32: 1, 2, 1>} : memref<23x23x32xf32, #tpu.memory_space<vmem>>, vector<1x10x32xf32>
      %294 = vector.shape_cast %293 : vector<1x10x32xf32> to vector<10x32xf32>
      %c416 = arith.constant 416 : index
      %c0_207 = arith.constant 0 : index
      %295 = vector.load %arg4[%c416, %c0_207] : memref<512x64xbf16, #tpu.memory_space<vmem>>, vector<32x64xbf16>
      %296 = arith.truncf %294 : vector<10x32xf32> to vector<10x32xbf16>
      %cst_208 = arith.constant dense<0.000000e+00> : vector<10x64xf32>
      %297 = tpu.matmul %296, %295, %cst_208 {dimension_numbers = #tpu.dot_dimension_numbers<[1], [0], [0], [1], [0, 0, 1, 1], [], []>} : vector<10x32xbf16>, vector<32x64xbf16>, vector<10x64xf32> -> vector<10x64xf32>
      %298 = arith.addf %289, %297 : vector<10x64xf32>
      %c2_i32_209 = arith.constant 2 : i32
      %299 = arith.muli %c2_i32_209, %arg17 : i32
      %c3_i32_210 = arith.constant 3 : i32
      %300 = arith.addi %299, %c3_i32_210 : i32
      %301 = arith.index_cast %300 : i32 to index
      %c2_211 = arith.constant 2 : index
      %c0_212 = arith.constant 0 : index
      %302 = tpu.strided_load %arg13[%301, %c2_211, %c0_212] {strides = array<i32: 1, 2, 1>} : memref<23x23x32xf32, #tpu.memory_space<vmem>>, vector<1x10x32xf32>
      %303 = vector.shape_cast %302 : vector<1x10x32xf32> to vector<10x32xf32>
      %c448 = arith.constant 448 : index
      %c0_213 = arith.constant 0 : index
      %304 = vector.load %arg4[%c448, %c0_213] : memref<512x64xbf16, #tpu.memory_space<vmem>>, vector<32x64xbf16>
      %305 = arith.truncf %303 : vector<10x32xf32> to vector<10x32xbf16>
      %cst_214 = arith.constant dense<0.000000e+00> : vector<10x64xf32>
      %306 = tpu.matmul %305, %304, %cst_214 {dimension_numbers = #tpu.dot_dimension_numbers<[1], [0], [0], [1], [0, 0, 1, 1], [], []>} : vector<10x32xbf16>, vector<32x64xbf16>, vector<10x64xf32> -> vector<10x64xf32>
      %307 = arith.addf %298, %306 : vector<10x64xf32>
      %c2_i32_215 = arith.constant 2 : i32
      %308 = arith.muli %c2_i32_215, %arg17 : i32
      %c3_i32_216 = arith.constant 3 : i32
      %309 = arith.addi %308, %c3_i32_216 : i32
      %310 = arith.index_cast %309 : i32 to index
      %c3_217 = arith.constant 3 : index
      %c0_218 = arith.constant 0 : index
      %311 = tpu.strided_load %arg13[%310, %c3_217, %c0_218] {strides = array<i32: 1, 2, 1>} : memref<23x23x32xf32, #tpu.memory_space<vmem>>, vector<1x10x32xf32>
      %312 = vector.shape_cast %311 : vector<1x10x32xf32> to vector<10x32xf32>
      %c480 = arith.constant 480 : index
      %c0_219 = arith.constant 0 : index
      %313 = vector.load %arg4[%c480, %c0_219] : memref<512x64xbf16, #tpu.memory_space<vmem>>, vector<32x64xbf16>
      %314 = arith.truncf %312 : vector<10x32xf32> to vector<10x32xbf16>
      %cst_220 = arith.constant dense<0.000000e+00> : vector<10x64xf32>
      %315 = tpu.matmul %314, %313, %cst_220 {dimension_numbers = #tpu.dot_dimension_numbers<[1], [0], [0], [1], [0, 0, 1, 1], [], []>} : vector<10x32xbf16>, vector<32x64xbf16>, vector<10x64xf32> -> vector<10x64xf32>
      %316 = arith.addf %307, %315 : vector<10x64xf32>
      %cst_221 = arith.constant 0.000000e+00 : f32
      %317 = vector.broadcast %cst_221 : f32 to vector<10x64xf32>
      %318 = arith.maximumf %316, %317 : vector<10x64xf32>
      %319 = arith.index_cast %arg17 : i32 to index
      %c0_222 = arith.constant 0 : index
      %c0_223 = arith.constant 0 : index
      %320 = vector.load %arg14[%319, %c0_222, %c0_223] : memref<10x10x64xf32, #tpu.memory_space<vmem>>, vector<1x10x64xf32>
      %321 = vector.shape_cast %320 : vector<1x10x64xf32> to vector<10x64xf32>
      %322 = vector.shape_cast %318 : vector<10x64xf32> to vector<1x10x64xf32>
      tpu.vector_store %arg14[%319, %c0_222, %c0_223], %322 {strides = array<i32>} : memref<10x10x64xf32, #tpu.memory_space<vmem>>, vector<1x10x64xf32>,
    }
    %c10_i32_6 = arith.constant 10 : i32
    %c0_7 = arith.constant 0 : index
    %c0_8 = arith.constant 0 : index
    %8 = vector.load %arg7[%c0_7, %c0_8] : memref<1x128xf32, #tpu.memory_space<vmem>>, vector<1x128xf32>
    %9 = vector.shape_cast %8 : vector<1x128xf32> to vector<1x128xf32>
    %10 = vector.broadcast %9 : vector<1x128xf32> to vector<4x128xf32>
    %c0_i32_9 = arith.constant 0 : i32
    %c4_i32 = arith.constant 4 : i32
    %11 = arith.addi %c0_i32_9, %c4_i32 : i32
    %c1_i32_10 = arith.constant 1 : i32
    scf.for %arg17 = %c0_i32_9 to %11 step %c1_i32_10  : i32 {
      %c2_i32_121 = arith.constant 2 : i32
      %173 = arith.muli %c2_i32_121, %arg17 : i32
      %c0_i32_122 = arith.constant 0 : i32
      %174 = arith.addi %173, %c0_i32_122 : i32
      %175 = arith.index_cast %174 : i32 to index
      %c0_123 = arith.constant 0 : index
      %c0_124 = arith.constant 0 : index
      %176 = tpu.strided_load %arg14[%175, %c0_123, %c0_124] {strides = array<i32: 1, 2, 1>} : memref<10x10x64xf32, #tpu.memory_space<vmem>>, vector<1x4x64xf32>
      %177 = vector.shape_cast %176 : vector<1x4x64xf32> to vector<4x64xf32>
      %c0_125 = arith.constant 0 : index
      %c0_126 = arith.constant 0 : index
      %178 = vector.load %arg6[%c0_125, %c0_126] : memref<1024x128xbf16, #tpu.memory_space<vmem>>, vector<64x128xbf16>
      %179 = arith.truncf %177 : vector<4x64xf32> to vector<4x64xbf16>
      %cst_127 = arith.constant dense<0.000000e+00> : vector<4x128xf32>
      %180 = tpu.matmul %179, %178, %cst_127 {dimension_numbers = #tpu.dot_dimension_numbers<[1], [0], [0], [1], [0, 0, 1, 1], [], []>} : vector<4x64xbf16>, vector<64x128xbf16>, vector<4x128xf32> -> vector<4x128xf32>
      %181 = arith.addf %10, %180 : vector<4x128xf32>
      %c2_i32_128 = arith.constant 2 : i32
      %182 = arith.muli %c2_i32_128, %arg17 : i32
      %c0_i32_129 = arith.constant 0 : i32
      %183 = arith.addi %182, %c0_i32_129 : i32
      %184 = arith.index_cast %183 : i32 to index
      %c1_130 = arith.constant 1 : index
      %c0_131 = arith.constant 0 : index
      %185 = tpu.strided_load %arg14[%184, %c1_130, %c0_131] {strides = array<i32: 1, 2, 1>} : memref<10x10x64xf32, #tpu.memory_space<vmem>>, vector<1x4x64xf32>
      %186 = vector.shape_cast %185 : vector<1x4x64xf32> to vector<4x64xf32>
      %c64 = arith.constant 64 : index
      %c0_132 = arith.constant 0 : index
      %187 = vector.load %arg6[%c64, %c0_132] : memref<1024x128xbf16, #tpu.memory_space<vmem>>, vector<64x128xbf16>
      %188 = arith.truncf %186 : vector<4x64xf32> to vector<4x64xbf16>
      %cst_133 = arith.constant dense<0.000000e+00> : vector<4x128xf32>
      %189 = tpu.matmul %188, %187, %cst_133 {dimension_numbers = #tpu.dot_dimension_numbers<[1], [0], [0], [1], [0, 0, 1, 1], [], []>} : vector<4x64xbf16>, vector<64x128xbf16>, vector<4x128xf32> -> vector<4x128xf32>
      %190 = arith.addf %181, %189 : vector<4x128xf32>
      %c2_i32_134 = arith.constant 2 : i32
      %191 = arith.muli %c2_i32_134, %arg17 : i32
      %c0_i32_135 = arith.constant 0 : i32
      %192 = arith.addi %191, %c0_i32_135 : i32
      %193 = arith.index_cast %192 : i32 to index
      %c2_136 = arith.constant 2 : index
      %c0_137 = arith.constant 0 : index
      %194 = tpu.strided_load %arg14[%193, %c2_136, %c0_137] {strides = array<i32: 1, 2, 1>} : memref<10x10x64xf32, #tpu.memory_space<vmem>>, vector<1x4x64xf32>
      %195 = vector.shape_cast %194 : vector<1x4x64xf32> to vector<4x64xf32>
      %c128_138 = arith.constant 128 : index
      %c0_139 = arith.constant 0 : index
      %196 = vector.load %arg6[%c128_138, %c0_139] : memref<1024x128xbf16, #tpu.memory_space<vmem>>, vector<64x128xbf16>
      %197 = arith.truncf %195 : vector<4x64xf32> to vector<4x64xbf16>
      %cst_140 = arith.constant dense<0.000000e+00> : vector<4x128xf32>
      %198 = tpu.matmul %197, %196, %cst_140 {dimension_numbers = #tpu.dot_dimension_numbers<[1], [0], [0], [1], [0, 0, 1, 1], [], []>} : vector<4x64xbf16>, vector<64x128xbf16>, vector<4x128xf32> -> vector<4x128xf32>
      %199 = arith.addf %190, %198 : vector<4x128xf32>
      %c2_i32_141 = arith.constant 2 : i32
      %200 = arith.muli %c2_i32_141, %arg17 : i32
      %c0_i32_142 = arith.constant 0 : i32
      %201 = arith.addi %200, %c0_i32_142 : i32
      %202 = arith.index_cast %201 : i32 to index
      %c3_143 = arith.constant 3 : index
      %c0_144 = arith.constant 0 : index
      %203 = tpu.strided_load %arg14[%202, %c3_143, %c0_144] {strides = array<i32: 1, 2, 1>} : memref<10x10x64xf32, #tpu.memory_space<vmem>>, vector<1x4x64xf32>
      %204 = vector.shape_cast %203 : vector<1x4x64xf32> to vector<4x64xf32>
      %c192 = arith.constant 192 : index
      %c0_145 = arith.constant 0 : index
      %205 = vector.load %arg6[%c192, %c0_145] : memref<1024x128xbf16, #tpu.memory_space<vmem>>, vector<64x128xbf16>
      %206 = arith.truncf %204 : vector<4x64xf32> to vector<4x64xbf16>
      %cst_146 = arith.constant dense<0.000000e+00> : vector<4x128xf32>
      %207 = tpu.matmul %206, %205, %cst_146 {dimension_numbers = #tpu.dot_dimension_numbers<[1], [0], [0], [1], [0, 0, 1, 1], [], []>} : vector<4x64xbf16>, vector<64x128xbf16>, vector<4x128xf32> -> vector<4x128xf32>
      %208 = arith.addf %199, %207 : vector<4x128xf32>
      %c2_i32_147 = arith.constant 2 : i32
      %209 = arith.muli %c2_i32_147, %arg17 : i32
      %c1_i32_148 = arith.constant 1 : i32
      %210 = arith.addi %209, %c1_i32_148 : i32
      %211 = arith.index_cast %210 : i32 to index
      %c0_149 = arith.constant 0 : index
      %c0_150 = arith.constant 0 : index
      %212 = tpu.strided_load %arg14[%211, %c0_149, %c0_150] {strides = array<i32: 1, 2, 1>} : memref<10x10x64xf32, #tpu.memory_space<vmem>>, vector<1x4x64xf32>
      %213 = vector.shape_cast %212 : vector<1x4x64xf32> to vector<4x64xf32>
      %c256_151 = arith.constant 256 : index
      %c0_152 = arith.constant 0 : index
      %214 = vector.load %arg6[%c256_151, %c0_152] : memref<1024x128xbf16, #tpu.memory_space<vmem>>, vector<64x128xbf16>
      %215 = arith.truncf %213 : vector<4x64xf32> to vector<4x64xbf16>
      %cst_153 = arith.constant dense<0.000000e+00> : vector<4x128xf32>
      %216 = tpu.matmul %215, %214, %cst_153 {dimension_numbers = #tpu.dot_dimension_numbers<[1], [0], [0], [1], [0, 0, 1, 1], [], []>} : vector<4x64xbf16>, vector<64x128xbf16>, vector<4x128xf32> -> vector<4x128xf32>
      %217 = arith.addf %208, %216 : vector<4x128xf32>
      %c2_i32_154 = arith.constant 2 : i32
      %218 = arith.muli %c2_i32_154, %arg17 : i32
      %c1_i32_155 = arith.constant 1 : i32
      %219 = arith.addi %218, %c1_i32_155 : i32
      %220 = arith.index_cast %219 : i32 to index
      %c1_156 = arith.constant 1 : index
      %c0_157 = arith.constant 0 : index
      %221 = tpu.strided_load %arg14[%220, %c1_156, %c0_157] {strides = array<i32: 1, 2, 1>} : memref<10x10x64xf32, #tpu.memory_space<vmem>>, vector<1x4x64xf32>
      %222 = vector.shape_cast %221 : vector<1x4x64xf32> to vector<4x64xf32>
      %c320 = arith.constant 320 : index
      %c0_158 = arith.constant 0 : index
      %223 = vector.load %arg6[%c320, %c0_158] : memref<1024x128xbf16, #tpu.memory_space<vmem>>, vector<64x128xbf16>
      %224 = arith.truncf %222 : vector<4x64xf32> to vector<4x64xbf16>
      %cst_159 = arith.constant dense<0.000000e+00> : vector<4x128xf32>
      %225 = tpu.matmul %224, %223, %cst_159 {dimension_numbers = #tpu.dot_dimension_numbers<[1], [0], [0], [1], [0, 0, 1, 1], [], []>} : vector<4x64xbf16>, vector<64x128xbf16>, vector<4x128xf32> -> vector<4x128xf32>
      %226 = arith.addf %217, %225 : vector<4x128xf32>
      %c2_i32_160 = arith.constant 2 : i32
      %227 = arith.muli %c2_i32_160, %arg17 : i32
      %c1_i32_161 = arith.constant 1 : i32
      %228 = arith.addi %227, %c1_i32_161 : i32
      %229 = arith.index_cast %228 : i32 to index
      %c2_162 = arith.constant 2 : index
      %c0_163 = arith.constant 0 : index
      %230 = tpu.strided_load %arg14[%229, %c2_162, %c0_163] {strides = array<i32: 1, 2, 1>} : memref<10x10x64xf32, #tpu.memory_space<vmem>>, vector<1x4x64xf32>
      %231 = vector.shape_cast %230 : vector<1x4x64xf32> to vector<4x64xf32>
      %c384_164 = arith.constant 384 : index
      %c0_165 = arith.constant 0 : index
      %232 = vector.load %arg6[%c384_164, %c0_165] : memref<1024x128xbf16, #tpu.memory_space<vmem>>, vector<64x128xbf16>
      %233 = arith.truncf %231 : vector<4x64xf32> to vector<4x64xbf16>
      %cst_166 = arith.constant dense<0.000000e+00> : vector<4x128xf32>
      %234 = tpu.matmul %233, %232, %cst_166 {dimension_numbers = #tpu.dot_dimension_numbers<[1], [0], [0], [1], [0, 0, 1, 1], [], []>} : vector<4x64xbf16>, vector<64x128xbf16>, vector<4x128xf32> -> vector<4x128xf32>
      %235 = arith.addf %226, %234 : vector<4x128xf32>
      %c2_i32_167 = arith.constant 2 : i32
      %236 = arith.muli %c2_i32_167, %arg17 : i32
      %c1_i32_168 = arith.constant 1 : i32
      %237 = arith.addi %236, %c1_i32_168 : i32
      %238 = arith.index_cast %237 : i32 to index
      %c3_169 = arith.constant 3 : index
      %c0_170 = arith.constant 0 : index
      %239 = tpu.strided_load %arg14[%238, %c3_169, %c0_170] {strides = array<i32: 1, 2, 1>} : memref<10x10x64xf32, #tpu.memory_space<vmem>>, vector<1x4x64xf32>
      %240 = vector.shape_cast %239 : vector<1x4x64xf32> to vector<4x64xf32>
      %c448 = arith.constant 448 : index
      %c0_171 = arith.constant 0 : index
      %241 = vector.load %arg6[%c448, %c0_171] : memref<1024x128xbf16, #tpu.memory_space<vmem>>, vector<64x128xbf16>
      %242 = arith.truncf %240 : vector<4x64xf32> to vector<4x64xbf16>
      %cst_172 = arith.constant dense<0.000000e+00> : vector<4x128xf32>
      %243 = tpu.matmul %242, %241, %cst_172 {dimension_numbers = #tpu.dot_dimension_numbers<[1], [0], [0], [1], [0, 0, 1, 1], [], []>} : vector<4x64xbf16>, vector<64x128xbf16>, vector<4x128xf32> -> vector<4x128xf32>
      %244 = arith.addf %235, %243 : vector<4x128xf32>
      %c2_i32_173 = arith.constant 2 : i32
      %245 = arith.muli %c2_i32_173, %arg17 : i32
      %c2_i32_174 = arith.constant 2 : i32
      %246 = arith.addi %245, %c2_i32_174 : i32
      %247 = arith.index_cast %246 : i32 to index
      %c0_175 = arith.constant 0 : index
      %c0_176 = arith.constant 0 : index
      %248 = tpu.strided_load %arg14[%247, %c0_175, %c0_176] {strides = array<i32: 1, 2, 1>} : memref<10x10x64xf32, #tpu.memory_space<vmem>>, vector<1x4x64xf32>
      %249 = vector.shape_cast %248 : vector<1x4x64xf32> to vector<4x64xf32>
      %c512_177 = arith.constant 512 : index
      %c0_178 = arith.constant 0 : index
      %250 = vector.load %arg6[%c512_177, %c0_178] : memref<1024x128xbf16, #tpu.memory_space<vmem>>, vector<64x128xbf16>
      %251 = arith.truncf %249 : vector<4x64xf32> to vector<4x64xbf16>
      %cst_179 = arith.constant dense<0.000000e+00> : vector<4x128xf32>
      %252 = tpu.matmul %251, %250, %cst_179 {dimension_numbers = #tpu.dot_dimension_numbers<[1], [0], [0], [1], [0, 0, 1, 1], [], []>} : vector<4x64xbf16>, vector<64x128xbf16>, vector<4x128xf32> -> vector<4x128xf32>
      %253 = arith.addf %244, %252 : vector<4x128xf32>
      %c2_i32_180 = arith.constant 2 : i32
      %254 = arith.muli %c2_i32_180, %arg17 : i32
      %c2_i32_181 = arith.constant 2 : i32
      %255 = arith.addi %254, %c2_i32_181 : i32
      %256 = arith.index_cast %255 : i32 to index
      %c1_182 = arith.constant 1 : index
      %c0_183 = arith.constant 0 : index
      %257 = tpu.strided_load %arg14[%256, %c1_182, %c0_183] {strides = array<i32: 1, 2, 1>} : memref<10x10x64xf32, #tpu.memory_space<vmem>>, vector<1x4x64xf32>
      %258 = vector.shape_cast %257 : vector<1x4x64xf32> to vector<4x64xf32>
      %c576 = arith.constant 576 : index
      %c0_184 = arith.constant 0 : index
      %259 = vector.load %arg6[%c576, %c0_184] : memref<1024x128xbf16, #tpu.memory_space<vmem>>, vector<64x128xbf16>
      %260 = arith.truncf %258 : vector<4x64xf32> to vector<4x64xbf16>
      %cst_185 = arith.constant dense<0.000000e+00> : vector<4x128xf32>
      %261 = tpu.matmul %260, %259, %cst_185 {dimension_numbers = #tpu.dot_dimension_numbers<[1], [0], [0], [1], [0, 0, 1, 1], [], []>} : vector<4x64xbf16>, vector<64x128xbf16>, vector<4x128xf32> -> vector<4x128xf32>
      %262 = arith.addf %253, %261 : vector<4x128xf32>
      %c2_i32_186 = arith.constant 2 : i32
      %263 = arith.muli %c2_i32_186, %arg17 : i32
      %c2_i32_187 = arith.constant 2 : i32
      %264 = arith.addi %263, %c2_i32_187 : i32
      %265 = arith.index_cast %264 : i32 to index
      %c2_188 = arith.constant 2 : index
      %c0_189 = arith.constant 0 : index
      %266 = tpu.strided_load %arg14[%265, %c2_188, %c0_189] {strides = array<i32: 1, 2, 1>} : memref<10x10x64xf32, #tpu.memory_space<vmem>>, vector<1x4x64xf32>
      %267 = vector.shape_cast %266 : vector<1x4x64xf32> to vector<4x64xf32>
      %c640_190 = arith.constant 640 : index
      %c0_191 = arith.constant 0 : index
      %268 = vector.load %arg6[%c640_190, %c0_191] : memref<1024x128xbf16, #tpu.memory_space<vmem>>, vector<64x128xbf16>
      %269 = arith.truncf %267 : vector<4x64xf32> to vector<4x64xbf16>
      %cst_192 = arith.constant dense<0.000000e+00> : vector<4x128xf32>
      %270 = tpu.matmul %269, %268, %cst_192 {dimension_numbers = #tpu.dot_dimension_numbers<[1], [0], [0], [1], [0, 0, 1, 1], [], []>} : vector<4x64xbf16>, vector<64x128xbf16>, vector<4x128xf32> -> vector<4x128xf32>
      %271 = arith.addf %262, %270 : vector<4x128xf32>
      %c2_i32_193 = arith.constant 2 : i32
      %272 = arith.muli %c2_i32_193, %arg17 : i32
      %c2_i32_194 = arith.constant 2 : i32
      %273 = arith.addi %272, %c2_i32_194 : i32
      %274 = arith.index_cast %273 : i32 to index
      %c3_195 = arith.constant 3 : index
      %c0_196 = arith.constant 0 : index
      %275 = tpu.strided_load %arg14[%274, %c3_195, %c0_196] {strides = array<i32: 1, 2, 1>} : memref<10x10x64xf32, #tpu.memory_space<vmem>>, vector<1x4x64xf32>
      %276 = vector.shape_cast %275 : vector<1x4x64xf32> to vector<4x64xf32>
      %c704 = arith.constant 704 : index
      %c0_197 = arith.constant 0 : index
      %277 = vector.load %arg6[%c704, %c0_197] : memref<1024x128xbf16, #tpu.memory_space<vmem>>, vector<64x128xbf16>
      %278 = arith.truncf %276 : vector<4x64xf32> to vector<4x64xbf16>
      %cst_198 = arith.constant dense<0.000000e+00> : vector<4x128xf32>
      %279 = tpu.matmul %278, %277, %cst_198 {dimension_numbers = #tpu.dot_dimension_numbers<[1], [0], [0], [1], [0, 0, 1, 1], [], []>} : vector<4x64xbf16>, vector<64x128xbf16>, vector<4x128xf32> -> vector<4x128xf32>
      %280 = arith.addf %271, %279 : vector<4x128xf32>
      %c2_i32_199 = arith.constant 2 : i32
      %281 = arith.muli %c2_i32_199, %arg17 : i32
      %c3_i32_200 = arith.constant 3 : i32
      %282 = arith.addi %281, %c3_i32_200 : i32
      %283 = arith.index_cast %282 : i32 to index
      %c0_201 = arith.constant 0 : index
      %c0_202 = arith.constant 0 : index
      %284 = tpu.strided_load %arg14[%283, %c0_201, %c0_202] {strides = array<i32: 1, 2, 1>} : memref<10x10x64xf32, #tpu.memory_space<vmem>>, vector<1x4x64xf32>
      %285 = vector.shape_cast %284 : vector<1x4x64xf32> to vector<4x64xf32>
      %c768_203 = arith.constant 768 : index
      %c0_204 = arith.constant 0 : index
      %286 = vector.load %arg6[%c768_203, %c0_204] : memref<1024x128xbf16, #tpu.memory_space<vmem>>, vector<64x128xbf16>
      %287 = arith.truncf %285 : vector<4x64xf32> to vector<4x64xbf16>
      %cst_205 = arith.constant dense<0.000000e+00> : vector<4x128xf32>
      %288 = tpu.matmul %287, %286, %cst_205 {dimension_numbers = #tpu.dot_dimension_numbers<[1], [0], [0], [1], [0, 0, 1, 1], [], []>} : vector<4x64xbf16>, vector<64x128xbf16>, vector<4x128xf32> -> vector<4x128xf32>
      %289 = arith.addf %280, %288 : vector<4x128xf32>
      %c2_i32_206 = arith.constant 2 : i32
      %290 = arith.muli %c2_i32_206, %arg17 : i32
      %c3_i32_207 = arith.constant 3 : i32
      %291 = arith.addi %290, %c3_i32_207 : i32
      %292 = arith.index_cast %291 : i32 to index
      %c1_208 = arith.constant 1 : index
      %c0_209 = arith.constant 0 : index
      %293 = tpu.strided_load %arg14[%292, %c1_208, %c0_209] {strides = array<i32: 1, 2, 1>} : memref<10x10x64xf32, #tpu.memory_space<vmem>>, vector<1x4x64xf32>
      %294 = vector.shape_cast %293 : vector<1x4x64xf32> to vector<4x64xf32>
      %c832 = arith.constant 832 : index
      %c0_210 = arith.constant 0 : index
      %295 = vector.load %arg6[%c832, %c0_210] : memref<1024x128xbf16, #tpu.memory_space<vmem>>, vector<64x128xbf16>
      %296 = arith.truncf %294 : vector<4x64xf32> to vector<4x64xbf16>
      %cst_211 = arith.constant dense<0.000000e+00> : vector<4x128xf32>
      %297 = tpu.matmul %296, %295, %cst_211 {dimension_numbers = #tpu.dot_dimension_numbers<[1], [0], [0], [1], [0, 0, 1, 1], [], []>} : vector<4x64xbf16>, vector<64x128xbf16>, vector<4x128xf32> -> vector<4x128xf32>
      %298 = arith.addf %289, %297 : vector<4x128xf32>
      %c2_i32_212 = arith.constant 2 : i32
      %299 = arith.muli %c2_i32_212, %arg17 : i32
      %c3_i32_213 = arith.constant 3 : i32
      %300 = arith.addi %299, %c3_i32_213 : i32
      %301 = arith.index_cast %300 : i32 to index
      %c2_214 = arith.constant 2 : index
      %c0_215 = arith.constant 0 : index
      %302 = tpu.strided_load %arg14[%301, %c2_214, %c0_215] {strides = array<i32: 1, 2, 1>} : memref<10x10x64xf32, #tpu.memory_space<vmem>>, vector<1x4x64xf32>
      %303 = vector.shape_cast %302 : vector<1x4x64xf32> to vector<4x64xf32>
      %c896_216 = arith.constant 896 : index
      %c0_217 = arith.constant 0 : index
      %304 = vector.load %arg6[%c896_216, %c0_217] : memref<1024x128xbf16, #tpu.memory_space<vmem>>, vector<64x128xbf16>
      %305 = arith.truncf %303 : vector<4x64xf32> to vector<4x64xbf16>
      %cst_218 = arith.constant dense<0.000000e+00> : vector<4x128xf32>
      %306 = tpu.matmul %305, %304, %cst_218 {dimension_numbers = #tpu.dot_dimension_numbers<[1], [0], [0], [1], [0, 0, 1, 1], [], []>} : vector<4x64xbf16>, vector<64x128xbf16>, vector<4x128xf32> -> vector<4x128xf32>
      %307 = arith.addf %298, %306 : vector<4x128xf32>
      %c2_i32_219 = arith.constant 2 : i32
      %308 = arith.muli %c2_i32_219, %arg17 : i32
      %c3_i32_220 = arith.constant 3 : i32
      %309 = arith.addi %308, %c3_i32_220 : i32
      %310 = arith.index_cast %309 : i32 to index
      %c3_221 = arith.constant 3 : index
      %c0_222 = arith.constant 0 : index
      %311 = tpu.strided_load %arg14[%310, %c3_221, %c0_222] {strides = array<i32: 1, 2, 1>} : memref<10x10x64xf32, #tpu.memory_space<vmem>>, vector<1x4x64xf32>
      %312 = vector.shape_cast %311 : vector<1x4x64xf32> to vector<4x64xf32>
      %c960 = arith.constant 960 : index
      %c0_223 = arith.constant 0 : index
      %313 = vector.load %arg6[%c960, %c0_223] : memref<1024x128xbf16, #tpu.memory_space<vmem>>, vector<64x128xbf16>
      %314 = arith.truncf %312 : vector<4x64xf32> to vector<4x64xbf16>
      %cst_224 = arith.constant dense<0.000000e+00> : vector<4x128xf32>
      %315 = tpu.matmul %314, %313, %cst_224 {dimension_numbers = #tpu.dot_dimension_numbers<[1], [0], [0], [1], [0, 0, 1, 1], [], []>} : vector<4x64xbf16>, vector<64x128xbf16>, vector<4x128xf32> -> vector<4x128xf32>
      %316 = arith.addf %307, %315 : vector<4x128xf32>
      %cst_225 = arith.constant 0.000000e+00 : f32
      %317 = vector.broadcast %cst_225 : f32 to vector<4x128xf32>
      %318 = arith.maximumf %316, %317 : vector<4x128xf32>
      %319 = arith.index_cast %arg17 : i32 to index
      %c0_226 = arith.constant 0 : index
      %c0_227 = arith.constant 0 : index
      %320 = vector.load %arg15[%319, %c0_226, %c0_227] : memref<4x4x128xf32, #tpu.memory_space<vmem>>, vector<1x4x128xf32>
      %321 = vector.shape_cast %320 : vector<1x4x128xf32> to vector<4x128xf32>
      %322 = vector.shape_cast %318 : vector<4x128xf32> to vector<1x4x128xf32>
      tpu.vector_store %arg15[%319, %c0_226, %c0_227], %322 {strides = array<i32>} : memref<4x4x128xf32, #tpu.memory_space<vmem>>, vector<1x4x128xf32>,
    }
    %c4_i32_11 = arith.constant 4 : i32
    %c0_12 = arith.constant 0 : index
    %c0_13 = arith.constant 0 : index
    %12 = vector.load %arg9[%c0_12, %c0_13] : memref<1x256xf32, #tpu.memory_space<vmem>>, vector<1x256xf32>
    %c0_i32_14 = arith.constant 0 : i32
    %c2_i32 = arith.constant 2 : i32
    %13 = arith.muli %c2_i32, %c0_i32_14 : i32
    %c0_i32_15 = arith.constant 0 : i32
    %14 = arith.addi %13, %c0_i32_15 : i32
    %15 = arith.index_cast %14 : i32 to index
    %c0_16 = arith.constant 0 : index
    %c0_17 = arith.constant 0 : index
    %16 = tpu.strided_load %arg15[%15, %c0_16, %c0_17] {strides = array<i32: 1, 2, 1>} : memref<4x4x128xf32, #tpu.memory_space<vmem>>, vector<1x1x128xf32>
    %17 = vector.shape_cast %16 : vector<1x1x128xf32> to vector<1x128xf32>
    %c0_18 = arith.constant 0 : index
    %c0_19 = arith.constant 0 : index
    %18 = vector.load %arg8[%c0_18, %c0_19] : memref<2048x256xbf16, #tpu.memory_space<vmem>>, vector<128x256xbf16>
    %19 = arith.truncf %17 : vector<1x128xf32> to vector<1x128xbf16>
    %cst = arith.constant dense<0.000000e+00> : vector<1x256xf32>
    %20 = tpu.matmul %19, %18, %cst {dimension_numbers = #tpu.dot_dimension_numbers<[1], [0], [0], [1], [0, 0, 1, 1], [], []>} : vector<1x128xbf16>, vector<128x256xbf16>, vector<1x256xf32> -> vector<1x256xf32>
    %21 = arith.addf %12, %20 : vector<1x256xf32>
    %c2_i32_20 = arith.constant 2 : i32
    %22 = arith.muli %c2_i32_20, %c0_i32_14 : i32
    %c0_i32_21 = arith.constant 0 : i32
    %23 = arith.addi %22, %c0_i32_21 : i32
    %24 = arith.index_cast %23 : i32 to index
    %c1 = arith.constant 1 : index
    %c0_22 = arith.constant 0 : index
    %25 = tpu.strided_load %arg15[%24, %c1, %c0_22] {strides = array<i32: 1, 2, 1>} : memref<4x4x128xf32, #tpu.memory_space<vmem>>, vector<1x1x128xf32>
    %26 = vector.shape_cast %25 : vector<1x1x128xf32> to vector<1x128xf32>
    %c128 = arith.constant 128 : index
    %c0_23 = arith.constant 0 : index
    %27 = vector.load %arg8[%c128, %c0_23] : memref<2048x256xbf16, #tpu.memory_space<vmem>>, vector<128x256xbf16>
    %28 = arith.truncf %26 : vector<1x128xf32> to vector<1x128xbf16>
    %cst_24 = arith.constant dense<0.000000e+00> : vector<1x256xf32>
    %29 = tpu.matmul %28, %27, %cst_24 {dimension_numbers = #tpu.dot_dimension_numbers<[1], [0], [0], [1], [0, 0, 1, 1], [], []>} : vector<1x128xbf16>, vector<128x256xbf16>, vector<1x256xf32> -> vector<1x256xf32>
    %30 = arith.addf %21, %29 : vector<1x256xf32>
    %c2_i32_25 = arith.constant 2 : i32
    %31 = arith.muli %c2_i32_25, %c0_i32_14 : i32
    %c0_i32_26 = arith.constant 0 : i32
    %32 = arith.addi %31, %c0_i32_26 : i32
    %33 = arith.index_cast %32 : i32 to index
    %c2 = arith.constant 2 : index
    %c0_27 = arith.constant 0 : index
    %34 = tpu.strided_load %arg15[%33, %c2, %c0_27] {strides = array<i32: 1, 2, 1>} : memref<4x4x128xf32, #tpu.memory_space<vmem>>, vector<1x1x128xf32>
    %35 = vector.shape_cast %34 : vector<1x1x128xf32> to vector<1x128xf32>
    %c256 = arith.constant 256 : index
    %c0_28 = arith.constant 0 : index
    %36 = vector.load %arg8[%c256, %c0_28] : memref<2048x256xbf16, #tpu.memory_space<vmem>>, vector<128x256xbf16>
    %37 = arith.truncf %35 : vector<1x128xf32> to vector<1x128xbf16>
    %cst_29 = arith.constant dense<0.000000e+00> : vector<1x256xf32>
    %38 = tpu.matmul %37, %36, %cst_29 {dimension_numbers = #tpu.dot_dimension_numbers<[1], [0], [0], [1], [0, 0, 1, 1], [], []>} : vector<1x128xbf16>, vector<128x256xbf16>, vector<1x256xf32> -> vector<1x256xf32>
    %39 = arith.addf %30, %38 : vector<1x256xf32>
    %c2_i32_30 = arith.constant 2 : i32
    %40 = arith.muli %c2_i32_30, %c0_i32_14 : i32
    %c0_i32_31 = arith.constant 0 : i32
    %41 = arith.addi %40, %c0_i32_31 : i32
    %42 = arith.index_cast %41 : i32 to index
    %c3 = arith.constant 3 : index
    %c0_32 = arith.constant 0 : index
    %43 = tpu.strided_load %arg15[%42, %c3, %c0_32] {strides = array<i32: 1, 2, 1>} : memref<4x4x128xf32, #tpu.memory_space<vmem>>, vector<1x1x128xf32>
    %44 = vector.shape_cast %43 : vector<1x1x128xf32> to vector<1x128xf32>
    %c384 = arith.constant 384 : index
    %c0_33 = arith.constant 0 : index
    %45 = vector.load %arg8[%c384, %c0_33] : memref<2048x256xbf16, #tpu.memory_space<vmem>>, vector<128x256xbf16>
    %46 = arith.truncf %44 : vector<1x128xf32> to vector<1x128xbf16>
    %cst_34 = arith.constant dense<0.000000e+00> : vector<1x256xf32>
    %47 = tpu.matmul %46, %45, %cst_34 {dimension_numbers = #tpu.dot_dimension_numbers<[1], [0], [0], [1], [0, 0, 1, 1], [], []>} : vector<1x128xbf16>, vector<128x256xbf16>, vector<1x256xf32> -> vector<1x256xf32>
    %48 = arith.addf %39, %47 : vector<1x256xf32>
    %c2_i32_35 = arith.constant 2 : i32
    %49 = arith.muli %c2_i32_35, %c0_i32_14 : i32
    %c1_i32_36 = arith.constant 1 : i32
    %50 = arith.addi %49, %c1_i32_36 : i32
    %51 = arith.index_cast %50 : i32 to index
    %c0_37 = arith.constant 0 : index
    %c0_38 = arith.constant 0 : index
    %52 = tpu.strided_load %arg15[%51, %c0_37, %c0_38] {strides = array<i32: 1, 2, 1>} : memref<4x4x128xf32, #tpu.memory_space<vmem>>, vector<1x1x128xf32>
    %53 = vector.shape_cast %52 : vector<1x1x128xf32> to vector<1x128xf32>
    %c512 = arith.constant 512 : index
    %c0_39 = arith.constant 0 : index
    %54 = vector.load %arg8[%c512, %c0_39] : memref<2048x256xbf16, #tpu.memory_space<vmem>>, vector<128x256xbf16>
    %55 = arith.truncf %53 : vector<1x128xf32> to vector<1x128xbf16>
    %cst_40 = arith.constant dense<0.000000e+00> : vector<1x256xf32>
    %56 = tpu.matmul %55, %54, %cst_40 {dimension_numbers = #tpu.dot_dimension_numbers<[1], [0], [0], [1], [0, 0, 1, 1], [], []>} : vector<1x128xbf16>, vector<128x256xbf16>, vector<1x256xf32> -> vector<1x256xf32>
    %57 = arith.addf %48, %56 : vector<1x256xf32>
    %c2_i32_41 = arith.constant 2 : i32
    %58 = arith.muli %c2_i32_41, %c0_i32_14 : i32
    %c1_i32_42 = arith.constant 1 : i32
    %59 = arith.addi %58, %c1_i32_42 : i32
    %60 = arith.index_cast %59 : i32 to index
    %c1_43 = arith.constant 1 : index
    %c0_44 = arith.constant 0 : index
    %61 = tpu.strided_load %arg15[%60, %c1_43, %c0_44] {strides = array<i32: 1, 2, 1>} : memref<4x4x128xf32, #tpu.memory_space<vmem>>, vector<1x1x128xf32>
    %62 = vector.shape_cast %61 : vector<1x1x128xf32> to vector<1x128xf32>
    %c640 = arith.constant 640 : index
    %c0_45 = arith.constant 0 : index
    %63 = vector.load %arg8[%c640, %c0_45] : memref<2048x256xbf16, #tpu.memory_space<vmem>>, vector<128x256xbf16>
    %64 = arith.truncf %62 : vector<1x128xf32> to vector<1x128xbf16>
    %cst_46 = arith.constant dense<0.000000e+00> : vector<1x256xf32>
    %65 = tpu.matmul %64, %63, %cst_46 {dimension_numbers = #tpu.dot_dimension_numbers<[1], [0], [0], [1], [0, 0, 1, 1], [], []>} : vector<1x128xbf16>, vector<128x256xbf16>, vector<1x256xf32> -> vector<1x256xf32>
    %66 = arith.addf %57, %65 : vector<1x256xf32>
    %c2_i32_47 = arith.constant 2 : i32
    %67 = arith.muli %c2_i32_47, %c0_i32_14 : i32
    %c1_i32_48 = arith.constant 1 : i32
    %68 = arith.addi %67, %c1_i32_48 : i32
    %69 = arith.index_cast %68 : i32 to index
    %c2_49 = arith.constant 2 : index
    %c0_50 = arith.constant 0 : index
    %70 = tpu.strided_load %arg15[%69, %c2_49, %c0_50] {strides = array<i32: 1, 2, 1>} : memref<4x4x128xf32, #tpu.memory_space<vmem>>, vector<1x1x128xf32>
    %71 = vector.shape_cast %70 : vector<1x1x128xf32> to vector<1x128xf32>
    %c768 = arith.constant 768 : index
    %c0_51 = arith.constant 0 : index
    %72 = vector.load %arg8[%c768, %c0_51] : memref<2048x256xbf16, #tpu.memory_space<vmem>>, vector<128x256xbf16>
    %73 = arith.truncf %71 : vector<1x128xf32> to vector<1x128xbf16>
    %cst_52 = arith.constant dense<0.000000e+00> : vector<1x256xf32>
    %74 = tpu.matmul %73, %72, %cst_52 {dimension_numbers = #tpu.dot_dimension_numbers<[1], [0], [0], [1], [0, 0, 1, 1], [], []>} : vector<1x128xbf16>, vector<128x256xbf16>, vector<1x256xf32> -> vector<1x256xf32>
    %75 = arith.addf %66, %74 : vector<1x256xf32>
    %c2_i32_53 = arith.constant 2 : i32
    %76 = arith.muli %c2_i32_53, %c0_i32_14 : i32
    %c1_i32_54 = arith.constant 1 : i32
    %77 = arith.addi %76, %c1_i32_54 : i32
    %78 = arith.index_cast %77 : i32 to index
    %c3_55 = arith.constant 3 : index
    %c0_56 = arith.constant 0 : index
    %79 = tpu.strided_load %arg15[%78, %c3_55, %c0_56] {strides = array<i32: 1, 2, 1>} : memref<4x4x128xf32, #tpu.memory_space<vmem>>, vector<1x1x128xf32>
    %80 = vector.shape_cast %79 : vector<1x1x128xf32> to vector<1x128xf32>
    %c896 = arith.constant 896 : index
    %c0_57 = arith.constant 0 : index
    %81 = vector.load %arg8[%c896, %c0_57] : memref<2048x256xbf16, #tpu.memory_space<vmem>>, vector<128x256xbf16>
    %82 = arith.truncf %80 : vector<1x128xf32> to vector<1x128xbf16>
    %cst_58 = arith.constant dense<0.000000e+00> : vector<1x256xf32>
    %83 = tpu.matmul %82, %81, %cst_58 {dimension_numbers = #tpu.dot_dimension_numbers<[1], [0], [0], [1], [0, 0, 1, 1], [], []>} : vector<1x128xbf16>, vector<128x256xbf16>, vector<1x256xf32> -> vector<1x256xf32>
    %84 = arith.addf %75, %83 : vector<1x256xf32>
    %c2_i32_59 = arith.constant 2 : i32
    %85 = arith.muli %c2_i32_59, %c0_i32_14 : i32
    %c2_i32_60 = arith.constant 2 : i32
    %86 = arith.addi %85, %c2_i32_60 : i32
    %87 = arith.index_cast %86 : i32 to index
    %c0_61 = arith.constant 0 : index
    %c0_62 = arith.constant 0 : index
    %88 = tpu.strided_load %arg15[%87, %c0_61, %c0_62] {strides = array<i32: 1, 2, 1>} : memref<4x4x128xf32, #tpu.memory_space<vmem>>, vector<1x1x128xf32>
    %89 = vector.shape_cast %88 : vector<1x1x128xf32> to vector<1x128xf32>
    %c1024 = arith.constant 1024 : index
    %c0_63 = arith.constant 0 : index
    %90 = vector.load %arg8[%c1024, %c0_63] : memref<2048x256xbf16, #tpu.memory_space<vmem>>, vector<128x256xbf16>
    %91 = arith.truncf %89 : vector<1x128xf32> to vector<1x128xbf16>
    %cst_64 = arith.constant dense<0.000000e+00> : vector<1x256xf32>
    %92 = tpu.matmul %91, %90, %cst_64 {dimension_numbers = #tpu.dot_dimension_numbers<[1], [0], [0], [1], [0, 0, 1, 1], [], []>} : vector<1x128xbf16>, vector<128x256xbf16>, vector<1x256xf32> -> vector<1x256xf32>
    %93 = arith.addf %84, %92 : vector<1x256xf32>
    %c2_i32_65 = arith.constant 2 : i32
    %94 = arith.muli %c2_i32_65, %c0_i32_14 : i32
    %c2_i32_66 = arith.constant 2 : i32
    %95 = arith.addi %94, %c2_i32_66 : i32
    %96 = arith.index_cast %95 : i32 to index
    %c1_67 = arith.constant 1 : index
    %c0_68 = arith.constant 0 : index
    %97 = tpu.strided_load %arg15[%96, %c1_67, %c0_68] {strides = array<i32: 1, 2, 1>} : memref<4x4x128xf32, #tpu.memory_space<vmem>>, vector<1x1x128xf32>
    %98 = vector.shape_cast %97 : vector<1x1x128xf32> to vector<1x128xf32>
    %c1152 = arith.constant 1152 : index
    %c0_69 = arith.constant 0 : index
    %99 = vector.load %arg8[%c1152, %c0_69] : memref<2048x256xbf16, #tpu.memory_space<vmem>>, vector<128x256xbf16>
    %100 = arith.truncf %98 : vector<1x128xf32> to vector<1x128xbf16>
    %cst_70 = arith.constant dense<0.000000e+00> : vector<1x256xf32>
    %101 = tpu.matmul %100, %99, %cst_70 {dimension_numbers = #tpu.dot_dimension_numbers<[1], [0], [0], [1], [0, 0, 1, 1], [], []>} : vector<1x128xbf16>, vector<128x256xbf16>, vector<1x256xf32> -> vector<1x256xf32>
    %102 = arith.addf %93, %101 : vector<1x256xf32>
    %c2_i32_71 = arith.constant 2 : i32
    %103 = arith.muli %c2_i32_71, %c0_i32_14 : i32
    %c2_i32_72 = arith.constant 2 : i32
    %104 = arith.addi %103, %c2_i32_72 : i32
    %105 = arith.index_cast %104 : i32 to index
    %c2_73 = arith.constant 2 : index
    %c0_74 = arith.constant 0 : index
    %106 = tpu.strided_load %arg15[%105, %c2_73, %c0_74] {strides = array<i32: 1, 2, 1>} : memref<4x4x128xf32, #tpu.memory_space<vmem>>, vector<1x1x128xf32>
    %107 = vector.shape_cast %106 : vector<1x1x128xf32> to vector<1x128xf32>
    %c1280 = arith.constant 1280 : index
    %c0_75 = arith.constant 0 : index
    %108 = vector.load %arg8[%c1280, %c0_75] : memref<2048x256xbf16, #tpu.memory_space<vmem>>, vector<128x256xbf16>
    %109 = arith.truncf %107 : vector<1x128xf32> to vector<1x128xbf16>
    %cst_76 = arith.constant dense<0.000000e+00> : vector<1x256xf32>
    %110 = tpu.matmul %109, %108, %cst_76 {dimension_numbers = #tpu.dot_dimension_numbers<[1], [0], [0], [1], [0, 0, 1, 1], [], []>} : vector<1x128xbf16>, vector<128x256xbf16>, vector<1x256xf32> -> vector<1x256xf32>
    %111 = arith.addf %102, %110 : vector<1x256xf32>
    %c2_i32_77 = arith.constant 2 : i32
    %112 = arith.muli %c2_i32_77, %c0_i32_14 : i32
    %c2_i32_78 = arith.constant 2 : i32
    %113 = arith.addi %112, %c2_i32_78 : i32
    %114 = arith.index_cast %113 : i32 to index
    %c3_79 = arith.constant 3 : index
    %c0_80 = arith.constant 0 : index
    %115 = tpu.strided_load %arg15[%114, %c3_79, %c0_80] {strides = array<i32: 1, 2, 1>} : memref<4x4x128xf32, #tpu.memory_space<vmem>>, vector<1x1x128xf32>
    %116 = vector.shape_cast %115 : vector<1x1x128xf32> to vector<1x128xf32>
    %c1408 = arith.constant 1408 : index
    %c0_81 = arith.constant 0 : index
    %117 = vector.load %arg8[%c1408, %c0_81] : memref<2048x256xbf16, #tpu.memory_space<vmem>>, vector<128x256xbf16>
    %118 = arith.truncf %116 : vector<1x128xf32> to vector<1x128xbf16>
    %cst_82 = arith.constant dense<0.000000e+00> : vector<1x256xf32>
    %119 = tpu.matmul %118, %117, %cst_82 {dimension_numbers = #tpu.dot_dimension_numbers<[1], [0], [0], [1], [0, 0, 1, 1], [], []>} : vector<1x128xbf16>, vector<128x256xbf16>, vector<1x256xf32> -> vector<1x256xf32>
    %120 = arith.addf %111, %119 : vector<1x256xf32>
    %c2_i32_83 = arith.constant 2 : i32
    %121 = arith.muli %c2_i32_83, %c0_i32_14 : i32
    %c3_i32 = arith.constant 3 : i32
    %122 = arith.addi %121, %c3_i32 : i32
    %123 = arith.index_cast %122 : i32 to index
    %c0_84 = arith.constant 0 : index
    %c0_85 = arith.constant 0 : index
    %124 = tpu.strided_load %arg15[%123, %c0_84, %c0_85] {strides = array<i32: 1, 2, 1>} : memref<4x4x128xf32, #tpu.memory_space<vmem>>, vector<1x1x128xf32>
    %125 = vector.shape_cast %124 : vector<1x1x128xf32> to vector<1x128xf32>
    %c1536 = arith.constant 1536 : index
    %c0_86 = arith.constant 0 : index
    %126 = vector.load %arg8[%c1536, %c0_86] : memref<2048x256xbf16, #tpu.memory_space<vmem>>, vector<128x256xbf16>
    %127 = arith.truncf %125 : vector<1x128xf32> to vector<1x128xbf16>
    %cst_87 = arith.constant dense<0.000000e+00> : vector<1x256xf32>
    %128 = tpu.matmul %127, %126, %cst_87 {dimension_numbers = #tpu.dot_dimension_numbers<[1], [0], [0], [1], [0, 0, 1, 1], [], []>} : vector<1x128xbf16>, vector<128x256xbf16>, vector<1x256xf32> -> vector<1x256xf32>
    %129 = arith.addf %120, %128 : vector<1x256xf32>
    %c2_i32_88 = arith.constant 2 : i32
    %130 = arith.muli %c2_i32_88, %c0_i32_14 : i32
    %c3_i32_89 = arith.constant 3 : i32
    %131 = arith.addi %130, %c3_i32_89 : i32
    %132 = arith.index_cast %131 : i32 to index
    %c1_90 = arith.constant 1 : index
    %c0_91 = arith.constant 0 : index
    %133 = tpu.strided_load %arg15[%132, %c1_90, %c0_91] {strides = array<i32: 1, 2, 1>} : memref<4x4x128xf32, #tpu.memory_space<vmem>>, vector<1x1x128xf32>
    %134 = vector.shape_cast %133 : vector<1x1x128xf32> to vector<1x128xf32>
    %c1664 = arith.constant 1664 : index
    %c0_92 = arith.constant 0 : index
    %135 = vector.load %arg8[%c1664, %c0_92] : memref<2048x256xbf16, #tpu.memory_space<vmem>>, vector<128x256xbf16>
    %136 = arith.truncf %134 : vector<1x128xf32> to vector<1x128xbf16>
    %cst_93 = arith.constant dense<0.000000e+00> : vector<1x256xf32>
    %137 = tpu.matmul %136, %135, %cst_93 {dimension_numbers = #tpu.dot_dimension_numbers<[1], [0], [0], [1], [0, 0, 1, 1], [], []>} : vector<1x128xbf16>, vector<128x256xbf16>, vector<1x256xf32> -> vector<1x256xf32>
    %138 = arith.addf %129, %137 : vector<1x256xf32>
    %c2_i32_94 = arith.constant 2 : i32
    %139 = arith.muli %c2_i32_94, %c0_i32_14 : i32
    %c3_i32_95 = arith.constant 3 : i32
    %140 = arith.addi %139, %c3_i32_95 : i32
    %141 = arith.index_cast %140 : i32 to index
    %c2_96 = arith.constant 2 : index
    %c0_97 = arith.constant 0 : index
    %142 = tpu.strided_load %arg15[%141, %c2_96, %c0_97] {strides = array<i32: 1, 2, 1>} : memref<4x4x128xf32, #tpu.memory_space<vmem>>, vector<1x1x128xf32>
    %143 = vector.shape_cast %142 : vector<1x1x128xf32> to vector<1x128xf32>
    %c1792 = arith.constant 1792 : index
    %c0_98 = arith.constant 0 : index
    %144 = vector.load %arg8[%c1792, %c0_98] : memref<2048x256xbf16, #tpu.memory_space<vmem>>, vector<128x256xbf16>
    %145 = arith.truncf %143 : vector<1x128xf32> to vector<1x128xbf16>
    %cst_99 = arith.constant dense<0.000000e+00> : vector<1x256xf32>
    %146 = tpu.matmul %145, %144, %cst_99 {dimension_numbers = #tpu.dot_dimension_numbers<[1], [0], [0], [1], [0, 0, 1, 1], [], []>} : vector<1x128xbf16>, vector<128x256xbf16>, vector<1x256xf32> -> vector<1x256xf32>
    %147 = arith.addf %138, %146 : vector<1x256xf32>
    %c2_i32_100 = arith.constant 2 : i32
    %148 = arith.muli %c2_i32_100, %c0_i32_14 : i32
    %c3_i32_101 = arith.constant 3 : i32
    %149 = arith.addi %148, %c3_i32_101 : i32
    %150 = arith.index_cast %149 : i32 to index
    %c3_102 = arith.constant 3 : index
    %c0_103 = arith.constant 0 : index
    %151 = tpu.strided_load %arg15[%150, %c3_102, %c0_103] {strides = array<i32: 1, 2, 1>} : memref<4x4x128xf32, #tpu.memory_space<vmem>>, vector<1x1x128xf32>
    %152 = vector.shape_cast %151 : vector<1x1x128xf32> to vector<1x128xf32>
    %c1920 = arith.constant 1920 : index
    %c0_104 = arith.constant 0 : index
    %153 = vector.load %arg8[%c1920, %c0_104] : memref<2048x256xbf16, #tpu.memory_space<vmem>>, vector<128x256xbf16>
    %154 = arith.truncf %152 : vector<1x128xf32> to vector<1x128xbf16>
    %cst_105 = arith.constant dense<0.000000e+00> : vector<1x256xf32>
    %155 = tpu.matmul %154, %153, %cst_105 {dimension_numbers = #tpu.dot_dimension_numbers<[1], [0], [0], [1], [0, 0, 1, 1], [], []>} : vector<1x128xbf16>, vector<128x256xbf16>, vector<1x256xf32> -> vector<1x256xf32>
    %156 = arith.addf %147, %155 : vector<1x256xf32>
    %cst_106 = arith.constant 0.000000e+00 : f32
    %157 = vector.broadcast %cst_106 : f32 to vector<1x256xf32>
    %158 = arith.maximumf %156, %157 : vector<1x256xf32>
    %159 = arith.index_cast %c0_i32_14 : i32 to index
    %c0_107 = arith.constant 0 : index
    %c0_108 = arith.constant 0 : index
    %160 = vector.load %arg16[%159, %c0_107, %c0_108] : memref<1x1x256xf32, #tpu.memory_space<vmem>>, vector<1x1x256xf32>
    %161 = vector.shape_cast %160 : vector<1x1x256xf32> to vector<1x256xf32>
    %162 = vector.shape_cast %158 : vector<1x256xf32> to vector<1x1x256xf32>
    tpu.vector_store %arg16[%159, %c0_107, %c0_108], %162 {strides = array<i32>} : memref<1x1x256xf32, #tpu.memory_space<vmem>>, vector<1x1x256xf32>,
    %c1_i32_109 = arith.constant 1 : i32
    %c0_110 = arith.constant 0 : index
    %c0_111 = arith.constant 0 : index
    %c0_112 = arith.constant 0 : index
    %163 = vector.load %arg16[%c0_110, %c0_111, %c0_112] : memref<1x1x256xf32, #tpu.memory_space<vmem>>, vector<1x1x256xf32>
    %164 = vector.shape_cast %163 : vector<1x1x256xf32> to vector<1x256xf32>
    %165 = arith.truncf %164 : vector<1x256xf32> to vector<1x256xbf16>
    %c0_113 = arith.constant 0 : index
    %c0_114 = arith.constant 0 : index
    %166 = vector.load %arg10[%c0_113, %c0_114] : memref<256x32xbf16, #tpu.memory_space<vmem>>, vector<256x32xbf16>
    %cst_115 = arith.constant dense<0.000000e+00> : vector<1x32xf32>
    %167 = tpu.matmul %165, %166, %cst_115 {dimension_numbers = #tpu.dot_dimension_numbers<[1], [0], [0], [1], [0, 0, 1, 1], [], []>} : vector<1x256xbf16>, vector<256x32xbf16>, vector<1x32xf32> -> vector<1x32xf32>
    %c0_116 = arith.constant 0 : index
    %c0_117 = arith.constant 0 : index
    %168 = vector.load %arg11[%c0_116, %c0_117] : memref<1x32xf32, #tpu.memory_space<vmem>>, vector<1x32xf32>
    %169 = arith.addf %167, %168 : vector<1x32xf32>
    %c0_118 = arith.constant 0 : index
    %c0_119 = arith.constant 0 : index
    %c0_120 = arith.constant 0 : index
    %170 = vector.load %arg12[%c0_118, %c0_119, %c0_120] : memref<1x1x32xf32, #tpu.memory_space<vmem>>, vector<1x1x32xf32>
    %171 = vector.shape_cast %170 : vector<1x1x32xf32> to vector<1x32xf32>
    %172 = vector.shape_cast %169 : vector<1x32xf32> to vector<1x1x32xf32>
    tpu.vector_store %arg12[%c0_118, %c0_119, %c0_120], %172 {strides = array<i32>} : memref<1x1x32xf32, #tpu.memory_space<vmem>>, vector<1x1x32xf32>,
    return
  }
  func.func @transform_0(%arg0: i32) -> (i32, i32, i32, i32) {
    %c0_i32 = arith.constant 0 : i32
    %c0_i32_0 = arith.constant 0 : i32
    %c0_i32_1 = arith.constant 0 : i32
    %c0_i32_2 = arith.constant 0 : i32
    return %arg0, %c0_i32, %c0_i32_0, %c0_i32_1 : i32, i32, i32, i32
  }
  func.func @transform_1(%arg0: i32) -> (i32, i32) {
    %c0_i32 = arith.constant 0 : i32
    %c0_i32_0 = arith.constant 0 : i32
    %c0_i32_1 = arith.constant 0 : i32
    return %c0_i32, %c0_i32_0 : i32, i32
  }
  func.func @transform_2(%arg0: i32) -> (i32, i32) {
    %c0_i32 = arith.constant 0 : i32
    %c0_i32_0 = arith.constant 0 : i32
    %c0_i32_1 = arith.constant 0 : i32
    return %c0_i32, %c0_i32_0 : i32, i32
  }
  func.func @transform_3(%arg0: i32) -> (i32, i32) {
    %c0_i32 = arith.constant 0 : i32
    %c0_i32_0 = arith.constant 0 : i32
    %c0_i32_1 = arith.constant 0 : i32
    return %c0_i32, %c0_i32_0 : i32, i32
  }
  func.func @transform_4(%arg0: i32) -> (i32, i32) {
    %c0_i32 = arith.constant 0 : i32
    %c0_i32_0 = arith.constant 0 : i32
    %c0_i32_1 = arith.constant 0 : i32
    return %c0_i32, %c0_i32_0 : i32, i32
  }
  func.func @transform_5(%arg0: i32) -> (i32, i32) {
    %c0_i32 = arith.constant 0 : i32
    %c0_i32_0 = arith.constant 0 : i32
    %c0_i32_1 = arith.constant 0 : i32
    return %c0_i32, %c0_i32_0 : i32, i32
  }
  func.func @transform_6(%arg0: i32) -> (i32, i32) {
    %c0_i32 = arith.constant 0 : i32
    %c0_i32_0 = arith.constant 0 : i32
    %c0_i32_1 = arith.constant 0 : i32
    return %c0_i32, %c0_i32_0 : i32, i32
  }
  func.func @transform_7(%arg0: i32) -> (i32, i32) {
    %c0_i32 = arith.constant 0 : i32
    %c0_i32_0 = arith.constant 0 : i32
    %c0_i32_1 = arith.constant 0 : i32
    return %c0_i32, %c0_i32_0 : i32, i32
  }
  func.func @transform_8(%arg0: i32) -> (i32, i32) {
    %c0_i32 = arith.constant 0 : i32
    %c0_i32_0 = arith.constant 0 : i32
    %c0_i32_1 = arith.constant 0 : i32
    return %c0_i32, %c0_i32_0 : i32, i32
  }
  func.func @transform_9(%arg0: i32) -> (i32, i32) {
    %c0_i32 = arith.constant 0 : i32
    %c0_i32_0 = arith.constant 0 : i32
    %c0_i32_1 = arith.constant 0 : i32
    return %c0_i32, %c0_i32_0 : i32, i32
  }
  func.func @transform_10(%arg0: i32) -> (i32, i32) {
    %c0_i32 = arith.constant 0 : i32
    %c0_i32_0 = arith.constant 0 : i32
    %c0_i32_1 = arith.constant 0 : i32
    return %c0_i32, %c0_i32_0 : i32, i32
  }
  func.func @transform_11(%arg0: i32) -> (i32, i32, i32) {
    %c0_i32 = arith.constant 0 : i32
    %c0_i32_0 = arith.constant 0 : i32
    %c0_i32_1 = arith.constant 0 : i32
    return %arg0, %c0_i32, %c0_i32_0 : i32, i32, i32
  }
}

</mosaic_0001>

<llo_original>
// kernel: conv_encoder_forward.1
$region0: #{conv_encoder_forward.1}
  #allocation0 [shape = 'u32[]', space=smem, size = 0x4, offset = 0x4, fixed_abs, tag = 'smem constant byte address 0x4 - core index']
  #allocation1 [shape = 'u32[144,128]{1,0:T(1,128)}', space=vmem, size = 0x12000, scoped, tag = 'internal scratch']
  #allocation2 [shape = 'f32[23,23,32]{2,1,0:T(8,128)}', space=vmem, size = 0x45000, scoped, tag = 'scratch operand']
  #allocation3 [shape = 'f32[10,10,64]{2,1,0:T(8,128)}', space=vmem, size = 0x14000, scoped, tag = 'scratch operand']
  #allocation4 [shape = 'f32[4,4,128]{2,1,0:T(4,128)}', space=vmem, size = 0x2000, scoped, tag = 'scratch operand']
  #allocation5 [shape = 'f32[1,1,256]{2,1,0:T(1,128)}', space=vmem, size = 0x400, scoped, tag = 'scratch operand']
  %s0 = inlined_call_operand.vmem [shape: f32[2,48,48,8], index: 0, kind: input, shape index: {}]
  %s1 = inlined_call_operand.vmem [shape: bf16[128,32], index: 1, kind: input, shape index: {}]
  %s2 = inlined_call_operand.vmem [shape: f32[1,32], index: 2, kind: input, shape index: {}]
  %s3 = inlined_call_operand.vmem [shape: bf16[512,64], index: 3, kind: input, shape index: {}]
  %s4 = inlined_call_operand.vmem [shape: f32[1,64], index: 4, kind: input, shape index: {}]
  %s5 = inlined_call_operand.vmem [shape: bf16[1024,128], index: 5, kind: input, shape index: {}]
  %s6 = inlined_call_operand.vmem [shape: f32[1,128], index: 6, kind: input, shape index: {}]
  %s7 = inlined_call_operand.vmem [shape: bf16[2048,256], index: 7, kind: input, shape index: {}]
  %s8 = inlined_call_operand.vmem [shape: f32[1,256], index: 8, kind: input, shape index: {}]
  %s9 = inlined_call_operand.vmem [shape: bf16[256,32], index: 9, kind: input, shape index: {}]
  %s10 = inlined_call_operand.vmem [shape: f32[1,32], index: 10, kind: input, shape index: {}]
  %s11 = inlined_call_operand.hbm [shape: f32[2,1,32], index: 11, kind: output, shape index: {}]
  %s12 = sld [smem:[#allocation0]]
  $region98: #{conv_encoder_forward.1} parent=0
    _
  %s14 = ssub.s32 1, %s12
  %s15 = scalar_select 0, %s14, %s12
  $region1: #{conv_encoder_forward.1} parent=0
    #allocation6 [shape = 'u8[1024]{0}', space=vmem, size = 0x400, scoped, tag = 'output window, operand 0']
    #allocation7 [shape = 's32[2]{0}', space=sflag, size = 0x8, scoped, tag = 'scoped memory for conv_encoder_forward.1']
    %16 = vsyncpa [#allocation7], 0
    %s17 = scalar_lea.sflag [#allocation7], 1
    %18 = vsyncpa %s17, 0
    loop: start=0, step=1, limit=4
    $region2: #{conv_encoder_forward.1} parent=1 // loop_pre_header
      _
    $region3: #{conv_encoder_forward.1} parent=1 // loop_header
      %s20 = sphi 0, %s24
      %p21 = scmp.ge.s32.totalorder %s20, 4
      %s30 = sphi 0, %s32
      %s33 = sphi 0, %s30
      %s34 = sphi 0, %s33
      %s50 = sphi 0, %s34
      %s54 = sphi 0, %s54
      %s56 = sphi 0, %s54
      %s57 = sphi 0, %s56
      %s71 = sphi 0, %s57
      %s75 = sphi 0, %s75
      %s77 = sphi 0, %s75
      %s78 = sphi 0, %s77
      %s92 = sphi 0, %s78
      %s96 = sphi 0, %s96
      %s98 = sphi 0, %s96
      %s99 = sphi 0, %s98
      %s113 = sphi 0, %s99
      %s117 = sphi 0, %s117
      %s119 = sphi 0, %s117
      %s120 = sphi 0, %s119
      %s134 = sphi 0, %s120
      %s138 = sphi 0, %s138
      %s140 = sphi 0, %s138
      %s141 = sphi 0, %s140
      %s155 = sphi 0, %s141
      %s159 = sphi 0, %s159
      %s161 = sphi 0, %s159
      %s162 = sphi 0, %s161
      %s176 = sphi 0, %s162
      %s180 = sphi 0, %s180
      %s182 = sphi 0, %s180
      %s183 = sphi 0, %s182
      %s197 = sphi 0, %s183
      %s201 = sphi 0, %s201
      %s203 = sphi 0, %s201
      %s204 = sphi 0, %s203
      %s218 = sphi 0, %s204
      %s222 = sphi 0, %s222
      %s224 = sphi 0, %s222
      %s225 = sphi 0, %s224
      %s239 = sphi 0, %s225
      %s243 = sphi 0, %s243
      %s245 = sphi 0, %s243
      %s246 = sphi 0, %s245
      %s260 = sphi 0, %s246
      %s266 = sphi 0, %s268
      %s269 = sphi 0, %s266
      %s270 = sphi 0, %s269
      %s286 = sphi 0, %s270
    $region4: #{conv_encoder_forward.1} parent=1 // loop_header_branch
      %23 = sbr.rel (%p21) target = $region8
    $region5: #{conv_encoder_forward.1} parent=1 // loop_body
      %s25 = ssub.s32 %s20, 1
      %s26 = ssub.s32 %s20, 2
      %s27 = sadd.s32 %s20, 1
      %s28 = ssub.s32 %s20, %s27
      %p29 = scmp.eq.s32.totalorder %s28, 0
      %s31 = sadd.s32 %s30, 1
      %s32 = scalar_select %p29, %s30, %s31
      %p35 = pneg %p29
      %p36 = scmp.eq.s32.totalorder %s20, 1
      %p37 = por %p35, %p36
      %p38 = scmp.ne.s32.totalorder %s30, %s33
      %p39 = scmp.eq.s32.totalorder %s20, 0
      %p40 = por %p38, %p39
      %p41 = scmp.ne.s32.totalorder %s30, %s33
      %p42 = scmp.eq.s32.totalorder %s25, 1
      %p43 = por %p41, %p42
      %p44 = scmp.ne.s32.totalorder %s33, %s34
      %p45 = scmp.eq.s32.totalorder %s25, 0
      %p46 = por %p44, %p45
      %p47 = scmp.ne.s32.totalorder %s33, %s34
      %p48 = scmp.eq.s32.totalorder %s26, 1
      %p49 = por %p47, %p48
      %p51 = scmp.ne.s32.totalorder %s34, %s50
      %p52 = scmp.eq.s32.totalorder %s26, 0
      %p53 = por %p51, %p52
      %s55 = sadd.s32 %s54, 1
      %p58 = scmp.eq.s32.totalorder %s20, 1
      %p59 = scmp.ne.s32.totalorder %s54, %s56
      %p60 = scmp.eq.s32.totalorder %s20, 0
      %p61 = por %p59, %p60
      %p62 = scmp.ne.s32.totalorder %s54, %s56
      %p63 = scmp.eq.s32.totalorder %s25, 1
      %p64 = por %p62, %p63
      %p65 = scmp.ne.s32.totalorder %s56, %s57
      %p66 = scmp.eq.s32.totalorder %s25, 0
      %p67 = por %p65, %p66
      %p68 = scmp.ne.s32.totalorder %s56, %s57
      %p69 = scmp.eq.s32.totalorder %s26, 1
      %p70 = por %p68, %p69
      %p72 = scmp.ne.s32.totalorder %s57, %s71
      %p73 = scmp.eq.s32.totalorder %s26, 0
      %p74 = por %p72, %p73
      %s76 = sadd.s32 %s75, 1
      %p79 = scmp.eq.s32.totalorder %s20, 1
      %p80 = scmp.ne.s32.totalorder %s75, %s77
      %p81 = scmp.eq.s32.totalorder %s20, 0
      %p82 = por %p80, %p81
      %p83 = scmp.ne.s32.totalorder %s75, %s77
      %p84 = scmp.eq.s32.totalorder %s25, 1
      %p85 = por %p83, %p84
      %p86 = scmp.ne.s32.totalorder %s77, %s78
      %p87 = scmp.eq.s32.totalorder %s25, 0
      %p88 = por %p86, %p87
      %p89 = scmp.ne.s32.totalorder %s77, %s78
      %p90 = scmp.eq.s32.totalorder %s26, 1
      %p91 = por %p89, %p90
      %p93 = scmp.ne.s32.totalorder %s78, %s92
      %p94 = scmp.eq.s32.totalorder %s26, 0
      %p95 = por %p93, %p94
      %s97 = sadd.s32 %s96, 1
      %p100 = scmp.eq.s32.totalorder %s20, 1
      %p101 = scmp.ne.s32.totalorder %s96, %s98
      %p102 = scmp.eq.s32.totalorder %s20, 0
      %p103 = por %p101, %p102
      %p104 = scmp.ne.s32.totalorder %s96, %s98
      %p105 = scmp.eq.s32.totalorder %s25, 1
      %p106 = por %p104, %p105
      %p107 = scmp.ne.s32.totalorder %s98, %s99
      %p108 = scmp.eq.s32.totalorder %s25, 0
      %p109 = por %p107, %p108
      %p110 = scmp.ne.s32.totalorder %s98, %s99
      %p111 = scmp.eq.s32.totalorder %s26, 1
      %p112 = por %p110, %p111
      %p114 = scmp.ne.s32.totalorder %s99, %s113
      %p115 = scmp.eq.s32.totalorder %s26, 0
      %p116 = por %p114, %p115
      %s118 = sadd.s32 %s117, 1
      %p121 = scmp.eq.s32.totalorder %s20, 1
      %p122 = scmp.ne.s32.totalorder %s117, %s119
      %p123 = scmp.eq.s32.totalorder %s20, 0
      %p124 = por %p122, %p123
      %p125 = scmp.ne.s32.totalorder %s117, %s119
      %p126 = scmp.eq.s32.totalorder %s25, 1
      %p127 = por %p125, %p126
      %p128 = scmp.ne.s32.totalorder %s119, %s120
      %p129 = scmp.eq.s32.totalorder %s25, 0
      %p130 = por %p128, %p129
      %p131 = scmp.ne.s32.totalorder %s119, %s120
      %p132 = scmp.eq.s32.totalorder %s26, 1
      %p133 = por %p131, %p132
      %p135 = scmp.ne.s32.totalorder %s120, %s134
      %p136 = scmp.eq.s32.totalorder %s26, 0
      %p137 = por %p135, %p136
      %s139 = sadd.s32 %s138, 1
      %p142 = scmp.eq.s32.totalorder %s20, 1
      %p143 = scmp.ne.s32.totalorder %s138, %s140
      %p144 = scmp.eq.s32.totalorder %s20, 0
      %p145 = por %p143, %p144
      %p146 = scmp.ne.s32.totalorder %s138, %s140
      %p147 = scmp.eq.s32.totalorder %s25, 1
      %p148 = por %p146, %p147
      %p149 = scmp.ne.s32.totalorder %s140, %s141
      %p150 = scmp.eq.s32.totalorder %s25, 0
      %p151 = por %p149, %p150
      %p152 = scmp.ne.s32.totalorder %s140, %s141
      %p153 = scmp.eq.s32.totalorder %s26, 1
      %p154 = por %p152, %p153
      %p156 = scmp.ne.s32.totalorder %s141, %s155
      %p157 = scmp.eq.s32.totalorder %s26, 0
      %p158 = por %p156, %p157
      %s160 = sadd.s32 %s159, 1
      %p163 = scmp.eq.s32.totalorder %s20, 1
      %p164 = scmp.ne.s32.totalorder %s159, %s161
      %p165 = scmp.eq.s32.totalorder %s20, 0
      %p166 = por %p164, %p165
      %p167 = scmp.ne.s32.totalorder %s159, %s161
      %p168 = scmp.eq.s32.totalorder %s25, 1
      %p169 = por %p167, %p168
      %p170 = scmp.ne.s32.totalorder %s161, %s162
      %p171 = scmp.eq.s32.totalorder %s25, 0
      %p172 = por %p170, %p171
      %p173 = scmp.ne.s32.totalorder %s161, %s162
      %p174 = scmp.eq.s32.totalorder %s26, 1
      %p175 = por %p173, %p174
      %p177 = scmp.ne.s32.totalorder %s162, %s176
      %p178 = scmp.eq.s32.totalorder %s26, 0
      %p179 = por %p177, %p178
      %s181 = sadd.s32 %s180, 1
      %p184 = scmp.eq.s32.totalorder %s20, 1
      %p185 = scmp.ne.s32.totalorder %s180, %s182
      %p186 = scmp.eq.s32.totalorder %s20, 0
      %p187 = por %p185, %p186
      %p188 = scmp.ne.s32.totalorder %s180, %s182
      %p189 = scmp.eq.s32.totalorder %s25, 1
      %p190 = por %p188, %p189
      %p191 = scmp.ne.s32.totalorder %s182, %s183
      %p192 = scmp.eq.s32.totalorder %s25, 0
      %p193 = por %p191, %p192
      %p194 = scmp.ne.s32.totalorder %s182, %s183
      %p195 = scmp.eq.s32.totalorder %s26, 1
      %p196 = por %p194, %p195
      %p198 = scmp.ne.s32.totalorder %s183, %s197
      %p199 = scmp.eq.s32.totalorder %s26, 0
      %p200 = por %p198, %p199
      %s202 = sadd.s32 %s201, 1
      %p205 = scmp.eq.s32.totalorder %s20, 1
      %p206 = scmp.ne.s32.totalorder %s201, %s203
      %p207 = scmp.eq.s32.totalorder %s20, 0
      %p208 = por %p206, %p207
      %p209 = scmp.ne.s32.totalorder %s201, %s203
      %p210 = scmp.eq.s32.totalorder %s25, 1
      %p211 = por %p209, %p210
      %p212 = scmp.ne.s32.totalorder %s203, %s204
      %p213 = scmp.eq.s32.totalorder %s25, 0
      %p214 = por %p212, %p213
      %p215 = scmp.ne.s32.totalorder %s203, %s204
      %p216 = scmp.eq.s32.totalorder %s26, 1
      %p217 = por %p215, %p216
      %p219 = scmp.ne.s32.totalorder %s204, %s218
      %p220 = scmp.eq.s32.totalorder %s26, 0
      %p221 = por %p219, %p220
      %s223 = sadd.s32 %s222, 1
      %p226 = scmp.eq.s32.totalorder %s20, 1
      %p227 = scmp.ne.s32.totalorder %s222, %s224
      %p228 = scmp.eq.s32.totalorder %s20, 0
      %p229 = por %p227, %p228
      %p230 = scmp.ne.s32.totalorder %s222, %s224
      %p231 = scmp.eq.s32.totalorder %s25, 1
      %p232 = por %p230, %p231
      %p233 = scmp.ne.s32.totalorder %s224, %s225
      %p234 = scmp.eq.s32.totalorder %s25, 0
      %p235 = por %p233, %p234
      %p236 = scmp.ne.s32.totalorder %s224, %s225
      %p237 = scmp.eq.s32.totalorder %s26, 1
      %p238 = por %p236, %p237
      %p240 = scmp.ne.s32.totalorder %s225, %s239
      %p241 = scmp.eq.s32.totalorder %s26, 0
      %p242 = por %p240, %p241
      %s244 = sadd.s32 %s243, 1
      %p247 = scmp.eq.s32.totalorder %s20, 1
      %p248 = scmp.ne.s32.totalorder %s243, %s245
      %p249 = scmp.eq.s32.totalorder %s20, 0
      %p250 = por %p248, %p249
      %p251 = scmp.ne.s32.totalorder %s243, %s245
      %p252 = scmp.eq.s32.totalorder %s25, 1
      %p253 = por %p251, %p252
      %p254 = scmp.ne.s32.totalorder %s245, %s246
      %p255 = scmp.eq.s32.totalorder %s25, 0
      %p256 = por %p254, %p255
      %p257 = scmp.ne.s32.totalorder %s245, %s246
      %p258 = scmp.eq.s32.totalorder %s26, 1
      %p259 = por %p257, %p258
      %p261 = scmp.ne.s32.totalorder %s246, %s260
      %p262 = scmp.eq.s32.totalorder %s26, 0
      %p263 = por %p261, %p262
      %s264 = ssub.s32 %s20, %s27
      %p265 = scmp.eq.s32.totalorder %s264, 0
      %s267 = sadd.s32 %s266, 1
      %s268 = scalar_select %p265, %s266, %s267
      %p271 = pneg %p265
      %p272 = scmp.eq.s32.totalorder %s20, 1
      %p273 = por %p271, %p272
      %p274 = scmp.ne.s32.totalorder %s266, %s269
      %p275 = scmp.eq.s32.totalorder %s20, 0
      %p276 = por %p274, %p275
      %p277 = scmp.ne.s32.totalorder %s266, %s269
      %p278 = scmp.eq.s32.totalorder %s25, 1
      %p279 = por %p277, %p278
      %p280 = scmp.ne.s32.totalorder %s269, %s270
      %p281 = scmp.eq.s32.totalorder %s25, 0
      %p282 = por %p280, %p281
      %p283 = scmp.ne.s32.totalorder %s269, %s270
      %p284 = scmp.eq.s32.totalorder %s26, 1
      %p285 = por %p283, %p284
      %p287 = scmp.ne.s32.totalorder %s270, %s286
      %p288 = scmp.eq.s32.totalorder %s26, 0
      %p289 = por %p287, %p288
      %p290 = scmp.le.s32.totalorder 1, %s20
      %p291 = scmp.lt.s32.totalorder %s20, 3
      %p292 = pnand %p290, %p291
      %p293 = pneg %p292
      // Predicated region
      $region9: #{conv_encoder_forward.1} parent=5 // pred_check
        _
      $region10: #{conv_encoder_forward.1} parent=5 // pred_check_branch
        %295 = sbr.rel (%p292) target = $region12
      $region11: #{conv_encoder_forward.1} parent=5 // pred_region
        %s296 = ssub.s32 %s20, 1
        // Predicated region
        $region13: #{conv_encoder_forward.1} parent=11 // pred_check
          %p297 = pneg %p67
        $region14: #{conv_encoder_forward.1} parent=11 // pred_check_branch
          %299 = sbr.rel (%p297) target = $region16
        $region15: #{conv_encoder_forward.1} parent=11 // pred_region
          _
        $region16: #{conv_encoder_forward.1} parent=11 // pred_fallthru
          _
        // Predicated region
        $region17: #{conv_encoder_forward.1} parent=11 // pred_check
          %p300 = pneg %p88
        $region18: #{conv_encoder_forward.1} parent=11 // pred_check_branch
          %302 = sbr.rel (%p300) target = $region20
        $region19: #{conv_encoder_forward.1} parent=11 // pred_region
          _
        $region20: #{conv_encoder_forward.1} parent=11 // pred_fallthru
          _
        // Predicated region
        $region21: #{conv_encoder_forward.1} parent=11 // pred_check
          %p303 = pneg %p109
        $region22: #{conv_encoder_forward.1} parent=11 // pred_check_branch
          %305 = sbr.rel (%p303) target = $region24
        $region23: #{conv_encoder_forward.1} parent=11 // pred_region
          _
        $region24: #{conv_encoder_forward.1} parent=11 // pred_fallthru
          _
        // Predicated region
        $region25: #{conv_encoder_forward.1} parent=11 // pred_check
          %p306 = pneg %p130
        $region26: #{conv_encoder_forward.1} parent=11 // pred_check_branch
          %308 = sbr.rel (%p306) target = $region28
        $region27: #{conv_encoder_forward.1} parent=11 // pred_region
          _
        $region28: #{conv_encoder_forward.1} parent=11 // pred_fallthru
          _
        // Predicated region
        $region29: #{conv_encoder_forward.1} parent=11 // pred_check
          %p309 = pneg %p151
        $region30: #{conv_encoder_forward.1} parent=11 // pred_check_branch
          %311 = sbr.rel (%p309) target = $region32
        $region31: #{conv_encoder_forward.1} parent=11 // pred_region
          _
        $region32: #{conv_encoder_forward.1} parent=11 // pred_fallthru
          _
        // Predicated region
        $region33: #{conv_encoder_forward.1} parent=11 // pred_check
          %p312 = pneg %p172
        $region34: #{conv_encoder_forward.1} parent=11 // pred_check_branch
          %314 = sbr.rel (%p312) target = $region36
        $region35: #{conv_encoder_forward.1} parent=11 // pred_region
          _
        $region36: #{conv_encoder_forward.1} parent=11 // pred_fallthru
          _
        // Predicated region
        $region37: #{conv_encoder_forward.1} parent=11 // pred_check
          %p315 = pneg %p193
        $region38: #{conv_encoder_forward.1} parent=11 // pred_check_branch
          %317 = sbr.rel (%p315) target = $region40
        $region39: #{conv_encoder_forward.1} parent=11 // pred_region
          _
        $region40: #{conv_encoder_forward.1} parent=11 // pred_fallthru
          _
        // Predicated region
        $region41: #{conv_encoder_forward.1} parent=11 // pred_check
          %p318 = pneg %p214
        $region42: #{conv_encoder_forward.1} parent=11 // pred_check_branch
          %320 = sbr.rel (%p318) target = $region44
        $region43: #{conv_encoder_forward.1} parent=11 // pred_region
          _
        $region44: #{conv_encoder_forward.1} parent=11 // pred_fallthru
          _
        // Predicated region
        $region45: #{conv_encoder_forward.1} parent=11 // pred_check
          %p321 = pneg %p235
        $region46: #{conv_encoder_forward.1} parent=11 // pred_check_branch
          %323 = sbr.rel (%p321) target = $region48
        $region47: #{conv_encoder_forward.1} parent=11 // pred_region
          _
        $region48: #{conv_encoder_forward.1} parent=11 // pred_fallthru
          _
        // Predicated region
        $region49: #{conv_encoder_forward.1} parent=11 // pred_check
          %p324 = pneg %p256
        $region50: #{conv_encoder_forward.1} parent=11 // pred_check_branch
          %326 = sbr.rel (%p324) target = $region52
        $region51: #{conv_encoder_forward.1} parent=11 // pred_region
          _
        $region52: #{conv_encoder_forward.1} parent=11 // pred_fallthru
          _
      $region12: #{conv_encoder_forward.1} parent=5 // pred_fallthru
        _
      %p327 = scmp.lt.s32.totalorder %s20, 2
      // Predicated region
      $region53: #{conv_encoder_forward.1} parent=5 // pred_check
        %p328 = pneg %p327
      $region54: #{conv_encoder_forward.1} parent=5 // pred_check_branch
        %330 = sbr.rel (%p328) target = $region56
      $region55: #{conv_encoder_forward.1} parent=5 // pred_region
        // Predicated region
        $region57: #{conv_encoder_forward.1} parent=55 // pred_check
          %p331 = pneg %p40
        $region58: #{conv_encoder_forward.1} parent=55 // pred_check_branch
          %333 = sbr.rel (%p331) target = $region60
        $region59: #{conv_encoder_forward.1} parent=55 // pred_region
          %p334 = scmp.lt.s32.totalorder %s20, 1
          %s335 = scalar_select %p334, %s20, 1
          %s336 = smul.addr %s335, 288
          %s337 = smul.addr %s336, 8
          %s338 = scalar_lea.vmem %s0, %s337
        $region60: #{conv_encoder_forward.1} parent=55 // pred_fallthru
          _
      $region56: #{conv_encoder_forward.1} parent=5 // pred_fallthru
        _
      %p339 = scmp.le.s32.totalorder 1, %s20
      %p340 = scmp.lt.s32.totalorder %s20, 3
      %p341 = pnand %p339, %p340
      %p342 = pneg %p341
      // Predicated region
      $region61: #{conv_encoder_forward.1} parent=5 // pred_check
        _
      $region62: #{conv_encoder_forward.1} parent=5 // pred_check_branch
        %344 = sbr.rel (%p341) target = $region64
      $region63: #{conv_encoder_forward.1} parent=5 // pred_region
        %s345 = ssub.s32 %s20, 1
        %p346 = scmp.lt.s32.totalorder %s25, 1
        %s347 = scalar_select %p346, %s25, 1
        %s348 = smul.addr %s347, 288
        %s349 = smul.addr %s348, 8
        %s350 = scalar_lea.vmem %s0, %s349
        %p351 = pneg %p46
        %p352 = pneg %p43
        %p353 = pneg %p67
        %p354 = pneg %p64
        %p355 = pneg %p88
        %p356 = pneg %p85
        %p357 = pneg %p109
        %p358 = pneg %p106
        %p359 = pneg %p130
        %p360 = pneg %p127
        %p361 = pneg %p151
        %p362 = pneg %p148
        %p363 = pneg %p172
        %p364 = pneg %p169
        %p365 = pneg %p193
        %p366 = pneg %p190
        %p367 = pneg %p214
        %p368 = pneg %p211
        %p369 = pneg %p235
        %p370 = pneg %p232
        %p371 = pneg %p256
        %p372 = pneg %p253
        %p373 = pneg %p282
        %p374 = pneg %p279
        %s375 = sand.u32 %s269, 1
        %s376 = scalar_lea.sflag [#allocation7], %s375
        %s377 = sand.u32 %s269, 1
        %s378 = scalar_lea.vmem [#allocation6], %s377
        %p379 = scmp.lt.s32.totalorder %s25, 1
        %s380 = scalar_select %p379, %s25, 1
        %s381 = smul.addr %s380, 288
        %s382 = smul.addr %s381, 8
        %s383 = scalar_lea.vmem %s0, %s382
        %v385 = vld [vmem:[%s2] sm:$0x1]
        %v387 = vlaneseq
        %v388 = vshrl.u32 %v387, 7
        %v389 = vsub.s32 0, %v388
        %v390 = vrot.slane %v385, %v389
        loop: start=0, step=1, limit=23
        $region65: #{conv_encoder_forward.1} parent=63 // loop_pre_header
          _
        $region66: #{conv_encoder_forward.1} parent=63 // loop_header
          %s393 = sphi 0, %s397
          %p394 = scmp.ge.s32.totalorder %s393, 23
        $region67: #{conv_encoder_forward.1} parent=63 // loop_header_branch
          %396 = sbr.rel (%p394) target = $region71
        $region68: #{conv_encoder_forward.1} parent=63 // loop_body
          %s398 = smul.u32 %s393, 2
          %s399 = smul.u32 %s398, 48
          %s400 = scalar_lea.vmem %s383, %s399
          %v401 = vld [vmem:[%s400] ss:$2 sm:$0xff]
          %s402 = scalar_lea.vmem %s400, 16
          %v403 = vld [vmem:[%s402] ss:$2 sm:$0xff]
          %s404 = scalar_lea.vmem %s400, 32
          %v405 = vld [vmem:[%s404] ss:$2 sm:$0x7f]
          %v406 = vld [vmem:[%s1] sm:$0xf]
          %v407 = vpack.c.bf16 %v403, %v401
          %v408 = vpack.c.bf16 %v405, %v405
          %vm409 = vcmask 64512
          %v411 = vsel %vm409, %v407, 0
          %v414 = vsel %vm409, %v408, 0
          %vm416 = vcmask 1043456
          %v418 = vsel %vm416, %v406, 0
          %420 = vmatprep.subr.bf16.mxu0 0
          %421 = vmatpush1.bf16.msra.mxu0 %v418
          %422 = vmatprep.subr.bf16.mxu0 0
          %423 = vmatpush1.bf16.msra.mxu0 0
          %424 = vmatprep.subr.bf16.mxu0 0
          %425 = vmatpush1.bf16.msra.mxu0 0
          %426 = vmatprep.subr.bf16.mxu0 0
          %427 = vmatpush1.bf16.msra.mxu0 0
          %428 = vmatprep.subr.bf16.mxu0 0
          %429 = vmatpush1.bf16.msra.mxu0 0
          %430 = vmatprep.subr.bf16.mxu0 0
          %431 = vmatpush1.bf16.msra.mxu0 0
          %432 = vmatprep.subr.bf16.mxu0 0
          %433 = vmatpush1.bf16.msra.mxu0 0
          %434 = vmatprep.subr.bf16.mxu0 0
          %435 = vmatpush1.bf16.msra.mxu0 0
          %436 = vmatprep.subr.bf16.mxu0 0
          %437 = vmatpush1.bf16.msra.mxu0 0
          %438 = vmatprep.subr.bf16.mxu0 0
          %439 = vmatpush1.bf16.msra.mxu0 0
          %440 = vmatprep.subr.bf16.mxu0 0
          %441 = vmatpush1.bf16.msra.mxu0 0
          %442 = vmatprep.subr.bf16.mxu0 0
          %443 = vmatpush1.bf16.msra.mxu0 0
          %444 = vmatprep.subr.bf16.mxu0 0
          %445 = vmatpush1.bf16.msra.mxu0 0
          %446 = vmatprep.subr.bf16.mxu0 0
          %447 = vmatpush1.bf16.msra.mxu0 0
          %448 = vmatprep.subr.bf16.mxu0 0
          %449 = vmatpush1.bf16.msra.mxu0 0
          %450 = vmatprep.subr.bf16.mxu0 0
          %451 = vmatpush1.bf16.msra.mxu0 0
          %452 = vmatprep.mubr.bf16.mxu0 0
          %453 = vmatmul.mubr.bf16.gmra.mrb[0].mxu0 %v411
          %v454 = vpop.f32.mrb[0].mxu0
          %v455 = vadd.f32 0.0, %v454
          %v456 = vpop.f32.mrb[0].mxu0
          %v457 = vpop.f32.mrb[0].mxu0
          %v458 = vadd.f32 0.0, %v457
          %v459 = vpop.f32.mrb[0].mxu0
          %460 = vmatprep.mubr.bf16.mxu0 0
          %461 = vmatmul.mubr.bf16.gmra.mrb[0].mxu0 %v414
          %v462 = vpop.f32.mrb[0].mxu0
          %v463 = vadd.f32 0.0, %v462
          %v464 = vpop.f32.mrb[0].mxu0
          %v465 = vpop.f32.mrb[0].mxu0
          %v466 = vpop.f32.mrb[0].mxu0
          %467 = vdwg.mxu0
          %v468 = vadd.f32 %v390, %v455
          %v469 = vadd.f32 %v390, %v458
          %v470 = vadd.f32 %v390, %v463
          %s471 = scalar_lea.vmem %s400, 1
          %v472 = vld [vmem:[%s471] ss:$2 sm:$0xff]
          %s473 = scalar_lea.vmem %s400, 17
          %v474 = vld [vmem:[%s473] ss:$2 sm:$0xff]
          %s475 = scalar_lea.vmem %s400, 33
          %v476 = vld [vmem:[%s475] ss:$2 sm:$0x7f]
          %v477 = vld [vmem:[%s1 + $0x4] sm:$0xf]
          %v478 = vpack.c.bf16 %v474, %v472
          %v479 = vpack.c.bf16 %v476, %v476
          %v481 = vsel %vm409, %v478, 0
          %v484 = vsel %vm409, %v479, 0
          %v487 = vsel %vm416, %v477, 0
          %489 = vmatprep.subr.bf16.mxu0 0
          %490 = vmatpush1.bf16.msra.mxu0 %v487
          %491 = vmatprep.subr.bf16.mxu0 0
          %492 = vmatpush1.bf16.msra.mxu0 0
          %493 = vmatprep.subr.bf16.mxu0 0
          %494 = vmatpush1.bf16.msra.mxu0 0
          %495 = vmatprep.subr.bf16.mxu0 0
          %496 = vmatpush1.bf16.msra.mxu0 0
          %497 = vmatprep.subr.bf16.mxu0 0
          %498 = vmatpush1.bf16.msra.mxu0 0
          %499 = vmatprep.subr.bf16.mxu0 0
          %500 = vmatpush1.bf16.msra.mxu0 0
          %501 = vmatprep.subr.bf16.mxu0 0
          %502 = vmatpush1.bf16.msra.mxu0 0
          %503 = vmatprep.subr.bf16.mxu0 0
          %504 = vmatpush1.bf16.msra.mxu0 0
          %505 = vmatprep.subr.bf16.mxu0 0
          %506 = vmatpush1.bf16.msra.mxu0 0
          %507 = vmatprep.subr.bf16.mxu0 0
          %508 = vmatpush1.bf16.msra.mxu0 0
          %509 = vmatprep.subr.bf16.mxu0 0
          %510 = vmatpush1.bf16.msra.mxu0 0
          %511 = vmatprep.subr.bf16.mxu0 0
          %512 = vmatpush1.bf16.msra.mxu0 0
          %513 = vmatprep.subr.bf16.mxu0 0
          %514 = vmatpush1.bf16.msra.mxu0 0
          %515 = vmatprep.subr.bf16.mxu0 0
          %516 = vmatpush1.bf16.msra.mxu0 0
          %517 = vmatprep.subr.bf16.mxu0 0
          %518 = vmatpush1.bf16.msra.mxu0 0
          %519 = vmatprep.subr.bf16.mxu0 0
          %520 = vmatpush1.bf16.msra.mxu0 0
          %521 = vmatprep.mubr.bf16.mxu0 0
          %522 = vmatmul.mubr.bf16.gmra.mrb[0].mxu0 %v481
          %v523 = vpop.f32.mrb[0].mxu0
          %v524 = vadd.f32 0.0, %v523
          %v525 = vpop.f32.mrb[0].mxu0
          %v526 = vpop.f32.mrb[0].mxu0
          %v527 = vadd.f32 0.0, %v526
          %v528 = vpop.f32.mrb[0].mxu0
          %529 = vmatprep.mubr.bf16.mxu0 0
          %530 = vmatmul.mubr.bf16.gmra.mrb[0].mxu0 %v484
          %v531 = vpop.f32.mrb[0].mxu0
          %v532 = vadd.f32 0.0, %v531
          %v533 = vpop.f32.mrb[0].mxu0
          %v534 = vpop.f32.mrb[0].mxu0
          %v535 = vpop.f32.mrb[0].mxu0
          %536 = vdwg.mxu0
          %v537 = vadd.f32 %v468, %v524
          %v538 = vadd.f32 %v469, %v527
          %v539 = vadd.f32 %v470, %v532
          %s540 = scalar_lea.vmem %s400, 2
          %v541 = vld [vmem:[%s540] ss:$2 sm:$0xff]
          %s542 = scalar_lea.vmem %s400, 18
          %v543 = vld [vmem:[%s542] ss:$2 sm:$0xff]
          %s544 = scalar_lea.vmem %s400, 34
          %v545 = vld [vmem:[%s544] ss:$2 sm:$0x7f]
          %v546 = vld [vmem:[%s1 + $0x8] sm:$0xf]
          %v547 = vpack.c.bf16 %v543, %v541
          %v548 = vpack.c.bf16 %v545, %v545
          %v550 = vsel %vm409, %v547, 0
          %v553 = vsel %vm409, %v548, 0
          %v556 = vsel %vm416, %v546, 0
          %558 = vmatprep.subr.bf16.mxu0 0
          %559 = vmatpush1.bf16.msra.mxu0 %v556
          %560 = vmatprep.subr.bf16.mxu0 0
          %561 = vmatpush1.bf16.msra.mxu0 0
          %562 = vmatprep.subr.bf16.mxu0 0
          %563 = vmatpush1.bf16.msra.mxu0 0
          %564 = vmatprep.subr.bf16.mxu0 0
          %565 = vmatpush1.bf16.msra.mxu0 0
          %566 = vmatprep.subr.bf16.mxu0 0
          %567 = vmatpush1.bf16.msra.mxu0 0
          %568 = vmatprep.subr.bf16.mxu0 0
          %569 = vmatpush1.bf16.msra.mxu0 0
          %570 = vmatprep.subr.bf16.mxu0 0
          %571 = vmatpush1.bf16.msra.mxu0 0
          %572 = vmatprep.subr.bf16.mxu0 0
          %573 = vmatpush1.bf16.msra.mxu0 0
          %574 = vmatprep.subr.bf16.mxu0 0
          %575 = vmatpush1.bf16.msra.mxu0 0
          %576 = vmatprep.subr.bf16.mxu0 0
          %577 = vmatpush1.bf16.msra.mxu0 0
          %578 = vmatprep.subr.bf16.mxu0 0
          %579 = vmatpush1.bf16.msra.mxu0 0
          %580 = vmatprep.subr.bf16.mxu0 0
          %581 = vmatpush1.bf16.msra.mxu0 0
          %582 = vmatprep.subr.bf16.mxu0 0
          %583 = vmatpush1.bf16.msra.mxu0 0
          %584 = vmatprep.subr.bf16.mxu0 0
          %585 = vmatpush1.bf16.msra.mxu0 0
          %586 = vmatprep.subr.bf16.mxu0 0
          %587 = vmatpush1.bf16.msra.mxu0 0
          %588 = vmatprep.subr.bf16.mxu0 0
          %589 = vmatpush1.bf16.msra.mxu0 0
          %590 = vmatprep.mubr.bf16.mxu0 0
          %591 = vmatmul.mubr.bf16.gmra.mrb[0].mxu0 %v550
          %v592 = vpop.f32.mrb[0].mxu0
          %v593 = vadd.f32 0.0, %v592
          %v594 = vpop.f32.mrb[0].mxu0
          %v595 = vpop.f32.mrb[0].mxu0
          %v596 = vadd.f32 0.0, %v595
          %v597 = vpop.f32.mrb[0].mxu0
          %598 = vmatprep.mubr.bf16.mxu0 0
          %599 = vmatmul.mubr.bf16.gmra.mrb[0].mxu0 %v553
          %v600 = vpop.f32.mrb[0].mxu0
          %v601 = vadd.f32 0.0, %v600
          %v602 = vpop.f32.mrb[0].mxu0
          %v603 = vpop.f32.mrb[0].mxu0
          %v604 = vpop.f32.mrb[0].mxu0
          %605 = vdwg.mxu0
          %v606 = vadd.f32 %v537, %v593
          %v607 = vadd.f32 %v538, %v596
          %v608 = vadd.f32 %v539, %v601
          %s609 = scalar_lea.vmem %s400, 3
          %v610 = vld [vmem:[%s609] ss:$2 sm:$0xff]
          %s611 = scalar_lea.vmem %s400, 19
          %v612 = vld [vmem:[%s611] ss:$2 sm:$0xff]
          %s613 = scalar_lea.vmem %s400, 35
          %v614 = vld [vmem:[%s613] ss:$2 sm:$0x7f]
          %v615 = vld [vmem:[%s1 + $0xc] sm:$0xf]
          %v616 = vpack.c.bf16 %v612, %v610
          %v617 = vpack.c.bf16 %v614, %v614
          %v619 = vsel %vm409, %v616, 0
          %v622 = vsel %vm409, %v617, 0
          %v625 = vsel %vm416, %v615, 0
          %627 = vmatprep.subr.bf16.mxu0 0
          %628 = vmatpush1.bf16.msra.mxu0 %v625
          %629 = vmatprep.subr.bf16.mxu0 0
          %630 = vmatpush1.bf16.msra.mxu0 0
          %631 = vmatprep.subr.bf16.mxu0 0
          %632 = vmatpush1.bf16.msra.mxu0 0
          %633 = vmatprep.subr.bf16.mxu0 0
          %634 = vmatpush1.bf16.msra.mxu0 0
          %635 = vmatprep.subr.bf16.mxu0 0
          %636 = vmatpush1.bf16.msra.mxu0 0
          %637 = vmatprep.subr.bf16.mxu0 0
          %638 = vmatpush1.bf16.msra.mxu0 0
          %639 = vmatprep.subr.bf16.mxu0 0
          %640 = vmatpush1.bf16.msra.mxu0 0
          %641 = vmatprep.subr.bf16.mxu0 0
          %642 = vmatpush1.bf16.msra.mxu0 0
          %643 = vmatprep.subr.bf16.mxu0 0
          %644 = vmatpush1.bf16.msra.mxu0 0
          %645 = vmatprep.subr.bf16.mxu0 0
          %646 = vmatpush1.bf16.msra.mxu0 0
          %647 = vmatprep.subr.bf16.mxu0 0
          %648 = vmatpush1.bf16.msra.mxu0 0
          %649 = vmatprep.subr.bf16.mxu0 0
          %650 = vmatpush1.bf16.msra.mxu0 0
          %651 = vmatprep.subr.bf16.mxu0 0
          %652 = vmatpush1.bf16.msra.mxu0 0
          %653 = vmatprep.subr.bf16.mxu0 0
          %654 = vmatpush1.bf16.msra.mxu0 0
          %655 = vmatprep.subr.bf16.mxu0 0
          %656 = vmatpush1.bf16.msra.mxu0 0
          %657 = vmatprep.subr.bf16.mxu0 0
          %658 = vmatpush1.bf16.msra.mxu0 0
          %659 = vmatprep.mubr.bf16.mxu0 0
          %660 = vmatmul.mubr.bf16.gmra.mrb[0].mxu0 %v619
          %v661 = vpop.f32.mrb[0].mxu0
          %v662 = vadd.f32 0.0, %v661
          %v663 = vpop.f32.mrb[0].mxu0
          %v664 = vpop.f32.mrb[0].mxu0
          %v665 = vadd.f32 0.0, %v664
          %v666 = vpop.f32.mrb[0].mxu0
          %667 = vmatprep.mubr.bf16.mxu0 0
          %668 = vmatmul.mubr.bf16.gmra.mrb[0].mxu0 %v622
          %v669 = vpop.f32.mrb[0].mxu0
          %v670 = vadd.f32 0.0, %v669
          %v671 = vpop.f32.mrb[0].mxu0
          %v672 = vpop.f32.mrb[0].mxu0
          %v673 = vpop.f32.mrb[0].mxu0
          %674 = vdwg.mxu0
          %v675 = vadd.f32 %v606, %v662
          %v676 = vadd.f32 %v607, %v665
          %v677 = vadd.f32 %v608, %v670
          %s678 = sadd.s32 %s398, 1
          %s679 = smul.u32 %s678, 48
          %s680 = scalar_lea.vmem %s383, %s679
          %v681 = vld [vmem:[%s680] ss:$2 sm:$0xff]
          %s682 = scalar_lea.vmem %s680, 16
          %v683 = vld [vmem:[%s682] ss:$2 sm:$0xff]
          %s684 = scalar_lea.vmem %s680, 32
          %v685 = vld [vmem:[%s684] ss:$2 sm:$0x7f]
          %v686 = vld [vmem:[%s1 + $0x10] sm:$0xf]
          %v687 = vpack.c.bf16 %v683, %v681
          %v688 = vpack.c.bf16 %v685, %v685
          %v690 = vsel %vm409, %v687, 0
          %v693 = vsel %vm409, %v688, 0
          %v696 = vsel %vm416, %v686, 0
          %698 = vmatprep.subr.bf16.mxu0 0
          %699 = vmatpush1.bf16.msra.mxu0 %v696
          %700 = vmatprep.subr.bf16.mxu0 0
          %701 = vmatpush1.bf16.msra.mxu0 0
          %702 = vmatprep.subr.bf16.mxu0 0
          %703 = vmatpush1.bf16.msra.mxu0 0
          %704 = vmatprep.subr.bf16.mxu0 0
          %705 = vmatpush1.bf16.msra.mxu0 0
          %706 = vmatprep.subr.bf16.mxu0 0
          %707 = vmatpush1.bf16.msra.mxu0 0
          %708 = vmatprep.subr.bf16.mxu0 0
          %709 = vmatpush1.bf16.msra.mxu0 0
          %710 = vmatprep.subr.bf16.mxu0 0
          %711 = vmatpush1.bf16.msra.mxu0 0
          %712 = vmatprep.subr.bf16.mxu0 0
          %713 = vmatpush1.bf16.msra.mxu0 0
          %714 = vmatprep.subr.bf16.mxu0 0
          %715 = vmatpush1.bf16.msra.mxu0 0
          %716 = vmatprep.subr.bf16.mxu0 0
          %717 = vmatpush1.bf16.msra.mxu0 0
          %718 = vmatprep.subr.bf16.mxu0 0
          %719 = vmatpush1.bf16.msra.mxu0 0
          %720 = vmatprep.subr.bf16.mxu0 0
          %721 = vmatpush1.bf16.msra.mxu0 0
          %722 = vmatprep.subr.bf16.mxu0 0
          %723 = vmatpush1.bf16.msra.mxu0 0
          %724 = vmatprep.subr.bf16.mxu0 0
          %725 = vmatpush1.bf16.msra.mxu0 0
          %726 = vmatprep.subr.bf16.mxu0 0
          %727 = vmatpush1.bf16.msra.mxu0 0
          %728 = vmatprep.subr.bf16.mxu0 0
          %729 = vmatpush1.bf16.msra.mxu0 0
          %730 = vmatprep.mubr.bf16.mxu0 0
          %731 = vmatmul.mubr.bf16.gmra.mrb[0].mxu0 %v690
          %v732 = vpop.f32.mrb[0].mxu0
          %v733 = vadd.f32 0.0, %v732
          %v734 = vpop.f32.mrb[0].mxu0
          %v735 = vpop.f32.mrb[0].mxu0
          %v736 = vadd.f32 0.0, %v735
          %v737 = vpop.f32.mrb[0].mxu0
          %738 = vmatprep.mubr.bf16.mxu0 0
          %739 = vmatmul.mubr.bf16.gmra.mrb[0].mxu0 %v693
          %v740 = vpop.f32.mrb[0].mxu0
          %v741 = vadd.f32 0.0, %v740
          %v742 = vpop.f32.mrb[0].mxu0
          %v743 = vpop.f32.mrb[0].mxu0
          %v744 = vpop.f32.mrb[0].mxu0
          %745 = vdwg.mxu0
          %v746 = vadd.f32 %v675, %v733
          %v747 = vadd.f32 %v676, %v736
          %v748 = vadd.f32 %v677, %v741
          %s749 = scalar_lea.vmem %s680, 1
          %v750 = vld [vmem:[%s749] ss:$2 sm:$0xff]
          %s751 = scalar_lea.vmem %s680, 17
          %v752 = vld [vmem:[%s751] ss:$2 sm:$0xff]
          %s753 = scalar_lea.vmem %s680, 33
          %v754 = vld [vmem:[%s753] ss:$2 sm:$0x7f]
          %v755 = vld [vmem:[%s1 + $0x14] sm:$0xf]
          %v756 = vpack.c.bf16 %v752, %v750
          %v757 = vpack.c.bf16 %v754, %v754
          %v759 = vsel %vm409, %v756, 0
          %v762 = vsel %vm409, %v757, 0
          %v765 = vsel %vm416, %v755, 0
          %767 = vmatprep.subr.bf16.mxu0 0
          %768 = vmatpush1.bf16.msra.mxu0 %v765
          %769 = vmatprep.subr.bf16.mxu0 0
          %770 = vmatpush1.bf16.msra.mxu0 0
          %771 = vmatprep.subr.bf16.mxu0 0
          %772 = vmatpush1.bf16.msra.mxu0 0
          %773 = vmatprep.subr.bf16.mxu0 0
          %774 = vmatpush1.bf16.msra.mxu0 0
          %775 = vmatprep.subr.bf16.mxu0 0
          %776 = vmatpush1.bf16.msra.mxu0 0
          %777 = vmatprep.subr.bf16.mxu0 0
          %778 = vmatpush1.bf16.msra.mxu0 0
          %779 = vmatprep.subr.bf16.mxu0 0
          %780 = vmatpush1.bf16.msra.mxu0 0
          %781 = vmatprep.subr.bf16.mxu0 0
          %782 = vmatpush1.bf16.msra.mxu0 0
          %783 = vmatprep.subr.bf16.mxu0 0
          %784 = vmatpush1.bf16.msra.mxu0 0
          %785 = vmatprep.subr.bf16.mxu0 0
          %786 = vmatpush1.bf16.msra.mxu0 0
          %787 = vmatprep.subr.bf16.mxu0 0
          %788 = vmatpush1.bf16.msra.mxu0 0
          %789 = vmatprep.subr.bf16.mxu0 0
          %790 = vmatpush1.bf16.msra.mxu0 0
          %791 = vmatprep.subr.bf16.mxu0 0
          %792 = vmatpush1.bf16.msra.mxu0 0
          %793 = vmatprep.subr.bf16.mxu0 0
          %794 = vmatpush1.bf16.msra.mxu0 0
          %795 = vmatprep.subr.bf16.mxu0 0
          %796 = vmatpush1.bf16.msra.mxu0 0
          %797 = vmatprep.subr.bf16.mxu0 0
          %798 = vmatpush1.bf16.msra.mxu0 0
          %799 = vmatprep.mubr.bf16.mxu0 0
          %800 = vmatmul.mubr.bf16.gmra.mrb[0].mxu0 %v759
          %v801 = vpop.f32.mrb[0].mxu0
          %v802 = vadd.f32 0.0, %v801
          %v803 = vpop.f32.mrb[0].mxu0
          %v804 = vpop.f32.mrb[0].mxu0
          %v805 = vadd.f32 0.0, %v804
          %v806 = vpop.f32.mrb[0].mxu0
          %807 = vmatprep.mubr.bf16.mxu0 0
          %808 = vmatmul.mubr.bf16.gmra.mrb[0].mxu0 %v762
          %v809 = vpop.f32.mrb[0].mxu0
          %v810 = vadd.f32 0.0, %v809
          %v811 = vpop.f32.mrb[0].mxu0
          %v812 = vpop.f32.mrb[0].mxu0
          %v813 = vpop.f32.mrb[0].mxu0
          %814 = vdwg.mxu0
          %v815 = vadd.f32 %v746, %v802
          %v816 = vadd.f32 %v747, %v805
          %v817 = vadd.f32 %v748, %v810
          %s818 = scalar_lea.vmem %s680, 2
          %v819 = vld [vmem:[%s818] ss:$2 sm:$0xff]
          %s820 = scalar_lea.vmem %s680, 18
          %v821 = vld [vmem:[%s820] ss:$2 sm:$0xff]
          %s822 = scalar_lea.vmem %s680, 34
          %v823 = vld [vmem:[%s822] ss:$2 sm:$0x7f]
          %v824 = vld [vmem:[%s1 + $0x18] sm:$0xf]
          %v825 = vpack.c.bf16 %v821, %v819
          %v826 = vpack.c.bf16 %v823, %v823
          %v828 = vsel %vm409, %v825, 0
          %v831 = vsel %vm409, %v826, 0
          %v834 = vsel %vm416, %v824, 0
          %836 = vmatprep.subr.bf16.mxu0 0
          %837 = vmatpush1.bf16.msra.mxu0 %v834
          %838 = vmatprep.subr.bf16.mxu0 0
          %839 = vmatpush1.bf16.msra.mxu0 0
          %840 = vmatprep.subr.bf16.mxu0 0
          %841 = vmatpush1.bf16.msra.mxu0 0
          %842 = vmatprep.subr.bf16.mxu0 0
          %843 = vmatpush1.bf16.msra.mxu0 0
          %844 = vmatprep.subr.bf16.mxu0 0
          %845 = vmatpush1.bf16.msra.mxu0 0
          %846 = vmatprep.subr.bf16.mxu0 0
          %847 = vmatpush1.bf16.msra.mxu0 0
          %848 = vmatprep.subr.bf16.mxu0 0
          %849 = vmatpush1.bf16.msra.mxu0 0
          %850 = vmatprep.subr.bf16.mxu0 0
          %851 = vmatpush1.bf16.msra.mxu0 0
          %852 = vmatprep.subr.bf16.mxu0 0
          %853 = vmatpush1.bf16.msra.mxu0 0
          %854 = vmatprep.subr.bf16.mxu0 0
          %855 = vmatpush1.bf16.msra.mxu0 0
          %856 = vmatprep.subr.bf16.mxu0 0
          %857 = vmatpush1.bf16.msra.mxu0 0
          %858 = vmatprep.subr.bf16.mxu0 0
          %859 = vmatpush1.bf16.msra.mxu0 0
          %860 = vmatprep.subr.bf16.mxu0 0
          %861 = vmatpush1.bf16.msra.mxu0 0
          %862 = vmatprep.subr.bf16.mxu0 0
          %863 = vmatpush1.bf16.msra.mxu0 0
          %864 = vmatprep.subr.bf16.mxu0 0
          %865 = vmatpush1.bf16.msra.mxu0 0
          %866 = vmatprep.subr.bf16.mxu0 0
          %867 = vmatpush1.bf16.msra.mxu0 0
          %868 = vmatprep.mubr.bf16.mxu0 0
          %869 = vmatmul.mubr.bf16.gmra.mrb[0].mxu0 %v828
          %v870 = vpop.f32.mrb[0].mxu0
          %v871 = vadd.f32 0.0, %v870
          %v872 = vpop.f32.mrb[0].mxu0
          %v873 = vpop.f32.mrb[0].mxu0
          %v874 = vadd.f32 0.0, %v873
          %v875 = vpop.f32.mrb[0].mxu0
          %876 = vmatprep.mubr.bf16.mxu0 0
          %877 = vmatmul.mubr.bf16.gmra.mrb[0].mxu0 %v831
          %v878 = vpop.f32.mrb[0].mxu0
          %v879 = vadd.f32 0.0, %v878
          %v880 = vpop.f32.mrb[0].mxu0
          %v881 = vpop.f32.mrb[0].mxu0
          %v882 = vpop.f32.mrb[0].mxu0
          %883 = vdwg.mxu0
          %v884 = vadd.f32 %v815, %v871
          %v885 = vadd.f32 %v816, %v874
          %v886 = vadd.f32 %v817, %v879
          %s887 = scalar_lea.vmem %s680, 3
          %v888 = vld [vmem:[%s887] ss:$2 sm:$0xff]
          %s889 = scalar_lea.vmem %s680, 19
          %v890 = vld [vmem:[%s889] ss:$2 sm:$0xff]
          %s891 = scalar_lea.vmem %s680, 35
          %v892 = vld [vmem:[%s891] ss:$2 sm:$0x7f]
          %v893 = vld [vmem:[%s1 + $0x1c] sm:$0xf]
          %v894 = vpack.c.bf16 %v890, %v888
          %v895 = vpack.c.bf16 %v892, %v892
          %v897 = vsel %vm409, %v894, 0
          %v900 = vsel %vm409, %v895, 0
          %v903 = vsel %vm416, %v893, 0
          %905 = vmatprep.subr.bf16.mxu0 0
          %906 = vmatpush1.bf16.msra.mxu0 %v903
          %907 = vmatprep.subr.bf16.mxu0 0
          %908 = vmatpush1.bf16.msra.mxu0 0
          %909 = vmatprep.subr.bf16.mxu0 0
          %910 = vmatpush1.bf16.msra.mxu0 0
          %911 = vmatprep.subr.bf16.mxu0 0
          %912 = vmatpush1.bf16.msra.mxu0 0
          %913 = vmatprep.subr.bf16.mxu0 0
          %914 = vmatpush1.bf16.msra.mxu0 0
          %915 = vmatprep.subr.bf16.mxu0 0
          %916 = vmatpush1.bf16.msra.mxu0 0
          %917 = vmatprep.subr.bf16.mxu0 0
          %918 = vmatpush1.bf16.msra.mxu0 0
          %919 = vmatprep.subr.bf16.mxu0 0
          %920 = vmatpush1.bf16.msra.mxu0 0
          %921 = vmatprep.subr.bf16.mxu0 0
          %922 = vmatpush1.bf16.msra.mxu0 0
          %923 = vmatprep.subr.bf16.mxu0 0
          %924 = vmatpush1.bf16.msra.mxu0 0
          %925 = vmatprep.subr.bf16.mxu0 0
          %926 = vmatpush1.bf16.msra.mxu0 0
          %927 = vmatprep.subr.bf16.mxu0 0
          %928 = vmatpush1.bf16.msra.mxu0 0
          %929 = vmatprep.subr.bf16.mxu0 0
          %930 = vmatpush1.bf16.msra.mxu0 0
          %931 = vmatprep.subr.bf16.mxu0 0
          %932 = vmatpush1.bf16.msra.mxu0 0
          %933 = vmatprep.subr.bf16.mxu0 0
          %934 = vmatpush1.bf16.msra.mxu0 0
          %935 = vmatprep.subr.bf16.mxu0 0
          %936 = vmatpush1.bf16.msra.mxu0 0
          %937 = vmatprep.mubr.bf16.mxu0 0
          %938 = vmatmul.mubr.bf16.gmra.mrb[0].mxu0 %v897
          %v939 = vpop.f32.mrb[0].mxu0
          %v940 = vadd.f32 0.0, %v939
          %v941 = vpop.f32.mrb[0].mxu0
          %v942 = vpop.f32.mrb[0].mxu0
          %v943 = vadd.f32 0.0, %v942
          %v944 = vpop.f32.mrb[0].mxu0
          %945 = vmatprep.mubr.bf16.mxu0 0
          %946 = vmatmul.mubr.bf16.gmra.mrb[0].mxu0 %v900
          %v947 = vpop.f32.mrb[0].mxu0
          %v948 = vadd.f32 0.0, %v947
          %v949 = vpop.f32.mrb[0].mxu0
          %v950 = vpop.f32.mrb[0].mxu0
          %v951 = vpop.f32.mrb[0].mxu0
          %952 = vdwg.mxu0
          %v953 = vadd.f32 %v884, %v940
          %v954 = vadd.f32 %v885, %v943
          %v955 = vadd.f32 %v886, %v948
          %s956 = sadd.s32 %s398, 2
          %s957 = smul.u32 %s956, 48
          %s958 = scalar_lea.vmem %s383, %s957
          %v959 = vld [vmem:[%s958] ss:$2 sm:$0xff]
          %s960 = scalar_lea.vmem %s958, 16
          %v961 = vld [vmem:[%s960] ss:$2 sm:$0xff]
          %s962 = scalar_lea.vmem %s958, 32
          %v963 = vld [vmem:[%s962] ss:$2 sm:$0x7f]
          %v964 = vld [vmem:[%s1 + $0x20] sm:$0xf]
          %v965 = vpack.c.bf16 %v961, %v959
          %v966 = vpack.c.bf16 %v963, %v963
          %v968 = vsel %vm409, %v965, 0
          %v971 = vsel %vm409, %v966, 0
          %v974 = vsel %vm416, %v964, 0
          %976 = vmatprep.subr.bf16.mxu0 0
          %977 = vmatpush1.bf16.msra.mxu0 %v974
          %978 = vmatprep.subr.bf16.mxu0 0
          %979 = vmatpush1.bf16.msra.mxu0 0
          %980 = vmatprep.subr.bf16.mxu0 0
          %981 = vmatpush1.bf16.msra.mxu0 0
          %982 = vmatprep.subr.bf16.mxu0 0
          %983 = vmatpush1.bf16.msra.mxu0 0
          %984 = vmatprep.subr.bf16.mxu0 0
          %985 = vmatpush1.bf16.msra.mxu0 0
          %986 = vmatprep.subr.bf16.mxu0 0
          %987 = vmatpush1.bf16.msra.mxu0 0
          %988 = vmatprep.subr.bf16.mxu0 0
          %989 = vmatpush1.bf16.msra.mxu0 0
          %990 = vmatprep.subr.bf16.mxu0 0
          %991 = vmatpush1.bf16.msra.mxu0 0
          %992 = vmatprep.subr.bf16.mxu0 0
          %993 = vmatpush1.bf16.msra.mxu0 0
          %994 = vmatprep.subr.bf16.mxu0 0
          %995 = vmatpush1.bf16.msra.mxu0 0
          %996 = vmatprep.subr.bf16.mxu0 0
          %997 = vmatpush1.bf16.msra.mxu0 0
          %998 = vmatprep.subr.bf16.mxu0 0
          %999 = vmatpush1.bf16.msra.mxu0 0
          %1000 = vmatprep.subr.bf16.mxu0 0
          %1001 = vmatpush1.bf16.msra.mxu0 0
          %1002 = vmatprep.subr.bf16.mxu0 0
          %1003 = vmatpush1.bf16.msra.mxu0 0
          %1004 = vmatprep.subr.bf16.mxu0 0
          %1005 = vmatpush1.bf16.msra.mxu0 0
          %1006 = vmatprep.subr.bf16.mxu0 0
          %1007 = vmatpush1.bf16.msra.mxu0 0
          %1008 = vmatprep.mubr.bf16.mxu0 0
          %1009 = vmatmul.mubr.bf16.gmra.mrb[0].mxu0 %v968
          %v1010 = vpop.f32.mrb[0].mxu0
          %v1011 = vadd.f32 0.0, %v1010
          %v1012 = vpop.f32.mrb[0].mxu0
          %v1013 = vpop.f32.mrb[0].mxu0
          %v1014 = vadd.f32 0.0, %v1013
          %v1015 = vpop.f32.mrb[0].mxu0
          %1016 = vmatprep.mubr.bf16.mxu0 0
          %1017 = vmatmul.mubr.bf16.gmra.mrb[0].mxu0 %v971
          %v1018 = vpop.f32.mrb[0].mxu0
          %v1019 = vadd.f32 0.0, %v1018
          %v1020 = vpop.f32.mrb[0].mxu0
          %v1021 = vpop.f32.mrb[0].mxu0
          %v1022 = vpop.f32.mrb[0].mxu0
          %1023 = vdwg.mxu0
          %v1024 = vadd.f32 %v953, %v1011
          %v1025 = vadd.f32 %v954, %v1014
          %v1026 = vadd.f32 %v955, %v1019
          %s1027 = scalar_lea.vmem %s958, 1
          %v1028 = vld [vmem:[%s1027] ss:$2 sm:$0xff]
          %s1029 = scalar_lea.vmem %s958, 17
          %v1030 = vld [vmem:[%s1029] ss:$2 sm:$0xff]
          %s1031 = scalar_lea.vmem %s958, 33
          %v1032 = vld [vmem:[%s1031] ss:$2 sm:$0x7f]
          %v1033 = vld [vmem:[%s1 + $0x24] sm:$0xf]
          %v1034 = vpack.c.bf16 %v1030, %v1028
          %v1035 = vpack.c.bf16 %v1032, %v1032
          %v1037 = vsel %vm409, %v1034, 0
          %v1040 = vsel %vm409, %v1035, 0
          %v1043 = vsel %vm416, %v1033, 0
          %1045 = vmatprep.subr.bf16.mxu0 0
          %1046 = vmatpush1.bf16.msra.mxu0 %v1043
          %1047 = vmatprep.subr.bf16.mxu0 0
          %1048 = vmatpush1.bf16.msra.mxu0 0
          %1049 = vmatprep.subr.bf16.mxu0 0
          %1050 = vmatpush1.bf16.msra.mxu0 0
          %1051 = vmatprep.subr.bf16.mxu0 0
          %1052 = vmatpush1.bf16.msra.mxu0 0
          %1053 = vmatprep.subr.bf16.mxu0 0
          %1054 = vmatpush1.bf16.msra.mxu0 0
          %1055 = vmatprep.subr.bf16.mxu0 0
          %1056 = vmatpush1.bf16.msra.mxu0 0
          %1057 = vmatprep.subr.bf16.mxu0 0
          %1058 = vmatpush1.bf16.msra.mxu0 0
          %1059 = vmatprep.subr.bf16.mxu0 0
          %1060 = vmatpush1.bf16.msra.mxu0 0
          %1061 = vmatprep.subr.bf16.mxu0 0
          %1062 = vmatpush1.bf16.msra.mxu0 0
          %1063 = vmatprep.subr.bf16.mxu0 0
          %1064 = vmatpush1.bf16.msra.mxu0 0
          %1065 = vmatprep.subr.bf16.mxu0 0
          %1066 = vmatpush1.bf16.msra.mxu0 0
          %1067 = vmatprep.subr.bf16.mxu0 0
          %1068 = vmatpush1.bf16.msra.mxu0 0
          %1069 = vmatprep.subr.bf16.mxu0 0
          %1070 = vmatpush1.bf16.msra.mxu0 0
          %1071 = vmatprep.subr.bf16.mxu0 0
          %1072 = vmatpush1.bf16.msra.mxu0 0
          %1073 = vmatprep.subr.bf16.mxu0 0
          %1074 = vmatpush1.bf16.msra.mxu0 0
          %1075 = vmatprep.subr.bf16.mxu0 0
          %1076 = vmatpush1.bf16.msra.mxu0 0
          %1077 = vmatprep.mubr.bf16.mxu0 0
          %1078 = vmatmul.mubr.bf16.gmra.mrb[0].mxu0 %v1037
          %v1079 = vpop.f32.mrb[0].mxu0
          %v1080 = vadd.f32 0.0, %v1079
          %v1081 = vpop.f32.mrb[0].mxu0
          %v1082 = vpop.f32.mrb[0].mxu0
          %v1083 = vadd.f32 0.0, %v1082
          %v1084 = vpop.f32.mrb[0].mxu0
          %1085 = vmatprep.mubr.bf16.mxu0 0
          %1086 = vmatmul.mubr.bf16.gmra.mrb[0].mxu0 %v1040
          %v1087 = vpop.f32.mrb[0].mxu0
          %v1088 = vadd.f32 0.0, %v1087
          %v1089 = vpop.f32.mrb[0].mxu0
          %v1090 = vpop.f32.mrb[0].mxu0
          %v1091 = vpop.f32.mrb[0].mxu0
          %1092 = vdwg.mxu0
          %v1093 = vadd.f32 %v1024, %v1080
          %v1094 = vadd.f32 %v1025, %v1083
          %v1095 = vadd.f32 %v1026, %v1088
          %s1096 = scalar_lea.vmem %s958, 2
          %v1097 = vld [vmem:[%s1096] ss:$2 sm:$0xff]
          %s1098 = scalar_lea.vmem %s958, 18
          %v1099 = vld [vmem:[%s1098] ss:$2 sm:$0xff]
          %s1100 = scalar_lea.vmem %s958, 34
          %v1101 = vld [vmem:[%s1100] ss:$2 sm:$0x7f]
          %v1102 = vld [vmem:[%s1 + $0x28] sm:$0xf]
          %v1103 = vpack.c.bf16 %v1099, %v1097
          %v1104 = vpack.c.bf16 %v1101, %v1101
          %v1106 = vsel %vm409, %v1103, 0
          %v1109 = vsel %vm409, %v1104, 0
          %v1112 = vsel %vm416, %v1102, 0
          %1114 = vmatprep.subr.bf16.mxu0 0
          %1115 = vmatpush1.bf16.msra.mxu0 %v1112
          %1116 = vmatprep.subr.bf16.mxu0 0
          %1117 = vmatpush1.bf16.msra.mxu0 0
          %1118 = vmatprep.subr.bf16.mxu0 0
          %1119 = vmatpush1.bf16.msra.mxu0 0
          %1120 = vmatprep.subr.bf16.mxu0 0
          %1121 = vmatpush1.bf16.msra.mxu0 0
          %1122 = vmatprep.subr.bf16.mxu0 0
          %1123 = vmatpush1.bf16.msra.mxu0 0
          %1124 = vmatprep.subr.bf16.mxu0 0
          %1125 = vmatpush1.bf16.msra.mxu0 0
          %1126 = vmatprep.subr.bf16.mxu0 0
          %1127 = vmatpush1.bf16.msra.mxu0 0
          %1128 = vmatprep.subr.bf16.mxu0 0
          %1129 = vmatpush1.bf16.msra.mxu0 0
          %1130 = vmatprep.subr.bf16.mxu0 0
          %1131 = vmatpush1.bf16.msra.mxu0 0
          %1132 = vmatprep.subr.bf16.mxu0 0
          %1133 = vmatpush1.bf16.msra.mxu0 0
          %1134 = vmatprep.subr.bf16.mxu0 0
          %1135 = vmatpush1.bf16.msra.mxu0 0
          %1136 = vmatprep.subr.bf16.mxu0 0
          %1137 = vmatpush1.bf16.msra.mxu0 0
          %1138 = vmatprep.subr.bf16.mxu0 0
          %1139 = vmatpush1.bf16.msra.mxu0 0
          %1140 = vmatprep.subr.bf16.mxu0 0
          %1141 = vmatpush1.bf16.msra.mxu0 0
          %1142 = vmatprep.subr.bf16.mxu0 0
          %1143 = vmatpush1.bf16.msra.mxu0 0
          %1144 = vmatprep.subr.bf16.mxu0 0
          %1145 = vmatpush1.bf16.msra.mxu0 0
          %1146 = vmatprep.mubr.bf16.mxu0 0
          %1147 = vmatmul.mubr.bf16.gmra.mrb[0].mxu0 %v1106
          %v1148 = vpop.f32.mrb[0].mxu0
          %v1149 = vadd.f32 0.0, %v1148
          %v1150 = vpop.f32.mrb[0].mxu0
          %v1151 = vpop.f32.mrb[0].mxu0
          %v1152 = vadd.f32 0.0, %v1151
          %v1153 = vpop.f32.mrb[0].mxu0
          %1154 = vmatprep.mubr.bf16.mxu0 0
          %1155 = vmatmul.mubr.bf16.gmra.mrb[0].mxu0 %v1109
          %v1156 = vpop.f32.mrb[0].mxu0
          %v1157 = vadd.f32 0.0, %v1156
          %v1158 = vpop.f32.mrb[0].mxu0
          %v1159 = vpop.f32.mrb[0].mxu0
          %v1160 = vpop.f32.mrb[0].mxu0
          %1161 = vdwg.mxu0
          %v1162 = vadd.f32 %v1093, %v1149
          %v1163 = vadd.f32 %v1094, %v1152
          %v1164 = vadd.f32 %v1095, %v1157
          %s1165 = scalar_lea.vmem %s958, 3
          %v1166 = vld [vmem:[%s1165] ss:$2 sm:$0xff]
          %s1167 = scalar_lea.vmem %s958, 19
          %v1168 = vld [vmem:[%s1167] ss:$2 sm:$0xff]
          %s1169 = scalar_lea.vmem %s958, 35
          %v1170 = vld [vmem:[%s1169] ss:$2 sm:$0x7f]
          %v1171 = vld [vmem:[%s1 + $0x2c] sm:$0xf]
          %v1172 = vpack.c.bf16 %v1168, %v1166
          %v1173 = vpack.c.bf16 %v1170, %v1170
          %v1175 = vsel %vm409, %v1172, 0
          %v1178 = vsel %vm409, %v1173, 0
          %v1181 = vsel %vm416, %v1171, 0
          %1183 = vmatprep.subr.bf16.mxu0 0
          %1184 = vmatpush1.bf16.msra.mxu0 %v1181
          %1185 = vmatprep.subr.bf16.mxu0 0
          %1186 = vmatpush1.bf16.msra.mxu0 0
          %1187 = vmatprep.subr.bf16.mxu0 0
          %1188 = vmatpush1.bf16.msra.mxu0 0
          %1189 = vmatprep.subr.bf16.mxu0 0
          %1190 = vmatpush1.bf16.msra.mxu0 0
          %1191 = vmatprep.subr.bf16.mxu0 0
          %1192 = vmatpush1.bf16.msra.mxu0 0
          %1193 = vmatprep.subr.bf16.mxu0 0
          %1194 = vmatpush1.bf16.msra.mxu0 0
          %1195 = vmatprep.subr.bf16.mxu0 0
          %1196 = vmatpush1.bf16.msra.mxu0 0
          %1197 = vmatprep.subr.bf16.mxu0 0
          %1198 = vmatpush1.bf16.msra.mxu0 0
          %1199 = vmatprep.subr.bf16.mxu0 0
          %1200 = vmatpush1.bf16.msra.mxu0 0
          %1201 = vmatprep.subr.bf16.mxu0 0
          %1202 = vmatpush1.bf16.msra.mxu0 0
          %1203 = vmatprep.subr.bf16.mxu0 0
          %1204 = vmatpush1.bf16.msra.mxu0 0
          %1205 = vmatprep.subr.bf16.mxu0 0
          %1206 = vmatpush1.bf16.msra.mxu0 0
          %1207 = vmatprep.subr.bf16.mxu0 0
          %1208 = vmatpush1.bf16.msra.mxu0 0
          %1209 = vmatprep.subr.bf16.mxu0 0
          %1210 = vmatpush1.bf16.msra.mxu0 0
          %1211 = vmatprep.subr.bf16.mxu0 0
          %1212 = vmatpush1.bf16.msra.mxu0 0
          %1213 = vmatprep.subr.bf16.mxu0 0
          %1214 = vmatpush1.bf16.msra.mxu0 0
          %1215 = vmatprep.mubr.bf16.mxu0 0
          %1216 = vmatmul.mubr.bf16.gmra.mrb[0].mxu0 %v1175
          %v1217 = vpop.f32.mrb[0].mxu0
          %v1218 = vadd.f32 0.0, %v1217
          %v1219 = vpop.f32.mrb[0].mxu0
          %v1220 = vpop.f32.mrb[0].mxu0
          %v1221 = vadd.f32 0.0, %v1220
          %v1222 = vpop.f32.mrb[0].mxu0
          %1223 = vmatprep.mubr.bf16.mxu0 0
          %1224 = vmatmul.mubr.bf16.gmra.mrb[0].mxu0 %v1178
          %v1225 = vpop.f32.mrb[0].mxu0
          %v1226 = vadd.f32 0.0, %v1225
          %v1227 = vpop.f32.mrb[0].mxu0
          %v1228 = vpop.f32.mrb[0].mxu0
          %v1229 = vpop.f32.mrb[0].mxu0
          %1230 = vdwg.mxu0
          %v1231 = vadd.f32 %v1162, %v1218
          %v1232 = vadd.f32 %v1163, %v1221
          %v1233 = vadd.f32 %v1164, %v1226
          %s1234 = sadd.s32 %s398, 3
          %s1235 = smul.u32 %s1234, 48
          %s1236 = scalar_lea.vmem %s383, %s1235
          %v1237 = vld [vmem:[%s1236] ss:$2 sm:$0xff]
          %s1238 = scalar_lea.vmem %s1236, 16
          %v1239 = vld [vmem:[%s1238] ss:$2 sm:$0xff]
          %s1240 = scalar_lea.vmem %s1236, 32
          %v1241 = vld [vmem:[%s1240] ss:$2 sm:$0x7f]
          %v1242 = vld [vmem:[%s1 + $0x30] sm:$0xf]
          %v1243 = vpack.c.bf16 %v1239, %v1237
          %v1244 = vpack.c.bf16 %v1241, %v1241
          %v1246 = vsel %vm409, %v1243, 0
          %v1249 = vsel %vm409, %v1244, 0
          %v1252 = vsel %vm416, %v1242, 0
          %1254 = vmatprep.subr.bf16.mxu0 0
          %1255 = vmatpush1.bf16.msra.mxu0 %v1252
          %1256 = vmatprep.subr.bf16.mxu0 0
          %1257 = vmatpush1.bf16.msra.mxu0 0
          %1258 = vmatprep.subr.bf16.mxu0 0
          %1259 = vmatpush1.bf16.msra.mxu0 0
          %1260 = vmatprep.subr.bf16.mxu0 0
          %1261 = vmatpush1.bf16.msra.mxu0 0
          %1262 = vmatprep.subr.bf16.mxu0 0
          %1263 = vmatpush1.bf16.msra.mxu0 0
          %1264 = vmatprep.subr.bf16.mxu0 0
          %1265 = vmatpush1.bf16.msra.mxu0 0
          %1266 = vmatprep.subr.bf16.mxu0 0
          %1267 = vmatpush1.bf16.msra.mxu0 0
          %1268 = vmatprep.subr.bf16.mxu0 0
          %1269 = vmatpush1.bf16.msra.mxu0 0
          %1270 = vmatprep.subr.bf16.mxu0 0
          %1271 = vmatpush1.bf16.msra.mxu0 0
          %1272 = vmatprep.subr.bf16.mxu0 0
          %1273 = vmatpush1.bf16.msra.mxu0 0
          %1274 = vmatprep.subr.bf16.mxu0 0
          %1275 = vmatpush1.bf16.msra.mxu0 0
          %1276 = vmatprep.subr.bf16.mxu0 0
          %1277 = vmatpush1.bf16.msra.mxu0 0
          %1278 = vmatprep.subr.bf16.mxu0 0
          %1279 = vmatpush1.bf16.msra.mxu0 0
          %1280 = vmatprep.subr.bf16.mxu0 0
          %1281 = vmatpush1.bf16.msra.mxu0 0
          %1282 = vmatprep.subr.bf16.mxu0 0
          %1283 = vmatpush1.bf16.msra.mxu0 0
          %1284 = vmatprep.subr.bf16.mxu0 0
          %1285 = vmatpush1.bf16.msra.mxu0 0
          %1286 = vmatprep.mubr.bf16.mxu0 0
          %1287 = vmatmul.mubr.bf16.gmra.mrb[0].mxu0 %v1246
          %v1288 = vpop.f32.mrb[0].mxu0
          %v1289 = vadd.f32 0.0, %v1288
          %v1290 = vpop.f32.mrb[0].mxu0
          %v1291 = vpop.f32.mrb[0].mxu0
          %v1292 = vadd.f32 0.0, %v1291
          %v1293 = vpop.f32.mrb[0].mxu0
          %1294 = vmatprep.mubr.bf16.mxu0 0
          %1295 = vmatmul.mubr.bf16.gmra.mrb[0].mxu0 %v1249
          %v1296 = vpop.f32.mrb[0].mxu0
          %v1297 = vadd.f32 0.0, %v1296
          %v1298 = vpop.f32.mrb[0].mxu0
          %v1299 = vpop.f32.mrb[0].mxu0
          %v1300 = vpop.f32.mrb[0].mxu0
          %1301 = vdwg.mxu0
          %v1302 = vadd.f32 %v1231, %v1289
          %v1303 = vadd.f32 %v1232, %v1292
          %v1304 = vadd.f32 %v1233, %v1297
          %s1305 = scalar_lea.vmem %s1236, 1
          %v1306 = vld [vmem:[%s1305] ss:$2 sm:$0xff]
          %s1307 = scalar_lea.vmem %s1236, 17
          %v1308 = vld [vmem:[%s1307] ss:$2 sm:$0xff]
          %s1309 = scalar_lea.vmem %s1236, 33
          %v1310 = vld [vmem:[%s1309] ss:$2 sm:$0x7f]
          %v1311 = vld [vmem:[%s1 + $0x34] sm:$0xf]
          %v1312 = vpack.c.bf16 %v1308, %v1306
          %v1313 = vpack.c.bf16 %v1310, %v1310
          %v1315 = vsel %vm409, %v1312, 0
          %v1318 = vsel %vm409, %v1313, 0
          %v1321 = vsel %vm416, %v1311, 0
          %1323 = vmatprep.subr.bf16.mxu0 0
          %1324 = vmatpush1.bf16.msra.mxu0 %v1321
          %1325 = vmatprep.subr.bf16.mxu0 0
          %1326 = vmatpush1.bf16.msra.mxu0 0
          %1327 = vmatprep.subr.bf16.mxu0 0
          %1328 = vmatpush1.bf16.msra.mxu0 0
          %1329 = vmatprep.subr.bf16.mxu0 0
          %1330 = vmatpush1.bf16.msra.mxu0 0
          %1331 = vmatprep.subr.bf16.mxu0 0
          %1332 = vmatpush1.bf16.msra.mxu0 0
          %1333 = vmatprep.subr.bf16.mxu0 0
          %1334 = vmatpush1.bf16.msra.mxu0 0
          %1335 = vmatprep.subr.bf16.mxu0 0
          %1336 = vmatpush1.bf16.msra.mxu0 0
          %1337 = vmatprep.subr.bf16.mxu0 0
          %1338 = vmatpush1.bf16.msra.mxu0 0
          %1339 = vmatprep.subr.bf16.mxu0 0
          %1340 = vmatpush1.bf16.msra.mxu0 0
          %1341 = vmatprep.subr.bf16.mxu0 0
          %1342 = vmatpush1.bf16.msra.mxu0 0
          %1343 = vmatprep.subr.bf16.mxu0 0
          %1344 = vmatpush1.bf16.msra.mxu0 0
          %1345 = vmatprep.subr.bf16.mxu0 0
          %1346 = vmatpush1.bf16.msra.mxu0 0
          %1347 = vmatprep.subr.bf16.mxu0 0
          %1348 = vmatpush1.bf16.msra.mxu0 0
          %1349 = vmatprep.subr.bf16.mxu0 0
          %1350 = vmatpush1.bf16.msra.mxu0 0
          %1351 = vmatprep.subr.bf16.mxu0 0
          %1352 = vmatpush1.bf16.msra.mxu0 0
          %1353 = vmatprep.subr.bf16.mxu0 0
          %1354 = vmatpush1.bf16.msra.mxu0 0
          %1355 = vmatprep.mubr.bf16.mxu0 0
          %1356 = vmatmul.mubr.bf16.gmra.mrb[0].mxu0 %v1315
          %v1357 = vpop.f32.mrb[0].mxu0
          %v1358 = vadd.f32 0.0, %v1357
          %v1359 = vpop.f32.mrb[0].mxu0
          %v1360 = vpop.f32.mrb[0].mxu0
          %v1361 = vadd.f32 0.0, %v1360
          %v1362 = vpop.f32.mrb[0].mxu0
          %1363 = vmatprep.mubr.bf16.mxu0 0
          %1364 = vmatmul.mubr.bf16.gmra.mrb[0].mxu0 %v1318
          %v1365 = vpop.f32.mrb[0].mxu0
          %v1366 = vadd.f32 0.0, %v1365
          %v1367 = vpop.f32.mrb[0].mxu0
          %v1368 = vpop.f32.mrb[0].mxu0
          %v1369 = vpop.f32.mrb[0].mxu0
          %1370 = vdwg.mxu0
          %v1371 = vadd.f32 %v1302, %v1358
          %v1372 = vadd.f32 %v1303, %v1361
          %v1373 = vadd.f32 %v1304, %v1366
          %s1374 = scalar_lea.vmem %s1236, 2
          %v1375 = vld [vmem:[%s1374] ss:$2 sm:$0xff]
          %s1376 = scalar_lea.vmem %s1236, 18
          %v1377 = vld [vmem:[%s1376] ss:$2 sm:$0xff]
          %s1378 = scalar_lea.vmem %s1236, 34
          %v1379 = vld [vmem:[%s1378] ss:$2 sm:$0x7f]
          %v1380 = vld [vmem:[%s1 + $0x38] sm:$0xf]
          %v1381 = vpack.c.bf16 %v1377, %v1375
          %v1382 = vpack.c.bf16 %v1379, %v1379
          %v1384 = vsel %vm409, %v1381, 0
          %v1387 = vsel %vm409, %v1382, 0
          %v1390 = vsel %vm416, %v1380, 0
          %1392 = vmatprep.subr.bf16.mxu0 0
          %1393 = vmatpush1.bf16.msra.mxu0 %v1390
          %1394 = vmatprep.subr.bf16.mxu0 0
          %1395 = vmatpush1.bf16.msra.mxu0 0
          %1396 = vmatprep.subr.bf16.mxu0 0
          %1397 = vmatpush1.bf16.msra.mxu0 0
          %1398 = vmatprep.subr.bf16.mxu0 0
          %1399 = vmatpush1.bf16.msra.mxu0 0
          %1400 = vmatprep.subr.bf16.mxu0 0
          %1401 = vmatpush1.bf16.msra.mxu0 0
          %1402 = vmatprep.subr.bf16.mxu0 0
          %1403 = vmatpush1.bf16.msra.mxu0 0
          %1404 = vmatprep.subr.bf16.mxu0 0
          %1405 = vmatpush1.bf16.msra.mxu0 0
          %1406 = vmatprep.subr.bf16.mxu0 0
          %1407 = vmatpush1.bf16.msra.mxu0 0
          %1408 = vmatprep.subr.bf16.mxu0 0
          %1409 = vmatpush1.bf16.msra.mxu0 0
          %1410 = vmatprep.subr.bf16.mxu0 0
          %1411 = vmatpush1.bf16.msra.mxu0 0
          %1412 = vmatprep.subr.bf16.mxu0 0
          %1413 = vmatpush1.bf16.msra.mxu0 0
          %1414 = vmatprep.subr.bf16.mxu0 0
          %1415 = vmatpush1.bf16.msra.mxu0 0
          %1416 = vmatprep.subr.bf16.mxu0 0
          %1417 = vmatpush1.bf16.msra.mxu0 0
          %1418 = vmatprep.subr.bf16.mxu0 0
          %1419 = vmatpush1.bf16.msra.mxu0 0
          %1420 = vmatprep.subr.bf16.mxu0 0
          %1421 = vmatpush1.bf16.msra.mxu0 0
          %1422 = vmatprep.subr.bf16.mxu0 0
          %1423 = vmatpush1.bf16.msra.mxu0 0
          %1424 = vmatprep.mubr.bf16.mxu0 0
          %1425 = vmatmul.mubr.bf16.gmra.mrb[0].mxu0 %v1384
          %v1426 = vpop.f32.mrb[0].mxu0
          %v1427 = vadd.f32 0.0, %v1426
          %v1428 = vpop.f32.mrb[0].mxu0
          %v1429 = vpop.f32.mrb[0].mxu0
          %v1430 = vadd.f32 0.0, %v1429
          %v1431 = vpop.f32.mrb[0].mxu0
          %1432 = vmatprep.mubr.bf16.mxu0 0
          %1433 = vmatmul.mubr.bf16.gmra.mrb[0].mxu0 %v1387
          %v1434 = vpop.f32.mrb[0].mxu0
          %v1435 = vadd.f32 0.0, %v1434
          %v1436 = vpop.f32.mrb[0].mxu0
          %v1437 = vpop.f32.mrb[0].mxu0
          %v1438 = vpop.f32.mrb[0].mxu0
          %1439 = vdwg.mxu0
          %v1440 = vadd.f32 %v1371, %v1427
          %v1441 = vadd.f32 %v1372, %v1430
          %v1442 = vadd.f32 %v1373, %v1435
          %s1443 = scalar_lea.vmem %s1236, 3
          %v1444 = vld [vmem:[%s1443] ss:$2 sm:$0xff]
          %s1445 = scalar_lea.vmem %s1236, 19
          %v1446 = vld [vmem:[%s1445] ss:$2 sm:$0xff]
          %s1447 = scalar_lea.vmem %s1236, 35
          %v1448 = vld [vmem:[%s1447] ss:$2 sm:$0x7f]
          %v1449 = vld [vmem:[%s1 + $0x3c] sm:$0xf]
          %v1450 = vpack.c.bf16 %v1446, %v1444
          %v1451 = vpack.c.bf16 %v1448, %v1448
          %v1453 = vsel %vm409, %v1450, 0
          %v1456 = vsel %vm409, %v1451, 0
          %v1459 = vsel %vm416, %v1449, 0
          %1461 = vmatprep.subr.bf16.mxu0 0
          %1462 = vmatpush1.bf16.msra.mxu0 %v1459
          %1463 = vmatprep.subr.bf16.mxu0 0
          %1464 = vmatpush1.bf16.msra.mxu0 0
          %1465 = vmatprep.subr.bf16.mxu0 0
          %1466 = vmatpush1.bf16.msra.mxu0 0
          %1467 = vmatprep.subr.bf16.mxu0 0
          %1468 = vmatpush1.bf16.msra.mxu0 0
          %1469 = vmatprep.subr.bf16.mxu0 0
          %1470 = vmatpush1.bf16.msra.mxu0 0
          %1471 = vmatprep.subr.bf16.mxu0 0
          %1472 = vmatpush1.bf16.msra.mxu0 0
          %1473 = vmatprep.subr.bf16.mxu0 0
          %1474 = vmatpush1.bf16.msra.mxu0 0
          %1475 = vmatprep.subr.bf16.mxu0 0
          %1476 = vmatpush1.bf16.msra.mxu0 0
          %1477 = vmatprep.subr.bf16.mxu0 0
          %1478 = vmatpush1.bf16.msra.mxu0 0
          %1479 = vmatprep.subr.bf16.mxu0 0
          %1480 = vmatpush1.bf16.msra.mxu0 0
          %1481 = vmatprep.subr.bf16.mxu0 0
          %1482 = vmatpush1.bf16.msra.mxu0 0
          %1483 = vmatprep.subr.bf16.mxu0 0
          %1484 = vmatpush1.bf16.msra.mxu0 0
          %1485 = vmatprep.subr.bf16.mxu0 0
          %1486 = vmatpush1.bf16.msra.mxu0 0
          %1487 = vmatprep.subr.bf16.mxu0 0
          %1488 = vmatpush1.bf16.msra.mxu0 0
          %1489 = vmatprep.subr.bf16.mxu0 0
          %1490 = vmatpush1.bf16.msra.mxu0 0
          %1491 = vmatprep.subr.bf16.mxu0 0
          %1492 = vmatpush1.bf16.msra.mxu0 0
          %1493 = vmatprep.mubr.bf16.mxu0 0
          %1494 = vmatmul.mubr.bf16.gmra.mrb[0].mxu0 %v1453
          %v1495 = vpop.f32.mrb[0].mxu0
          %v1496 = vadd.f32 0.0, %v1495
          %v1497 = vpop.f32.mrb[0].mxu0
          %v1498 = vpop.f32.mrb[0].mxu0
          %v1499 = vadd.f32 0.0, %v1498
          %v1500 = vpop.f32.mrb[0].mxu0
          %1501 = vmatprep.mubr.bf16.mxu0 0
          %1502 = vmatmul.mubr.bf16.gmra.mrb[0].mxu0 %v1456
          %v1503 = vpop.f32.mrb[0].mxu0
          %v1504 = vadd.f32 0.0, %v1503
          %v1505 = vpop.f32.mrb[0].mxu0
          %v1506 = vpop.f32.mrb[0].mxu0
          %v1507 = vpop.f32.mrb[0].mxu0
          %1508 = vdwg.mxu0
          %v1509 = vadd.f32 %v1440, %v1496
          %v1510 = vadd.f32 %v1441, %v1499
          %v1511 = vadd.f32 %v1442, %v1504
          %v1512 = vmax.f32 %v1509, 0.0
          %v1513 = vmax.f32 %v1510, 0.0
          %v1514 = vmax.f32 %v1511, 0.0
          %s1515 = smul.u32 %s393, 24
          %s1516 = scalar_lea.vmem [#allocation2], %s1515
          %vm1517 = vcmask 261120
          %1518 = vst.msk [vmem:[%s1516] sm:$0xff] %vm1517, %v1512
          %1519 = vst.msk [vmem:[%s1516 + $0x8] sm:$0xff] %vm1517, %v1513
          %vm1520 = vcmask 260096
          %1521 = vst.msk [vmem:[%s1516 + $0x10] sm:$0x7f] %vm1520, %v1514
        $region69: #{conv_encoder_forward.1} parent=63 // loop_footer
          %s397 = sadd.s32 1, %s393
        $region70: #{conv_encoder_forward.1} parent=63 // loop_footer_branch
          %392 = sbr.rel target = $region66
        $region71: #{conv_encoder_forward.1} parent=63 // loop_exit
          _
        %v1522 = vld [vmem:[%s4] sm:$0x1]
        %v1524 = vlaneseq
        %v1525 = vshrl.u32 %v1524, 7
        %v1526 = vsub.s32 0, %v1525
        %v1527 = vrot.slane %v1522, %v1526
        loop: start=0, step=1, limit=10
        $region72: #{conv_encoder_forward.1} parent=63 // loop_pre_header
          _
        $region73: #{conv_encoder_forward.1} parent=63 // loop_header
          %s1530 = sphi 0, %s1534
          %p1531 = scmp.ge.s32.totalorder %s1530, 10
        $region74: #{conv_encoder_forward.1} parent=63 // loop_header_branch
          %1533 = sbr.rel (%p1531) target = $region78
        $region75: #{conv_encoder_forward.1} parent=63 // loop_body
          %s1535 = smul.u32 %s1530, 2
          %s1536 = smul.u32 %s1535, 24
          %s1537 = scalar_lea.vmem [#allocation2], %s1536
          %v1538 = vld [vmem:[%s1537] ss:$2 sm:$0xff]
          %s1539 = scalar_lea.vmem %s1537, 16 [#allocation2]
          %v1540 = vld [vmem:[%s1539] ss:$2 sm:$0x3]
          %v1541 = vld [vmem:[%s3] sm:$0xf]
          %v1542 = vld [vmem:[%s3 + $0x4] sm:$0xf]
          %v1543 = vld [vmem:[%s3 + $0x8] sm:$0xf]
          %v1544 = vld [vmem:[%s3 + $0xc] sm:$0xf]
          %v1545 = vpack.c.bf16 %v1540, %v1538
          %v1550 = vunpack.c.l.b16 %v1541
          %v1551 = vunpack.c.l.b16 %v1542
          %v1552 = vunpack.c.l.b16 %v1543
          %v1553 = vunpack.c.l.b16 %v1544
          %v1554 = vpack.c.b16 %v1551, %v1550
          %v1555 = vpack.c.b16 %v1553, %v1552
          %vm1558 = vcmask 261120
          %v1560 = vsel %vm1558, %v1545, 0
          %1562 = vmatprep.subr.bf16.mxu0 0
          %1563 = vmatpush1.bf16.msra.mxu0 %v1554
          %1564 = vmatprep.subr.bf16.mxu0 0
          %1565 = vmatpush1.bf16.msra.mxu0 %v1555
          %1566 = vmatprep.subr.bf16.mxu0 0
          %1567 = vmatpush1.bf16.msra.mxu0 0
          %1568 = vmatprep.subr.bf16.mxu0 0
          %1569 = vmatpush1.bf16.msra.mxu0 0
          %1570 = vmatprep.subr.bf16.mxu0 0
          %1571 = vmatpush1.bf16.msra.mxu0 0
          %1572 = vmatprep.subr.bf16.mxu0 0
          %1573 = vmatpush1.bf16.msra.mxu0 0
          %1574 = vmatprep.subr.bf16.mxu0 0
          %1575 = vmatpush1.bf16.msra.mxu0 0
          %1576 = vmatprep.subr.bf16.mxu0 0
          %1577 = vmatpush1.bf16.msra.mxu0 0
          %1578 = vmatprep.subr.bf16.mxu0 0
          %1579 = vmatpush1.bf16.msra.mxu0 0
          %1580 = vmatprep.subr.bf16.mxu0 0
          %1581 = vmatpush1.bf16.msra.mxu0 0
          %1582 = vmatprep.subr.bf16.mxu0 0
          %1583 = vmatpush1.bf16.msra.mxu0 0
          %1584 = vmatprep.subr.bf16.mxu0 0
          %1585 = vmatpush1.bf16.msra.mxu0 0
          %1586 = vmatprep.subr.bf16.mxu0 0
          %1587 = vmatpush1.bf16.msra.mxu0 0
          %1588 = vmatprep.subr.bf16.mxu0 0
          %1589 = vmatpush1.bf16.msra.mxu0 0
          %1590 = vmatprep.subr.bf16.mxu0 0
          %1591 = vmatpush1.bf16.msra.mxu0 0
          %1592 = vmatprep.subr.bf16.mxu0 0
          %1593 = vmatpush1.bf16.msra.mxu0 0
          %1594 = vmatprep.mubr.bf16.mxu0 0
          %1595 = vmatmul.mubr.bf16.gmra.mrb[0].mxu0 %v1560
          %v1596 = vpop.f32.mrb[0].mxu0
          %v1597 = vadd.f32 0.0, %v1596
          %v1598 = vpop.f32.mrb[0].mxu0
          %v1599 = vpop.f32.mrb[0].mxu0
          %v1600 = vadd.f32 0.0, %v1599
          %v1601 = vpop.f32.mrb[0].mxu0
          %1602 = vdwg.mxu0
          %v1603 = vadd.f32 %v1527, %v1597
          %v1604 = vadd.f32 %v1527, %v1600
          %s1605 = scalar_lea.vmem %s1537, 1 [#allocation2]
          %v1606 = vld [vmem:[%s1605] ss:$2 sm:$0xff]
          %s1607 = scalar_lea.vmem %s1537, 17 [#allocation2]
          %v1608 = vld [vmem:[%s1607] ss:$2 sm:$0x3]
          %v1609 = vld [vmem:[%s3 + $0x10] sm:$0xf]
          %v1610 = vld [vmem:[%s3 + $0x14] sm:$0xf]
          %v1611 = vld [vmem:[%s3 + $0x18] sm:$0xf]
          %v1612 = vld [vmem:[%s3 + $0x1c] sm:$0xf]
          %v1613 = vpack.c.bf16 %v1608, %v1606
          %v1618 = vunpack.c.l.b16 %v1609
          %v1619 = vunpack.c.l.b16 %v1610
          %v1620 = vunpack.c.l.b16 %v1611
          %v1621 = vunpack.c.l.b16 %v1612
          %v1622 = vpack.c.b16 %v1619, %v1618
          %v1623 = vpack.c.b16 %v1621, %v1620
          %v1627 = vsel %vm1558, %v1613, 0
          %1629 = vmatprep.subr.bf16.mxu0 0
          %1630 = vmatpush1.bf16.msra.mxu0 %v1622
          %1631 = vmatprep.subr.bf16.mxu0 0
          %1632 = vmatpush1.bf16.msra.mxu0 %v1623
          %1633 = vmatprep.subr.bf16.mxu0 0
          %1634 = vmatpush1.bf16.msra.mxu0 0
          %1635 = vmatprep.subr.bf16.mxu0 0
          %1636 = vmatpush1.bf16.msra.mxu0 0
          %1637 = vmatprep.subr.bf16.mxu0 0
          %1638 = vmatpush1.bf16.msra.mxu0 0
          %1639 = vmatprep.subr.bf16.mxu0 0
          %1640 = vmatpush1.bf16.msra.mxu0 0
          %1641 = vmatprep.subr.bf16.mxu0 0
          %1642 = vmatpush1.bf16.msra.mxu0 0
          %1643 = vmatprep.subr.bf16.mxu0 0
          %1644 = vmatpush1.bf16.msra.mxu0 0
          %1645 = vmatprep.subr.bf16.mxu0 0
          %1646 = vmatpush1.bf16.msra.mxu0 0
          %1647 = vmatprep.subr.bf16.mxu0 0
          %1648 = vmatpush1.bf16.msra.mxu0 0
          %1649 = vmatprep.subr.bf16.mxu0 0
          %1650 = vmatpush1.bf16.msra.mxu0 0
          %1651 = vmatprep.subr.bf16.mxu0 0
          %1652 = vmatpush1.bf16.msra.mxu0 0
          %1653 = vmatprep.subr.bf16.mxu0 0
          %1654 = vmatpush1.bf16.msra.mxu0 0
          %1655 = vmatprep.subr.bf16.mxu0 0
          %1656 = vmatpush1.bf16.msra.mxu0 0
          %1657 = vmatprep.subr.bf16.mxu0 0
          %1658 = vmatpush1.bf16.msra.mxu0 0
          %1659 = vmatprep.subr.bf16.mxu0 0
          %1660 = vmatpush1.bf16.msra.mxu0 0
          %1661 = vmatprep.mubr.bf16.mxu0 0
          %1662 = vmatmul.mubr.bf16.gmra.mrb[0].mxu0 %v1627
          %v1663 = vpop.f32.mrb[0].mxu0
          %v1664 = vadd.f32 0.0, %v1663
          %v1665 = vpop.f32.mrb[0].mxu0
          %v1666 = vpop.f32.mrb[0].mxu0
          %v1667 = vadd.f32 0.0, %v1666
          %v1668 = vpop.f32.mrb[0].mxu0
          %1669 = vdwg.mxu0
          %v1670 = vadd.f32 %v1603, %v1664
          %v1671 = vadd.f32 %v1604, %v1667
          %s1672 = scalar_lea.vmem %s1537, 2 [#allocation2]
          %v1673 = vld [vmem:[%s1672] ss:$2 sm:$0xff]
          %s1674 = scalar_lea.vmem %s1537, 18 [#allocation2]
          %v1675 = vld [vmem:[%s1674] ss:$2 sm:$0x3]
          %v1676 = vld [vmem:[%s3 + $0x20] sm:$0xf]
          %v1677 = vld [vmem:[%s3 + $0x24] sm:$0xf]
          %v1678 = vld [vmem:[%s3 + $0x28] sm:$0xf]
          %v1679 = vld [vmem:[%s3 + $0x2c] sm:$0xf]
          %v1680 = vpack.c.bf16 %v1675, %v1673
          %v1685 = vunpack.c.l.b16 %v1676
          %v1686 = vunpack.c.l.b16 %v1677
          %v1687 = vunpack.c.l.b16 %v1678
          %v1688 = vunpack.c.l.b16 %v1679
          %v1689 = vpack.c.b16 %v1686, %v1685
          %v1690 = vpack.c.b16 %v1688, %v1687
          %v1694 = vsel %vm1558, %v1680, 0
          %1696 = vmatprep.subr.bf16.mxu0 0
          %1697 = vmatpush1.bf16.msra.mxu0 %v1689
          %1698 = vmatprep.subr.bf16.mxu0 0
          %1699 = vmatpush1.bf16.msra.mxu0 %v1690
          %1700 = vmatprep.subr.bf16.mxu0 0
          %1701 = vmatpush1.bf16.msra.mxu0 0
          %1702 = vmatprep.subr.bf16.mxu0 0
          %1703 = vmatpush1.bf16.msra.mxu0 0
          %1704 = vmatprep.subr.bf16.mxu0 0
          %1705 = vmatpush1.bf16.msra.mxu0 0
          %1706 = vmatprep.subr.bf16.mxu0 0
          %1707 = vmatpush1.bf16.msra.mxu0 0
          %1708 = vmatprep.subr.bf16.mxu0 0
          %1709 = vmatpush1.bf16.msra.mxu0 0
          %1710 = vmatprep.subr.bf16.mxu0 0
          %1711 = vmatpush1.bf16.msra.mxu0 0
          %1712 = vmatprep.subr.bf16.mxu0 0
          %1713 = vmatpush1.bf16.msra.mxu0 0
          %1714 = vmatprep.subr.bf16.mxu0 0
          %1715 = vmatpush1.bf16.msra.mxu0 0
          %1716 = vmatprep.subr.bf16.mxu0 0
          %1717 = vmatpush1.bf16.msra.mxu0 0
          %1718 = vmatprep.subr.bf16.mxu0 0
          %1719 = vmatpush1.bf16.msra.mxu0 0
          %1720 = vmatprep.subr.bf16.mxu0 0
          %1721 = vmatpush1.bf16.msra.mxu0 0
          %1722 = vmatprep.subr.bf16.mxu0 0
          %1723 = vmatpush1.bf16.msra.mxu0 0
          %1724 = vmatprep.subr.bf16.mxu0 0
          %1725 = vmatpush1.bf16.msra.mxu0 0
          %1726 = vmatprep.subr.bf16.mxu0 0
          %1727 = vmatpush1.bf16.msra.mxu0 0
          %1728 = vmatprep.mubr.bf16.mxu0 0
          %1729 = vmatmul.mubr.bf16.gmra.mrb[0].mxu0 %v1694
          %v1730 = vpop.f32.mrb[0].mxu0
          %v1731 = vadd.f32 0.0, %v1730
          %v1732 = vpop.f32.mrb[0].mxu0
          %v1733 = vpop.f32.mrb[0].mxu0
          %v1734 = vadd.f32 0.0, %v1733
          %v1735 = vpop.f32.mrb[0].mxu0
          %1736 = vdwg.mxu0
          %v1737 = vadd.f32 %v1670, %v1731
          %v1738 = vadd.f32 %v1671, %v1734
          %s1739 = scalar_lea.vmem %s1537, 3 [#allocation2]
          %v1740 = vld [vmem:[%s1739] ss:$2 sm:$0xff]
          %s1741 = scalar_lea.vmem %s1537, 19 [#allocation2]
          %v1742 = vld [vmem:[%s1741] ss:$2 sm:$0x3]
          %v1743 = vld [vmem:[%s3 + $0x30] sm:$0xf]
          %v1744 = vld [vmem:[%s3 + $0x34] sm:$0xf]
          %v1745 = vld [vmem:[%s3 + $0x38] sm:$0xf]
          %v1746 = vld [vmem:[%s3 + $0x3c] sm:$0xf]
          %v1747 = vpack.c.bf16 %v1742, %v1740
          %v1752 = vunpack.c.l.b16 %v1743
          %v1753 = vunpack.c.l.b16 %v1744
          %v1754 = vunpack.c.l.b16 %v1745
          %v1755 = vunpack.c.l.b16 %v1746
          %v1756 = vpack.c.b16 %v1753, %v1752
          %v1757 = vpack.c.b16 %v1755, %v1754
          %v1761 = vsel %vm1558, %v1747, 0
          %1763 = vmatprep.subr.bf16.mxu0 0
          %1764 = vmatpush1.bf16.msra.mxu0 %v1756
          %1765 = vmatprep.subr.bf16.mxu0 0
          %1766 = vmatpush1.bf16.msra.mxu0 %v1757
          %1767 = vmatprep.subr.bf16.mxu0 0
          %1768 = vmatpush1.bf16.msra.mxu0 0
          %1769 = vmatprep.subr.bf16.mxu0 0
          %1770 = vmatpush1.bf16.msra.mxu0 0
          %1771 = vmatprep.subr.bf16.mxu0 0
          %1772 = vmatpush1.bf16.msra.mxu0 0
          %1773 = vmatprep.subr.bf16.mxu0 0
          %1774 = vmatpush1.bf16.msra.mxu0 0
          %1775 = vmatprep.subr.bf16.mxu0 0
          %1776 = vmatpush1.bf16.msra.mxu0 0
          %1777 = vmatprep.subr.bf16.mxu0 0
          %1778 = vmatpush1.bf16.msra.mxu0 0
          %1779 = vmatprep.subr.bf16.mxu0 0
          %1780 = vmatpush1.bf16.msra.mxu0 0
          %1781 = vmatprep.subr.bf16.mxu0 0
          %1782 = vmatpush1.bf16.msra.mxu0 0
          %1783 = vmatprep.subr.bf16.mxu0 0
          %1784 = vmatpush1.bf16.msra.mxu0 0
          %1785 = vmatprep.subr.bf16.mxu0 0
          %1786 = vmatpush1.bf16.msra.mxu0 0
          %1787 = vmatprep.subr.bf16.mxu0 0
          %1788 = vmatpush1.bf16.msra.mxu0 0
          %1789 = vmatprep.subr.bf16.mxu0 0
          %1790 = vmatpush1.bf16.msra.mxu0 0
          %1791 = vmatprep.subr.bf16.mxu0 0
          %1792 = vmatpush1.bf16.msra.mxu0 0
          %1793 = vmatprep.subr.bf16.mxu0 0
          %1794 = vmatpush1.bf16.msra.mxu0 0
          %1795 = vmatprep.mubr.bf16.mxu0 0
          %1796 = vmatmul.mubr.bf16.gmra.mrb[0].mxu0 %v1761
          %v1797 = vpop.f32.mrb[0].mxu0
          %v1798 = vadd.f32 0.0, %v1797
          %v1799 = vpop.f32.mrb[0].mxu0
          %v1800 = vpop.f32.mrb[0].mxu0
          %v1801 = vadd.f32 0.0, %v1800
          %v1802 = vpop.f32.mrb[0].mxu0
          %1803 = vdwg.mxu0
          %v1804 = vadd.f32 %v1737, %v1798
          %v1805 = vadd.f32 %v1738, %v1801
          %s1806 = sadd.s32 %s1535, 1
          %s1807 = smul.u32 %s1806, 24
          %s1808 = scalar_lea.vmem [#allocation2], %s1807
          %v1809 = vld [vmem:[%s1808] ss:$2 sm:$0xff]
          %s1810 = scalar_lea.vmem %s1808, 16 [#allocation2]
          %v1811 = vld [vmem:[%s1810] ss:$2 sm:$0x3]
          %v1812 = vld [vmem:[%s3 + $0x40] sm:$0xf]
          %v1813 = vld [vmem:[%s3 + $0x44] sm:$0xf]
          %v1814 = vld [vmem:[%s3 + $0x48] sm:$0xf]
          %v1815 = vld [vmem:[%s3 + $0x4c] sm:$0xf]
          %v1816 = vpack.c.bf16 %v1811, %v1809
          %v1821 = vunpack.c.l.b16 %v1812
          %v1822 = vunpack.c.l.b16 %v1813
          %v1823 = vunpack.c.l.b16 %v1814
          %v1824 = vunpack.c.l.b16 %v1815
          %v1825 = vpack.c.b16 %v1822, %v1821
          %v1826 = vpack.c.b16 %v1824, %v1823
          %v1830 = vsel %vm1558, %v1816, 0
          %1832 = vmatprep.subr.bf16.mxu0 0
          %1833 = vmatpush1.bf16.msra.mxu0 %v1825
          %1834 = vmatprep.subr.bf16.mxu0 0
          %1835 = vmatpush1.bf16.msra.mxu0 %v1826
          %1836 = vmatprep.subr.bf16.mxu0 0
          %1837 = vmatpush1.bf16.msra.mxu0 0
          %1838 = vmatprep.subr.bf16.mxu0 0
          %1839 = vmatpush1.bf16.msra.mxu0 0
          %1840 = vmatprep.subr.bf16.mxu0 0
          %1841 = vmatpush1.bf16.msra.mxu0 0
          %1842 = vmatprep.subr.bf16.mxu0 0
          %1843 = vmatpush1.bf16.msra.mxu0 0
          %1844 = vmatprep.subr.bf16.mxu0 0
          %1845 = vmatpush1.bf16.msra.mxu0 0
          %1846 = vmatprep.subr.bf16.mxu0 0
          %1847 = vmatpush1.bf16.msra.mxu0 0
          %1848 = vmatprep.subr.bf16.mxu0 0
          %1849 = vmatpush1.bf16.msra.mxu0 0
          %1850 = vmatprep.subr.bf16.mxu0 0
          %1851 = vmatpush1.bf16.msra.mxu0 0
          %1852 = vmatprep.subr.bf16.mxu0 0
          %1853 = vmatpush1.bf16.msra.mxu0 0
          %1854 = vmatprep.subr.bf16.mxu0 0
          %1855 = vmatpush1.bf16.msra.mxu0 0
          %1856 = vmatprep.subr.bf16.mxu0 0
          %1857 = vmatpush1.bf16.msra.mxu0 0
          %1858 = vmatprep.subr.bf16.mxu0 0
          %1859 = vmatpush1.bf16.msra.mxu0 0
          %1860 = vmatprep.subr.bf16.mxu0 0
          %1861 = vmatpush1.bf16.msra.mxu0 0
          %1862 = vmatprep.subr.bf16.mxu0 0
          %1863 = vmatpush1.bf16.msra.mxu0 0
          %1864 = vmatprep.mubr.bf16.mxu0 0
          %1865 = vmatmul.mubr.bf16.gmra.mrb[0].mxu0 %v1830
          %v1866 = vpop.f32.mrb[0].mxu0
          %v1867 = vadd.f32 0.0, %v1866
          %v1868 = vpop.f32.mrb[0].mxu0
          %v1869 = vpop.f32.mrb[0].mxu0
          %v1870 = vadd.f32 0.0, %v1869
          %v1871 = vpop.f32.mrb[0].mxu0
          %1872 = vdwg.mxu0
          %v1873 = vadd.f32 %v1804, %v1867
          %v1874 = vadd.f32 %v1805, %v1870
          %s1875 = scalar_lea.vmem %s1808, 1 [#allocation2]
          %v1876 = vld [vmem:[%s1875] ss:$2 sm:$0xff]
          %s1877 = scalar_lea.vmem %s1808, 17 [#allocation2]
          %v1878 = vld [vmem:[%s1877] ss:$2 sm:$0x3]
          %v1879 = vld [vmem:[%s3 + $0x50] sm:$0xf]
          %v1880 = vld [vmem:[%s3 + $0x54] sm:$0xf]
          %v1881 = vld [vmem:[%s3 + $0x58] sm:$0xf]
          %v1882 = vld [vmem:[%s3 + $0x5c] sm:$0xf]
          %v1883 = vpack.c.bf16 %v1878, %v1876
          %v1888 = vunpack.c.l.b16 %v1879
          %v1889 = vunpack.c.l.b16 %v1880
          %v1890 = vunpack.c.l.b16 %v1881
          %v1891 = vunpack.c.l.b16 %v1882
          %v1892 = vpack.c.b16 %v1889, %v1888
          %v1893 = vpack.c.b16 %v1891, %v1890
          %v1897 = vsel %vm1558, %v1883, 0
          %1899 = vmatprep.subr.bf16.mxu0 0
          %1900 = vmatpush1.bf16.msra.mxu0 %v1892
          %1901 = vmatprep.subr.bf16.mxu0 0
          %1902 = vmatpush1.bf16.msra.mxu0 %v1893
          %1903 = vmatprep.subr.bf16.mxu0 0
          %1904 = vmatpush1.bf16.msra.mxu0 0
          %1905 = vmatprep.subr.bf16.mxu0 0
          %1906 = vmatpush1.bf16.msra.mxu0 0
          %1907 = vmatprep.subr.bf16.mxu0 0
          %1908 = vmatpush1.bf16.msra.mxu0 0
          %1909 = vmatprep.subr.bf16.mxu0 0
          %1910 = vmatpush1.bf16.msra.mxu0 0
          %1911 = vmatprep.subr.bf16.mxu0 0
          %1912 = vmatpush1.bf16.msra.mxu0 0
          %1913 = vmatprep.subr.bf16.mxu0 0
          %1914 = vmatpush1.bf16.msra.mxu0 0
          %1915 = vmatprep.subr.bf16.mxu0 0
          %1916 = vmatpush1.bf16.msra.mxu0 0
          %1917 = vmatprep.subr.bf16.mxu0 0
          %1918 = vmatpush1.bf16.msra.mxu0 0
          %1919 = vmatprep.subr.bf16.mxu0 0
          %1920 = vmatpush1.bf16.msra.mxu0 0
          %1921 = vmatprep.subr.bf16.mxu0 0
          %1922 = vmatpush1.bf16.msra.mxu0 0
          %1923 = vmatprep.subr.bf16.mxu0 0
          %1924 = vmatpush1.bf16.msra.mxu0 0
          %1925 = vmatprep.subr.bf16.mxu0 0
          %1926 = vmatpush1.bf16.msra.mxu0 0
          %1927 = vmatprep.subr.bf16.mxu0 0
          %1928 = vmatpush1.bf16.msra.mxu0 0
          %1929 = vmatprep.subr.bf16.mxu0 0
          %1930 = vmatpush1.bf16.msra.mxu0 0
          %1931 = vmatprep.mubr.bf16.mxu0 0
          %1932 = vmatmul.mubr.bf16.gmra.mrb[0].mxu0 %v1897
          %v1933 = vpop.f32.mrb[0].mxu0
          %v1934 = vadd.f32 0.0, %v1933
          %v1935 = vpop.f32.mrb[0].mxu0
          %v1936 = vpop.f32.mrb[0].mxu0
          %v1937 = vadd.f32 0.0, %v1936
          %v1938 = vpop.f32.mrb[0].mxu0
          %1939 = vdwg.mxu0
          %v1940 = vadd.f32 %v1873, %v1934
          %v1941 = vadd.f32 %v1874, %v1937
          %s1942 = scalar_lea.vmem %s1808, 2 [#allocation2]
          %v1943 = vld [vmem:[%s1942] ss:$2 sm:$0xff]
          %s1944 = scalar_lea.vmem %s1808, 18 [#allocation2]
          %v1945 = vld [vmem:[%s1944] ss:$2 sm:$0x3]
          %v1946 = vld [vmem:[%s3 + $0x60] sm:$0xf]
          %v1947 = vld [vmem:[%s3 + $0x64] sm:$0xf]
          %v1948 = vld [vmem:[%s3 + $0x68] sm:$0xf]
          %v1949 = vld [vmem:[%s3 + $0x6c] sm:$0xf]
          %v1950 = vpack.c.bf16 %v1945, %v1943
          %v1955 = vunpack.c.l.b16 %v1946
          %v1956 = vunpack.c.l.b16 %v1947
          %v1957 = vunpack.c.l.b16 %v1948
          %v1958 = vunpack.c.l.b16 %v1949
          %v1959 = vpack.c.b16 %v1956, %v1955
          %v1960 = vpack.c.b16 %v1958, %v1957
          %v1964 = vsel %vm1558, %v1950, 0
          %1966 = vmatprep.subr.bf16.mxu0 0
          %1967 = vmatpush1.bf16.msra.mxu0 %v1959
          %1968 = vmatprep.subr.bf16.mxu0 0
          %1969 = vmatpush1.bf16.msra.mxu0 %v1960
          %1970 = vmatprep.subr.bf16.mxu0 0
          %1971 = vmatpush1.bf16.msra.mxu0 0
          %1972 = vmatprep.subr.bf16.mxu0 0
          %1973 = vmatpush1.bf16.msra.mxu0 0
          %1974 = vmatprep.subr.bf16.mxu0 0
          %1975 = vmatpush1.bf16.msra.mxu0 0
          %1976 = vmatprep.subr.bf16.mxu0 0
          %1977 = vmatpush1.bf16.msra.mxu0 0
          %1978 = vmatprep.subr.bf16.mxu0 0
          %1979 = vmatpush1.bf16.msra.mxu0 0
          %1980 = vmatprep.subr.bf16.mxu0 0
          %1981 = vmatpush1.bf16.msra.mxu0 0
          %1982 = vmatprep.subr.bf16.mxu0 0
          %1983 = vmatpush1.bf16.msra.mxu0 0
          %1984 = vmatprep.subr.bf16.mxu0 0
          %1985 = vmatpush1.bf16.msra.mxu0 0
          %1986 = vmatprep.subr.bf16.mxu0 0
          %1987 = vmatpush1.bf16.msra.mxu0 0
          %1988 = vmatprep.subr.bf16.mxu0 0
          %1989 = vmatpush1.bf16.msra.mxu0 0
          %1990 = vmatprep.subr.bf16.mxu0 0
          %1991 = vmatpush1.bf16.msra.mxu0 0
          %1992 = vmatprep.subr.bf16.mxu0 0
          %1993 = vmatpush1.bf16.msra.mxu0 0
          %1994 = vmatprep.subr.bf16.mxu0 0
          %1995 = vmatpush1.bf16.msra.mxu0 0
          %1996 = vmatprep.subr.bf16.mxu0 0
          %1997 = vmatpush1.bf16.msra.mxu0 0
          %1998 = vmatprep.mubr.bf16.mxu0 0
          %1999 = vmatmul.mubr.bf16.gmra.mrb[0].mxu0 %v1964
          %v2000 = vpop.f32.mrb[0].mxu0
          %v2001 = vadd.f32 0.0, %v2000
          %v2002 = vpop.f32.mrb[0].mxu0
          %v2003 = vpop.f32.mrb[0].mxu0
          %v2004 = vadd.f32 0.0, %v2003
          %v2005 = vpop.f32.mrb[0].mxu0
          %2006 = vdwg.mxu0
          %v2007 = vadd.f32 %v1940, %v2001
          %v2008 = vadd.f32 %v1941, %v2004
          %s2009 = scalar_lea.vmem %s1808, 3 [#allocation2]
          %v2010 = vld [vmem:[%s2009] ss:$2 sm:$0xff]
          %s2011 = scalar_lea.vmem %s1808, 19 [#allocation2]
          %v2012 = vld [vmem:[%s2011] ss:$2 sm:$0x3]
          %v2013 = vld [vmem:[%s3 + $0x70] sm:$0xf]
          %v2014 = vld [vmem:[%s3 + $0x74] sm:$0xf]
          %v2015 = vld [vmem:[%s3 + $0x78] sm:$0xf]
          %v2016 = vld [vmem:[%s3 + $0x7c] sm:$0xf]
          %v2017 = vpack.c.bf16 %v2012, %v2010
          %v2022 = vunpack.c.l.b16 %v2013
          %v2023 = vunpack.c.l.b16 %v2014
          %v2024 = vunpack.c.l.b16 %v2015
          %v2025 = vunpack.c.l.b16 %v2016
          %v2026 = vpack.c.b16 %v2023, %v2022
          %v2027 = vpack.c.b16 %v2025, %v2024
          %v2031 = vsel %vm1558, %v2017, 0
          %2033 = vmatprep.subr.bf16.mxu0 0
          %2034 = vmatpush1.bf16.msra.mxu0 %v2026
          %2035 = vmatprep.subr.bf16.mxu0 0
          %2036 = vmatpush1.bf16.msra.mxu0 %v2027
          %2037 = vmatprep.subr.bf16.mxu0 0
          %2038 = vmatpush1.bf16.msra.mxu0 0
          %2039 = vmatprep.subr.bf16.mxu0 0
          %2040 = vmatpush1.bf16.msra.mxu0 0
          %2041 = vmatprep.subr.bf16.mxu0 0
          %2042 = vmatpush1.bf16.msra.mxu0 0
          %2043 = vmatprep.subr.bf16.mxu0 0
          %2044 = vmatpush1.bf16.msra.mxu0 0
          %2045 = vmatprep.subr.bf16.mxu0 0
          %2046 = vmatpush1.bf16.msra.mxu0 0
          %2047 = vmatprep.subr.bf16.mxu0 0
          %2048 = vmatpush1.bf16.msra.mxu0 0
          %2049 = vmatprep.subr.bf16.mxu0 0
          %2050 = vmatpush1.bf16.msra.mxu0 0
          %2051 = vmatprep.subr.bf16.mxu0 0
          %2052 = vmatpush1.bf16.msra.mxu0 0
          %2053 = vmatprep.subr.bf16.mxu0 0
          %2054 = vmatpush1.bf16.msra.mxu0 0
          %2055 = vmatprep.subr.bf16.mxu0 0
          %2056 = vmatpush1.bf16.msra.mxu0 0
          %2057 = vmatprep.subr.bf16.mxu0 0
          %2058 = vmatpush1.bf16.msra.mxu0 0
          %2059 = vmatprep.subr.bf16.mxu0 0
          %2060 = vmatpush1.bf16.msra.mxu0 0
          %2061 = vmatprep.subr.bf16.mxu0 0
          %2062 = vmatpush1.bf16.msra.mxu0 0
          %2063 = vmatprep.subr.bf16.mxu0 0
          %2064 = vmatpush1.bf16.msra.mxu0 0
          %2065 = vmatprep.mubr.bf16.mxu0 0
          %2066 = vmatmul.mubr.bf16.gmra.mrb[0].mxu0 %v2031
          %v2067 = vpop.f32.mrb[0].mxu0
          %v2068 = vadd.f32 0.0, %v2067
          %v2069 = vpop.f32.mrb[0].mxu0
          %v2070 = vpop.f32.mrb[0].mxu0
          %v2071 = vadd.f32 0.0, %v2070
          %v2072 = vpop.f32.mrb[0].mxu0
          %2073 = vdwg.mxu0
          %v2074 = vadd.f32 %v2007, %v2068
          %v2075 = vadd.f32 %v2008, %v2071
          %s2076 = sadd.s32 %s1535, 2
          %s2077 = smul.u32 %s2076, 24
          %s2078 = scalar_lea.vmem [#allocation2], %s2077
          %v2079 = vld [vmem:[%s2078] ss:$2 sm:$0xff]
          %s2080 = scalar_lea.vmem %s2078, 16 [#allocation2]
          %v2081 = vld [vmem:[%s2080] ss:$2 sm:$0x3]
          %v2082 = vld [vmem:[%s3 + $0x80] sm:$0xf]
          %v2083 = vld [vmem:[%s3 + $0x84] sm:$0xf]
          %v2084 = vld [vmem:[%s3 + $0x88] sm:$0xf]
          %v2085 = vld [vmem:[%s3 + $0x8c] sm:$0xf]
          %v2086 = vpack.c.bf16 %v2081, %v2079
          %v2091 = vunpack.c.l.b16 %v2082
          %v2092 = vunpack.c.l.b16 %v2083
          %v2093 = vunpack.c.l.b16 %v2084
          %v2094 = vunpack.c.l.b16 %v2085
          %v2095 = vpack.c.b16 %v2092, %v2091
          %v2096 = vpack.c.b16 %v2094, %v2093
          %v2100 = vsel %vm1558, %v2086, 0
          %2102 = vmatprep.subr.bf16.mxu0 0
          %2103 = vmatpush1.bf16.msra.mxu0 %v2095
          %2104 = vmatprep.subr.bf16.mxu0 0
          %2105 = vmatpush1.bf16.msra.mxu0 %v2096
          %2106 = vmatprep.subr.bf16.mxu0 0
          %2107 = vmatpush1.bf16.msra.mxu0 0
          %2108 = vmatprep.subr.bf16.mxu0 0
          %2109 = vmatpush1.bf16.msra.mxu0 0
          %2110 = vmatprep.subr.bf16.mxu0 0
          %2111 = vmatpush1.bf16.msra.mxu0 0
          %2112 = vmatprep.subr.bf16.mxu0 0
          %2113 = vmatpush1.bf16.msra.mxu0 0
          %2114 = vmatprep.subr.bf16.mxu0 0
          %2115 = vmatpush1.bf16.msra.mxu0 0
          %2116 = vmatprep.subr.bf16.mxu0 0
          %2117 = vmatpush1.bf16.msra.mxu0 0
          %2118 = vmatprep.subr.bf16.mxu0 0
          %2119 = vmatpush1.bf16.msra.mxu0 0
          %2120 = vmatprep.subr.bf16.mxu0 0
          %2121 = vmatpush1.bf16.msra.mxu0 0
          %2122 = vmatprep.subr.bf16.mxu0 0
          %2123 = vmatpush1.bf16.msra.mxu0 0
          %2124 = vmatprep.subr.bf16.mxu0 0
          %2125 = vmatpush1.bf16.msra.mxu0 0
          %2126 = vmatprep.subr.bf16.mxu0 0
          %2127 = vmatpush1.bf16.msra.mxu0 0
          %2128 = vmatprep.subr.bf16.mxu0 0
          %2129 = vmatpush1.bf16.msra.mxu0 0
          %2130 = vmatprep.subr.bf16.mxu0 0
          %2131 = vmatpush1.bf16.msra.mxu0 0
          %2132 = vmatprep.subr.bf16.mxu0 0
          %2133 = vmatpush1.bf16.msra.mxu0 0
          %2134 = vmatprep.mubr.bf16.mxu0 0
          %2135 = vmatmul.mubr.bf16.gmra.mrb[0].mxu0 %v2100
          %v2136 = vpop.f32.mrb[0].mxu0
          %v2137 = vadd.f32 0.0, %v2136
          %v2138 = vpop.f32.mrb[0].mxu0
          %v2139 = vpop.f32.mrb[0].mxu0
          %v2140 = vadd.f32 0.0, %v2139
          %v2141 = vpop.f32.mrb[0].mxu0
          %2142 = vdwg.mxu0
          %v2143 = vadd.f32 %v2074, %v2137
          %v2144 = vadd.f32 %v2075, %v2140
          %s2145 = scalar_lea.vmem %s2078, 1 [#allocation2]
          %v2146 = vld [vmem:[%s2145] ss:$2 sm:$0xff]
          %s2147 = scalar_lea.vmem %s2078, 17 [#allocation2]
          %v2148 = vld [vmem:[%s2147] ss:$2 sm:$0x3]
          %v2149 = vld [vmem:[%s3 + $0x90] sm:$0xf]
          %v2150 = vld [vmem:[%s3 + $0x94] sm:$0xf]
          %v2151 = vld [vmem:[%s3 + $0x98] sm:$0xf]
          %v2152 = vld [vmem:[%s3 + $0x9c] sm:$0xf]
          %v2153 = vpack.c.bf16 %v2148, %v2146
          %v2158 = vunpack.c.l.b16 %v2149
          %v2159 = vunpack.c.l.b16 %v2150
          %v2160 = vunpack.c.l.b16 %v2151
          %v2161 = vunpack.c.l.b16 %v2152
          %v2162 = vpack.c.b16 %v2159, %v2158
          %v2163 = vpack.c.b16 %v2161, %v2160
          %v2167 = vsel %vm1558, %v2153, 0
          %2169 = vmatprep.subr.bf16.mxu0 0
          %2170 = vmatpush1.bf16.msra.mxu0 %v2162
          %2171 = vmatprep.subr.bf16.mxu0 0
          %2172 = vmatpush1.bf16.msra.mxu0 %v2163
          %2173 = vmatprep.subr.bf16.mxu0 0
          %2174 = vmatpush1.bf16.msra.mxu0 0
          %2175 = vmatprep.subr.bf16.mxu0 0
          %2176 = vmatpush1.bf16.msra.mxu0 0
          %2177 = vmatprep.subr.bf16.mxu0 0
          %2178 = vmatpush1.bf16.msra.mxu0 0
          %2179 = vmatprep.subr.bf16.mxu0 0
          %2180 = vmatpush1.bf16.msra.mxu0 0
          %2181 = vmatprep.subr.bf16.mxu0 0
          %2182 = vmatpush1.bf16.msra.mxu0 0
          %2183 = vmatprep.subr.bf16.mxu0 0
          %2184 = vmatpush1.bf16.msra.mxu0 0
          %2185 = vmatprep.subr.bf16.mxu0 0
          %2186 = vmatpush1.bf16.msra.mxu0 0
          %2187 = vmatprep.subr.bf16.mxu0 0
          %2188 = vmatpush1.bf16.msra.mxu0 0
          %2189 = vmatprep.subr.bf16.mxu0 0
          %2190 = vmatpush1.bf16.msra.mxu0 0
          %2191 = vmatprep.subr.bf16.mxu0 0
          %2192 = vmatpush1.bf16.msra.mxu0 0
          %2193 = vmatprep.subr.bf16.mxu0 0
          %2194 = vmatpush1.bf16.msra.mxu0 0
          %2195 = vmatprep.subr.bf16.mxu0 0
          %2196 = vmatpush1.bf16.msra.mxu0 0
          %2197 = vmatprep.subr.bf16.mxu0 0
          %2198 = vmatpush1.bf16.msra.mxu0 0
          %2199 = vmatprep.subr.bf16.mxu0 0
          %2200 = vmatpush1.bf16.msra.mxu0 0
          %2201 = vmatprep.mubr.bf16.mxu0 0
          %2202 = vmatmul.mubr.bf16.gmra.mrb[0].mxu0 %v2167
          %v2203 = vpop.f32.mrb[0].mxu0
          %v2204 = vadd.f32 0.0, %v2203
          %v2205 = vpop.f32.mrb[0].mxu0
          %v2206 = vpop.f32.mrb[0].mxu0
          %v2207 = vadd.f32 0.0, %v2206
          %v2208 = vpop.f32.mrb[0].mxu0
          %2209 = vdwg.mxu0
          %v2210 = vadd.f32 %v2143, %v2204
          %v2211 = vadd.f32 %v2144, %v2207
          %s2212 = scalar_lea.vmem %s2078, 2 [#allocation2]
          %v2213 = vld [vmem:[%s2212] ss:$2 sm:$0xff]
          %s2214 = scalar_lea.vmem %s2078, 18 [#allocation2]
          %v2215 = vld [vmem:[%s2214] ss:$2 sm:$0x3]
          %v2216 = vld [vmem:[%s3 + $0xa0] sm:$0xf]
          %v2217 = vld [vmem:[%s3 + $0xa4] sm:$0xf]
          %v2218 = vld [vmem:[%s3 + $0xa8] sm:$0xf]
          %v2219 = vld [vmem:[%s3 + $0xac] sm:$0xf]
          %v2220 = vpack.c.bf16 %v2215, %v2213
          %v2225 = vunpack.c.l.b16 %v2216
          %v2226 = vunpack.c.l.b16 %v2217
          %v2227 = vunpack.c.l.b16 %v2218
          %v2228 = vunpack.c.l.b16 %v2219
          %v2229 = vpack.c.b16 %v2226, %v2225
          %v2230 = vpack.c.b16 %v2228, %v2227
          %v2234 = vsel %vm1558, %v2220, 0
          %2236 = vmatprep.subr.bf16.mxu0 0
          %2237 = vmatpush1.bf16.msra.mxu0 %v2229
          %2238 = vmatprep.subr.bf16.mxu0 0
          %2239 = vmatpush1.bf16.msra.mxu0 %v2230
          %2240 = vmatprep.subr.bf16.mxu0 0
          %2241 = vmatpush1.bf16.msra.mxu0 0
          %2242 = vmatprep.subr.bf16.mxu0 0
          %2243 = vmatpush1.bf16.msra.mxu0 0
          %2244 = vmatprep.subr.bf16.mxu0 0
          %2245 = vmatpush1.bf16.msra.mxu0 0
          %2246 = vmatprep.subr.bf16.mxu0 0
          %2247 = vmatpush1.bf16.msra.mxu0 0
          %2248 = vmatprep.subr.bf16.mxu0 0
          %2249 = vmatpush1.bf16.msra.mxu0 0
          %2250 = vmatprep.subr.bf16.mxu0 0
          %2251 = vmatpush1.bf16.msra.mxu0 0
          %2252 = vmatprep.subr.bf16.mxu0 0
          %2253 = vmatpush1.bf16.msra.mxu0 0
          %2254 = vmatprep.subr.bf16.mxu0 0
          %2255 = vmatpush1.bf16.msra.mxu0 0
          %2256 = vmatprep.subr.bf16.mxu0 0
          %2257 = vmatpush1.bf16.msra.mxu0 0
          %2258 = vmatprep.subr.bf16.mxu0 0
          %2259 = vmatpush1.bf16.msra.mxu0 0
          %2260 = vmatprep.subr.bf16.mxu0 0
          %2261 = vmatpush1.bf16.msra.mxu0 0
          %2262 = vmatprep.subr.bf16.mxu0 0
          %2263 = vmatpush1.bf16.msra.mxu0 0
          %2264 = vmatprep.subr.bf16.mxu0 0
          %2265 = vmatpush1.bf16.msra.mxu0 0
          %2266 = vmatprep.subr.bf16.mxu0 0
          %2267 = vmatpush1.bf16.msra.mxu0 0
          %2268 = vmatprep.mubr.bf16.mxu0 0
          %2269 = vmatmul.mubr.bf16.gmra.mrb[0].mxu0 %v2234
          %v2270 = vpop.f32.mrb[0].mxu0
          %v2271 = vadd.f32 0.0, %v2270
          %v2272 = vpop.f32.mrb[0].mxu0
          %v2273 = vpop.f32.mrb[0].mxu0
          %v2274 = vadd.f32 0.0, %v2273
          %v2275 = vpop.f32.mrb[0].mxu0
          %2276 = vdwg.mxu0
          %v2277 = vadd.f32 %v2210, %v2271
          %v2278 = vadd.f32 %v2211, %v2274
          %s2279 = scalar_lea.vmem %s2078, 3 [#allocation2]
          %v2280 = vld [vmem:[%s2279] ss:$2 sm:$0xff]
          %s2281 = scalar_lea.vmem %s2078, 19 [#allocation2]
          %v2282 = vld [vmem:[%s2281] ss:$2 sm:$0x3]
          %v2283 = vld [vmem:[%s3 + $0xb0] sm:$0xf]
          %v2284 = vld [vmem:[%s3 + $0xb4] sm:$0xf]
          %v2285 = vld [vmem:[%s3 + $0xb8] sm:$0xf]
          %v2286 = vld [vmem:[%s3 + $0xbc] sm:$0xf]
          %v2287 = vpack.c.bf16 %v2282, %v2280
          %v2292 = vunpack.c.l.b16 %v2283
          %v2293 = vunpack.c.l.b16 %v2284
          %v2294 = vunpack.c.l.b16 %v2285
          %v2295 = vunpack.c.l.b16 %v2286
          %v2296 = vpack.c.b16 %v2293, %v2292
          %v2297 = vpack.c.b16 %v2295, %v2294
          %v2301 = vsel %vm1558, %v2287, 0
          %2303 = vmatprep.subr.bf16.mxu0 0
          %2304 = vmatpush1.bf16.msra.mxu0 %v2296
          %2305 = vmatprep.subr.bf16.mxu0 0
          %2306 = vmatpush1.bf16.msra.mxu0 %v2297
          %2307 = vmatprep.subr.bf16.mxu0 0
          %2308 = vmatpush1.bf16.msra.mxu0 0
          %2309 = vmatprep.subr.bf16.mxu0 0
          %2310 = vmatpush1.bf16.msra.mxu0 0
          %2311 = vmatprep.subr.bf16.mxu0 0
          %2312 = vmatpush1.bf16.msra.mxu0 0
          %2313 = vmatprep.subr.bf16.mxu0 0
          %2314 = vmatpush1.bf16.msra.mxu0 0
          %2315 = vmatprep.subr.bf16.mxu0 0
          %2316 = vmatpush1.bf16.msra.mxu0 0
          %2317 = vmatprep.subr.bf16.mxu0 0
          %2318 = vmatpush1.bf16.msra.mxu0 0
          %2319 = vmatprep.subr.bf16.mxu0 0
          %2320 = vmatpush1.bf16.msra.mxu0 0
          %2321 = vmatprep.subr.bf16.mxu0 0
          %2322 = vmatpush1.bf16.msra.mxu0 0
          %2323 = vmatprep.subr.bf16.mxu0 0
          %2324 = vmatpush1.bf16.msra.mxu0 0
          %2325 = vmatprep.subr.bf16.mxu0 0
          %2326 = vmatpush1.bf16.msra.mxu0 0
          %2327 = vmatprep.subr.bf16.mxu0 0
          %2328 = vmatpush1.bf16.msra.mxu0 0
          %2329 = vmatprep.subr.bf16.mxu0 0
          %2330 = vmatpush1.bf16.msra.mxu0 0
          %2331 = vmatprep.subr.bf16.mxu0 0
          %2332 = vmatpush1.bf16.msra.mxu0 0
          %2333 = vmatprep.subr.bf16.mxu0 0
          %2334 = vmatpush1.bf16.msra.mxu0 0
          %2335 = vmatprep.mubr.bf16.mxu0 0
          %2336 = vmatmul.mubr.bf16.gmra.mrb[0].mxu0 %v2301
          %v2337 = vpop.f32.mrb[0].mxu0
          %v2338 = vadd.f32 0.0, %v2337
          %v2339 = vpop.f32.mrb[0].mxu0
          %v2340 = vpop.f32.mrb[0].mxu0
          %v2341 = vadd.f32 0.0, %v2340
          %v2342 = vpop.f32.mrb[0].mxu0
          %2343 = vdwg.mxu0
          %v2344 = vadd.f32 %v2277, %v2338
          %v2345 = vadd.f32 %v2278, %v2341
          %s2346 = sadd.s32 %s1535, 3
          %s2347 = smul.u32 %s2346, 24
          %s2348 = scalar_lea.vmem [#allocation2], %s2347
          %v2349 = vld [vmem:[%s2348] ss:$2 sm:$0xff]
          %s2350 = scalar_lea.vmem %s2348, 16 [#allocation2]
          %v2351 = vld [vmem:[%s2350] ss:$2 sm:$0x3]
          %v2352 = vld [vmem:[%s3 + $0xc0] sm:$0xf]
          %v2353 = vld [vmem:[%s3 + $0xc4] sm:$0xf]
          %v2354 = vld [vmem:[%s3 + $0xc8] sm:$0xf]
          %v2355 = vld [vmem:[%s3 + $0xcc] sm:$0xf]
          %v2356 = vpack.c.bf16 %v2351, %v2349
          %v2361 = vunpack.c.l.b16 %v2352
          %v2362 = vunpack.c.l.b16 %v2353
          %v2363 = vunpack.c.l.b16 %v2354
          %v2364 = vunpack.c.l.b16 %v2355
          %v2365 = vpack.c.b16 %v2362, %v2361
          %v2366 = vpack.c.b16 %v2364, %v2363
          %v2370 = vsel %vm1558, %v2356, 0
          %2372 = vmatprep.subr.bf16.mxu0 0
          %2373 = vmatpush1.bf16.msra.mxu0 %v2365
          %2374 = vmatprep.subr.bf16.mxu0 0
          %2375 = vmatpush1.bf16.msra.mxu0 %v2366
          %2376 = vmatprep.subr.bf16.mxu0 0
          %2377 = vmatpush1.bf16.msra.mxu0 0
          %2378 = vmatprep.subr.bf16.mxu0 0
          %2379 = vmatpush1.bf16.msra.mxu0 0
          %2380 = vmatprep.subr.bf16.mxu0 0
          %2381 = vmatpush1.bf16.msra.mxu0 0
          %2382 = vmatprep.subr.bf16.mxu0 0
          %2383 = vmatpush1.bf16.msra.mxu0 0
          %2384 = vmatprep.subr.bf16.mxu0 0
          %2385 = vmatpush1.bf16.msra.mxu0 0
          %2386 = vmatprep.subr.bf16.mxu0 0
          %2387 = vmatpush1.bf16.msra.mxu0 0
          %2388 = vmatprep.subr.bf16.mxu0 0
          %2389 = vmatpush1.bf16.msra.mxu0 0
          %2390 = vmatprep.subr.bf16.mxu0 0
          %2391 = vmatpush1.bf16.msra.mxu0 0
          %2392 = vmatprep.subr.bf16.mxu0 0
          %2393 = vmatpush1.bf16.msra.mxu0 0
          %2394 = vmatprep.subr.bf16.mxu0 0
          %2395 = vmatpush1.bf16.msra.mxu0 0
          %2396 = vmatprep.subr.bf16.mxu0 0
          %2397 = vmatpush1.bf16.msra.mxu0 0
          %2398 = vmatprep.subr.bf16.mxu0 0
          %2399 = vmatpush1.bf16.msra.mxu0 0
          %2400 = vmatprep.subr.bf16.mxu0 0
          %2401 = vmatpush1.bf16.msra.mxu0 0
          %2402 = vmatprep.subr.bf16.mxu0 0
          %2403 = vmatpush1.bf16.msra.mxu0 0
          %2404 = vmatprep.mubr.bf16.mxu0 0
          %2405 = vmatmul.mubr.bf16.gmra.mrb[0].mxu0 %v2370
          %v2406 = vpop.f32.mrb[0].mxu0
          %v2407 = vadd.f32 0.0, %v2406
          %v2408 = vpop.f32.mrb[0].mxu0
          %v2409 = vpop.f32.mrb[0].mxu0
          %v2410 = vadd.f32 0.0, %v2409
          %v2411 = vpop.f32.mrb[0].mxu0
          %2412 = vdwg.mxu0
          %v2413 = vadd.f32 %v2344, %v2407
          %v2414 = vadd.f32 %v2345, %v2410
          %s2415 = scalar_lea.vmem %s2348, 1 [#allocation2]
          %v2416 = vld [vmem:[%s2415] ss:$2 sm:$0xff]
          %s2417 = scalar_lea.vmem %s2348, 17 [#allocation2]
          %v2418 = vld [vmem:[%s2417] ss:$2 sm:$0x3]
          %v2419 = vld [vmem:[%s3 + $0xd0] sm:$0xf]
          %v2420 = vld [vmem:[%s3 + $0xd4] sm:$0xf]
          %v2421 = vld [vmem:[%s3 + $0xd8] sm:$0xf]
          %v2422 = vld [vmem:[%s3 + $0xdc] sm:$0xf]
          %v2423 = vpack.c.bf16 %v2418, %v2416
          %v2428 = vunpack.c.l.b16 %v2419
          %v2429 = vunpack.c.l.b16 %v2420
          %v2430 = vunpack.c.l.b16 %v2421
          %v2431 = vunpack.c.l.b16 %v2422
          %v2432 = vpack.c.b16 %v2429, %v2428
          %v2433 = vpack.c.b16 %v2431, %v2430
          %v2437 = vsel %vm1558, %v2423, 0
          %2439 = vmatprep.subr.bf16.mxu0 0
          %2440 = vmatpush1.bf16.msra.mxu0 %v2432
          %2441 = vmatprep.subr.bf16.mxu0 0
          %2442 = vmatpush1.bf16.msra.mxu0 %v2433
          %2443 = vmatprep.subr.bf16.mxu0 0
          %2444 = vmatpush1.bf16.msra.mxu0 0
          %2445 = vmatprep.subr.bf16.mxu0 0
          %2446 = vmatpush1.bf16.msra.mxu0 0
          %2447 = vmatprep.subr.bf16.mxu0 0
          %2448 = vmatpush1.bf16.msra.mxu0 0
          %2449 = vmatprep.subr.bf16.mxu0 0
          %2450 = vmatpush1.bf16.msra.mxu0 0
          %2451 = vmatprep.subr.bf16.mxu0 0
          %2452 = vmatpush1.bf16.msra.mxu0 0
          %2453 = vmatprep.subr.bf16.mxu0 0
          %2454 = vmatpush1.bf16.msra.mxu0 0
          %2455 = vmatprep.subr.bf16.mxu0 0
          %2456 = vmatpush1.bf16.msra.mxu0 0
          %2457 = vmatprep.subr.bf16.mxu0 0
          %2458 = vmatpush1.bf16.msra.mxu0 0
          %2459 = vmatprep.subr.bf16.mxu0 0
          %2460 = vmatpush1.bf16.msra.mxu0 0
          %2461 = vmatprep.subr.bf16.mxu0 0
          %2462 = vmatpush1.bf16.msra.mxu0 0
          %2463 = vmatprep.subr.bf16.mxu0 0
          %2464 = vmatpush1.bf16.msra.mxu0 0
          %2465 = vmatprep.subr.bf16.mxu0 0
          %2466 = vmatpush1.bf16.msra.mxu0 0
          %2467 = vmatprep.subr.bf16.mxu0 0
          %2468 = vmatpush1.bf16.msra.mxu0 0
          %2469 = vmatprep.subr.bf16.mxu0 0
          %2470 = vmatpush1.bf16.msra.mxu0 0
          %2471 = vmatprep.mubr.bf16.mxu0 0
          %2472 = vmatmul.mubr.bf16.gmra.mrb[0].mxu0 %v2437
          %v2473 = vpop.f32.mrb[0].mxu0
          %v2474 = vadd.f32 0.0, %v2473
          %v2475 = vpop.f32.mrb[0].mxu0
          %v2476 = vpop.f32.mrb[0].mxu0
          %v2477 = vadd.f32 0.0, %v2476
          %v2478 = vpop.f32.mrb[0].mxu0
          %2479 = vdwg.mxu0
          %v2480 = vadd.f32 %v2413, %v2474
          %v2481 = vadd.f32 %v2414, %v2477
          %s2482 = scalar_lea.vmem %s2348, 2 [#allocation2]
          %v2483 = vld [vmem:[%s2482] ss:$2 sm:$0xff]
          %s2484 = scalar_lea.vmem %s2348, 18 [#allocation2]
          %v2485 = vld [vmem:[%s2484] ss:$2 sm:$0x3]
          %v2486 = vld [vmem:[%s3 + $0xe0] sm:$0xf]
          %v2487 = vld [vmem:[%s3 + $0xe4] sm:$0xf]
          %v2488 = vld [vmem:[%s3 + $0xe8] sm:$0xf]
          %v2489 = vld [vmem:[%s3 + $0xec] sm:$0xf]
          %v2490 = vpack.c.bf16 %v2485, %v2483
          %v2495 = vunpack.c.l.b16 %v2486
          %v2496 = vunpack.c.l.b16 %v2487
          %v2497 = vunpack.c.l.b16 %v2488
          %v2498 = vunpack.c.l.b16 %v2489
          %v2499 = vpack.c.b16 %v2496, %v2495
          %v2500 = vpack.c.b16 %v2498, %v2497
          %v2504 = vsel %vm1558, %v2490, 0
          %2506 = vmatprep.subr.bf16.mxu0 0
          %2507 = vmatpush1.bf16.msra.mxu0 %v2499
          %2508 = vmatprep.subr.bf16.mxu0 0
          %2509 = vmatpush1.bf16.msra.mxu0 %v2500
          %2510 = vmatprep.subr.bf16.mxu0 0
          %2511 = vmatpush1.bf16.msra.mxu0 0
          %2512 = vmatprep.subr.bf16.mxu0 0
          %2513 = vmatpush1.bf16.msra.mxu0 0
          %2514 = vmatprep.subr.bf16.mxu0 0
          %2515 = vmatpush1.bf16.msra.mxu0 0
          %2516 = vmatprep.subr.bf16.mxu0 0
          %2517 = vmatpush1.bf16.msra.mxu0 0
          %2518 = vmatprep.subr.bf16.mxu0 0
          %2519 = vmatpush1.bf16.msra.mxu0 0
          %2520 = vmatprep.subr.bf16.mxu0 0
          %2521 = vmatpush1.bf16.msra.mxu0 0
          %2522 = vmatprep.subr.bf16.mxu0 0
          %2523 = vmatpush1.bf16.msra.mxu0 0
          %2524 = vmatprep.subr.bf16.mxu0 0
          %2525 = vmatpush1.bf16.msra.mxu0 0
          %2526 = vmatprep.subr.bf16.mxu0 0
          %2527 = vmatpush1.bf16.msra.mxu0 0
          %2528 = vmatprep.subr.bf16.mxu0 0
          %2529 = vmatpush1.bf16.msra.mxu0 0
          %2530 = vmatprep.subr.bf16.mxu0 0
          %2531 = vmatpush1.bf16.msra.mxu0 0
          %2532 = vmatprep.subr.bf16.mxu0 0
          %2533 = vmatpush1.bf16.msra.mxu0 0
          %2534 = vmatprep.subr.bf16.mxu0 0
          %2535 = vmatpush1.bf16.msra.mxu0 0
          %2536 = vmatprep.subr.bf16.mxu0 0
          %2537 = vmatpush1.bf16.msra.mxu0 0
          %2538 = vmatprep.mubr.bf16.mxu0 0
          %2539 = vmatmul.mubr.bf16.gmra.mrb[0].mxu0 %v2504
          %v2540 = vpop.f32.mrb[0].mxu0
          %v2541 = vadd.f32 0.0, %v2540
          %v2542 = vpop.f32.mrb[0].mxu0
          %v2543 = vpop.f32.mrb[0].mxu0
          %v2544 = vadd.f32 0.0, %v2543
          %v2545 = vpop.f32.mrb[0].mxu0
          %2546 = vdwg.mxu0
          %v2547 = vadd.f32 %v2480, %v2541
          %v2548 = vadd.f32 %v2481, %v2544
          %s2549 = scalar_lea.vmem %s2348, 3 [#allocation2]
          %v2550 = vld [vmem:[%s2549] ss:$2 sm:$0xff]
          %s2551 = scalar_lea.vmem %s2348, 19 [#allocation2]
          %v2552 = vld [vmem:[%s2551] ss:$2 sm:$0x3]
          %v2553 = vld [vmem:[%s3 + $0xf0] sm:$0xf]
          %v2554 = vld [vmem:[%s3 + $0xf4] sm:$0xf]
          %v2555 = vld [vmem:[%s3 + $0xf8] sm:$0xf]
          %v2556 = vld [vmem:[%s3 + $0xfc] sm:$0xf]
          %v2557 = vpack.c.bf16 %v2552, %v2550
          %v2562 = vunpack.c.l.b16 %v2553
          %v2563 = vunpack.c.l.b16 %v2554
          %v2564 = vunpack.c.l.b16 %v2555
          %v2565 = vunpack.c.l.b16 %v2556
          %v2566 = vpack.c.b16 %v2563, %v2562
          %v2567 = vpack.c.b16 %v2565, %v2564
          %v2571 = vsel %vm1558, %v2557, 0
          %2573 = vmatprep.subr.bf16.mxu0 0
          %2574 = vmatpush1.bf16.msra.mxu0 %v2566
          %2575 = vmatprep.subr.bf16.mxu0 0
          %2576 = vmatpush1.bf16.msra.mxu0 %v2567
          %2577 = vmatprep.subr.bf16.mxu0 0
          %2578 = vmatpush1.bf16.msra.mxu0 0
          %2579 = vmatprep.subr.bf16.mxu0 0
          %2580 = vmatpush1.bf16.msra.mxu0 0
          %2581 = vmatprep.subr.bf16.mxu0 0
          %2582 = vmatpush1.bf16.msra.mxu0 0
          %2583 = vmatprep.subr.bf16.mxu0 0
          %2584 = vmatpush1.bf16.msra.mxu0 0
          %2585 = vmatprep.subr.bf16.mxu0 0
          %2586 = vmatpush1.bf16.msra.mxu0 0
          %2587 = vmatprep.subr.bf16.mxu0 0
          %2588 = vmatpush1.bf16.msra.mxu0 0
          %2589 = vmatprep.subr.bf16.mxu0 0
          %2590 = vmatpush1.bf16.msra.mxu0 0
          %2591 = vmatprep.subr.bf16.mxu0 0
          %2592 = vmatpush1.bf16.msra.mxu0 0
          %2593 = vmatprep.subr.bf16.mxu0 0
          %2594 = vmatpush1.bf16.msra.mxu0 0
          %2595 = vmatprep.subr.bf16.mxu0 0
          %2596 = vmatpush1.bf16.msra.mxu0 0
          %2597 = vmatprep.subr.bf16.mxu0 0
          %2598 = vmatpush1.bf16.msra.mxu0 0
          %2599 = vmatprep.subr.bf16.mxu0 0
          %2600 = vmatpush1.bf16.msra.mxu0 0
          %2601 = vmatprep.subr.bf16.mxu0 0
          %2602 = vmatpush1.bf16.msra.mxu0 0
          %2603 = vmatprep.subr.bf16.mxu0 0
          %2604 = vmatpush1.bf16.msra.mxu0 0
          %2605 = vmatprep.mubr.bf16.mxu0 0
          %2606 = vmatmul.mubr.bf16.gmra.mrb[0].mxu0 %v2571
          %v2607 = vpop.f32.mrb[0].mxu0
          %v2608 = vadd.f32 0.0, %v2607
          %v2609 = vpop.f32.mrb[0].mxu0
          %v2610 = vpop.f32.mrb[0].mxu0
          %v2611 = vadd.f32 0.0, %v2610
          %v2612 = vpop.f32.mrb[0].mxu0
          %2613 = vdwg.mxu0
          %v2614 = vadd.f32 %v2547, %v2608
          %v2615 = vadd.f32 %v2548, %v2611
          %v2616 = vmax.f32 %v2614, 0.0
          %v2617 = vmax.f32 %v2615, 0.0
          %s2618 = smul.u32 %s1530, 16
          %s2619 = scalar_lea.vmem [#allocation3], %s2618
          %vm2620 = vcmask 523264
          %2621 = vst.msk [vmem:[%s2619] sm:$0xff] %vm2620, %v2616
          %vm2622 = vcmask 517120
          %2623 = vst.msk [vmem:[%s2619 + $0x8] sm:$0x3] %vm2622, %v2617
        $region76: #{conv_encoder_forward.1} parent=63 // loop_footer
          %s1534 = sadd.s32 1, %s1530
        $region77: #{conv_encoder_forward.1} parent=63 // loop_footer_branch
          %1529 = sbr.rel target = $region73
        $region78: #{conv_encoder_forward.1} parent=63 // loop_exit
          _
        %v2624 = vld [vmem:[%s6] sm:$0x1]
        %v2626 = vlaneseq
        %v2627 = vshrl.u32 %v2626, 7
        %v2628 = vsub.s32 0, %v2627
        %v2629 = vrot.slane %v2624, %v2628
        loop: start=0, step=1, limit=4
        $region79: #{conv_encoder_forward.1} parent=63 // loop_pre_header
          _
        $region80: #{conv_encoder_forward.1} parent=63 // loop_header
          %s2632 = sphi 0, %s2636
          %p2633 = scmp.ge.s32.totalorder %s2632, 4
        $region81: #{conv_encoder_forward.1} parent=63 // loop_header_branch
          %2635 = sbr.rel (%p2633) target = $region85
        $region82: #{conv_encoder_forward.1} parent=63 // loop_body
          %s2637 = smul.u32 %s2632, 2
          %s2638 = smul.u32 %s2637, 16
          %s2639 = scalar_lea.vmem [#allocation3], %s2638
          %v2640 = vld [vmem:[%s2639] ss:$2 sm:$0xf]
          %v2641 = vld [vmem:[%s5] sm:$0xf]
          %v2642 = vld [vmem:[%s5 + $0x4] sm:$0xf]
          %v2643 = vld [vmem:[%s5 + $0x8] sm:$0xf]
          %v2644 = vld [vmem:[%s5 + $0xc] sm:$0xf]
          %v2645 = vld [vmem:[%s5 + $0x10] sm:$0xf]
          %v2646 = vld [vmem:[%s5 + $0x14] sm:$0xf]
          %v2647 = vld [vmem:[%s5 + $0x18] sm:$0xf]
          %v2648 = vld [vmem:[%s5 + $0x1c] sm:$0xf]
          %v2649 = vpack.c.bf16 %v2640, %v2640
          %v2658 = vunpack.c.l.b16 %v2641
          %v2659 = vunpack.c.l.b16 %v2642
          %v2660 = vunpack.c.l.b16 %v2643
          %v2661 = vunpack.c.l.b16 %v2644
          %v2662 = vunpack.c.l.b16 %v2645
          %v2663 = vunpack.c.l.b16 %v2646
          %v2664 = vunpack.c.l.b16 %v2647
          %v2665 = vunpack.c.l.b16 %v2648
          %v2666 = vpack.c.b16 %v2659, %v2658
          %v2667 = vpack.c.b16 %v2661, %v2660
          %v2668 = vpack.c.b16 %v2663, %v2662
          %v2669 = vpack.c.b16 %v2665, %v2664
          %vm2674 = vcmask 523264
          %v2676 = vsel %vm2674, %v2649, 0
          %2678 = vmatprep.subr.bf16.mxu0 0
          %2679 = vmatpush1.bf16.msra.mxu0 %v2666
          %2680 = vmatprep.subr.bf16.mxu0 0
          %2681 = vmatpush1.bf16.msra.mxu0 %v2667
          %2682 = vmatprep.subr.bf16.mxu0 0
          %2683 = vmatpush1.bf16.msra.mxu0 %v2668
          %2684 = vmatprep.subr.bf16.mxu0 0
          %2685 = vmatpush1.bf16.msra.mxu0 %v2669
          %2686 = vmatprep.subr.bf16.mxu0 0
          %2687 = vmatpush1.bf16.msra.mxu0 0
          %2688 = vmatprep.subr.bf16.mxu0 0
          %2689 = vmatpush1.bf16.msra.mxu0 0
          %2690 = vmatprep.subr.bf16.mxu0 0
          %2691 = vmatpush1.bf16.msra.mxu0 0
          %2692 = vmatprep.subr.bf16.mxu0 0
          %2693 = vmatpush1.bf16.msra.mxu0 0
          %2694 = vmatprep.subr.bf16.mxu0 0
          %2695 = vmatpush1.bf16.msra.mxu0 0
          %2696 = vmatprep.subr.bf16.mxu0 0
          %2697 = vmatpush1.bf16.msra.mxu0 0
          %2698 = vmatprep.subr.bf16.mxu0 0
          %2699 = vmatpush1.bf16.msra.mxu0 0
          %2700 = vmatprep.subr.bf16.mxu0 0
          %2701 = vmatpush1.bf16.msra.mxu0 0
          %2702 = vmatprep.subr.bf16.mxu0 0
          %2703 = vmatpush1.bf16.msra.mxu0 0
          %2704 = vmatprep.subr.bf16.mxu0 0
          %2705 = vmatpush1.bf16.msra.mxu0 0
          %2706 = vmatprep.subr.bf16.mxu0 0
          %2707 = vmatpush1.bf16.msra.mxu0 0
          %2708 = vmatprep.subr.bf16.mxu0 0
          %2709 = vmatpush1.bf16.msra.mxu0 0
          %2710 = vmatprep.mubr.bf16.mxu0 0
          %2711 = vmatmul.mubr.bf16.gmra.mrb[0].mxu0 %v2676
          %v2712 = vpop.f32.mrb[0].mxu0
          %v2713 = vadd.f32 0.0, %v2712
          %v2714 = vpop.f32.mrb[0].mxu0
          %v2715 = vpop.f32.mrb[0].mxu0
          %v2716 = vpop.f32.mrb[0].mxu0
          %2717 = vdwg.mxu0
          %v2718 = vadd.f32 %v2629, %v2713
          %s2719 = scalar_lea.vmem %s2639, 1 [#allocation3]
          %v2720 = vld [vmem:[%s2719] ss:$2 sm:$0xf]
          %v2721 = vld [vmem:[%s5 + $0x20] sm:$0xf]
          %v2722 = vld [vmem:[%s5 + $0x24] sm:$0xf]
          %v2723 = vld [vmem:[%s5 + $0x28] sm:$0xf]
          %v2724 = vld [vmem:[%s5 + $0x2c] sm:$0xf]
          %v2725 = vld [vmem:[%s5 + $0x30] sm:$0xf]
          %v2726 = vld [vmem:[%s5 + $0x34] sm:$0xf]
          %v2727 = vld [vmem:[%s5 + $0x38] sm:$0xf]
          %v2728 = vld [vmem:[%s5 + $0x3c] sm:$0xf]
          %v2729 = vpack.c.bf16 %v2720, %v2720
          %v2738 = vunpack.c.l.b16 %v2721
          %v2739 = vunpack.c.l.b16 %v2722
          %v2740 = vunpack.c.l.b16 %v2723
          %v2741 = vunpack.c.l.b16 %v2724
          %v2742 = vunpack.c.l.b16 %v2725
          %v2743 = vunpack.c.l.b16 %v2726
          %v2744 = vunpack.c.l.b16 %v2727
          %v2745 = vunpack.c.l.b16 %v2728
          %v2746 = vpack.c.b16 %v2739, %v2738
          %v2747 = vpack.c.b16 %v2741, %v2740
          %v2748 = vpack.c.b16 %v2743, %v2742
          %v2749 = vpack.c.b16 %v2745, %v2744
          %v2755 = vsel %vm2674, %v2729, 0
          %2757 = vmatprep.subr.bf16.mxu0 0
          %2758 = vmatpush1.bf16.msra.mxu0 %v2746
          %2759 = vmatprep.subr.bf16.mxu0 0
          %2760 = vmatpush1.bf16.msra.mxu0 %v2747
          %2761 = vmatprep.subr.bf16.mxu0 0
          %2762 = vmatpush1.bf16.msra.mxu0 %v2748
          %2763 = vmatprep.subr.bf16.mxu0 0
          %2764 = vmatpush1.bf16.msra.mxu0 %v2749
          %2765 = vmatprep.subr.bf16.mxu0 0
          %2766 = vmatpush1.bf16.msra.mxu0 0
          %2767 = vmatprep.subr.bf16.mxu0 0
          %2768 = vmatpush1.bf16.msra.mxu0 0
          %2769 = vmatprep.subr.bf16.mxu0 0
          %2770 = vmatpush1.bf16.msra.mxu0 0
          %2771 = vmatprep.subr.bf16.mxu0 0
          %2772 = vmatpush1.bf16.msra.mxu0 0
          %2773 = vmatprep.subr.bf16.mxu0 0
          %2774 = vmatpush1.bf16.msra.mxu0 0
          %2775 = vmatprep.subr.bf16.mxu0 0
          %2776 = vmatpush1.bf16.msra.mxu0 0
          %2777 = vmatprep.subr.bf16.mxu0 0
          %2778 = vmatpush1.bf16.msra.mxu0 0
          %2779 = vmatprep.subr.bf16.mxu0 0
          %2780 = vmatpush1.bf16.msra.mxu0 0
          %2781 = vmatprep.subr.bf16.mxu0 0
          %2782 = vmatpush1.bf16.msra.mxu0 0
          %2783 = vmatprep.subr.bf16.mxu0 0
          %2784 = vmatpush1.bf16.msra.mxu0 0
          %2785 = vmatprep.subr.bf16.mxu0 0
          %2786 = vmatpush1.bf16.msra.mxu0 0
          %2787 = vmatprep.subr.bf16.mxu0 0
          %2788 = vmatpush1.bf16.msra.mxu0 0
          %2789 = vmatprep.mubr.bf16.mxu0 0
          %2790 = vmatmul.mubr.bf16.gmra.mrb[0].mxu0 %v2755
          %v2791 = vpop.f32.mrb[0].mxu0
          %v2792 = vadd.f32 0.0, %v2791
          %v2793 = vpop.f32.mrb[0].mxu0
          %v2794 = vpop.f32.mrb[0].mxu0
          %v2795 = vpop.f32.mrb[0].mxu0
          %2796 = vdwg.mxu0
          %v2797 = vadd.f32 %v2718, %v2792
          %s2798 = scalar_lea.vmem %s2639, 2 [#allocation3]
          %v2799 = vld [vmem:[%s2798] ss:$2 sm:$0xf]
          %v2800 = vld [vmem:[%s5 + $0x40] sm:$0xf]
          %v2801 = vld [vmem:[%s5 + $0x44] sm:$0xf]
          %v2802 = vld [vmem:[%s5 + $0x48] sm:$0xf]
          %v2803 = vld [vmem:[%s5 + $0x4c] sm:$0xf]
          %v2804 = vld [vmem:[%s5 + $0x50] sm:$0xf]
          %v2805 = vld [vmem:[%s5 + $0x54] sm:$0xf]
          %v2806 = vld [vmem:[%s5 + $0x58] sm:$0xf]
          %v2807 = vld [vmem:[%s5 + $0x5c] sm:$0xf]
          %v2808 = vpack.c.bf16 %v2799, %v2799
          %v2817 = vunpack.c.l.b16 %v2800
          %v2818 = vunpack.c.l.b16 %v2801
          %v2819 = vunpack.c.l.b16 %v2802
          %v2820 = vunpack.c.l.b16 %v2803
          %v2821 = vunpack.c.l.b16 %v2804
          %v2822 = vunpack.c.l.b16 %v2805
          %v2823 = vunpack.c.l.b16 %v2806
          %v2824 = vunpack.c.l.b16 %v2807
          %v2825 = vpack.c.b16 %v2818, %v2817
          %v2826 = vpack.c.b16 %v2820, %v2819
          %v2827 = vpack.c.b16 %v2822, %v2821
          %v2828 = vpack.c.b16 %v2824, %v2823
          %v2834 = vsel %vm2674, %v2808, 0
          %2836 = vmatprep.subr.bf16.mxu0 0
          %2837 = vmatpush1.bf16.msra.mxu0 %v2825
          %2838 = vmatprep.subr.bf16.mxu0 0
          %2839 = vmatpush1.bf16.msra.mxu0 %v2826
          %2840 = vmatprep.subr.bf16.mxu0 0
          %2841 = vmatpush1.bf16.msra.mxu0 %v2827
          %2842 = vmatprep.subr.bf16.mxu0 0
          %2843 = vmatpush1.bf16.msra.mxu0 %v2828
          %2844 = vmatprep.subr.bf16.mxu0 0
          %2845 = vmatpush1.bf16.msra.mxu0 0
          %2846 = vmatprep.subr.bf16.mxu0 0
          %2847 = vmatpush1.bf16.msra.mxu0 0
          %2848 = vmatprep.subr.bf16.mxu0 0
          %2849 = vmatpush1.bf16.msra.mxu0 0
          %2850 = vmatprep.subr.bf16.mxu0 0
          %2851 = vmatpush1.bf16.msra.mxu0 0
          %2852 = vmatprep.subr.bf16.mxu0 0
          %2853 = vmatpush1.bf16.msra.mxu0 0
          %2854 = vmatprep.subr.bf16.mxu0 0
          %2855 = vmatpush1.bf16.msra.mxu0 0
          %2856 = vmatprep.subr.bf16.mxu0 0
          %2857 = vmatpush1.bf16.msra.mxu0 0
          %2858 = vmatprep.subr.bf16.mxu0 0
          %2859 = vmatpush1.bf16.msra.mxu0 0
          %2860 = vmatprep.subr.bf16.mxu0 0
          %2861 = vmatpush1.bf16.msra.mxu0 0
          %2862 = vmatprep.subr.bf16.mxu0 0
          %2863 = vmatpush1.bf16.msra.mxu0 0
          %2864 = vmatprep.subr.bf16.mxu0 0
          %2865 = vmatpush1.bf16.msra.mxu0 0
          %2866 = vmatprep.subr.bf16.mxu0 0
          %2867 = vmatpush1.bf16.msra.mxu0 0
          %2868 = vmatprep.mubr.bf16.mxu0 0
          %2869 = vmatmul.mubr.bf16.gmra.mrb[0].mxu0 %v2834
          %v2870 = vpop.f32.mrb[0].mxu0
          %v2871 = vadd.f32 0.0, %v2870
          %v2872 = vpop.f32.mrb[0].mxu0
          %v2873 = vpop.f32.mrb[0].mxu0
          %v2874 = vpop.f32.mrb[0].mxu0
          %2875 = vdwg.mxu0
          %v2876 = vadd.f32 %v2797, %v2871
          %s2877 = scalar_lea.vmem %s2639, 3 [#allocation3]
          %v2878 = vld [vmem:[%s2877] ss:$2 sm:$0xf]
          %v2879 = vld [vmem:[%s5 + $0x60] sm:$0xf]
          %v2880 = vld [vmem:[%s5 + $0x64] sm:$0xf]
          %v2881 = vld [vmem:[%s5 + $0x68] sm:$0xf]
          %v2882 = vld [vmem:[%s5 + $0x6c] sm:$0xf]
          %v2883 = vld [vmem:[%s5 + $0x70] sm:$0xf]
          %v2884 = vld [vmem:[%s5 + $0x74] sm:$0xf]
          %v2885 = vld [vmem:[%s5 + $0x78] sm:$0xf]
          %v2886 = vld [vmem:[%s5 + $0x7c] sm:$0xf]
          %v2887 = vpack.c.bf16 %v2878, %v2878
          %v2896 = vunpack.c.l.b16 %v2879
          %v2897 = vunpack.c.l.b16 %v2880
          %v2898 = vunpack.c.l.b16 %v2881
          %v2899 = vunpack.c.l.b16 %v2882
          %v2900 = vunpack.c.l.b16 %v2883
          %v2901 = vunpack.c.l.b16 %v2884
          %v2902 = vunpack.c.l.b16 %v2885
          %v2903 = vunpack.c.l.b16 %v2886
          %v2904 = vpack.c.b16 %v2897, %v2896
          %v2905 = vpack.c.b16 %v2899, %v2898
          %v2906 = vpack.c.b16 %v2901, %v2900
          %v2907 = vpack.c.b16 %v2903, %v2902
          %v2913 = vsel %vm2674, %v2887, 0
          %2915 = vmatprep.subr.bf16.mxu0 0
          %2916 = vmatpush1.bf16.msra.mxu0 %v2904
          %2917 = vmatprep.subr.bf16.mxu0 0
          %2918 = vmatpush1.bf16.msra.mxu0 %v2905
          %2919 = vmatprep.subr.bf16.mxu0 0
          %2920 = vmatpush1.bf16.msra.mxu0 %v2906
          %2921 = vmatprep.subr.bf16.mxu0 0
          %2922 = vmatpush1.bf16.msra.mxu0 %v2907
          %2923 = vmatprep.subr.bf16.mxu0 0
          %2924 = vmatpush1.bf16.msra.mxu0 0
          %2925 = vmatprep.subr.bf16.mxu0 0
          %2926 = vmatpush1.bf16.msra.mxu0 0
          %2927 = vmatprep.subr.bf16.mxu0 0
          %2928 = vmatpush1.bf16.msra.mxu0 0
          %2929 = vmatprep.subr.bf16.mxu0 0
          %2930 = vmatpush1.bf16.msra.mxu0 0
          %2931 = vmatprep.subr.bf16.mxu0 0
          %2932 = vmatpush1.bf16.msra.mxu0 0
          %2933 = vmatprep.subr.bf16.mxu0 0
          %2934 = vmatpush1.bf16.msra.mxu0 0
          %2935 = vmatprep.subr.bf16.mxu0 0
          %2936 = vmatpush1.bf16.msra.mxu0 0
          %2937 = vmatprep.subr.bf16.mxu0 0
          %2938 = vmatpush1.bf16.msra.mxu0 0
          %2939 = vmatprep.subr.bf16.mxu0 0
          %2940 = vmatpush1.bf16.msra.mxu0 0
          %2941 = vmatprep.subr.bf16.mxu0 0
          %2942 = vmatpush1.bf16.msra.mxu0 0
          %2943 = vmatprep.subr.bf16.mxu0 0
          %2944 = vmatpush1.bf16.msra.mxu0 0
          %2945 = vmatprep.subr.bf16.mxu0 0
          %2946 = vmatpush1.bf16.msra.mxu0 0
          %2947 = vmatprep.mubr.bf16.mxu0 0
          %2948 = vmatmul.mubr.bf16.gmra.mrb[0].mxu0 %v2913
          %v2949 = vpop.f32.mrb[0].mxu0
          %v2950 = vadd.f32 0.0, %v2949
          %v2951 = vpop.f32.mrb[0].mxu0
          %v2952 = vpop.f32.mrb[0].mxu0
          %v2953 = vpop.f32.mrb[0].mxu0
          %2954 = vdwg.mxu0
          %v2955 = vadd.f32 %v2876, %v2950
          %s2956 = sadd.s32 %s2637, 1
          %s2957 = smul.u32 %s2956, 16
          %s2958 = scalar_lea.vmem [#allocation3], %s2957
          %v2959 = vld [vmem:[%s2958] ss:$2 sm:$0xf]
          %v2960 = vld [vmem:[%s5 + $0x80] sm:$0xf]
          %v2961 = vld [vmem:[%s5 + $0x84] sm:$0xf]
          %v2962 = vld [vmem:[%s5 + $0x88] sm:$0xf]
          %v2963 = vld [vmem:[%s5 + $0x8c] sm:$0xf]
          %v2964 = vld [vmem:[%s5 + $0x90] sm:$0xf]
          %v2965 = vld [vmem:[%s5 + $0x94] sm:$0xf]
          %v2966 = vld [vmem:[%s5 + $0x98] sm:$0xf]
          %v2967 = vld [vmem:[%s5 + $0x9c] sm:$0xf]
          %v2968 = vpack.c.bf16 %v2959, %v2959
          %v2977 = vunpack.c.l.b16 %v2960
          %v2978 = vunpack.c.l.b16 %v2961
          %v2979 = vunpack.c.l.b16 %v2962
          %v2980 = vunpack.c.l.b16 %v2963
          %v2981 = vunpack.c.l.b16 %v2964
          %v2982 = vunpack.c.l.b16 %v2965
          %v2983 = vunpack.c.l.b16 %v2966
          %v2984 = vunpack.c.l.b16 %v2967
          %v2985 = vpack.c.b16 %v2978, %v2977
          %v2986 = vpack.c.b16 %v2980, %v2979
          %v2987 = vpack.c.b16 %v2982, %v2981
          %v2988 = vpack.c.b16 %v2984, %v2983
          %v2994 = vsel %vm2674, %v2968, 0
          %2996 = vmatprep.subr.bf16.mxu0 0
          %2997 = vmatpush1.bf16.msra.mxu0 %v2985
          %2998 = vmatprep.subr.bf16.mxu0 0
          %2999 = vmatpush1.bf16.msra.mxu0 %v2986
          %3000 = vmatprep.subr.bf16.mxu0 0
          %3001 = vmatpush1.bf16.msra.mxu0 %v2987
          %3002 = vmatprep.subr.bf16.mxu0 0
          %3003 = vmatpush1.bf16.msra.mxu0 %v2988
          %3004 = vmatprep.subr.bf16.mxu0 0
          %3005 = vmatpush1.bf16.msra.mxu0 0
          %3006 = vmatprep.subr.bf16.mxu0 0
          %3007 = vmatpush1.bf16.msra.mxu0 0
          %3008 = vmatprep.subr.bf16.mxu0 0
          %3009 = vmatpush1.bf16.msra.mxu0 0
          %3010 = vmatprep.subr.bf16.mxu0 0
          %3011 = vmatpush1.bf16.msra.mxu0 0
          %3012 = vmatprep.subr.bf16.mxu0 0
          %3013 = vmatpush1.bf16.msra.mxu0 0
          %3014 = vmatprep.subr.bf16.mxu0 0
          %3015 = vmatpush1.bf16.msra.mxu0 0
          %3016 = vmatprep.subr.bf16.mxu0 0
          %3017 = vmatpush1.bf16.msra.mxu0 0
          %3018 = vmatprep.subr.bf16.mxu0 0
          %3019 = vmatpush1.bf16.msra.mxu0 0
          %3020 = vmatprep.subr.bf16.mxu0 0
          %3021 = vmatpush1.bf16.msra.mxu0 0
          %3022 = vmatprep.subr.bf16.mxu0 0
          %3023 = vmatpush1.bf16.msra.mxu0 0
          %3024 = vmatprep.subr.bf16.mxu0 0
          %3025 = vmatpush1.bf16.msra.mxu0 0
          %3026 = vmatprep.subr.bf16.mxu0 0
          %3027 = vmatpush1.bf16.msra.mxu0 0
          %3028 = vmatprep.mubr.bf16.mxu0 0
          %3029 = vmatmul.mubr.bf16.gmra.mrb[0].mxu0 %v2994
          %v3030 = vpop.f32.mrb[0].mxu0
          %v3031 = vadd.f32 0.0, %v3030
          %v3032 = vpop.f32.mrb[0].mxu0
          %v3033 = vpop.f32.mrb[0].mxu0
          %v3034 = vpop.f32.mrb[0].mxu0
          %3035 = vdwg.mxu0
          %v3036 = vadd.f32 %v2955, %v3031
          %s3037 = scalar_lea.vmem %s2958, 1 [#allocation3]
          %v3038 = vld [vmem:[%s3037] ss:$2 sm:$0xf]
          %v3039 = vld [vmem:[%s5 + $0xa0] sm:$0xf]
          %v3040 = vld [vmem:[%s5 + $0xa4] sm:$0xf]
          %v3041 = vld [vmem:[%s5 + $0xa8] sm:$0xf]
          %v3042 = vld [vmem:[%s5 + $0xac] sm:$0xf]
          %v3043 = vld [vmem:[%s5 + $0xb0] sm:$0xf]
          %v3044 = vld [vmem:[%s5 + $0xb4] sm:$0xf]
          %v3045 = vld [vmem:[%s5 + $0xb8] sm:$0xf]
          %v3046 = vld [vmem:[%s5 + $0xbc] sm:$0xf]
          %v3047 = vpack.c.bf16 %v3038, %v3038
          %v3056 = vunpack.c.l.b16 %v3039
          %v3057 = vunpack.c.l.b16 %v3040
          %v3058 = vunpack.c.l.b16 %v3041
          %v3059 = vunpack.c.l.b16 %v3042
          %v3060 = vunpack.c.l.b16 %v3043
          %v3061 = vunpack.c.l.b16 %v3044
          %v3062 = vunpack.c.l.b16 %v3045
          %v3063 = vunpack.c.l.b16 %v3046
          %v3064 = vpack.c.b16 %v3057, %v3056
          %v3065 = vpack.c.b16 %v3059, %v3058
          %v3066 = vpack.c.b16 %v3061, %v3060
          %v3067 = vpack.c.b16 %v3063, %v3062
          %v3073 = vsel %vm2674, %v3047, 0
          %3075 = vmatprep.subr.bf16.mxu0 0
          %3076 = vmatpush1.bf16.msra.mxu0 %v3064
          %3077 = vmatprep.subr.bf16.mxu0 0
          %3078 = vmatpush1.bf16.msra.mxu0 %v3065
          %3079 = vmatprep.subr.bf16.mxu0 0
          %3080 = vmatpush1.bf16.msra.mxu0 %v3066
          %3081 = vmatprep.subr.bf16.mxu0 0
          %3082 = vmatpush1.bf16.msra.mxu0 %v3067
          %3083 = vmatprep.subr.bf16.mxu0 0
          %3084 = vmatpush1.bf16.msra.mxu0 0
          %3085 = vmatprep.subr.bf16.mxu0 0
          %3086 = vmatpush1.bf16.msra.mxu0 0
          %3087 = vmatprep.subr.bf16.mxu0 0
          %3088 = vmatpush1.bf16.msra.mxu0 0
          %3089 = vmatprep.subr.bf16.mxu0 0
          %3090 = vmatpush1.bf16.msra.mxu0 0
          %3091 = vmatprep.subr.bf16.mxu0 0
          %3092 = vmatpush1.bf16.msra.mxu0 0
          %3093 = vmatprep.subr.bf16.mxu0 0
          %3094 = vmatpush1.bf16.msra.mxu0 0
          %3095 = vmatprep.subr.bf16.mxu0 0
          %3096 = vmatpush1.bf16.msra.mxu0 0
          %3097 = vmatprep.subr.bf16.mxu0 0
          %3098 = vmatpush1.bf16.msra.mxu0 0
          %3099 = vmatprep.subr.bf16.mxu0 0
          %3100 = vmatpush1.bf16.msra.mxu0 0
          %3101 = vmatprep.subr.bf16.mxu0 0
          %3102 = vmatpush1.bf16.msra.mxu0 0
          %3103 = vmatprep.subr.bf16.mxu0 0
          %3104 = vmatpush1.bf16.msra.mxu0 0
          %3105 = vmatprep.subr.bf16.mxu0 0
          %3106 = vmatpush1.bf16.msra.mxu0 0
          %3107 = vmatprep.mubr.bf16.mxu0 0
          %3108 = vmatmul.mubr.bf16.gmra.mrb[0].mxu0 %v3073
          %v3109 = vpop.f32.mrb[0].mxu0
          %v3110 = vadd.f32 0.0, %v3109
          %v3111 = vpop.f32.mrb[0].mxu0
          %v3112 = vpop.f32.mrb[0].mxu0
          %v3113 = vpop.f32.mrb[0].mxu0
          %3114 = vdwg.mxu0
          %v3115 = vadd.f32 %v3036, %v3110
          %s3116 = scalar_lea.vmem %s2958, 2 [#allocation3]
          %v3117 = vld [vmem:[%s3116] ss:$2 sm:$0xf]
          %v3118 = vld [vmem:[%s5 + $0xc0] sm:$0xf]
          %v3119 = vld [vmem:[%s5 + $0xc4] sm:$0xf]
          %v3120 = vld [vmem:[%s5 + $0xc8] sm:$0xf]
          %v3121 = vld [vmem:[%s5 + $0xcc] sm:$0xf]
          %v3122 = vld [vmem:[%s5 + $0xd0] sm:$0xf]
          %v3123 = vld [vmem:[%s5 + $0xd4] sm:$0xf]
          %v3124 = vld [vmem:[%s5 + $0xd8] sm:$0xf]
          %v3125 = vld [vmem:[%s5 + $0xdc] sm:$0xf]
          %v3126 = vpack.c.bf16 %v3117, %v3117
          %v3135 = vunpack.c.l.b16 %v3118
          %v3136 = vunpack.c.l.b16 %v3119
          %v3137 = vunpack.c.l.b16 %v3120
          %v3138 = vunpack.c.l.b16 %v3121
          %v3139 = vunpack.c.l.b16 %v3122
          %v3140 = vunpack.c.l.b16 %v3123
          %v3141 = vunpack.c.l.b16 %v3124
          %v3142 = vunpack.c.l.b16 %v3125
          %v3143 = vpack.c.b16 %v3136, %v3135
          %v3144 = vpack.c.b16 %v3138, %v3137
          %v3145 = vpack.c.b16 %v3140, %v3139
          %v3146 = vpack.c.b16 %v3142, %v3141
          %v3152 = vsel %vm2674, %v3126, 0
          %3154 = vmatprep.subr.bf16.mxu0 0
          %3155 = vmatpush1.bf16.msra.mxu0 %v3143
          %3156 = vmatprep.subr.bf16.mxu0 0
          %3157 = vmatpush1.bf16.msra.mxu0 %v3144
          %3158 = vmatprep.subr.bf16.mxu0 0
          %3159 = vmatpush1.bf16.msra.mxu0 %v3145
          %3160 = vmatprep.subr.bf16.mxu0 0
          %3161 = vmatpush1.bf16.msra.mxu0 %v3146
          %3162 = vmatprep.subr.bf16.mxu0 0
          %3163 = vmatpush1.bf16.msra.mxu0 0
          %3164 = vmatprep.subr.bf16.mxu0 0
          %3165 = vmatpush1.bf16.msra.mxu0 0
          %3166 = vmatprep.subr.bf16.mxu0 0
          %3167 = vmatpush1.bf16.msra.mxu0 0
          %3168 = vmatprep.subr.bf16.mxu0 0
          %3169 = vmatpush1.bf16.msra.mxu0 0
          %3170 = vmatprep.subr.bf16.mxu0 0
          %3171 = vmatpush1.bf16.msra.mxu0 0
          %3172 = vmatprep.subr.bf16.mxu0 0
          %3173 = vmatpush1.bf16.msra.mxu0 0
          %3174 = vmatprep.subr.bf16.mxu0 0
          %3175 = vmatpush1.bf16.msra.mxu0 0
          %3176 = vmatprep.subr.bf16.mxu0 0
          %3177 = vmatpush1.bf16.msra.mxu0 0
          %3178 = vmatprep.subr.bf16.mxu0 0
          %3179 = vmatpush1.bf16.msra.mxu0 0
          %3180 = vmatprep.subr.bf16.mxu0 0
          %3181 = vmatpush1.bf16.msra.mxu0 0
          %3182 = vmatprep.subr.bf16.mxu0 0
          %3183 = vmatpush1.bf16.msra.mxu0 0
          %3184 = vmatprep.subr.bf16.mxu0 0
          %3185 = vmatpush1.bf16.msra.mxu0 0
          %3186 = vmatprep.mubr.bf16.mxu0 0
          %3187 = vmatmul.mubr.bf16.gmra.mrb[0].mxu0 %v3152
          %v3188 = vpop.f32.mrb[0].mxu0
          %v3189 = vadd.f32 0.0, %v3188
          %v3190 = vpop.f32.mrb[0].mxu0
          %v3191 = vpop.f32.mrb[0].mxu0
          %v3192 = vpop.f32.mrb[0].mxu0
          %3193 = vdwg.mxu0
          %v3194 = vadd.f32 %v3115, %v3189
          %s3195 = scalar_lea.vmem %s2958, 3 [#allocation3]
          %v3196 = vld [vmem:[%s3195] ss:$2 sm:$0xf]
          %v3197 = vld [vmem:[%s5 + $0xe0] sm:$0xf]
          %v3198 = vld [vmem:[%s5 + $0xe4] sm:$0xf]
          %v3199 = vld [vmem:[%s5 + $0xe8] sm:$0xf]
          %v3200 = vld [vmem:[%s5 + $0xec] sm:$0xf]
          %v3201 = vld [vmem:[%s5 + $0xf0] sm:$0xf]
          %v3202 = vld [vmem:[%s5 + $0xf4] sm:$0xf]
          %v3203 = vld [vmem:[%s5 + $0xf8] sm:$0xf]
          %v3204 = vld [vmem:[%s5 + $0xfc] sm:$0xf]
          %v3205 = vpack.c.bf16 %v3196, %v3196
          %v3214 = vunpack.c.l.b16 %v3197
          %v3215 = vunpack.c.l.b16 %v3198
          %v3216 = vunpack.c.l.b16 %v3199
          %v3217 = vunpack.c.l.b16 %v3200
          %v3218 = vunpack.c.l.b16 %v3201
          %v3219 = vunpack.c.l.b16 %v3202
          %v3220 = vunpack.c.l.b16 %v3203
          %v3221 = vunpack.c.l.b16 %v3204
          %v3222 = vpack.c.b16 %v3215, %v3214
          %v3223 = vpack.c.b16 %v3217, %v3216
          %v3224 = vpack.c.b16 %v3219, %v3218
          %v3225 = vpack.c.b16 %v3221, %v3220
          %v3231 = vsel %vm2674, %v3205, 0
          %3233 = vmatprep.subr.bf16.mxu0 0
          %3234 = vmatpush1.bf16.msra.mxu0 %v3222
          %3235 = vmatprep.subr.bf16.mxu0 0
          %3236 = vmatpush1.bf16.msra.mxu0 %v3223
          %3237 = vmatprep.subr.bf16.mxu0 0
          %3238 = vmatpush1.bf16.msra.mxu0 %v3224
          %3239 = vmatprep.subr.bf16.mxu0 0
          %3240 = vmatpush1.bf16.msra.mxu0 %v3225
          %3241 = vmatprep.subr.bf16.mxu0 0
          %3242 = vmatpush1.bf16.msra.mxu0 0
          %3243 = vmatprep.subr.bf16.mxu0 0
          %3244 = vmatpush1.bf16.msra.mxu0 0
          %3245 = vmatprep.subr.bf16.mxu0 0
          %3246 = vmatpush1.bf16.msra.mxu0 0
          %3247 = vmatprep.subr.bf16.mxu0 0
          %3248 = vmatpush1.bf16.msra.mxu0 0
          %3249 = vmatprep.subr.bf16.mxu0 0
          %3250 = vmatpush1.bf16.msra.mxu0 0
          %3251 = vmatprep.subr.bf16.mxu0 0
          %3252 = vmatpush1.bf16.msra.mxu0 0
          %3253 = vmatprep.subr.bf16.mxu0 0
          %3254 = vmatpush1.bf16.msra.mxu0 0
          %3255 = vmatprep.subr.bf16.mxu0 0
          %3256 = vmatpush1.bf16.msra.mxu0 0
          %3257 = vmatprep.subr.bf16.mxu0 0
          %3258 = vmatpush1.bf16.msra.mxu0 0
          %3259 = vmatprep.subr.bf16.mxu0 0
          %3260 = vmatpush1.bf16.msra.mxu0 0
          %3261 = vmatprep.subr.bf16.mxu0 0
          %3262 = vmatpush1.bf16.msra.mxu0 0
          %3263 = vmatprep.subr.bf16.mxu0 0
          %3264 = vmatpush1.bf16.msra.mxu0 0
          %3265 = vmatprep.mubr.bf16.mxu0 0
          %3266 = vmatmul.mubr.bf16.gmra.mrb[0].mxu0 %v3231
          %v3267 = vpop.f32.mrb[0].mxu0
          %v3268 = vadd.f32 0.0, %v3267
          %v3269 = vpop.f32.mrb[0].mxu0
          %v3270 = vpop.f32.mrb[0].mxu0
          %v3271 = vpop.f32.mrb[0].mxu0
          %3272 = vdwg.mxu0
          %v3273 = vadd.f32 %v3194, %v3268
          %s3274 = sadd.s32 %s2637, 2
          %s3275 = smul.u32 %s3274, 16
          %s3276 = scalar_lea.vmem [#allocation3], %s3275
          %v3277 = vld [vmem:[%s3276] ss:$2 sm:$0xf]
          %v3278 = vld [vmem:[%s5 + $0x100] sm:$0xf]
          %v3279 = vld [vmem:[%s5 + $0x104] sm:$0xf]
          %v3280 = vld [vmem:[%s5 + $0x108] sm:$0xf]
          %v3281 = vld [vmem:[%s5 + $0x10c] sm:$0xf]
          %v3282 = vld [vmem:[%s5 + $0x110] sm:$0xf]
          %v3283 = vld [vmem:[%s5 + $0x114] sm:$0xf]
          %v3284 = vld [vmem:[%s5 + $0x118] sm:$0xf]
          %v3285 = vld [vmem:[%s5 + $0x11c] sm:$0xf]
          %v3286 = vpack.c.bf16 %v3277, %v3277
          %v3295 = vunpack.c.l.b16 %v3278
          %v3296 = vunpack.c.l.b16 %v3279
          %v3297 = vunpack.c.l.b16 %v3280
          %v3298 = vunpack.c.l.b16 %v3281
          %v3299 = vunpack.c.l.b16 %v3282
          %v3300 = vunpack.c.l.b16 %v3283
          %v3301 = vunpack.c.l.b16 %v3284
          %v3302 = vunpack.c.l.b16 %v3285
          %v3303 = vpack.c.b16 %v3296, %v3295
          %v3304 = vpack.c.b16 %v3298, %v3297
          %v3305 = vpack.c.b16 %v3300, %v3299
          %v3306 = vpack.c.b16 %v3302, %v3301
          %v3312 = vsel %vm2674, %v3286, 0
          %3314 = vmatprep.subr.bf16.mxu0 0
          %3315 = vmatpush1.bf16.msra.mxu0 %v3303
          %3316 = vmatprep.subr.bf16.mxu0 0
          %3317 = vmatpush1.bf16.msra.mxu0 %v3304
          %3318 = vmatprep.subr.bf16.mxu0 0
          %3319 = vmatpush1.bf16.msra.mxu0 %v3305
          %3320 = vmatprep.subr.bf16.mxu0 0
          %3321 = vmatpush1.bf16.msra.mxu0 %v3306
          %3322 = vmatprep.subr.bf16.mxu0 0
          %3323 = vmatpush1.bf16.msra.mxu0 0
          %3324 = vmatprep.subr.bf16.mxu0 0
          %3325 = vmatpush1.bf16.msra.mxu0 0
          %3326 = vmatprep.subr.bf16.mxu0 0
          %3327 = vmatpush1.bf16.msra.mxu0 0
          %3328 = vmatprep.subr.bf16.mxu0 0
          %3329 = vmatpush1.bf16.msra.mxu0 0
          %3330 = vmatprep.subr.bf16.mxu0 0
          %3331 = vmatpush1.bf16.msra.mxu0 0
          %3332 = vmatprep.subr.bf16.mxu0 0
          %3333 = vmatpush1.bf16.msra.mxu0 0
          %3334 = vmatprep.subr.bf16.mxu0 0
          %3335 = vmatpush1.bf16.msra.mxu0 0
          %3336 = vmatprep.subr.bf16.mxu0 0
          %3337 = vmatpush1.bf16.msra.mxu0 0
          %3338 = vmatprep.subr.bf16.mxu0 0
          %3339 = vmatpush1.bf16.msra.mxu0 0
          %3340 = vmatprep.subr.bf16.mxu0 0
          %3341 = vmatpush1.bf16.msra.mxu0 0
          %3342 = vmatprep.subr.bf16.mxu0 0
          %3343 = vmatpush1.bf16.msra.mxu0 0
          %3344 = vmatprep.subr.bf16.mxu0 0
          %3345 = vmatpush1.bf16.msra.mxu0 0
          %3346 = vmatprep.mubr.bf16.mxu0 0
          %3347 = vmatmul.mubr.bf16.gmra.mrb[0].mxu0 %v3312
          %v3348 = vpop.f32.mrb[0].mxu0
          %v3349 = vadd.f32 0.0, %v3348
          %v3350 = vpop.f32.mrb[0].mxu0
          %v3351 = vpop.f32.mrb[0].mxu0
          %v3352 = vpop.f32.mrb[0].mxu0
          %3353 = vdwg.mxu0
          %v3354 = vadd.f32 %v3273, %v3349
          %s3355 = scalar_lea.vmem %s3276, 1 [#allocation3]
          %v3356 = vld [vmem:[%s3355] ss:$2 sm:$0xf]
          %v3357 = vld [vmem:[%s5 + $0x120] sm:$0xf]
          %v3358 = vld [vmem:[%s5 + $0x124] sm:$0xf]
          %v3359 = vld [vmem:[%s5 + $0x128] sm:$0xf]
          %v3360 = vld [vmem:[%s5 + $0x12c] sm:$0xf]
          %v3361 = vld [vmem:[%s5 + $0x130] sm:$0xf]
          %v3362 = vld [vmem:[%s5 + $0x134] sm:$0xf]
          %v3363 = vld [vmem:[%s5 + $0x138] sm:$0xf]
          %v3364 = vld [vmem:[%s5 + $0x13c] sm:$0xf]
          %v3365 = vpack.c.bf16 %v3356, %v3356
          %v3374 = vunpack.c.l.b16 %v3357
          %v3375 = vunpack.c.l.b16 %v3358
          %v3376 = vunpack.c.l.b16 %v3359
          %v3377 = vunpack.c.l.b16 %v3360
          %v3378 = vunpack.c.l.b16 %v3361
          %v3379 = vunpack.c.l.b16 %v3362
          %v3380 = vunpack.c.l.b16 %v3363
          %v3381 = vunpack.c.l.b16 %v3364
          %v3382 = vpack.c.b16 %v3375, %v3374
          %v3383 = vpack.c.b16 %v3377, %v3376
          %v3384 = vpack.c.b16 %v3379, %v3378
          %v3385 = vpack.c.b16 %v3381, %v3380
          %v3391 = vsel %vm2674, %v3365, 0
          %3393 = vmatprep.subr.bf16.mxu0 0
          %3394 = vmatpush1.bf16.msra.mxu0 %v3382
          %3395 = vmatprep.subr.bf16.mxu0 0
          %3396 = vmatpush1.bf16.msra.mxu0 %v3383
          %3397 = vmatprep.subr.bf16.mxu0 0
          %3398 = vmatpush1.bf16.msra.mxu0 %v3384
          %3399 = vmatprep.subr.bf16.mxu0 0
          %3400 = vmatpush1.bf16.msra.mxu0 %v3385
          %3401 = vmatprep.subr.bf16.mxu0 0
          %3402 = vmatpush1.bf16.msra.mxu0 0
          %3403 = vmatprep.subr.bf16.mxu0 0
          %3404 = vmatpush1.bf16.msra.mxu0 0
          %3405 = vmatprep.subr.bf16.mxu0 0
          %3406 = vmatpush1.bf16.msra.mxu0 0
          %3407 = vmatprep.subr.bf16.mxu0 0
          %3408 = vmatpush1.bf16.msra.mxu0 0
          %3409 = vmatprep.subr.bf16.mxu0 0
          %3410 = vmatpush1.bf16.msra.mxu0 0
          %3411 = vmatprep.subr.bf16.mxu0 0
          %3412 = vmatpush1.bf16.msra.mxu0 0
          %3413 = vmatprep.subr.bf16.mxu0 0
          %3414 = vmatpush1.bf16.msra.mxu0 0
          %3415 = vmatprep.subr.bf16.mxu0 0
          %3416 = vmatpush1.bf16.msra.mxu0 0
          %3417 = vmatprep.subr.bf16.mxu0 0
          %3418 = vmatpush1.bf16.msra.mxu0 0
          %3419 = vmatprep.subr.bf16.mxu0 0
          %3420 = vmatpush1.bf16.msra.mxu0 0
          %3421 = vmatprep.subr.bf16.mxu0 0
          %3422 = vmatpush1.bf16.msra.mxu0 0
          %3423 = vmatprep.subr.bf16.mxu0 0
          %3424 = vmatpush1.bf16.msra.mxu0 0
          %3425 = vmatprep.mubr.bf16.mxu0 0
          %3426 = vmatmul.mubr.bf16.gmra.mrb[0].mxu0 %v3391
          %v3427 = vpop.f32.mrb[0].mxu0
          %v3428 = vadd.f32 0.0, %v3427
          %v3429 = vpop.f32.mrb[0].mxu0
          %v3430 = vpop.f32.mrb[0].mxu0
          %v3431 = vpop.f32.mrb[0].mxu0
          %3432 = vdwg.mxu0
          %v3433 = vadd.f32 %v3354, %v3428
          %s3434 = scalar_lea.vmem %s3276, 2 [#allocation3]
          %v3435 = vld [vmem:[%s3434] ss:$2 sm:$0xf]
          %v3436 = vld [vmem:[%s5 + $0x140] sm:$0xf]
          %v3437 = vld [vmem:[%s5 + $0x144] sm:$0xf]
          %v3438 = vld [vmem:[%s5 + $0x148] sm:$0xf]
          %v3439 = vld [vmem:[%s5 + $0x14c] sm:$0xf]
          %v3440 = vld [vmem:[%s5 + $0x150] sm:$0xf]
          %v3441 = vld [vmem:[%s5 + $0x154] sm:$0xf]
          %v3442 = vld [vmem:[%s5 + $0x158] sm:$0xf]
          %v3443 = vld [vmem:[%s5 + $0x15c] sm:$0xf]
          %v3444 = vpack.c.bf16 %v3435, %v3435
          %v3453 = vunpack.c.l.b16 %v3436
          %v3454 = vunpack.c.l.b16 %v3437
          %v3455 = vunpack.c.l.b16 %v3438
          %v3456 = vunpack.c.l.b16 %v3439
          %v3457 = vunpack.c.l.b16 %v3440
          %v3458 = vunpack.c.l.b16 %v3441
          %v3459 = vunpack.c.l.b16 %v3442
          %v3460 = vunpack.c.l.b16 %v3443
          %v3461 = vpack.c.b16 %v3454, %v3453
          %v3462 = vpack.c.b16 %v3456, %v3455
          %v3463 = vpack.c.b16 %v3458, %v3457
          %v3464 = vpack.c.b16 %v3460, %v3459
          %v3470 = vsel %vm2674, %v3444, 0
          %3472 = vmatprep.subr.bf16.mxu0 0
          %3473 = vmatpush1.bf16.msra.mxu0 %v3461
          %3474 = vmatprep.subr.bf16.mxu0 0
          %3475 = vmatpush1.bf16.msra.mxu0 %v3462
          %3476 = vmatprep.subr.bf16.mxu0 0
          %3477 = vmatpush1.bf16.msra.mxu0 %v3463
          %3478 = vmatprep.subr.bf16.mxu0 0
          %3479 = vmatpush1.bf16.msra.mxu0 %v3464
          %3480 = vmatprep.subr.bf16.mxu0 0
          %3481 = vmatpush1.bf16.msra.mxu0 0
          %3482 = vmatprep.subr.bf16.mxu0 0
          %3483 = vmatpush1.bf16.msra.mxu0 0
          %3484 = vmatprep.subr.bf16.mxu0 0
          %3485 = vmatpush1.bf16.msra.mxu0 0
          %3486 = vmatprep.subr.bf16.mxu0 0
          %3487 = vmatpush1.bf16.msra.mxu0 0
          %3488 = vmatprep.subr.bf16.mxu0 0
          %3489 = vmatpush1.bf16.msra.mxu0 0
          %3490 = vmatprep.subr.bf16.mxu0 0
          %3491 = vmatpush1.bf16.msra.mxu0 0
          %3492 = vmatprep.subr.bf16.mxu0 0
          %3493 = vmatpush1.bf16.msra.mxu0 0
          %3494 = vmatprep.subr.bf16.mxu0 0
          %3495 = vmatpush1.bf16.msra.mxu0 0
          %3496 = vmatprep.subr.bf16.mxu0 0
          %3497 = vmatpush1.bf16.msra.mxu0 0
          %3498 = vmatprep.subr.bf16.mxu0 0
          %3499 = vmatpush1.bf16.msra.mxu0 0
          %3500 = vmatprep.subr.bf16.mxu0 0
          %3501 = vmatpush1.bf16.msra.mxu0 0
          %3502 = vmatprep.subr.bf16.mxu0 0
          %3503 = vmatpush1.bf16.msra.mxu0 0
          %3504 = vmatprep.mubr.bf16.mxu0 0
          %3505 = vmatmul.mubr.bf16.gmra.mrb[0].mxu0 %v3470
          %v3506 = vpop.f32.mrb[0].mxu0
          %v3507 = vadd.f32 0.0, %v3506
          %v3508 = vpop.f32.mrb[0].mxu0
          %v3509 = vpop.f32.mrb[0].mxu0
          %v3510 = vpop.f32.mrb[0].mxu0
          %3511 = vdwg.mxu0
          %v3512 = vadd.f32 %v3433, %v3507
          %s3513 = scalar_lea.vmem %s3276, 3 [#allocation3]
          %v3514 = vld [vmem:[%s3513] ss:$2 sm:$0xf]
          %v3515 = vld [vmem:[%s5 + $0x160] sm:$0xf]
          %v3516 = vld [vmem:[%s5 + $0x164] sm:$0xf]
          %v3517 = vld [vmem:[%s5 + $0x168] sm:$0xf]
          %v3518 = vld [vmem:[%s5 + $0x16c] sm:$0xf]
          %v3519 = vld [vmem:[%s5 + $0x170] sm:$0xf]
          %v3520 = vld [vmem:[%s5 + $0x174] sm:$0xf]
          %v3521 = vld [vmem:[%s5 + $0x178] sm:$0xf]
          %v3522 = vld [vmem:[%s5 + $0x17c] sm:$0xf]
          %v3523 = vpack.c.bf16 %v3514, %v3514
          %v3532 = vunpack.c.l.b16 %v3515
          %v3533 = vunpack.c.l.b16 %v3516
          %v3534 = vunpack.c.l.b16 %v3517
          %v3535 = vunpack.c.l.b16 %v3518
          %v3536 = vunpack.c.l.b16 %v3519
          %v3537 = vunpack.c.l.b16 %v3520
          %v3538 = vunpack.c.l.b16 %v3521
          %v3539 = vunpack.c.l.b16 %v3522
          %v3540 = vpack.c.b16 %v3533, %v3532
          %v3541 = vpack.c.b16 %v3535, %v3534
          %v3542 = vpack.c.b16 %v3537, %v3536
          %v3543 = vpack.c.b16 %v3539, %v3538
          %v3549 = vsel %vm2674, %v3523, 0
          %3551 = vmatprep.subr.bf16.mxu0 0
          %3552 = vmatpush1.bf16.msra.mxu0 %v3540
          %3553 = vmatprep.subr.bf16.mxu0 0
          %3554 = vmatpush1.bf16.msra.mxu0 %v3541
          %3555 = vmatprep.subr.bf16.mxu0 0
          %3556 = vmatpush1.bf16.msra.mxu0 %v3542
          %3557 = vmatprep.subr.bf16.mxu0 0
          %3558 = vmatpush1.bf16.msra.mxu0 %v3543
          %3559 = vmatprep.subr.bf16.mxu0 0
          %3560 = vmatpush1.bf16.msra.mxu0 0
          %3561 = vmatprep.subr.bf16.mxu0 0
          %3562 = vmatpush1.bf16.msra.mxu0 0
          %3563 = vmatprep.subr.bf16.mxu0 0
          %3564 = vmatpush1.bf16.msra.mxu0 0
          %3565 = vmatprep.subr.bf16.mxu0 0
          %3566 = vmatpush1.bf16.msra.mxu0 0
          %3567 = vmatprep.subr.bf16.mxu0 0
          %3568 = vmatpush1.bf16.msra.mxu0 0
          %3569 = vmatprep.subr.bf16.mxu0 0
          %3570 = vmatpush1.bf16.msra.mxu0 0
          %3571 = vmatprep.subr.bf16.mxu0 0
          %3572 = vmatpush1.bf16.msra.mxu0 0
          %3573 = vmatprep.subr.bf16.mxu0 0
          %3574 = vmatpush1.bf16.msra.mxu0 0
          %3575 = vmatprep.subr.bf16.mxu0 0
          %3576 = vmatpush1.bf16.msra.mxu0 0
          %3577 = vmatprep.subr.bf16.mxu0 0
          %3578 = vmatpush1.bf16.msra.mxu0 0
          %3579 = vmatprep.subr.bf16.mxu0 0
          %3580 = vmatpush1.bf16.msra.mxu0 0
          %3581 = vmatprep.subr.bf16.mxu0 0
          %3582 = vmatpush1.bf16.msra.mxu0 0
          %3583 = vmatprep.mubr.bf16.mxu0 0
          %3584 = vmatmul.mubr.bf16.gmra.mrb[0].mxu0 %v3549
          %v3585 = vpop.f32.mrb[0].mxu0
          %v3586 = vadd.f32 0.0, %v3585
          %v3587 = vpop.f32.mrb[0].mxu0
          %v3588 = vpop.f32.mrb[0].mxu0
          %v3589 = vpop.f32.mrb[0].mxu0
          %3590 = vdwg.mxu0
          %v3591 = vadd.f32 %v3512, %v3586
          %s3592 = sadd.s32 %s2637, 3
          %s3593 = smul.u32 %s3592, 16
          %s3594 = scalar_lea.vmem [#allocation3], %s3593
          %v3595 = vld [vmem:[%s3594] ss:$2 sm:$0xf]
          %v3596 = vld [vmem:[%s5 + $0x180] sm:$0xf]
          %v3597 = vld [vmem:[%s5 + $0x184] sm:$0xf]
          %v3598 = vld [vmem:[%s5 + $0x188] sm:$0xf]
          %v3599 = vld [vmem:[%s5 + $0x18c] sm:$0xf]
          %v3600 = vld [vmem:[%s5 + $0x190] sm:$0xf]
          %v3601 = vld [vmem:[%s5 + $0x194] sm:$0xf]
          %v3602 = vld [vmem:[%s5 + $0x198] sm:$0xf]
          %v3603 = vld [vmem:[%s5 + $0x19c] sm:$0xf]
          %v3604 = vpack.c.bf16 %v3595, %v3595
          %v3613 = vunpack.c.l.b16 %v3596
          %v3614 = vunpack.c.l.b16 %v3597
          %v3615 = vunpack.c.l.b16 %v3598
          %v3616 = vunpack.c.l.b16 %v3599
          %v3617 = vunpack.c.l.b16 %v3600
          %v3618 = vunpack.c.l.b16 %v3601
          %v3619 = vunpack.c.l.b16 %v3602
          %v3620 = vunpack.c.l.b16 %v3603
          %v3621 = vpack.c.b16 %v3614, %v3613
          %v3622 = vpack.c.b16 %v3616, %v3615
          %v3623 = vpack.c.b16 %v3618, %v3617
          %v3624 = vpack.c.b16 %v3620, %v3619
          %v3630 = vsel %vm2674, %v3604, 0
          %3632 = vmatprep.subr.bf16.mxu0 0
          %3633 = vmatpush1.bf16.msra.mxu0 %v3621
          %3634 = vmatprep.subr.bf16.mxu0 0
          %3635 = vmatpush1.bf16.msra.mxu0 %v3622
          %3636 = vmatprep.subr.bf16.mxu0 0
          %3637 = vmatpush1.bf16.msra.mxu0 %v3623
          %3638 = vmatprep.subr.bf16.mxu0 0
          %3639 = vmatpush1.bf16.msra.mxu0 %v3624
          %3640 = vmatprep.subr.bf16.mxu0 0
          %3641 = vmatpush1.bf16.msra.mxu0 0
          %3642 = vmatprep.subr.bf16.mxu0 0
          %3643 = vmatpush1.bf16.msra.mxu0 0
          %3644 = vmatprep.subr.bf16.mxu0 0
          %3645 = vmatpush1.bf16.msra.mxu0 0
          %3646 = vmatprep.subr.bf16.mxu0 0
          %3647 = vmatpush1.bf16.msra.mxu0 0
          %3648 = vmatprep.subr.bf16.mxu0 0
          %3649 = vmatpush1.bf16.msra.mxu0 0
          %3650 = vmatprep.subr.bf16.mxu0 0
          %3651 = vmatpush1.bf16.msra.mxu0 0
          %3652 = vmatprep.subr.bf16.mxu0 0
          %3653 = vmatpush1.bf16.msra.mxu0 0
          %3654 = vmatprep.subr.bf16.mxu0 0
          %3655 = vmatpush1.bf16.msra.mxu0 0
          %3656 = vmatprep.subr.bf16.mxu0 0
          %3657 = vmatpush1.bf16.msra.mxu0 0
          %3658 = vmatprep.subr.bf16.mxu0 0
          %3659 = vmatpush1.bf16.msra.mxu0 0
          %3660 = vmatprep.subr.bf16.mxu0 0
          %3661 = vmatpush1.bf16.msra.mxu0 0
          %3662 = vmatprep.subr.bf16.mxu0 0
          %3663 = vmatpush1.bf16.msra.mxu0 0
          %3664 = vmatprep.mubr.bf16.mxu0 0
          %3665 = vmatmul.mubr.bf16.gmra.mrb[0].mxu0 %v3630
          %v3666 = vpop.f32.mrb[0].mxu0
          %v3667 = vadd.f32 0.0, %v3666
          %v3668 = vpop.f32.mrb[0].mxu0
          %v3669 = vpop.f32.mrb[0].mxu0
          %v3670 = vpop.f32.mrb[0].mxu0
          %3671 = vdwg.mxu0
          %v3672 = vadd.f32 %v3591, %v3667
          %s3673 = scalar_lea.vmem %s3594, 1 [#allocation3]
          %v3674 = vld [vmem:[%s3673] ss:$2 sm:$0xf]
          %v3675 = vld [vmem:[%s5 + $0x1a0] sm:$0xf]
          %v3676 = vld [vmem:[%s5 + $0x1a4] sm:$0xf]
          %v3677 = vld [vmem:[%s5 + $0x1a8] sm:$0xf]
          %v3678 = vld [vmem:[%s5 + $0x1ac] sm:$0xf]
          %v3679 = vld [vmem:[%s5 + $0x1b0] sm:$0xf]
          %v3680 = vld [vmem:[%s5 + $0x1b4] sm:$0xf]
          %v3681 = vld [vmem:[%s5 + $0x1b8] sm:$0xf]
          %v3682 = vld [vmem:[%s5 + $0x1bc] sm:$0xf]
          %v3683 = vpack.c.bf16 %v3674, %v3674
          %v3692 = vunpack.c.l.b16 %v3675
          %v3693 = vunpack.c.l.b16 %v3676
          %v3694 = vunpack.c.l.b16 %v3677
          %v3695 = vunpack.c.l.b16 %v3678
          %v3696 = vunpack.c.l.b16 %v3679
          %v3697 = vunpack.c.l.b16 %v3680
          %v3698 = vunpack.c.l.b16 %v3681
          %v3699 = vunpack.c.l.b16 %v3682
          %v3700 = vpack.c.b16 %v3693, %v3692
          %v3701 = vpack.c.b16 %v3695, %v3694
          %v3702 = vpack.c.b16 %v3697, %v3696
          %v3703 = vpack.c.b16 %v3699, %v3698
          %v3709 = vsel %vm2674, %v3683, 0
          %3711 = vmatprep.subr.bf16.mxu0 0
          %3712 = vmatpush1.bf16.msra.mxu0 %v3700
          %3713 = vmatprep.subr.bf16.mxu0 0
          %3714 = vmatpush1.bf16.msra.mxu0 %v3701
          %3715 = vmatprep.subr.bf16.mxu0 0
          %3716 = vmatpush1.bf16.msra.mxu0 %v3702
          %3717 = vmatprep.subr.bf16.mxu0 0
          %3718 = vmatpush1.bf16.msra.mxu0 %v3703
          %3719 = vmatprep.subr.bf16.mxu0 0
          %3720 = vmatpush1.bf16.msra.mxu0 0
          %3721 = vmatprep.subr.bf16.mxu0 0
          %3722 = vmatpush1.bf16.msra.mxu0 0
          %3723 = vmatprep.subr.bf16.mxu0 0
          %3724 = vmatpush1.bf16.msra.mxu0 0
          %3725 = vmatprep.subr.bf16.mxu0 0
          %3726 = vmatpush1.bf16.msra.mxu0 0
          %3727 = vmatprep.subr.bf16.mxu0 0
          %3728 = vmatpush1.bf16.msra.mxu0 0
          %3729 = vmatprep.subr.bf16.mxu0 0
          %3730 = vmatpush1.bf16.msra.mxu0 0
          %3731 = vmatprep.subr.bf16.mxu0 0
          %3732 = vmatpush1.bf16.msra.mxu0 0
          %3733 = vmatprep.subr.bf16.mxu0 0
          %3734 = vmatpush1.bf16.msra.mxu0 0
          %3735 = vmatprep.subr.bf16.mxu0 0
          %3736 = vmatpush1.bf16.msra.mxu0 0
          %3737 = vmatprep.subr.bf16.mxu0 0
          %3738 = vmatpush1.bf16.msra.mxu0 0
          %3739 = vmatprep.subr.bf16.mxu0 0
          %3740 = vmatpush1.bf16.msra.mxu0 0
          %3741 = vmatprep.subr.bf16.mxu0 0
          %3742 = vmatpush1.bf16.msra.mxu0 0
          %3743 = vmatprep.mubr.bf16.mxu0 0
          %3744 = vmatmul.mubr.bf16.gmra.mrb[0].mxu0 %v3709
          %v3745 = vpop.f32.mrb[0].mxu0
          %v3746 = vadd.f32 0.0, %v3745
          %v3747 = vpop.f32.mrb[0].mxu0
          %v3748 = vpop.f32.mrb[0].mxu0
          %v3749 = vpop.f32.mrb[0].mxu0
          %3750 = vdwg.mxu0
          %v3751 = vadd.f32 %v3672, %v3746
          %s3752 = scalar_lea.vmem %s3594, 2 [#allocation3]
          %v3753 = vld [vmem:[%s3752] ss:$2 sm:$0xf]
          %v3754 = vld [vmem:[%s5 + $0x1c0] sm:$0xf]
          %v3755 = vld [vmem:[%s5 + $0x1c4] sm:$0xf]
          %v3756 = vld [vmem:[%s5 + $0x1c8] sm:$0xf]
          %v3757 = vld [vmem:[%s5 + $0x1cc] sm:$0xf]
          %v3758 = vld [vmem:[%s5 + $0x1d0] sm:$0xf]
          %v3759 = vld [vmem:[%s5 + $0x1d4] sm:$0xf]
          %v3760 = vld [vmem:[%s5 + $0x1d8] sm:$0xf]
          %v3761 = vld [vmem:[%s5 + $0x1dc] sm:$0xf]
          %v3762 = vpack.c.bf16 %v3753, %v3753
          %v3771 = vunpack.c.l.b16 %v3754
          %v3772 = vunpack.c.l.b16 %v3755
          %v3773 = vunpack.c.l.b16 %v3756
          %v3774 = vunpack.c.l.b16 %v3757
          %v3775 = vunpack.c.l.b16 %v3758
          %v3776 = vunpack.c.l.b16 %v3759
          %v3777 = vunpack.c.l.b16 %v3760
          %v3778 = vunpack.c.l.b16 %v3761
          %v3779 = vpack.c.b16 %v3772, %v3771
          %v3780 = vpack.c.b16 %v3774, %v3773
          %v3781 = vpack.c.b16 %v3776, %v3775
          %v3782 = vpack.c.b16 %v3778, %v3777
          %v3788 = vsel %vm2674, %v3762, 0
          %3790 = vmatprep.subr.bf16.mxu0 0
          %3791 = vmatpush1.bf16.msra.mxu0 %v3779
          %3792 = vmatprep.subr.bf16.mxu0 0
          %3793 = vmatpush1.bf16.msra.mxu0 %v3780
          %3794 = vmatprep.subr.bf16.mxu0 0
          %3795 = vmatpush1.bf16.msra.mxu0 %v3781
          %3796 = vmatprep.subr.bf16.mxu0 0
          %3797 = vmatpush1.bf16.msra.mxu0 %v3782
          %3798 = vmatprep.subr.bf16.mxu0 0
          %3799 = vmatpush1.bf16.msra.mxu0 0
          %3800 = vmatprep.subr.bf16.mxu0 0
          %3801 = vmatpush1.bf16.msra.mxu0 0
          %3802 = vmatprep.subr.bf16.mxu0 0
          %3803 = vmatpush1.bf16.msra.mxu0 0
          %3804 = vmatprep.subr.bf16.mxu0 0
          %3805 = vmatpush1.bf16.msra.mxu0 0
          %3806 = vmatprep.subr.bf16.mxu0 0
          %3807 = vmatpush1.bf16.msra.mxu0 0
          %3808 = vmatprep.subr.bf16.mxu0 0
          %3809 = vmatpush1.bf16.msra.mxu0 0
          %3810 = vmatprep.subr.bf16.mxu0 0
          %3811 = vmatpush1.bf16.msra.mxu0 0
          %3812 = vmatprep.subr.bf16.mxu0 0
          %3813 = vmatpush1.bf16.msra.mxu0 0
          %3814 = vmatprep.subr.bf16.mxu0 0
          %3815 = vmatpush1.bf16.msra.mxu0 0
          %3816 = vmatprep.subr.bf16.mxu0 0
          %3817 = vmatpush1.bf16.msra.mxu0 0
          %3818 = vmatprep.subr.bf16.mxu0 0
          %3819 = vmatpush1.bf16.msra.mxu0 0
          %3820 = vmatprep.subr.bf16.mxu0 0
          %3821 = vmatpush1.bf16.msra.mxu0 0
          %3822 = vmatprep.mubr.bf16.mxu0 0
          %3823 = vmatmul.mubr.bf16.gmra.mrb[0].mxu0 %v3788
          %v3824 = vpop.f32.mrb[0].mxu0
          %v3825 = vadd.f32 0.0, %v3824
          %v3826 = vpop.f32.mrb[0].mxu0
          %v3827 = vpop.f32.mrb[0].mxu0
          %v3828 = vpop.f32.mrb[0].mxu0
          %3829 = vdwg.mxu0
          %v3830 = vadd.f32 %v3751, %v3825
          %s3831 = scalar_lea.vmem %s3594, 3 [#allocation3]
          %v3832 = vld [vmem:[%s3831] ss:$2 sm:$0xf]
          %v3833 = vld [vmem:[%s5 + $0x1e0] sm:$0xf]
          %v3834 = vld [vmem:[%s5 + $0x1e4] sm:$0xf]
          %v3835 = vld [vmem:[%s5 + $0x1e8] sm:$0xf]
          %v3836 = vld [vmem:[%s5 + $0x1ec] sm:$0xf]
          %v3837 = vld [vmem:[%s5 + $0x1f0] sm:$0xf]
          %v3838 = vld [vmem:[%s5 + $0x1f4] sm:$0xf]
          %v3839 = vld [vmem:[%s5 + $0x1f8] sm:$0xf]
          %v3840 = vld [vmem:[%s5 + $0x1fc] sm:$0xf]
          %v3841 = vpack.c.bf16 %v3832, %v3832
          %v3850 = vunpack.c.l.b16 %v3833
          %v3851 = vunpack.c.l.b16 %v3834
          %v3852 = vunpack.c.l.b16 %v3835
          %v3853 = vunpack.c.l.b16 %v3836
          %v3854 = vunpack.c.l.b16 %v3837
          %v3855 = vunpack.c.l.b16 %v3838
          %v3856 = vunpack.c.l.b16 %v3839
          %v3857 = vunpack.c.l.b16 %v3840
          %v3858 = vpack.c.b16 %v3851, %v3850
          %v3859 = vpack.c.b16 %v3853, %v3852
          %v3860 = vpack.c.b16 %v3855, %v3854
          %v3861 = vpack.c.b16 %v3857, %v3856
          %v3867 = vsel %vm2674, %v3841, 0
          %3869 = vmatprep.subr.bf16.mxu0 0
          %3870 = vmatpush1.bf16.msra.mxu0 %v3858
          %3871 = vmatprep.subr.bf16.mxu0 0
          %3872 = vmatpush1.bf16.msra.mxu0 %v3859
          %3873 = vmatprep.subr.bf16.mxu0 0
          %3874 = vmatpush1.bf16.msra.mxu0 %v3860
          %3875 = vmatprep.subr.bf16.mxu0 0
          %3876 = vmatpush1.bf16.msra.mxu0 %v3861
          %3877 = vmatprep.subr.bf16.mxu0 0
          %3878 = vmatpush1.bf16.msra.mxu0 0
          %3879 = vmatprep.subr.bf16.mxu0 0
          %3880 = vmatpush1.bf16.msra.mxu0 0
          %3881 = vmatprep.subr.bf16.mxu0 0
          %3882 = vmatpush1.bf16.msra.mxu0 0
          %3883 = vmatprep.subr.bf16.mxu0 0
          %3884 = vmatpush1.bf16.msra.mxu0 0
          %3885 = vmatprep.subr.bf16.mxu0 0
          %3886 = vmatpush1.bf16.msra.mxu0 0
          %3887 = vmatprep.subr.bf16.mxu0 0
          %3888 = vmatpush1.bf16.msra.mxu0 0
          %3889 = vmatprep.subr.bf16.mxu0 0
          %3890 = vmatpush1.bf16.msra.mxu0 0
          %3891 = vmatprep.subr.bf16.mxu0 0
          %3892 = vmatpush1.bf16.msra.mxu0 0
          %3893 = vmatprep.subr.bf16.mxu0 0
          %3894 = vmatpush1.bf16.msra.mxu0 0
          %3895 = vmatprep.subr.bf16.mxu0 0
          %3896 = vmatpush1.bf16.msra.mxu0 0
          %3897 = vmatprep.subr.bf16.mxu0 0
          %3898 = vmatpush1.bf16.msra.mxu0 0
          %3899 = vmatprep.subr.bf16.mxu0 0
          %3900 = vmatpush1.bf16.msra.mxu0 0
          %3901 = vmatprep.mubr.bf16.mxu0 0
          %3902 = vmatmul.mubr.bf16.gmra.mrb[0].mxu0 %v3867
          %v3903 = vpop.f32.mrb[0].mxu0
          %v3904 = vadd.f32 0.0, %v3903
          %v3905 = vpop.f32.mrb[0].mxu0
          %v3906 = vpop.f32.mrb[0].mxu0
          %v3907 = vpop.f32.mrb[0].mxu0
          %3908 = vdwg.mxu0
          %v3909 = vadd.f32 %v3830, %v3904
          %v3910 = vmax.f32 %v3909, 0.0
          %s3911 = smul.u32 %s2632, 4
          %s3912 = scalar_lea.vmem [#allocation4], %s3911
          %3913 = vst [vmem:[%s3912] sm:$0xf] %v3910
        $region83: #{conv_encoder_forward.1} parent=63 // loop_footer
          %s2636 = sadd.s32 1, %s2632
        $region84: #{conv_encoder_forward.1} parent=63 // loop_footer_branch
          %2631 = sbr.rel target = $region80
        $region85: #{conv_encoder_forward.1} parent=63 // loop_exit
          _
        %v3914 = vld [vmem:[%s8] sm:$0x3]
        %v3915 = vld [vmem:[#allocation4] ss:$2 sm:$0x1]
        %v3916 = vld [vmem:[%s7] sm:$0xff]
        %v3917 = vld [vmem:[%s7 + $0x8] sm:$0xff]
        %v3918 = vld [vmem:[%s7 + $0x10] sm:$0xff]
        %v3919 = vld [vmem:[%s7 + $0x18] sm:$0xff]
        %v3920 = vld [vmem:[%s7 + $0x20] sm:$0xff]
        %v3921 = vld [vmem:[%s7 + $0x28] sm:$0xff]
        %v3922 = vld [vmem:[%s7 + $0x30] sm:$0xff]
        %v3923 = vld [vmem:[%s7 + $0x38] sm:$0xff]
        %v3924 = vld [vmem:[%s7 + $0x40] sm:$0xff]
        %v3925 = vld [vmem:[%s7 + $0x48] sm:$0xff]
        %v3926 = vld [vmem:[%s7 + $0x50] sm:$0xff]
        %v3927 = vld [vmem:[%s7 + $0x58] sm:$0xff]
        %v3928 = vld [vmem:[%s7 + $0x60] sm:$0xff]
        %v3929 = vld [vmem:[%s7 + $0x68] sm:$0xff]
        %v3930 = vld [vmem:[%s7 + $0x70] sm:$0xff]
        %v3931 = vld [vmem:[%s7 + $0x78] sm:$0xff]
        %v3932 = vpack.c.bf16 %v3915, %v3915
        %v3949 = vunpack.c.l.b16 %v3916
        %v3950 = vunpack.c.h.b16 %v3916
        %v3951 = vunpack.c.l.b16 %v3917
        %v3952 = vunpack.c.h.b16 %v3917
        %v3953 = vunpack.c.l.b16 %v3918
        %v3954 = vunpack.c.h.b16 %v3918
        %v3955 = vunpack.c.l.b16 %v3919
        %v3956 = vunpack.c.h.b16 %v3919
        %v3957 = vunpack.c.l.b16 %v3920
        %v3958 = vunpack.c.h.b16 %v3920
        %v3959 = vunpack.c.l.b16 %v3921
        %v3960 = vunpack.c.h.b16 %v3921
        %v3961 = vunpack.c.l.b16 %v3922
        %v3962 = vunpack.c.h.b16 %v3922
        %v3963 = vunpack.c.l.b16 %v3923
        %v3964 = vunpack.c.h.b16 %v3923
        %v3965 = vunpack.c.l.b16 %v3924
        %v3966 = vunpack.c.h.b16 %v3924
        %v3967 = vunpack.c.l.b16 %v3925
        %v3968 = vunpack.c.h.b16 %v3925
        %v3969 = vunpack.c.l.b16 %v3926
        %v3970 = vunpack.c.h.b16 %v3926
        %v3971 = vunpack.c.l.b16 %v3927
        %v3972 = vunpack.c.h.b16 %v3927
        %v3973 = vunpack.c.l.b16 %v3928
        %v3974 = vunpack.c.h.b16 %v3928
        %v3975 = vunpack.c.l.b16 %v3929
        %v3976 = vunpack.c.h.b16 %v3929
        %v3977 = vunpack.c.l.b16 %v3930
        %v3978 = vunpack.c.h.b16 %v3930
        %v3979 = vunpack.c.l.b16 %v3931
        %v3980 = vunpack.c.h.b16 %v3931
        %v3981 = vpack.c.b16 %v3951, %v3949
        %v3982 = vpack.c.b16 %v3952, %v3950
        %v3983 = vpack.c.b16 %v3955, %v3953
        %v3984 = vpack.c.b16 %v3956, %v3954
        %v3985 = vpack.c.b16 %v3959, %v3957
        %v3986 = vpack.c.b16 %v3960, %v3958
        %v3987 = vpack.c.b16 %v3963, %v3961
        %v3988 = vpack.c.b16 %v3964, %v3962
        %v3989 = vpack.c.b16 %v3967, %v3965
        %v3990 = vpack.c.b16 %v3968, %v3966
        %v3991 = vpack.c.b16 %v3971, %v3969
        %v3992 = vpack.c.b16 %v3972, %v3970
        %v3993 = vpack.c.b16 %v3975, %v3973
        %v3994 = vpack.c.b16 %v3976, %v3974
        %v3995 = vpack.c.b16 %v3979, %v3977
        %v3996 = vpack.c.b16 %v3980, %v3978
        %4013 = vmatprep.subr.bf16.mxu0 %v3982
        %4014 = vmatpush1.bf16.msra.mxu0 %v3981
        %4015 = vmatprep.subr.bf16.mxu0 %v3984
        %4016 = vmatpush1.bf16.msra.mxu0 %v3983
        %4017 = vmatprep.subr.bf16.mxu0 %v3986
        %4018 = vmatpush1.bf16.msra.mxu0 %v3985
        %4019 = vmatprep.subr.bf16.mxu0 %v3988
        %4020 = vmatpush1.bf16.msra.mxu0 %v3987
        %4021 = vmatprep.subr.bf16.mxu0 %v3990
        %4022 = vmatpush1.bf16.msra.mxu0 %v3989
        %4023 = vmatprep.subr.bf16.mxu0 %v3992
        %4024 = vmatpush1.bf16.msra.mxu0 %v3991
        %4025 = vmatprep.subr.bf16.mxu0 %v3994
        %4026 = vmatpush1.bf16.msra.mxu0 %v3993
        %4027 = vmatprep.subr.bf16.mxu0 %v3996
        %4028 = vmatpush1.bf16.msra.mxu0 %v3995
        %4029 = vmatprep.subr.bf16.mxu0 0
        %4030 = vmatpush1.bf16.msra.mxu0 0
        %4031 = vmatprep.subr.bf16.mxu0 0
        %4032 = vmatpush1.bf16.msra.mxu0 0
        %4033 = vmatprep.subr.bf16.mxu0 0
        %4034 = vmatpush1.bf16.msra.mxu0 0
        %4035 = vmatprep.subr.bf16.mxu0 0
        %4036 = vmatpush1.bf16.msra.mxu0 0
        %4037 = vmatprep.subr.bf16.mxu0 0
        %4038 = vmatpush1.bf16.msra.mxu0 0
        %4039 = vmatprep.subr.bf16.mxu0 0
        %4040 = vmatpush1.bf16.msra.mxu0 0
        %4041 = vmatprep.subr.bf16.mxu0 0
        %4042 = vmatpush1.bf16.msra.mxu0 0
        %4043 = vmatprep.subr.bf16.mxu0 0
        %4044 = vmatpush1.bf16.msra.mxu0 0
        %4045 = vmatprep.mubr.bf16.mxu0 0
        %4046 = vmatmul.mubr.bf16.gmra.mrb[0].mxu0 %v3932
        %v4047 = vpop.f32.mrb[0].mxu0
        %v4048 = vadd.f32 0.0, %v4047
        %v4049 = vpop.f32.mrb[0].mxu0
        %v4050 = vadd.f32 0.0, %v4049
        %v4051 = vpop.f32.mrb[0].mxu0
        %v4052 = vpop.f32.mrb[0].mxu0
        %4053 = vdwg.mxu0
        %v4056 = vcombine.low %v4048, %v4050
        %v4058 = vunpack.c.l.s4 1966171168
        %v4059 = vunpack.c.0.s8 %v4058
        %v4060 = vlaneseq
        %v4061 = vshrl.u32 %v4060, 7
        %v4062 = vsub.s32 %v4059, %v4061
        %v4063 = vrot.slane %v4056, %v4062
        %v4065 = vunpack.c.l.s4 1966171168
        %v4066 = vunpack.c.0.s8 %v4065
        %v4067 = vlaneseq
        %v4068 = vshrl.u32 %v4067, 7
        %v4069 = vsub.s32 %v4066, %v4068
        %v4070 = vrot.slane %v4063, %v4069
        %v4072 = vadd.f32 %v3914, %v4070
        %s4073 = scalar_lea.vmem [#allocation4], 1
        %v4074 = vld [vmem:[%s4073] ss:$2 sm:$0x1]
        %v4075 = vld [vmem:[%s7 + $0x80] sm:$0xff]
        %v4076 = vld [vmem:[%s7 + $0x88] sm:$0xff]
        %v4077 = vld [vmem:[%s7 + $0x90] sm:$0xff]
        %v4078 = vld [vmem:[%s7 + $0x98] sm:$0xff]
        %v4079 = vld [vmem:[%s7 + $0xa0] sm:$0xff]
        %v4080 = vld [vmem:[%s7 + $0xa8] sm:$0xff]
        %v4081 = vld [vmem:[%s7 + $0xb0] sm:$0xff]
        %v4082 = vld [vmem:[%s7 + $0xb8] sm:$0xff]
        %v4083 = vld [vmem:[%s7 + $0xc0] sm:$0xff]
        %v4084 = vld [vmem:[%s7 + $0xc8] sm:$0xff]
        %v4085 = vld [vmem:[%s7 + $0xd0] sm:$0xff]
        %v4086 = vld [vmem:[%s7 + $0xd8] sm:$0xff]
        %v4087 = vld [vmem:[%s7 + $0xe0] sm:$0xff]
        %v4088 = vld [vmem:[%s7 + $0xe8] sm:$0xff]
        %v4089 = vld [vmem:[%s7 + $0xf0] sm:$0xff]
        %v4090 = vld [vmem:[%s7 + $0xf8] sm:$0xff]
        %v4091 = vpack.c.bf16 %v4074, %v4074
        %v4108 = vunpack.c.l.b16 %v4075
        %v4109 = vunpack.c.h.b16 %v4075
        %v4110 = vunpack.c.l.b16 %v4076
        %v4111 = vunpack.c.h.b16 %v4076
        %v4112 = vunpack.c.l.b16 %v4077
        %v4113 = vunpack.c.h.b16 %v4077
        %v4114 = vunpack.c.l.b16 %v4078
        %v4115 = vunpack.c.h.b16 %v4078
        %v4116 = vunpack.c.l.b16 %v4079
        %v4117 = vunpack.c.h.b16 %v4079
        %v4118 = vunpack.c.l.b16 %v4080
        %v4119 = vunpack.c.h.b16 %v4080
        %v4120 = vunpack.c.l.b16 %v4081
        %v4121 = vunpack.c.h.b16 %v4081
        %v4122 = vunpack.c.l.b16 %v4082
        %v4123 = vunpack.c.h.b16 %v4082
        %v4124 = vunpack.c.l.b16 %v4083
        %v4125 = vunpack.c.h.b16 %v4083
        %v4126 = vunpack.c.l.b16 %v4084
        %v4127 = vunpack.c.h.b16 %v4084
        %v4128 = vunpack.c.l.b16 %v4085
        %v4129 = vunpack.c.h.b16 %v4085
        %v4130 = vunpack.c.l.b16 %v4086
        %v4131 = vunpack.c.h.b16 %v4086
        %v4132 = vunpack.c.l.b16 %v4087
        %v4133 = vunpack.c.h.b16 %v4087
        %v4134 = vunpack.c.l.b16 %v4088
        %v4135 = vunpack.c.h.b16 %v4088
        %v4136 = vunpack.c.l.b16 %v4089
        %v4137 = vunpack.c.h.b16 %v4089
        %v4138 = vunpack.c.l.b16 %v4090
        %v4139 = vunpack.c.h.b16 %v4090
        %v4140 = vpack.c.b16 %v4110, %v4108
        %v4141 = vpack.c.b16 %v4111, %v4109
        %v4142 = vpack.c.b16 %v4114, %v4112
        %v4143 = vpack.c.b16 %v4115, %v4113
        %v4144 = vpack.c.b16 %v4118, %v4116
        %v4145 = vpack.c.b16 %v4119, %v4117
        %v4146 = vpack.c.b16 %v4122, %v4120
        %v4147 = vpack.c.b16 %v4123, %v4121
        %v4148 = vpack.c.b16 %v4126, %v4124
        %v4149 = vpack.c.b16 %v4127, %v4125
        %v4150 = vpack.c.b16 %v4130, %v4128
        %v4151 = vpack.c.b16 %v4131, %v4129
        %v4152 = vpack.c.b16 %v4134, %v4132
        %v4153 = vpack.c.b16 %v4135, %v4133
        %v4154 = vpack.c.b16 %v4138, %v4136
        %v4155 = vpack.c.b16 %v4139, %v4137
        %4172 = vmatprep.subr.bf16.mxu0 %v4141
        %4173 = vmatpush1.bf16.msra.mxu0 %v4140
        %4174 = vmatprep.subr.bf16.mxu0 %v4143
        %4175 = vmatpush1.bf16.msra.mxu0 %v4142
        %4176 = vmatprep.subr.bf16.mxu0 %v4145
        %4177 = vmatpush1.bf16.msra.mxu0 %v4144
        %4178 = vmatprep.subr.bf16.mxu0 %v4147
        %4179 = vmatpush1.bf16.msra.mxu0 %v4146
        %4180 = vmatprep.subr.bf16.mxu0 %v4149
        %4181 = vmatpush1.bf16.msra.mxu0 %v4148
        %4182 = vmatprep.subr.bf16.mxu0 %v4151
        %4183 = vmatpush1.bf16.msra.mxu0 %v4150
        %4184 = vmatprep.subr.bf16.mxu0 %v4153
        %4185 = vmatpush1.bf16.msra.mxu0 %v4152
        %4186 = vmatprep.subr.bf16.mxu0 %v4155
        %4187 = vmatpush1.bf16.msra.mxu0 %v4154
        %4188 = vmatprep.subr.bf16.mxu0 0
        %4189 = vmatpush1.bf16.msra.mxu0 0
        %4190 = vmatprep.subr.bf16.mxu0 0
        %4191 = vmatpush1.bf16.msra.mxu0 0
        %4192 = vmatprep.subr.bf16.mxu0 0
        %4193 = vmatpush1.bf16.msra.mxu0 0
        %4194 = vmatprep.subr.bf16.mxu0 0
        %4195 = vmatpush1.bf16.msra.mxu0 0
        %4196 = vmatprep.subr.bf16.mxu0 0
        %4197 = vmatpush1.bf16.msra.mxu0 0
        %4198 = vmatprep.subr.bf16.mxu0 0
        %4199 = vmatpush1.bf16.msra.mxu0 0
        %4200 = vmatprep.subr.bf16.mxu0 0
        %4201 = vmatpush1.bf16.msra.mxu0 0
        %4202 = vmatprep.subr.bf16.mxu0 0
        %4203 = vmatpush1.bf16.msra.mxu0 0
        %4204 = vmatprep.mubr.bf16.mxu0 0
        %4205 = vmatmul.mubr.bf16.gmra.mrb[0].mxu0 %v4091
        %v4206 = vpop.f32.mrb[0].mxu0
        %v4207 = vadd.f32 0.0, %v4206
        %v4208 = vpop.f32.mrb[0].mxu0
        %v4209 = vadd.f32 0.0, %v4208
        %v4210 = vpop.f32.mrb[0].mxu0
        %v4211 = vpop.f32.mrb[0].mxu0
        %4212 = vdwg.mxu0
        %v4215 = vcombine.low %v4207, %v4209
        %v4217 = vunpack.c.l.s4 1966171168
        %v4218 = vunpack.c.0.s8 %v4217
        %v4219 = vlaneseq
        %v4220 = vshrl.u32 %v4219, 7
        %v4221 = vsub.s32 %v4218, %v4220
        %v4222 = vrot.slane %v4215, %v4221
        %v4224 = vunpack.c.l.s4 1966171168
        %v4225 = vunpack.c.0.s8 %v4224
        %v4226 = vlaneseq
        %v4227 = vshrl.u32 %v4226, 7
        %v4228 = vsub.s32 %v4225, %v4227
        %v4229 = vrot.slane %v4222, %v4228
        %v4231 = vadd.f32 %v4072, %v4229
        %s4232 = scalar_lea.vmem [#allocation4], 2
        %v4233 = vld [vmem:[%s4232] ss:$2 sm:$0x1]
        %v4234 = vld [vmem:[%s7 + $0x100] sm:$0xff]
        %v4235 = vld [vmem:[%s7 + $0x108] sm:$0xff]
        %v4236 = vld [vmem:[%s7 + $0x110] sm:$0xff]
        %v4237 = vld [vmem:[%s7 + $0x118] sm:$0xff]
        %v4238 = vld [vmem:[%s7 + $0x120] sm:$0xff]
        %v4239 = vld [vmem:[%s7 + $0x128] sm:$0xff]
        %v4240 = vld [vmem:[%s7 + $0x130] sm:$0xff]
        %v4241 = vld [vmem:[%s7 + $0x138] sm:$0xff]
        %v4242 = vld [vmem:[%s7 + $0x140] sm:$0xff]
        %v4243 = vld [vmem:[%s7 + $0x148] sm:$0xff]
        %v4244 = vld [vmem:[%s7 + $0x150] sm:$0xff]
        %v4245 = vld [vmem:[%s7 + $0x158] sm:$0xff]
        %v4246 = vld [vmem:[%s7 + $0x160] sm:$0xff]
        %v4247 = vld [vmem:[%s7 + $0x168] sm:$0xff]
        %v4248 = vld [vmem:[%s7 + $0x170] sm:$0xff]
        %v4249 = vld [vmem:[%s7 + $0x178] sm:$0xff]
        %v4250 = vpack.c.bf16 %v4233, %v4233
        %v4267 = vunpack.c.l.b16 %v4234
        %v4268 = vunpack.c.h.b16 %v4234
        %v4269 = vunpack.c.l.b16 %v4235
        %v4270 = vunpack.c.h.b16 %v4235
        %v4271 = vunpack.c.l.b16 %v4236
        %v4272 = vunpack.c.h.b16 %v4236
        %v4273 = vunpack.c.l.b16 %v4237
        %v4274 = vunpack.c.h.b16 %v4237
        %v4275 = vunpack.c.l.b16 %v4238
        %v4276 = vunpack.c.h.b16 %v4238
        %v4277 = vunpack.c.l.b16 %v4239
        %v4278 = vunpack.c.h.b16 %v4239
        %v4279 = vunpack.c.l.b16 %v4240
        %v4280 = vunpack.c.h.b16 %v4240
        %v4281 = vunpack.c.l.b16 %v4241
        %v4282 = vunpack.c.h.b16 %v4241
        %v4283 = vunpack.c.l.b16 %v4242
        %v4284 = vunpack.c.h.b16 %v4242
        %v4285 = vunpack.c.l.b16 %v4243
        %v4286 = vunpack.c.h.b16 %v4243
        %v4287 = vunpack.c.l.b16 %v4244
        %v4288 = vunpack.c.h.b16 %v4244
        %v4289 = vunpack.c.l.b16 %v4245
        %v4290 = vunpack.c.h.b16 %v4245
        %v4291 = vunpack.c.l.b16 %v4246
        %v4292 = vunpack.c.h.b16 %v4246
        %v4293 = vunpack.c.l.b16 %v4247
        %v4294 = vunpack.c.h.b16 %v4247
        %v4295 = vunpack.c.l.b16 %v4248
        %v4296 = vunpack.c.h.b16 %v4248
        %v4297 = vunpack.c.l.b16 %v4249
        %v4298 = vunpack.c.h.b16 %v4249
        %v4299 = vpack.c.b16 %v4269, %v4267
        %v4300 = vpack.c.b16 %v4270, %v4268
        %v4301 = vpack.c.b16 %v4273, %v4271
        %v4302 = vpack.c.b16 %v4274, %v4272
        %v4303 = vpack.c.b16 %v4277, %v4275
        %v4304 = vpack.c.b16 %v4278, %v4276
        %v4305 = vpack.c.b16 %v4281, %v4279
        %v4306 = vpack.c.b16 %v4282, %v4280
        %v4307 = vpack.c.b16 %v4285, %v4283
        %v4308 = vpack.c.b16 %v4286, %v4284
        %v4309 = vpack.c.b16 %v4289, %v4287
        %v4310 = vpack.c.b16 %v4290, %v4288
        %v4311 = vpack.c.b16 %v4293, %v4291
        %v4312 = vpack.c.b16 %v4294, %v4292
        %v4313 = vpack.c.b16 %v4297, %v4295
        %v4314 = vpack.c.b16 %v4298, %v4296
        %4331 = vmatprep.subr.bf16.mxu0 %v4300
        %4332 = vmatpush1.bf16.msra.mxu0 %v4299
        %4333 = vmatprep.subr.bf16.mxu0 %v4302
        %4334 = vmatpush1.bf16.msra.mxu0 %v4301
        %4335 = vmatprep.subr.bf16.mxu0 %v4304
        %4336 = vmatpush1.bf16.msra.mxu0 %v4303
        %4337 = vmatprep.subr.bf16.mxu0 %v4306
        %4338 = vmatpush1.bf16.msra.mxu0 %v4305
        %4339 = vmatprep.subr.bf16.mxu0 %v4308
        %4340 = vmatpush1.bf16.msra.mxu0 %v4307
        %4341 = vmatprep.subr.bf16.mxu0 %v4310
        %4342 = vmatpush1.bf16.msra.mxu0 %v4309
        %4343 = vmatprep.subr.bf16.mxu0 %v4312
        %4344 = vmatpush1.bf16.msra.mxu0 %v4311
        %4345 = vmatprep.subr.bf16.mxu0 %v4314
        %4346 = vmatpush1.bf16.msra.mxu0 %v4313
        %4347 = vmatprep.subr.bf16.mxu0 0
        %4348 = vmatpush1.bf16.msra.mxu0 0
        %4349 = vmatprep.subr.bf16.mxu0 0
        %4350 = vmatpush1.bf16.msra.mxu0 0
        %4351 = vmatprep.subr.bf16.mxu0 0
        %4352 = vmatpush1.bf16.msra.mxu0 0
        %4353 = vmatprep.subr.bf16.mxu0 0
        %4354 = vmatpush1.bf16.msra.mxu0 0
        %4355 = vmatprep.subr.bf16.mxu0 0
        %4356 = vmatpush1.bf16.msra.mxu0 0
        %4357 = vmatprep.subr.bf16.mxu0 0
        %4358 = vmatpush1.bf16.msra.mxu0 0
        %4359 = vmatprep.subr.bf16.mxu0 0
        %4360 = vmatpush1.bf16.msra.mxu0 0
        %4361 = vmatprep.subr.bf16.mxu0 0
        %4362 = vmatpush1.bf16.msra.mxu0 0
        %4363 = vmatprep.mubr.bf16.mxu0 0
        %4364 = vmatmul.mubr.bf16.gmra.mrb[0].mxu0 %v4250
        %v4365 = vpop.f32.mrb[0].mxu0
        %v4366 = vadd.f32 0.0, %v4365
        %v4367 = vpop.f32.mrb[0].mxu0
        %v4368 = vadd.f32 0.0, %v4367
        %v4369 = vpop.f32.mrb[0].mxu0
        %v4370 = vpop.f32.mrb[0].mxu0
        %4371 = vdwg.mxu0
        %v4374 = vcombine.low %v4366, %v4368
        %v4376 = vunpack.c.l.s4 1966171168
        %v4377 = vunpack.c.0.s8 %v4376
        %v4378 = vlaneseq
        %v4379 = vshrl.u32 %v4378, 7
        %v4380 = vsub.s32 %v4377, %v4379
        %v4381 = vrot.slane %v4374, %v4380
        %v4383 = vunpack.c.l.s4 1966171168
        %v4384 = vunpack.c.0.s8 %v4383
        %v4385 = vlaneseq
        %v4386 = vshrl.u32 %v4385, 7
        %v4387 = vsub.s32 %v4384, %v4386
        %v4388 = vrot.slane %v4381, %v4387
        %v4390 = vadd.f32 %v4231, %v4388
        %s4391 = scalar_lea.vmem [#allocation4], 3
        %v4392 = vld [vmem:[%s4391] ss:$2 sm:$0x1]
        %v4393 = vld [vmem:[%s7 + $0x180] sm:$0xff]
        %v4394 = vld [vmem:[%s7 + $0x188] sm:$0xff]
        %v4395 = vld [vmem:[%s7 + $0x190] sm:$0xff]
        %v4396 = vld [vmem:[%s7 + $0x198] sm:$0xff]
        %v4397 = vld [vmem:[%s7 + $0x1a0] sm:$0xff]
        %v4398 = vld [vmem:[%s7 + $0x1a8] sm:$0xff]
        %v4399 = vld [vmem:[%s7 + $0x1b0] sm:$0xff]
        %v4400 = vld [vmem:[%s7 + $0x1b8] sm:$0xff]
        %v4401 = vld [vmem:[%s7 + $0x1c0] sm:$0xff]
        %v4402 = vld [vmem:[%s7 + $0x1c8] sm:$0xff]
        %v4403 = vld [vmem:[%s7 + $0x1d0] sm:$0xff]
        %v4404 = vld [vmem:[%s7 + $0x1d8] sm:$0xff]
        %v4405 = vld [vmem:[%s7 + $0x1e0] sm:$0xff]
        %v4406 = vld [vmem:[%s7 + $0x1e8] sm:$0xff]
        %v4407 = vld [vmem:[%s7 + $0x1f0] sm:$0xff]
        %v4408 = vld [vmem:[%s7 + $0x1f8] sm:$0xff]
        %v4409 = vpack.c.bf16 %v4392, %v4392
        %v4426 = vunpack.c.l.b16 %v4393
        %v4427 = vunpack.c.h.b16 %v4393
        %v4428 = vunpack.c.l.b16 %v4394
        %v4429 = vunpack.c.h.b16 %v4394
        %v4430 = vunpack.c.l.b16 %v4395
        %v4431 = vunpack.c.h.b16 %v4395
        %v4432 = vunpack.c.l.b16 %v4396
        %v4433 = vunpack.c.h.b16 %v4396
        %v4434 = vunpack.c.l.b16 %v4397
        %v4435 = vunpack.c.h.b16 %v4397
        %v4436 = vunpack.c.l.b16 %v4398
        %v4437 = vunpack.c.h.b16 %v4398
        %v4438 = vunpack.c.l.b16 %v4399
        %v4439 = vunpack.c.h.b16 %v4399
        %v4440 = vunpack.c.l.b16 %v4400
        %v4441 = vunpack.c.h.b16 %v4400
        %v4442 = vunpack.c.l.b16 %v4401
        %v4443 = vunpack.c.h.b16 %v4401
        %v4444 = vunpack.c.l.b16 %v4402
        %v4445 = vunpack.c.h.b16 %v4402
        %v4446 = vunpack.c.l.b16 %v4403
        %v4447 = vunpack.c.h.b16 %v4403
        %v4448 = vunpack.c.l.b16 %v4404
        %v4449 = vunpack.c.h.b16 %v4404
        %v4450 = vunpack.c.l.b16 %v4405
        %v4451 = vunpack.c.h.b16 %v4405
        %v4452 = vunpack.c.l.b16 %v4406
        %v4453 = vunpack.c.h.b16 %v4406
        %v4454 = vunpack.c.l.b16 %v4407
        %v4455 = vunpack.c.h.b16 %v4407
        %v4456 = vunpack.c.l.b16 %v4408
        %v4457 = vunpack.c.h.b16 %v4408
        %v4458 = vpack.c.b16 %v4428, %v4426
        %v4459 = vpack.c.b16 %v4429, %v4427
        %v4460 = vpack.c.b16 %v4432, %v4430
        %v4461 = vpack.c.b16 %v4433, %v4431
        %v4462 = vpack.c.b16 %v4436, %v4434
        %v4463 = vpack.c.b16 %v4437, %v4435
        %v4464 = vpack.c.b16 %v4440, %v4438
        %v4465 = vpack.c.b16 %v4441, %v4439
        %v4466 = vpack.c.b16 %v4444, %v4442
        %v4467 = vpack.c.b16 %v4445, %v4443
        %v4468 = vpack.c.b16 %v4448, %v4446
        %v4469 = vpack.c.b16 %v4449, %v4447
        %v4470 = vpack.c.b16 %v4452, %v4450
        %v4471 = vpack.c.b16 %v4453, %v4451
        %v4472 = vpack.c.b16 %v4456, %v4454
        %v4473 = vpack.c.b16 %v4457, %v4455
        %4490 = vmatprep.subr.bf16.mxu0 %v4459
        %4491 = vmatpush1.bf16.msra.mxu0 %v4458
        %4492 = vmatprep.subr.bf16.mxu0 %v4461
        %4493 = vmatpush1.bf16.msra.mxu0 %v4460
        %4494 = vmatprep.subr.bf16.mxu0 %v4463
        %4495 = vmatpush1.bf16.msra.mxu0 %v4462
        %4496 = vmatprep.subr.bf16.mxu0 %v4465
        %4497 = vmatpush1.bf16.msra.mxu0 %v4464
        %4498 = vmatprep.subr.bf16.mxu0 %v4467
        %4499 = vmatpush1.bf16.msra.mxu0 %v4466
        %4500 = vmatprep.subr.bf16.mxu0 %v4469
        %4501 = vmatpush1.bf16.msra.mxu0 %v4468
        %4502 = vmatprep.subr.bf16.mxu0 %v4471
        %4503 = vmatpush1.bf16.msra.mxu0 %v4470
        %4504 = vmatprep.subr.bf16.mxu0 %v4473
        %4505 = vmatpush1.bf16.msra.mxu0 %v4472
        %4506 = vmatprep.subr.bf16.mxu0 0
        %4507 = vmatpush1.bf16.msra.mxu0 0
        %4508 = vmatprep.subr.bf16.mxu0 0
        %4509 = vmatpush1.bf16.msra.mxu0 0
        %4510 = vmatprep.subr.bf16.mxu0 0
        %4511 = vmatpush1.bf16.msra.mxu0 0
        %4512 = vmatprep.subr.bf16.mxu0 0
        %4513 = vmatpush1.bf16.msra.mxu0 0
        %4514 = vmatprep.subr.bf16.mxu0 0
        %4515 = vmatpush1.bf16.msra.mxu0 0
        %4516 = vmatprep.subr.bf16.mxu0 0
        %4517 = vmatpush1.bf16.msra.mxu0 0
        %4518 = vmatprep.subr.bf16.mxu0 0
        %4519 = vmatpush1.bf16.msra.mxu0 0
        %4520 = vmatprep.subr.bf16.mxu0 0
        %4521 = vmatpush1.bf16.msra.mxu0 0
        %4522 = vmatprep.mubr.bf16.mxu0 0
        %4523 = vmatmul.mubr.bf16.gmra.mrb[0].mxu0 %v4409
        %v4524 = vpop.f32.mrb[0].mxu0
        %v4525 = vadd.f32 0.0, %v4524
        %v4526 = vpop.f32.mrb[0].mxu0
        %v4527 = vadd.f32 0.0, %v4526
        %v4528 = vpop.f32.mrb[0].mxu0
        %v4529 = vpop.f32.mrb[0].mxu0
        %4530 = vdwg.mxu0
        %v4533 = vcombine.low %v4525, %v4527
        %v4535 = vunpack.c.l.s4 1966171168
        %v4536 = vunpack.c.0.s8 %v4535
        %v4537 = vlaneseq
        %v4538 = vshrl.u32 %v4537, 7
        %v4539 = vsub.s32 %v4536, %v4538
        %v4540 = vrot.slane %v4533, %v4539
        %v4542 = vunpack.c.l.s4 1966171168
        %v4543 = vunpack.c.0.s8 %v4542
        %v4544 = vlaneseq
        %v4545 = vshrl.u32 %v4544, 7
        %v4546 = vsub.s32 %v4543, %v4545
        %v4547 = vrot.slane %v4540, %v4546
        %v4549 = vadd.f32 %v4390, %v4547
        %s4550 = scalar_lea.vmem [#allocation4], 4
        %v4551 = vld [vmem:[%s4550] ss:$2 sm:$0x1]
        %v4552 = vld [vmem:[%s7 + $0x200] sm:$0xff]
        %v4553 = vld [vmem:[%s7 + $0x208] sm:$0xff]
        %v4554 = vld [vmem:[%s7 + $0x210] sm:$0xff]
        %v4555 = vld [vmem:[%s7 + $0x218] sm:$0xff]
        %v4556 = vld [vmem:[%s7 + $0x220] sm:$0xff]
        %v4557 = vld [vmem:[%s7 + $0x228] sm:$0xff]
        %v4558 = vld [vmem:[%s7 + $0x230] sm:$0xff]
        %v4559 = vld [vmem:[%s7 + $0x238] sm:$0xff]
        %v4560 = vld [vmem:[%s7 + $0x240] sm:$0xff]
        %v4561 = vld [vmem:[%s7 + $0x248] sm:$0xff]
        %v4562 = vld [vmem:[%s7 + $0x250] sm:$0xff]
        %v4563 = vld [vmem:[%s7 + $0x258] sm:$0xff]
        %v4564 = vld [vmem:[%s7 + $0x260] sm:$0xff]
        %v4565 = vld [vmem:[%s7 + $0x268] sm:$0xff]
        %v4566 = vld [vmem:[%s7 + $0x270] sm:$0xff]
        %v4567 = vld [vmem:[%s7 + $0x278] sm:$0xff]
        %v4568 = vpack.c.bf16 %v4551, %v4551
        %v4585 = vunpack.c.l.b16 %v4552
        %v4586 = vunpack.c.h.b16 %v4552
        %v4587 = vunpack.c.l.b16 %v4553
        %v4588 = vunpack.c.h.b16 %v4553
        %v4589 = vunpack.c.l.b16 %v4554
        %v4590 = vunpack.c.h.b16 %v4554
        %v4591 = vunpack.c.l.b16 %v4555
        %v4592 = vunpack.c.h.b16 %v4555
        %v4593 = vunpack.c.l.b16 %v4556
        %v4594 = vunpack.c.h.b16 %v4556
        %v4595 = vunpack.c.l.b16 %v4557
        %v4596 = vunpack.c.h.b16 %v4557
        %v4597 = vunpack.c.l.b16 %v4558
        %v4598 = vunpack.c.h.b16 %v4558
        %v4599 = vunpack.c.l.b16 %v4559
        %v4600 = vunpack.c.h.b16 %v4559
        %v4601 = vunpack.c.l.b16 %v4560
        %v4602 = vunpack.c.h.b16 %v4560
        %v4603 = vunpack.c.l.b16 %v4561
        %v4604 = vunpack.c.h.b16 %v4561
        %v4605 = vunpack.c.l.b16 %v4562
        %v4606 = vunpack.c.h.b16 %v4562
        %v4607 = vunpack.c.l.b16 %v4563
        %v4608 = vunpack.c.h.b16 %v4563
        %v4609 = vunpack.c.l.b16 %v4564
        %v4610 = vunpack.c.h.b16 %v4564
        %v4611 = vunpack.c.l.b16 %v4565
        %v4612 = vunpack.c.h.b16 %v4565
        %v4613 = vunpack.c.l.b16 %v4566
        %v4614 = vunpack.c.h.b16 %v4566
        %v4615 = vunpack.c.l.b16 %v4567
        %v4616 = vunpack.c.h.b16 %v4567
        %v4617 = vpack.c.b16 %v4587, %v4585
        %v4618 = vpack.c.b16 %v4588, %v4586
        %v4619 = vpack.c.b16 %v4591, %v4589
        %v4620 = vpack.c.b16 %v4592, %v4590
        %v4621 = vpack.c.b16 %v4595, %v4593
        %v4622 = vpack.c.b16 %v4596, %v4594
        %v4623 = vpack.c.b16 %v4599, %v4597
        %v4624 = vpack.c.b16 %v4600, %v4598
        %v4625 = vpack.c.b16 %v4603, %v4601
        %v4626 = vpack.c.b16 %v4604, %v4602
        %v4627 = vpack.c.b16 %v4607, %v4605
        %v4628 = vpack.c.b16 %v4608, %v4606
        %v4629 = vpack.c.b16 %v4611, %v4609
        %v4630 = vpack.c.b16 %v4612, %v4610
        %v4631 = vpack.c.b16 %v4615, %v4613
        %v4632 = vpack.c.b16 %v4616, %v4614
        %4649 = vmatprep.subr.bf16.mxu0 %v4618
        %4650 = vmatpush1.bf16.msra.mxu0 %v4617
        %4651 = vmatprep.subr.bf16.mxu0 %v4620
        %4652 = vmatpush1.bf16.msra.mxu0 %v4619
        %4653 = vmatprep.subr.bf16.mxu0 %v4622
        %4654 = vmatpush1.bf16.msra.mxu0 %v4621
        %4655 = vmatprep.subr.bf16.mxu0 %v4624
        %4656 = vmatpush1.bf16.msra.mxu0 %v4623
        %4657 = vmatprep.subr.bf16.mxu0 %v4626
        %4658 = vmatpush1.bf16.msra.mxu0 %v4625
        %4659 = vmatprep.subr.bf16.mxu0 %v4628
        %4660 = vmatpush1.bf16.msra.mxu0 %v4627
        %4661 = vmatprep.subr.bf16.mxu0 %v4630
        %4662 = vmatpush1.bf16.msra.mxu0 %v4629
        %4663 = vmatprep.subr.bf16.mxu0 %v4632
        %4664 = vmatpush1.bf16.msra.mxu0 %v4631
        %4665 = vmatprep.subr.bf16.mxu0 0
        %4666 = vmatpush1.bf16.msra.mxu0 0
        %4667 = vmatprep.subr.bf16.mxu0 0
        %4668 = vmatpush1.bf16.msra.mxu0 0
        %4669 = vmatprep.subr.bf16.mxu0 0
        %4670 = vmatpush1.bf16.msra.mxu0 0
        %4671 = vmatprep.subr.bf16.mxu0 0
        %4672 = vmatpush1.bf16.msra.mxu0 0
        %4673 = vmatprep.subr.bf16.mxu0 0
        %4674 = vmatpush1.bf16.msra.mxu0 0
        %4675 = vmatprep.subr.bf16.mxu0 0
        %4676 = vmatpush1.bf16.msra.mxu0 0
        %4677 = vmatprep.subr.bf16.mxu0 0
        %4678 = vmatpush1.bf16.msra.mxu0 0
        %4679 = vmatprep.subr.bf16.mxu0 0
        %4680 = vmatpush1.bf16.msra.mxu0 0
        %4681 = vmatprep.mubr.bf16.mxu0 0
        %4682 = vmatmul.mubr.bf16.gmra.mrb[0].mxu0 %v4568
        %v4683 = vpop.f32.mrb[0].mxu0
        %v4684 = vadd.f32 0.0, %v4683
        %v4685 = vpop.f32.mrb[0].mxu0
        %v4686 = vadd.f32 0.0, %v4685
        %v4687 = vpop.f32.mrb[0].mxu0
        %v4688 = vpop.f32.mrb[0].mxu0
        %4689 = vdwg.mxu0
        %v4692 = vcombine.low %v4684, %v4686
        %v4694 = vunpack.c.l.s4 1966171168
        %v4695 = vunpack.c.0.s8 %v4694
        %v4696 = vlaneseq
        %v4697 = vshrl.u32 %v4696, 7
        %v4698 = vsub.s32 %v4695, %v4697
        %v4699 = vrot.slane %v4692, %v4698
        %v4701 = vunpack.c.l.s4 1966171168
        %v4702 = vunpack.c.0.s8 %v4701
        %v4703 = vlaneseq
        %v4704 = vshrl.u32 %v4703, 7
        %v4705 = vsub.s32 %v4702, %v4704
        %v4706 = vrot.slane %v4699, %v4705
        %v4708 = vadd.f32 %v4549, %v4706
        %s4709 = scalar_lea.vmem %s4550, 1 [#allocation4]
        %v4710 = vld [vmem:[%s4709] ss:$2 sm:$0x1]
        %v4711 = vld [vmem:[%s7 + $0x280] sm:$0xff]
        %v4712 = vld [vmem:[%s7 + $0x288] sm:$0xff]
        %v4713 = vld [vmem:[%s7 + $0x290] sm:$0xff]
        %v4714 = vld [vmem:[%s7 + $0x298] sm:$0xff]
        %v4715 = vld [vmem:[%s7 + $0x2a0] sm:$0xff]
        %v4716 = vld [vmem:[%s7 + $0x2a8] sm:$0xff]
        %v4717 = vld [vmem:[%s7 + $0x2b0] sm:$0xff]
        %v4718 = vld [vmem:[%s7 + $0x2b8] sm:$0xff]
        %v4719 = vld [vmem:[%s7 + $0x2c0] sm:$0xff]
        %v4720 = vld [vmem:[%s7 + $0x2c8] sm:$0xff]
        %v4721 = vld [vmem:[%s7 + $0x2d0] sm:$0xff]
        %v4722 = vld [vmem:[%s7 + $0x2d8] sm:$0xff]
        %v4723 = vld [vmem:[%s7 + $0x2e0] sm:$0xff]
        %v4724 = vld [vmem:[%s7 + $0x2e8] sm:$0xff]
        %v4725 = vld [vmem:[%s7 + $0x2f0] sm:$0xff]
        %v4726 = vld [vmem:[%s7 + $0x2f8] sm:$0xff]
        %v4727 = vpack.c.bf16 %v4710, %v4710
        %v4744 = vunpack.c.l.b16 %v4711
        %v4745 = vunpack.c.h.b16 %v4711
        %v4746 = vunpack.c.l.b16 %v4712
        %v4747 = vunpack.c.h.b16 %v4712
        %v4748 = vunpack.c.l.b16 %v4713
        %v4749 = vunpack.c.h.b16 %v4713
        %v4750 = vunpack.c.l.b16 %v4714
        %v4751 = vunpack.c.h.b16 %v4714
        %v4752 = vunpack.c.l.b16 %v4715
        %v4753 = vunpack.c.h.b16 %v4715
        %v4754 = vunpack.c.l.b16 %v4716
        %v4755 = vunpack.c.h.b16 %v4716
        %v4756 = vunpack.c.l.b16 %v4717
        %v4757 = vunpack.c.h.b16 %v4717
        %v4758 = vunpack.c.l.b16 %v4718
        %v4759 = vunpack.c.h.b16 %v4718
        %v4760 = vunpack.c.l.b16 %v4719
        %v4761 = vunpack.c.h.b16 %v4719
        %v4762 = vunpack.c.l.b16 %v4720
        %v4763 = vunpack.c.h.b16 %v4720
        %v4764 = vunpack.c.l.b16 %v4721
        %v4765 = vunpack.c.h.b16 %v4721
        %v4766 = vunpack.c.l.b16 %v4722
        %v4767 = vunpack.c.h.b16 %v4722
        %v4768 = vunpack.c.l.b16 %v4723
        %v4769 = vunpack.c.h.b16 %v4723
        %v4770 = vunpack.c.l.b16 %v4724
        %v4771 = vunpack.c.h.b16 %v4724
        %v4772 = vunpack.c.l.b16 %v4725
        %v4773 = vunpack.c.h.b16 %v4725
        %v4774 = vunpack.c.l.b16 %v4726
        %v4775 = vunpack.c.h.b16 %v4726
        %v4776 = vpack.c.b16 %v4746, %v4744
        %v4777 = vpack.c.b16 %v4747, %v4745
        %v4778 = vpack.c.b16 %v4750, %v4748
        %v4779 = vpack.c.b16 %v4751, %v4749
        %v4780 = vpack.c.b16 %v4754, %v4752
        %v4781 = vpack.c.b16 %v4755, %v4753
        %v4782 = vpack.c.b16 %v4758, %v4756
        %v4783 = vpack.c.b16 %v4759, %v4757
        %v4784 = vpack.c.b16 %v4762, %v4760
        %v4785 = vpack.c.b16 %v4763, %v4761
        %v4786 = vpack.c.b16 %v4766, %v4764
        %v4787 = vpack.c.b16 %v4767, %v4765
        %v4788 = vpack.c.b16 %v4770, %v4768
        %v4789 = vpack.c.b16 %v4771, %v4769
        %v4790 = vpack.c.b16 %v4774, %v4772
        %v4791 = vpack.c.b16 %v4775, %v4773
        %4808 = vmatprep.subr.bf16.mxu0 %v4777
        %4809 = vmatpush1.bf16.msra.mxu0 %v4776
        %4810 = vmatprep.subr.bf16.mxu0 %v4779
        %4811 = vmatpush1.bf16.msra.mxu0 %v4778
        %4812 = vmatprep.subr.bf16.mxu0 %v4781
        %4813 = vmatpush1.bf16.msra.mxu0 %v4780
        %4814 = vmatprep.subr.bf16.mxu0 %v4783
        %4815 = vmatpush1.bf16.msra.mxu0 %v4782
        %4816 = vmatprep.subr.bf16.mxu0 %v4785
        %4817 = vmatpush1.bf16.msra.mxu0 %v4784
        %4818 = vmatprep.subr.bf16.mxu0 %v4787
        %4819 = vmatpush1.bf16.msra.mxu0 %v4786
        %4820 = vmatprep.subr.bf16.mxu0 %v4789
        %4821 = vmatpush1.bf16.msra.mxu0 %v4788
        %4822 = vmatprep.subr.bf16.mxu0 %v4791
        %4823 = vmatpush1.bf16.msra.mxu0 %v4790
        %4824 = vmatprep.subr.bf16.mxu0 0
        %4825 = vmatpush1.bf16.msra.mxu0 0
        %4826 = vmatprep.subr.bf16.mxu0 0
        %4827 = vmatpush1.bf16.msra.mxu0 0
        %4828 = vmatprep.subr.bf16.mxu0 0
        %4829 = vmatpush1.bf16.msra.mxu0 0
        %4830 = vmatprep.subr.bf16.mxu0 0
        %4831 = vmatpush1.bf16.msra.mxu0 0
        %4832 = vmatprep.subr.bf16.mxu0 0
        %4833 = vmatpush1.bf16.msra.mxu0 0
        %4834 = vmatprep.subr.bf16.mxu0 0
        %4835 = vmatpush1.bf16.msra.mxu0 0
        %4836 = vmatprep.subr.bf16.mxu0 0
        %4837 = vmatpush1.bf16.msra.mxu0 0
        %4838 = vmatprep.subr.bf16.mxu0 0
        %4839 = vmatpush1.bf16.msra.mxu0 0
        %4840 = vmatprep.mubr.bf16.mxu0 0
        %4841 = vmatmul.mubr.bf16.gmra.mrb[0].mxu0 %v4727
        %v4842 = vpop.f32.mrb[0].mxu0
        %v4843 = vadd.f32 0.0, %v4842
        %v4844 = vpop.f32.mrb[0].mxu0
        %v4845 = vadd.f32 0.0, %v4844
        %v4846 = vpop.f32.mrb[0].mxu0
        %v4847 = vpop.f32.mrb[0].mxu0
        %4848 = vdwg.mxu0
        %v4851 = vcombine.low %v4843, %v4845
        %v4853 = vunpack.c.l.s4 1966171168
        %v4854 = vunpack.c.0.s8 %v4853
        %v4855 = vlaneseq
        %v4856 = vshrl.u32 %v4855, 7
        %v4857 = vsub.s32 %v4854, %v4856
        %v4858 = vrot.slane %v4851, %v4857
        %v4860 = vunpack.c.l.s4 1966171168
        %v4861 = vunpack.c.0.s8 %v4860
        %v4862 = vlaneseq
        %v4863 = vshrl.u32 %v4862, 7
        %v4864 = vsub.s32 %v4861, %v4863
        %v4865 = vrot.slane %v4858, %v4864
        %v4867 = vadd.f32 %v4708, %v4865
        %s4868 = scalar_lea.vmem %s4550, 2 [#allocation4]
        %v4869 = vld [vmem:[%s4868] ss:$2 sm:$0x1]
        %v4870 = vld [vmem:[%s7 + $0x300] sm:$0xff]
        %v4871 = vld [vmem:[%s7 + $0x308] sm:$0xff]
        %v4872 = vld [vmem:[%s7 + $0x310] sm:$0xff]
        %v4873 = vld [vmem:[%s7 + $0x318] sm:$0xff]
        %v4874 = vld [vmem:[%s7 + $0x320] sm:$0xff]
        %v4875 = vld [vmem:[%s7 + $0x328] sm:$0xff]
        %v4876 = vld [vmem:[%s7 + $0x330] sm:$0xff]
        %v4877 = vld [vmem:[%s7 + $0x338] sm:$0xff]
        %v4878 = vld [vmem:[%s7 + $0x340] sm:$0xff]
        %v4879 = vld [vmem:[%s7 + $0x348] sm:$0xff]
        %v4880 = vld [vmem:[%s7 + $0x350] sm:$0xff]
        %v4881 = vld [vmem:[%s7 + $0x358] sm:$0xff]
        %v4882 = vld [vmem:[%s7 + $0x360] sm:$0xff]
        %v4883 = vld [vmem:[%s7 + $0x368] sm:$0xff]
        %v4884 = vld [vmem:[%s7 + $0x370] sm:$0xff]
        %v4885 = vld [vmem:[%s7 + $0x378] sm:$0xff]
        %v4886 = vpack.c.bf16 %v4869, %v4869
        %v4903 = vunpack.c.l.b16 %v4870
        %v4904 = vunpack.c.h.b16 %v4870
        %v4905 = vunpack.c.l.b16 %v4871
        %v4906 = vunpack.c.h.b16 %v4871
        %v4907 = vunpack.c.l.b16 %v4872
        %v4908 = vunpack.c.h.b16 %v4872
        %v4909 = vunpack.c.l.b16 %v4873
        %v4910 = vunpack.c.h.b16 %v4873
        %v4911 = vunpack.c.l.b16 %v4874
        %v4912 = vunpack.c.h.b16 %v4874
        %v4913 = vunpack.c.l.b16 %v4875
        %v4914 = vunpack.c.h.b16 %v4875
        %v4915 = vunpack.c.l.b16 %v4876
        %v4916 = vunpack.c.h.b16 %v4876
        %v4917 = vunpack.c.l.b16 %v4877
        %v4918 = vunpack.c.h.b16 %v4877
        %v4919 = vunpack.c.l.b16 %v4878
        %v4920 = vunpack.c.h.b16 %v4878
        %v4921 = vunpack.c.l.b16 %v4879
        %v4922 = vunpack.c.h.b16 %v4879
        %v4923 = vunpack.c.l.b16 %v4880
        %v4924 = vunpack.c.h.b16 %v4880
        %v4925 = vunpack.c.l.b16 %v4881
        %v4926 = vunpack.c.h.b16 %v4881
        %v4927 = vunpack.c.l.b16 %v4882
        %v4928 = vunpack.c.h.b16 %v4882
        %v4929 = vunpack.c.l.b16 %v4883
        %v4930 = vunpack.c.h.b16 %v4883
        %v4931 = vunpack.c.l.b16 %v4884
        %v4932 = vunpack.c.h.b16 %v4884
        %v4933 = vunpack.c.l.b16 %v4885
        %v4934 = vunpack.c.h.b16 %v4885
        %v4935 = vpack.c.b16 %v4905, %v4903
        %v4936 = vpack.c.b16 %v4906, %v4904
        %v4937 = vpack.c.b16 %v4909, %v4907
        %v4938 = vpack.c.b16 %v4910, %v4908
        %v4939 = vpack.c.b16 %v4913, %v4911
        %v4940 = vpack.c.b16 %v4914, %v4912
        %v4941 = vpack.c.b16 %v4917, %v4915
        %v4942 = vpack.c.b16 %v4918, %v4916
        %v4943 = vpack.c.b16 %v4921, %v4919
        %v4944 = vpack.c.b16 %v4922, %v4920
        %v4945 = vpack.c.b16 %v4925, %v4923
        %v4946 = vpack.c.b16 %v4926, %v4924
        %v4947 = vpack.c.b16 %v4929, %v4927
        %v4948 = vpack.c.b16 %v4930, %v4928
        %v4949 = vpack.c.b16 %v4933, %v4931
        %v4950 = vpack.c.b16 %v4934, %v4932
        %4967 = vmatprep.subr.bf16.mxu0 %v4936
        %4968 = vmatpush1.bf16.msra.mxu0 %v4935
        %4969 = vmatprep.subr.bf16.mxu0 %v4938
        %4970 = vmatpush1.bf16.msra.mxu0 %v4937
        %4971 = vmatprep.subr.bf16.mxu0 %v4940
        %4972 = vmatpush1.bf16.msra.mxu0 %v4939
        %4973 = vmatprep.subr.bf16.mxu0 %v4942
        %4974 = vmatpush1.bf16.msra.mxu0 %v4941
        %4975 = vmatprep.subr.bf16.mxu0 %v4944
        %4976 = vmatpush1.bf16.msra.mxu0 %v4943
        %4977 = vmatprep.subr.bf16.mxu0 %v4946
        %4978 = vmatpush1.bf16.msra.mxu0 %v4945
        %4979 = vmatprep.subr.bf16.mxu0 %v4948
        %4980 = vmatpush1.bf16.msra.mxu0 %v4947
        %4981 = vmatprep.subr.bf16.mxu0 %v4950
        %4982 = vmatpush1.bf16.msra.mxu0 %v4949
        %4983 = vmatprep.subr.bf16.mxu0 0
        %4984 = vmatpush1.bf16.msra.mxu0 0
        %4985 = vmatprep.subr.bf16.mxu0 0
        %4986 = vmatpush1.bf16.msra.mxu0 0
        %4987 = vmatprep.subr.bf16.mxu0 0
        %4988 = vmatpush1.bf16.msra.mxu0 0
        %4989 = vmatprep.subr.bf16.mxu0 0
        %4990 = vmatpush1.bf16.msra.mxu0 0
        %4991 = vmatprep.subr.bf16.mxu0 0
        %4992 = vmatpush1.bf16.msra.mxu0 0
        %4993 = vmatprep.subr.bf16.mxu0 0
        %4994 = vmatpush1.bf16.msra.mxu0 0
        %4995 = vmatprep.subr.bf16.mxu0 0
        %4996 = vmatpush1.bf16.msra.mxu0 0
        %4997 = vmatprep.subr.bf16.mxu0 0
        %4998 = vmatpush1.bf16.msra.mxu0 0
        %4999 = vmatprep.mubr.bf16.mxu0 0
        %5000 = vmatmul.mubr.bf16.gmra.mrb[0].mxu0 %v4886
        %v5001 = vpop.f32.mrb[0].mxu0
        %v5002 = vadd.f32 0.0, %v5001
        %v5003 = vpop.f32.mrb[0].mxu0
        %v5004 = vadd.f32 0.0, %v5003
        %v5005 = vpop.f32.mrb[0].mxu0
        %v5006 = vpop.f32.mrb[0].mxu0
        %5007 = vdwg.mxu0
        %v5010 = vcombine.low %v5002, %v5004
        %v5012 = vunpack.c.l.s4 1966171168
        %v5013 = vunpack.c.0.s8 %v5012
        %v5014 = vlaneseq
        %v5015 = vshrl.u32 %v5014, 7
        %v5016 = vsub.s32 %v5013, %v5015
        %v5017 = vrot.slane %v5010, %v5016
        %v5019 = vunpack.c.l.s4 1966171168
        %v5020 = vunpack.c.0.s8 %v5019
        %v5021 = vlaneseq
        %v5022 = vshrl.u32 %v5021, 7
        %v5023 = vsub.s32 %v5020, %v5022
        %v5024 = vrot.slane %v5017, %v5023
        %v5026 = vadd.f32 %v4867, %v5024
        %s5027 = scalar_lea.vmem %s4550, 3 [#allocation4]
        %v5028 = vld [vmem:[%s5027] ss:$2 sm:$0x1]
        %v5029 = vld [vmem:[%s7 + $0x380] sm:$0xff]
        %v5030 = vld [vmem:[%s7 + $0x388] sm:$0xff]
        %v5031 = vld [vmem:[%s7 + $0x390] sm:$0xff]
        %v5032 = vld [vmem:[%s7 + $0x398] sm:$0xff]
        %v5033 = vld [vmem:[%s7 + $0x3a0] sm:$0xff]
        %v5034 = vld [vmem:[%s7 + $0x3a8] sm:$0xff]
        %v5035 = vld [vmem:[%s7 + $0x3b0] sm:$0xff]
        %v5036 = vld [vmem:[%s7 + $0x3b8] sm:$0xff]
        %v5037 = vld [vmem:[%s7 + $0x3c0] sm:$0xff]
        %v5038 = vld [vmem:[%s7 + $0x3c8] sm:$0xff]
        %v5039 = vld [vmem:[%s7 + $0x3d0] sm:$0xff]
        %v5040 = vld [vmem:[%s7 + $0x3d8] sm:$0xff]
        %v5041 = vld [vmem:[%s7 + $0x3e0] sm:$0xff]
        %v5042 = vld [vmem:[%s7 + $0x3e8] sm:$0xff]
        %v5043 = vld [vmem:[%s7 + $0x3f0] sm:$0xff]
        %v5044 = vld [vmem:[%s7 + $0x3f8] sm:$0xff]
        %v5045 = vpack.c.bf16 %v5028, %v5028
        %v5062 = vunpack.c.l.b16 %v5029
        %v5063 = vunpack.c.h.b16 %v5029
        %v5064 = vunpack.c.l.b16 %v5030
        %v5065 = vunpack.c.h.b16 %v5030
        %v5066 = vunpack.c.l.b16 %v5031
        %v5067 = vunpack.c.h.b16 %v5031
        %v5068 = vunpack.c.l.b16 %v5032
        %v5069 = vunpack.c.h.b16 %v5032
        %v5070 = vunpack.c.l.b16 %v5033
        %v5071 = vunpack.c.h.b16 %v5033
        %v5072 = vunpack.c.l.b16 %v5034
        %v5073 = vunpack.c.h.b16 %v5034
        %v5074 = vunpack.c.l.b16 %v5035
        %v5075 = vunpack.c.h.b16 %v5035
        %v5076 = vunpack.c.l.b16 %v5036
        %v5077 = vunpack.c.h.b16 %v5036
        %v5078 = vunpack.c.l.b16 %v5037
        %v5079 = vunpack.c.h.b16 %v5037
        %v5080 = vunpack.c.l.b16 %v5038
        %v5081 = vunpack.c.h.b16 %v5038
        %v5082 = vunpack.c.l.b16 %v5039
        %v5083 = vunpack.c.h.b16 %v5039
        %v5084 = vunpack.c.l.b16 %v5040
        %v5085 = vunpack.c.h.b16 %v5040
        %v5086 = vunpack.c.l.b16 %v5041
        %v5087 = vunpack.c.h.b16 %v5041
        %v5088 = vunpack.c.l.b16 %v5042
        %v5089 = vunpack.c.h.b16 %v5042
        %v5090 = vunpack.c.l.b16 %v5043
        %v5091 = vunpack.c.h.b16 %v5043
        %v5092 = vunpack.c.l.b16 %v5044
        %v5093 = vunpack.c.h.b16 %v5044
        %v5094 = vpack.c.b16 %v5064, %v5062
        %v5095 = vpack.c.b16 %v5065, %v5063
        %v5096 = vpack.c.b16 %v5068, %v5066
        %v5097 = vpack.c.b16 %v5069, %v5067
        %v5098 = vpack.c.b16 %v5072, %v5070
        %v5099 = vpack.c.b16 %v5073, %v5071
        %v5100 = vpack.c.b16 %v5076, %v5074
        %v5101 = vpack.c.b16 %v5077, %v5075
        %v5102 = vpack.c.b16 %v5080, %v5078
        %v5103 = vpack.c.b16 %v5081, %v5079
        %v5104 = vpack.c.b16 %v5084, %v5082
        %v5105 = vpack.c.b16 %v5085, %v5083
        %v5106 = vpack.c.b16 %v5088, %v5086
        %v5107 = vpack.c.b16 %v5089, %v5087
        %v5108 = vpack.c.b16 %v5092, %v5090
        %v5109 = vpack.c.b16 %v5093, %v5091
        %5126 = vmatprep.subr.bf16.mxu0 %v5095
        %5127 = vmatpush1.bf16.msra.mxu0 %v5094
        %5128 = vmatprep.subr.bf16.mxu0 %v5097
        %5129 = vmatpush1.bf16.msra.mxu0 %v5096
        %5130 = vmatprep.subr.bf16.mxu0 %v5099
        %5131 = vmatpush1.bf16.msra.mxu0 %v5098
        %5132 = vmatprep.subr.bf16.mxu0 %v5101
        %5133 = vmatpush1.bf16.msra.mxu0 %v5100
        %5134 = vmatprep.subr.bf16.mxu0 %v5103
        %5135 = vmatpush1.bf16.msra.mxu0 %v5102
        %5136 = vmatprep.subr.bf16.mxu0 %v5105
        %5137 = vmatpush1.bf16.msra.mxu0 %v5104
        %5138 = vmatprep.subr.bf16.mxu0 %v5107
        %5139 = vmatpush1.bf16.msra.mxu0 %v5106
        %5140 = vmatprep.subr.bf16.mxu0 %v5109
        %5141 = vmatpush1.bf16.msra.mxu0 %v5108
        %5142 = vmatprep.subr.bf16.mxu0 0
        %5143 = vmatpush1.bf16.msra.mxu0 0
        %5144 = vmatprep.subr.bf16.mxu0 0
        %5145 = vmatpush1.bf16.msra.mxu0 0
        %5146 = vmatprep.subr.bf16.mxu0 0
        %5147 = vmatpush1.bf16.msra.mxu0 0
        %5148 = vmatprep.subr.bf16.mxu0 0
        %5149 = vmatpush1.bf16.msra.mxu0 0
        %5150 = vmatprep.subr.bf16.mxu0 0
        %5151 = vmatpush1.bf16.msra.mxu0 0
        %5152 = vmatprep.subr.bf16.mxu0 0
        %5153 = vmatpush1.bf16.msra.mxu0 0
        %5154 = vmatprep.subr.bf16.mxu0 0
        %5155 = vmatpush1.bf16.msra.mxu0 0
        %5156 = vmatprep.subr.bf16.mxu0 0
        %5157 = vmatpush1.bf16.msra.mxu0 0
        %5158 = vmatprep.mubr.bf16.mxu0 0
        %5159 = vmatmul.mubr.bf16.gmra.mrb[0].mxu0 %v5045
        %v5160 = vpop.f32.mrb[0].mxu0
        %v5161 = vadd.f32 0.0, %v5160
        %v5162 = vpop.f32.mrb[0].mxu0
        %v5163 = vadd.f32 0.0, %v5162
        %v5164 = vpop.f32.mrb[0].mxu0
        %v5165 = vpop.f32.mrb[0].mxu0
        %5166 = vdwg.mxu0
        %v5169 = vcombine.low %v5161, %v5163
        %v5171 = vunpack.c.l.s4 1966171168
        %v5172 = vunpack.c.0.s8 %v5171
        %v5173 = vlaneseq
        %v5174 = vshrl.u32 %v5173, 7
        %v5175 = vsub.s32 %v5172, %v5174
        %v5176 = vrot.slane %v5169, %v5175
        %v5178 = vunpack.c.l.s4 1966171168
        %v5179 = vunpack.c.0.s8 %v5178
        %v5180 = vlaneseq
        %v5181 = vshrl.u32 %v5180, 7
        %v5182 = vsub.s32 %v5179, %v5181
        %v5183 = vrot.slane %v5176, %v5182
        %v5185 = vadd.f32 %v5026, %v5183
        %s5186 = scalar_lea.vmem [#allocation4], 8
        %v5187 = vld [vmem:[%s5186] ss:$2 sm:$0x1]
        %v5188 = vld [vmem:[%s7 + $0x400] sm:$0xff]
        %v5189 = vld [vmem:[%s7 + $0x408] sm:$0xff]
        %v5190 = vld [vmem:[%s7 + $0x410] sm:$0xff]
        %v5191 = vld [vmem:[%s7 + $0x418] sm:$0xff]
        %v5192 = vld [vmem:[%s7 + $0x420] sm:$0xff]
        %v5193 = vld [vmem:[%s7 + $0x428] sm:$0xff]
        %v5194 = vld [vmem:[%s7 + $0x430] sm:$0xff]
        %v5195 = vld [vmem:[%s7 + $0x438] sm:$0xff]
        %v5196 = vld [vmem:[%s7 + $0x440] sm:$0xff]
        %v5197 = vld [vmem:[%s7 + $0x448] sm:$0xff]
        %v5198 = vld [vmem:[%s7 + $0x450] sm:$0xff]
        %v5199 = vld [vmem:[%s7 + $0x458] sm:$0xff]
        %v5200 = vld [vmem:[%s7 + $0x460] sm:$0xff]
        %v5201 = vld [vmem:[%s7 + $0x468] sm:$0xff]
        %v5202 = vld [vmem:[%s7 + $0x470] sm:$0xff]
        %v5203 = vld [vmem:[%s7 + $0x478] sm:$0xff]
        %v5204 = vpack.c.bf16 %v5187, %v5187
        %v5221 = vunpack.c.l.b16 %v5188
        %v5222 = vunpack.c.h.b16 %v5188
        %v5223 = vunpack.c.l.b16 %v5189
        %v5224 = vunpack.c.h.b16 %v5189
        %v5225 = vunpack.c.l.b16 %v5190
        %v5226 = vunpack.c.h.b16 %v5190
        %v5227 = vunpack.c.l.b16 %v5191
        %v5228 = vunpack.c.h.b16 %v5191
        %v5229 = vunpack.c.l.b16 %v5192
        %v5230 = vunpack.c.h.b16 %v5192
        %v5231 = vunpack.c.l.b16 %v5193
        %v5232 = vunpack.c.h.b16 %v5193
        %v5233 = vunpack.c.l.b16 %v5194
        %v5234 = vunpack.c.h.b16 %v5194
        %v5235 = vunpack.c.l.b16 %v5195
        %v5236 = vunpack.c.h.b16 %v5195
        %v5237 = vunpack.c.l.b16 %v5196
        %v5238 = vunpack.c.h.b16 %v5196
        %v5239 = vunpack.c.l.b16 %v5197
        %v5240 = vunpack.c.h.b16 %v5197
        %v5241 = vunpack.c.l.b16 %v5198
        %v5242 = vunpack.c.h.b16 %v5198
        %v5243 = vunpack.c.l.b16 %v5199
        %v5244 = vunpack.c.h.b16 %v5199
        %v5245 = vunpack.c.l.b16 %v5200
        %v5246 = vunpack.c.h.b16 %v5200
        %v5247 = vunpack.c.l.b16 %v5201
        %v5248 = vunpack.c.h.b16 %v5201
        %v5249 = vunpack.c.l.b16 %v5202
        %v5250 = vunpack.c.h.b16 %v5202
        %v5251 = vunpack.c.l.b16 %v5203
        %v5252 = vunpack.c.h.b16 %v5203
        %v5253 = vpack.c.b16 %v5223, %v5221
        %v5254 = vpack.c.b16 %v5224, %v5222
        %v5255 = vpack.c.b16 %v5227, %v5225
        %v5256 = vpack.c.b16 %v5228, %v5226
        %v5257 = vpack.c.b16 %v5231, %v5229
        %v5258 = vpack.c.b16 %v5232, %v5230
        %v5259 = vpack.c.b16 %v5235, %v5233
        %v5260 = vpack.c.b16 %v5236, %v5234
        %v5261 = vpack.c.b16 %v5239, %v5237
        %v5262 = vpack.c.b16 %v5240, %v5238
        %v5263 = vpack.c.b16 %v5243, %v5241
        %v5264 = vpack.c.b16 %v5244, %v5242
        %v5265 = vpack.c.b16 %v5247, %v5245
        %v5266 = vpack.c.b16 %v5248, %v5246
        %v5267 = vpack.c.b16 %v5251, %v5249
        %v5268 = vpack.c.b16 %v5252, %v5250
        %5285 = vmatprep.subr.bf16.mxu0 %v5254
        %5286 = vmatpush1.bf16.msra.mxu0 %v5253
        %5287 = vmatprep.subr.bf16.mxu0 %v5256
        %5288 = vmatpush1.bf16.msra.mxu0 %v5255
        %5289 = vmatprep.subr.bf16.mxu0 %v5258
        %5290 = vmatpush1.bf16.msra.mxu0 %v5257
        %5291 = vmatprep.subr.bf16.mxu0 %v5260
        %5292 = vmatpush1.bf16.msra.mxu0 %v5259
        %5293 = vmatprep.subr.bf16.mxu0 %v5262
        %5294 = vmatpush1.bf16.msra.mxu0 %v5261
        %5295 = vmatprep.subr.bf16.mxu0 %v5264
        %5296 = vmatpush1.bf16.msra.mxu0 %v5263
        %5297 = vmatprep.subr.bf16.mxu0 %v5266
        %5298 = vmatpush1.bf16.msra.mxu0 %v5265
        %5299 = vmatprep.subr.bf16.mxu0 %v5268
        %5300 = vmatpush1.bf16.msra.mxu0 %v5267
        %5301 = vmatprep.subr.bf16.mxu0 0
        %5302 = vmatpush1.bf16.msra.mxu0 0
        %5303 = vmatprep.subr.bf16.mxu0 0
        %5304 = vmatpush1.bf16.msra.mxu0 0
        %5305 = vmatprep.subr.bf16.mxu0 0
        %5306 = vmatpush1.bf16.msra.mxu0 0
        %5307 = vmatprep.subr.bf16.mxu0 0
        %5308 = vmatpush1.bf16.msra.mxu0 0
        %5309 = vmatprep.subr.bf16.mxu0 0
        %5310 = vmatpush1.bf16.msra.mxu0 0
        %5311 = vmatprep.subr.bf16.mxu0 0
        %5312 = vmatpush1.bf16.msra.mxu0 0
        %5313 = vmatprep.subr.bf16.mxu0 0
        %5314 = vmatpush1.bf16.msra.mxu0 0
        %5315 = vmatprep.subr.bf16.mxu0 0
        %5316 = vmatpush1.bf16.msra.mxu0 0
        %5317 = vmatprep.mubr.bf16.mxu0 0
        %5318 = vmatmul.mubr.bf16.gmra.mrb[0].mxu0 %v5204
        %v5319 = vpop.f32.mrb[0].mxu0
        %v5320 = vadd.f32 0.0, %v5319
        %v5321 = vpop.f32.mrb[0].mxu0
        %v5322 = vadd.f32 0.0, %v5321
        %v5323 = vpop.f32.mrb[0].mxu0
        %v5324 = vpop.f32.mrb[0].mxu0
        %5325 = vdwg.mxu0
        %v5328 = vcombine.low %v5320, %v5322
        %v5330 = vunpack.c.l.s4 1966171168
        %v5331 = vunpack.c.0.s8 %v5330
        %v5332 = vlaneseq
        %v5333 = vshrl.u32 %v5332, 7
        %v5334 = vsub.s32 %v5331, %v5333
        %v5335 = vrot.slane %v5328, %v5334
        %v5337 = vunpack.c.l.s4 1966171168
        %v5338 = vunpack.c.0.s8 %v5337
        %v5339 = vlaneseq
        %v5340 = vshrl.u32 %v5339, 7
        %v5341 = vsub.s32 %v5338, %v5340
        %v5342 = vrot.slane %v5335, %v5341
        %v5344 = vadd.f32 %v5185, %v5342
        %s5345 = scalar_lea.vmem %s5186, 1 [#allocation4]
        %v5346 = vld [vmem:[%s5345] ss:$2 sm:$0x1]
        %v5347 = vld [vmem:[%s7 + $0x480] sm:$0xff]
        %v5348 = vld [vmem:[%s7 + $0x488] sm:$0xff]
        %v5349 = vld [vmem:[%s7 + $0x490] sm:$0xff]
        %v5350 = vld [vmem:[%s7 + $0x498] sm:$0xff]
        %v5351 = vld [vmem:[%s7 + $0x4a0] sm:$0xff]
        %v5352 = vld [vmem:[%s7 + $0x4a8] sm:$0xff]
        %v5353 = vld [vmem:[%s7 + $0x4b0] sm:$0xff]
        %v5354 = vld [vmem:[%s7 + $0x4b8] sm:$0xff]
        %v5355 = vld [vmem:[%s7 + $0x4c0] sm:$0xff]
        %v5356 = vld [vmem:[%s7 + $0x4c8] sm:$0xff]
        %v5357 = vld [vmem:[%s7 + $0x4d0] sm:$0xff]
        %v5358 = vld [vmem:[%s7 + $0x4d8] sm:$0xff]
        %v5359 = vld [vmem:[%s7 + $0x4e0] sm:$0xff]
        %v5360 = vld [vmem:[%s7 + $0x4e8] sm:$0xff]
        %v5361 = vld [vmem:[%s7 + $0x4f0] sm:$0xff]
        %v5362 = vld [vmem:[%s7 + $0x4f8] sm:$0xff]
        %v5363 = vpack.c.bf16 %v5346, %v5346
        %v5380 = vunpack.c.l.b16 %v5347
        %v5381 = vunpack.c.h.b16 %v5347
        %v5382 = vunpack.c.l.b16 %v5348
        %v5383 = vunpack.c.h.b16 %v5348
        %v5384 = vunpack.c.l.b16 %v5349
        %v5385 = vunpack.c.h.b16 %v5349
        %v5386 = vunpack.c.l.b16 %v5350
        %v5387 = vunpack.c.h.b16 %v5350
        %v5388 = vunpack.c.l.b16 %v5351
        %v5389 = vunpack.c.h.b16 %v5351
        %v5390 = vunpack.c.l.b16 %v5352
        %v5391 = vunpack.c.h.b16 %v5352
        %v5392 = vunpack.c.l.b16 %v5353
        %v5393 = vunpack.c.h.b16 %v5353
        %v5394 = vunpack.c.l.b16 %v5354
        %v5395 = vunpack.c.h.b16 %v5354
        %v5396 = vunpack.c.l.b16 %v5355
        %v5397 = vunpack.c.h.b16 %v5355
        %v5398 = vunpack.c.l.b16 %v5356
        %v5399 = vunpack.c.h.b16 %v5356
        %v5400 = vunpack.c.l.b16 %v5357
        %v5401 = vunpack.c.h.b16 %v5357
        %v5402 = vunpack.c.l.b16 %v5358
        %v5403 = vunpack.c.h.b16 %v5358
        %v5404 = vunpack.c.l.b16 %v5359
        %v5405 = vunpack.c.h.b16 %v5359
        %v5406 = vunpack.c.l.b16 %v5360
        %v5407 = vunpack.c.h.b16 %v5360
        %v5408 = vunpack.c.l.b16 %v5361
        %v5409 = vunpack.c.h.b16 %v5361
        %v5410 = vunpack.c.l.b16 %v5362
        %v5411 = vunpack.c.h.b16 %v5362
        %v5412 = vpack.c.b16 %v5382, %v5380
        %v5413 = vpack.c.b16 %v5383, %v5381
        %v5414 = vpack.c.b16 %v5386, %v5384
        %v5415 = vpack.c.b16 %v5387, %v5385
        %v5416 = vpack.c.b16 %v5390, %v5388
        %v5417 = vpack.c.b16 %v5391, %v5389
        %v5418 = vpack.c.b16 %v5394, %v5392
        %v5419 = vpack.c.b16 %v5395, %v5393
        %v5420 = vpack.c.b16 %v5398, %v5396
        %v5421 = vpack.c.b16 %v5399, %v5397
        %v5422 = vpack.c.b16 %v5402, %v5400
        %v5423 = vpack.c.b16 %v5403, %v5401
        %v5424 = vpack.c.b16 %v5406, %v5404
        %v5425 = vpack.c.b16 %v5407, %v5405
        %v5426 = vpack.c.b16 %v5410, %v5408
        %v5427 = vpack.c.b16 %v5411, %v5409
        %5444 = vmatprep.subr.bf16.mxu0 %v5413
        %5445 = vmatpush1.bf16.msra.mxu0 %v5412
        %5446 = vmatprep.subr.bf16.mxu0 %v5415
        %5447 = vmatpush1.bf16.msra.mxu0 %v5414
        %5448 = vmatprep.subr.bf16.mxu0 %v5417
        %5449 = vmatpush1.bf16.msra.mxu0 %v5416
        %5450 = vmatprep.subr.bf16.mxu0 %v5419
        %5451 = vmatpush1.bf16.msra.mxu0 %v5418
        %5452 = vmatprep.subr.bf16.mxu0 %v5421
        %5453 = vmatpush1.bf16.msra.mxu0 %v5420
        %5454 = vmatprep.subr.bf16.mxu0 %v5423
        %5455 = vmatpush1.bf16.msra.mxu0 %v5422
        %5456 = vmatprep.subr.bf16.mxu0 %v5425
        %5457 = vmatpush1.bf16.msra.mxu0 %v5424
        %5458 = vmatprep.subr.bf16.mxu0 %v5427
        %5459 = vmatpush1.bf16.msra.mxu0 %v5426
        %5460 = vmatprep.subr.bf16.mxu0 0
        %5461 = vmatpush1.bf16.msra.mxu0 0
        %5462 = vmatprep.subr.bf16.mxu0 0
        %5463 = vmatpush1.bf16.msra.mxu0 0
        %5464 = vmatprep.subr.bf16.mxu0 0
        %5465 = vmatpush1.bf16.msra.mxu0 0
        %5466 = vmatprep.subr.bf16.mxu0 0
        %5467 = vmatpush1.bf16.msra.mxu0 0
        %5468 = vmatprep.subr.bf16.mxu0 0
        %5469 = vmatpush1.bf16.msra.mxu0 0
        %5470 = vmatprep.subr.bf16.mxu0 0
        %5471 = vmatpush1.bf16.msra.mxu0 0
        %5472 = vmatprep.subr.bf16.mxu0 0
        %5473 = vmatpush1.bf16.msra.mxu0 0
        %5474 = vmatprep.subr.bf16.mxu0 0
        %5475 = vmatpush1.bf16.msra.mxu0 0
        %5476 = vmatprep.mubr.bf16.mxu0 0
        %5477 = vmatmul.mubr.bf16.gmra.mrb[0].mxu0 %v5363
        %v5478 = vpop.f32.mrb[0].mxu0
        %v5479 = vadd.f32 0.0, %v5478
        %v5480 = vpop.f32.mrb[0].mxu0
        %v5481 = vadd.f32 0.0, %v5480
        %v5482 = vpop.f32.mrb[0].mxu0
        %v5483 = vpop.f32.mrb[0].mxu0
        %5484 = vdwg.mxu0
        %v5487 = vcombine.low %v5479, %v5481
        %v5489 = vunpack.c.l.s4 1966171168
        %v5490 = vunpack.c.0.s8 %v5489
        %v5491 = vlaneseq
        %v5492 = vshrl.u32 %v5491, 7
        %v5493 = vsub.s32 %v5490, %v5492
        %v5494 = vrot.slane %v5487, %v5493
        %v5496 = vunpack.c.l.s4 1966171168
        %v5497 = vunpack.c.0.s8 %v5496
        %v5498 = vlaneseq
        %v5499 = vshrl.u32 %v5498, 7
        %v5500 = vsub.s32 %v5497, %v5499
        %v5501 = vrot.slane %v5494, %v5500
        %v5503 = vadd.f32 %v5344, %v5501
        %s5504 = scalar_lea.vmem %s5186, 2 [#allocation4]
        %v5505 = vld [vmem:[%s5504] ss:$2 sm:$0x1]
        %v5506 = vld [vmem:[%s7 + $0x500] sm:$0xff]
        %v5507 = vld [vmem:[%s7 + $0x508] sm:$0xff]
        %v5508 = vld [vmem:[%s7 + $0x510] sm:$0xff]
        %v5509 = vld [vmem:[%s7 + $0x518] sm:$0xff]
        %v5510 = vld [vmem:[%s7 + $0x520] sm:$0xff]
        %v5511 = vld [vmem:[%s7 + $0x528] sm:$0xff]
        %v5512 = vld [vmem:[%s7 + $0x530] sm:$0xff]
        %v5513 = vld [vmem:[%s7 + $0x538] sm:$0xff]
        %v5514 = vld [vmem:[%s7 + $0x540] sm:$0xff]
        %v5515 = vld [vmem:[%s7 + $0x548] sm:$0xff]
        %v5516 = vld [vmem:[%s7 + $0x550] sm:$0xff]
        %v5517 = vld [vmem:[%s7 + $0x558] sm:$0xff]
        %v5518 = vld [vmem:[%s7 + $0x560] sm:$0xff]
        %v5519 = vld [vmem:[%s7 + $0x568] sm:$0xff]
        %v5520 = vld [vmem:[%s7 + $0x570] sm:$0xff]
        %v5521 = vld [vmem:[%s7 + $0x578] sm:$0xff]
        %v5522 = vpack.c.bf16 %v5505, %v5505
        %v5539 = vunpack.c.l.b16 %v5506
        %v5540 = vunpack.c.h.b16 %v5506
        %v5541 = vunpack.c.l.b16 %v5507
        %v5542 = vunpack.c.h.b16 %v5507
        %v5543 = vunpack.c.l.b16 %v5508
        %v5544 = vunpack.c.h.b16 %v5508
        %v5545 = vunpack.c.l.b16 %v5509
        %v5546 = vunpack.c.h.b16 %v5509
        %v5547 = vunpack.c.l.b16 %v5510
        %v5548 = vunpack.c.h.b16 %v5510
        %v5549 = vunpack.c.l.b16 %v5511
        %v5550 = vunpack.c.h.b16 %v5511
        %v5551 = vunpack.c.l.b16 %v5512
        %v5552 = vunpack.c.h.b16 %v5512
        %v5553 = vunpack.c.l.b16 %v5513
        %v5554 = vunpack.c.h.b16 %v5513
        %v5555 = vunpack.c.l.b16 %v5514
        %v5556 = vunpack.c.h.b16 %v5514
        %v5557 = vunpack.c.l.b16 %v5515
        %v5558 = vunpack.c.h.b16 %v5515
        %v5559 = vunpack.c.l.b16 %v5516
        %v5560 = vunpack.c.h.b16 %v5516
        %v5561 = vunpack.c.l.b16 %v5517
        %v5562 = vunpack.c.h.b16 %v5517
        %v5563 = vunpack.c.l.b16 %v5518
        %v5564 = vunpack.c.h.b16 %v5518
        %v5565 = vunpack.c.l.b16 %v5519
        %v5566 = vunpack.c.h.b16 %v5519
        %v5567 = vunpack.c.l.b16 %v5520
        %v5568 = vunpack.c.h.b16 %v5520
        %v5569 = vunpack.c.l.b16 %v5521
        %v5570 = vunpack.c.h.b16 %v5521
        %v5571 = vpack.c.b16 %v5541, %v5539
        %v5572 = vpack.c.b16 %v5542, %v5540
        %v5573 = vpack.c.b16 %v5545, %v5543
        %v5574 = vpack.c.b16 %v5546, %v5544
        %v5575 = vpack.c.b16 %v5549, %v5547
        %v5576 = vpack.c.b16 %v5550, %v5548
        %v5577 = vpack.c.b16 %v5553, %v5551
        %v5578 = vpack.c.b16 %v5554, %v5552
        %v5579 = vpack.c.b16 %v5557, %v5555
        %v5580 = vpack.c.b16 %v5558, %v5556
        %v5581 = vpack.c.b16 %v5561, %v5559
        %v5582 = vpack.c.b16 %v5562, %v5560
        %v5583 = vpack.c.b16 %v5565, %v5563
        %v5584 = vpack.c.b16 %v5566, %v5564
        %v5585 = vpack.c.b16 %v5569, %v5567
        %v5586 = vpack.c.b16 %v5570, %v5568
        %5603 = vmatprep.subr.bf16.mxu0 %v5572
        %5604 = vmatpush1.bf16.msra.mxu0 %v5571
        %5605 = vmatprep.subr.bf16.mxu0 %v5574
        %5606 = vmatpush1.bf16.msra.mxu0 %v5573
        %5607 = vmatprep.subr.bf16.mxu0 %v5576
        %5608 = vmatpush1.bf16.msra.mxu0 %v5575
        %5609 = vmatprep.subr.bf16.mxu0 %v5578
        %5610 = vmatpush1.bf16.msra.mxu0 %v5577
        %5611 = vmatprep.subr.bf16.mxu0 %v5580
        %5612 = vmatpush1.bf16.msra.mxu0 %v5579
        %5613 = vmatprep.subr.bf16.mxu0 %v5582
        %5614 = vmatpush1.bf16.msra.mxu0 %v5581
        %5615 = vmatprep.subr.bf16.mxu0 %v5584
        %5616 = vmatpush1.bf16.msra.mxu0 %v5583
        %5617 = vmatprep.subr.bf16.mxu0 %v5586
        %5618 = vmatpush1.bf16.msra.mxu0 %v5585
        %5619 = vmatprep.subr.bf16.mxu0 0
        %5620 = vmatpush1.bf16.msra.mxu0 0
        %5621 = vmatprep.subr.bf16.mxu0 0
        %5622 = vmatpush1.bf16.msra.mxu0 0
        %5623 = vmatprep.subr.bf16.mxu0 0
        %5624 = vmatpush1.bf16.msra.mxu0 0
        %5625 = vmatprep.subr.bf16.mxu0 0
        %5626 = vmatpush1.bf16.msra.mxu0 0
        %5627 = vmatprep.subr.bf16.mxu0 0
        %5628 = vmatpush1.bf16.msra.mxu0 0
        %5629 = vmatprep.subr.bf16.mxu0 0
        %5630 = vmatpush1.bf16.msra.mxu0 0
        %5631 = vmatprep.subr.bf16.mxu0 0
        %5632 = vmatpush1.bf16.msra.mxu0 0
        %5633 = vmatprep.subr.bf16.mxu0 0
        %5634 = vmatpush1.bf16.msra.mxu0 0
        %5635 = vmatprep.mubr.bf16.mxu0 0
        %5636 = vmatmul.mubr.bf16.gmra.mrb[0].mxu0 %v5522
        %v5637 = vpop.f32.mrb[0].mxu0
        %v5638 = vadd.f32 0.0, %v5637
        %v5639 = vpop.f32.mrb[0].mxu0
        %v5640 = vadd.f32 0.0, %v5639
        %v5641 = vpop.f32.mrb[0].mxu0
        %v5642 = vpop.f32.mrb[0].mxu0
        %5643 = vdwg.mxu0
        %v5646 = vcombine.low %v5638, %v5640
        %v5648 = vunpack.c.l.s4 1966171168
        %v5649 = vunpack.c.0.s8 %v5648
        %v5650 = vlaneseq
        %v5651 = vshrl.u32 %v5650, 7
        %v5652 = vsub.s32 %v5649, %v5651
        %v5653 = vrot.slane %v5646, %v5652
        %v5655 = vunpack.c.l.s4 1966171168
        %v5656 = vunpack.c.0.s8 %v5655
        %v5657 = vlaneseq
        %v5658 = vshrl.u32 %v5657, 7
        %v5659 = vsub.s32 %v5656, %v5658
        %v5660 = vrot.slane %v5653, %v5659
        %v5662 = vadd.f32 %v5503, %v5660
        %s5663 = scalar_lea.vmem %s5186, 3 [#allocation4]
        %v5664 = vld [vmem:[%s5663] ss:$2 sm:$0x1]
        %v5665 = vld [vmem:[%s7 + $0x580] sm:$0xff]
        %v5666 = vld [vmem:[%s7 + $0x588] sm:$0xff]
        %v5667 = vld [vmem:[%s7 + $0x590] sm:$0xff]
        %v5668 = vld [vmem:[%s7 + $0x598] sm:$0xff]
        %v5669 = vld [vmem:[%s7 + $0x5a0] sm:$0xff]
        %v5670 = vld [vmem:[%s7 + $0x5a8] sm:$0xff]
        %v5671 = vld [vmem:[%s7 + $0x5b0] sm:$0xff]
        %v5672 = vld [vmem:[%s7 + $0x5b8] sm:$0xff]
        %v5673 = vld [vmem:[%s7 + $0x5c0] sm:$0xff]
        %v5674 = vld [vmem:[%s7 + $0x5c8] sm:$0xff]
        %v5675 = vld [vmem:[%s7 + $0x5d0] sm:$0xff]
        %v5676 = vld [vmem:[%s7 + $0x5d8] sm:$0xff]
        %v5677 = vld [vmem:[%s7 + $0x5e0] sm:$0xff]
        %v5678 = vld [vmem:[%s7 + $0x5e8] sm:$0xff]
        %v5679 = vld [vmem:[%s7 + $0x5f0] sm:$0xff]
        %v5680 = vld [vmem:[%s7 + $0x5f8] sm:$0xff]
        %v5681 = vpack.c.bf16 %v5664, %v5664
        %v5698 = vunpack.c.l.b16 %v5665
        %v5699 = vunpack.c.h.b16 %v5665
        %v5700 = vunpack.c.l.b16 %v5666
        %v5701 = vunpack.c.h.b16 %v5666
        %v5702 = vunpack.c.l.b16 %v5667
        %v5703 = vunpack.c.h.b16 %v5667
        %v5704 = vunpack.c.l.b16 %v5668
        %v5705 = vunpack.c.h.b16 %v5668
        %v5706 = vunpack.c.l.b16 %v5669
        %v5707 = vunpack.c.h.b16 %v5669
        %v5708 = vunpack.c.l.b16 %v5670
        %v5709 = vunpack.c.h.b16 %v5670
        %v5710 = vunpack.c.l.b16 %v5671
        %v5711 = vunpack.c.h.b16 %v5671
        %v5712 = vunpack.c.l.b16 %v5672
        %v5713 = vunpack.c.h.b16 %v5672
        %v5714 = vunpack.c.l.b16 %v5673
        %v5715 = vunpack.c.h.b16 %v5673
        %v5716 = vunpack.c.l.b16 %v5674
        %v5717 = vunpack.c.h.b16 %v5674
        %v5718 = vunpack.c.l.b16 %v5675
        %v5719 = vunpack.c.h.b16 %v5675
        %v5720 = vunpack.c.l.b16 %v5676
        %v5721 = vunpack.c.h.b16 %v5676
        %v5722 = vunpack.c.l.b16 %v5677
        %v5723 = vunpack.c.h.b16 %v5677
        %v5724 = vunpack.c.l.b16 %v5678
        %v5725 = vunpack.c.h.b16 %v5678
        %v5726 = vunpack.c.l.b16 %v5679
        %v5727 = vunpack.c.h.b16 %v5679
        %v5728 = vunpack.c.l.b16 %v5680
        %v5729 = vunpack.c.h.b16 %v5680
        %v5730 = vpack.c.b16 %v5700, %v5698
        %v5731 = vpack.c.b16 %v5701, %v5699
        %v5732 = vpack.c.b16 %v5704, %v5702
        %v5733 = vpack.c.b16 %v5705, %v5703
        %v5734 = vpack.c.b16 %v5708, %v5706
        %v5735 = vpack.c.b16 %v5709, %v5707
        %v5736 = vpack.c.b16 %v5712, %v5710
        %v5737 = vpack.c.b16 %v5713, %v5711
        %v5738 = vpack.c.b16 %v5716, %v5714
        %v5739 = vpack.c.b16 %v5717, %v5715
        %v5740 = vpack.c.b16 %v5720, %v5718
        %v5741 = vpack.c.b16 %v5721, %v5719
        %v5742 = vpack.c.b16 %v5724, %v5722
        %v5743 = vpack.c.b16 %v5725, %v5723
        %v5744 = vpack.c.b16 %v5728, %v5726
        %v5745 = vpack.c.b16 %v5729, %v5727
        %5762 = vmatprep.subr.bf16.mxu0 %v5731
        %5763 = vmatpush1.bf16.msra.mxu0 %v5730
        %5764 = vmatprep.subr.bf16.mxu0 %v5733
        %5765 = vmatpush1.bf16.msra.mxu0 %v5732
        %5766 = vmatprep.subr.bf16.mxu0 %v5735
        %5767 = vmatpush1.bf16.msra.mxu0 %v5734
        %5768 = vmatprep.subr.bf16.mxu0 %v5737
        %5769 = vmatpush1.bf16.msra.mxu0 %v5736
        %5770 = vmatprep.subr.bf16.mxu0 %v5739
        %5771 = vmatpush1.bf16.msra.mxu0 %v5738
        %5772 = vmatprep.subr.bf16.mxu0 %v5741
        %5773 = vmatpush1.bf16.msra.mxu0 %v5740
        %5774 = vmatprep.subr.bf16.mxu0 %v5743
        %5775 = vmatpush1.bf16.msra.mxu0 %v5742
        %5776 = vmatprep.subr.bf16.mxu0 %v5745
        %5777 = vmatpush1.bf16.msra.mxu0 %v5744
        %5778 = vmatprep.subr.bf16.mxu0 0
        %5779 = vmatpush1.bf16.msra.mxu0 0
        %5780 = vmatprep.subr.bf16.mxu0 0
        %5781 = vmatpush1.bf16.msra.mxu0 0
        %5782 = vmatprep.subr.bf16.mxu0 0
        %5783 = vmatpush1.bf16.msra.mxu0 0
        %5784 = vmatprep.subr.bf16.mxu0 0
        %5785 = vmatpush1.bf16.msra.mxu0 0
        %5786 = vmatprep.subr.bf16.mxu0 0
        %5787 = vmatpush1.bf16.msra.mxu0 0
        %5788 = vmatprep.subr.bf16.mxu0 0
        %5789 = vmatpush1.bf16.msra.mxu0 0
        %5790 = vmatprep.subr.bf16.mxu0 0
        %5791 = vmatpush1.bf16.msra.mxu0 0
        %5792 = vmatprep.subr.bf16.mxu0 0
        %5793 = vmatpush1.bf16.msra.mxu0 0
        %5794 = vmatprep.mubr.bf16.mxu0 0
        %5795 = vmatmul.mubr.bf16.gmra.mrb[0].mxu0 %v5681
        %v5796 = vpop.f32.mrb[0].mxu0
        %v5797 = vadd.f32 0.0, %v5796
        %v5798 = vpop.f32.mrb[0].mxu0
        %v5799 = vadd.f32 0.0, %v5798
        %v5800 = vpop.f32.mrb[0].mxu0
        %v5801 = vpop.f32.mrb[0].mxu0
        %5802 = vdwg.mxu0
        %v5805 = vcombine.low %v5797, %v5799
        %v5807 = vunpack.c.l.s4 1966171168
        %v5808 = vunpack.c.0.s8 %v5807
        %v5809 = vlaneseq
        %v5810 = vshrl.u32 %v5809, 7
        %v5811 = vsub.s32 %v5808, %v5810
        %v5812 = vrot.slane %v5805, %v5811
        %v5814 = vunpack.c.l.s4 1966171168
        %v5815 = vunpack.c.0.s8 %v5814
        %v5816 = vlaneseq
        %v5817 = vshrl.u32 %v5816, 7
        %v5818 = vsub.s32 %v5815, %v5817
        %v5819 = vrot.slane %v5812, %v5818
        %v5821 = vadd.f32 %v5662, %v5819
        %s5822 = scalar_lea.vmem [#allocation4], 12
        %v5823 = vld [vmem:[%s5822] ss:$2 sm:$0x1]
        %v5824 = vld [vmem:[%s7 + $0x600] sm:$0xff]
        %v5825 = vld [vmem:[%s7 + $0x608] sm:$0xff]
        %v5826 = vld [vmem:[%s7 + $0x610] sm:$0xff]
        %v5827 = vld [vmem:[%s7 + $0x618] sm:$0xff]
        %v5828 = vld [vmem:[%s7 + $0x620] sm:$0xff]
        %v5829 = vld [vmem:[%s7 + $0x628] sm:$0xff]
        %v5830 = vld [vmem:[%s7 + $0x630] sm:$0xff]
        %v5831 = vld [vmem:[%s7 + $0x638] sm:$0xff]
        %v5832 = vld [vmem:[%s7 + $0x640] sm:$0xff]
        %v5833 = vld [vmem:[%s7 + $0x648] sm:$0xff]
        %v5834 = vld [vmem:[%s7 + $0x650] sm:$0xff]
        %v5835 = vld [vmem:[%s7 + $0x658] sm:$0xff]
        %v5836 = vld [vmem:[%s7 + $0x660] sm:$0xff]
        %v5837 = vld [vmem:[%s7 + $0x668] sm:$0xff]
        %v5838 = vld [vmem:[%s7 + $0x670] sm:$0xff]
        %v5839 = vld [vmem:[%s7 + $0x678] sm:$0xff]
        %v5840 = vpack.c.bf16 %v5823, %v5823
        %v5857 = vunpack.c.l.b16 %v5824
        %v5858 = vunpack.c.h.b16 %v5824
        %v5859 = vunpack.c.l.b16 %v5825
        %v5860 = vunpack.c.h.b16 %v5825
        %v5861 = vunpack.c.l.b16 %v5826
        %v5862 = vunpack.c.h.b16 %v5826
        %v5863 = vunpack.c.l.b16 %v5827
        %v5864 = vunpack.c.h.b16 %v5827
        %v5865 = vunpack.c.l.b16 %v5828
        %v5866 = vunpack.c.h.b16 %v5828
        %v5867 = vunpack.c.l.b16 %v5829
        %v5868 = vunpack.c.h.b16 %v5829
        %v5869 = vunpack.c.l.b16 %v5830
        %v5870 = vunpack.c.h.b16 %v5830
        %v5871 = vunpack.c.l.b16 %v5831
        %v5872 = vunpack.c.h.b16 %v5831
        %v5873 = vunpack.c.l.b16 %v5832
        %v5874 = vunpack.c.h.b16 %v5832
        %v5875 = vunpack.c.l.b16 %v5833
        %v5876 = vunpack.c.h.b16 %v5833
        %v5877 = vunpack.c.l.b16 %v5834
        %v5878 = vunpack.c.h.b16 %v5834
        %v5879 = vunpack.c.l.b16 %v5835
        %v5880 = vunpack.c.h.b16 %v5835
        %v5881 = vunpack.c.l.b16 %v5836
        %v5882 = vunpack.c.h.b16 %v5836
        %v5883 = vunpack.c.l.b16 %v5837
        %v5884 = vunpack.c.h.b16 %v5837
        %v5885 = vunpack.c.l.b16 %v5838
        %v5886 = vunpack.c.h.b16 %v5838
        %v5887 = vunpack.c.l.b16 %v5839
        %v5888 = vunpack.c.h.b16 %v5839
        %v5889 = vpack.c.b16 %v5859, %v5857
        %v5890 = vpack.c.b16 %v5860, %v5858
        %v5891 = vpack.c.b16 %v5863, %v5861
        %v5892 = vpack.c.b16 %v5864, %v5862
        %v5893 = vpack.c.b16 %v5867, %v5865
        %v5894 = vpack.c.b16 %v5868, %v5866
        %v5895 = vpack.c.b16 %v5871, %v5869
        %v5896 = vpack.c.b16 %v5872, %v5870
        %v5897 = vpack.c.b16 %v5875, %v5873
        %v5898 = vpack.c.b16 %v5876, %v5874
        %v5899 = vpack.c.b16 %v5879, %v5877
        %v5900 = vpack.c.b16 %v5880, %v5878
        %v5901 = vpack.c.b16 %v5883, %v5881
        %v5902 = vpack.c.b16 %v5884, %v5882
        %v5903 = vpack.c.b16 %v5887, %v5885
        %v5904 = vpack.c.b16 %v5888, %v5886
        %5921 = vmatprep.subr.bf16.mxu0 %v5890
        %5922 = vmatpush1.bf16.msra.mxu0 %v5889
        %5923 = vmatprep.subr.bf16.mxu0 %v5892
        %5924 = vmatpush1.bf16.msra.mxu0 %v5891
        %5925 = vmatprep.subr.bf16.mxu0 %v5894
        %5926 = vmatpush1.bf16.msra.mxu0 %v5893
        %5927 = vmatprep.subr.bf16.mxu0 %v5896
        %5928 = vmatpush1.bf16.msra.mxu0 %v5895
        %5929 = vmatprep.subr.bf16.mxu0 %v5898
        %5930 = vmatpush1.bf16.msra.mxu0 %v5897
        %5931 = vmatprep.subr.bf16.mxu0 %v5900
        %5932 = vmatpush1.bf16.msra.mxu0 %v5899
        %5933 = vmatprep.subr.bf16.mxu0 %v5902
        %5934 = vmatpush1.bf16.msra.mxu0 %v5901
        %5935 = vmatprep.subr.bf16.mxu0 %v5904
        %5936 = vmatpush1.bf16.msra.mxu0 %v5903
        %5937 = vmatprep.subr.bf16.mxu0 0
        %5938 = vmatpush1.bf16.msra.mxu0 0
        %5939 = vmatprep.subr.bf16.mxu0 0
        %5940 = vmatpush1.bf16.msra.mxu0 0
        %5941 = vmatprep.subr.bf16.mxu0 0
        %5942 = vmatpush1.bf16.msra.mxu0 0
        %5943 = vmatprep.subr.bf16.mxu0 0
        %5944 = vmatpush1.bf16.msra.mxu0 0
        %5945 = vmatprep.subr.bf16.mxu0 0
        %5946 = vmatpush1.bf16.msra.mxu0 0
        %5947 = vmatprep.subr.bf16.mxu0 0
        %5948 = vmatpush1.bf16.msra.mxu0 0
        %5949 = vmatprep.subr.bf16.mxu0 0
        %5950 = vmatpush1.bf16.msra.mxu0 0
        %5951 = vmatprep.subr.bf16.mxu0 0
        %5952 = vmatpush1.bf16.msra.mxu0 0
        %5953 = vmatprep.mubr.bf16.mxu0 0
        %5954 = vmatmul.mubr.bf16.gmra.mrb[0].mxu0 %v5840
        %v5955 = vpop.f32.mrb[0].mxu0
        %v5956 = vadd.f32 0.0, %v5955
        %v5957 = vpop.f32.mrb[0].mxu0
        %v5958 = vadd.f32 0.0, %v5957
        %v5959 = vpop.f32.mrb[0].mxu0
        %v5960 = vpop.f32.mrb[0].mxu0
        %5961 = vdwg.mxu0
        %v5964 = vcombine.low %v5956, %v5958
        %v5966 = vunpack.c.l.s4 1966171168
        %v5967 = vunpack.c.0.s8 %v5966
        %v5968 = vlaneseq
        %v5969 = vshrl.u32 %v5968, 7
        %v5970 = vsub.s32 %v5967, %v5969
        %v5971 = vrot.slane %v5964, %v5970
        %v5973 = vunpack.c.l.s4 1966171168
        %v5974 = vunpack.c.0.s8 %v5973
        %v5975 = vlaneseq
        %v5976 = vshrl.u32 %v5975, 7
        %v5977 = vsub.s32 %v5974, %v5976
        %v5978 = vrot.slane %v5971, %v5977
        %v5980 = vadd.f32 %v5821, %v5978
        %s5981 = scalar_lea.vmem %s5822, 1 [#allocation4]
        %v5982 = vld [vmem:[%s5981] ss:$2 sm:$0x1]
        %v5983 = vld [vmem:[%s7 + $0x680] sm:$0xff]
        %v5984 = vld [vmem:[%s7 + $0x688] sm:$0xff]
        %v5985 = vld [vmem:[%s7 + $0x690] sm:$0xff]
        %v5986 = vld [vmem:[%s7 + $0x698] sm:$0xff]
        %v5987 = vld [vmem:[%s7 + $0x6a0] sm:$0xff]
        %v5988 = vld [vmem:[%s7 + $0x6a8] sm:$0xff]
        %v5989 = vld [vmem:[%s7 + $0x6b0] sm:$0xff]
        %v5990 = vld [vmem:[%s7 + $0x6b8] sm:$0xff]
        %v5991 = vld [vmem:[%s7 + $0x6c0] sm:$0xff]
        %v5992 = vld [vmem:[%s7 + $0x6c8] sm:$0xff]
        %v5993 = vld [vmem:[%s7 + $0x6d0] sm:$0xff]
        %v5994 = vld [vmem:[%s7 + $0x6d8] sm:$0xff]
        %v5995 = vld [vmem:[%s7 + $0x6e0] sm:$0xff]
        %v5996 = vld [vmem:[%s7 + $0x6e8] sm:$0xff]
        %v5997 = vld [vmem:[%s7 + $0x6f0] sm:$0xff]
        %v5998 = vld [vmem:[%s7 + $0x6f8] sm:$0xff]
        %v5999 = vpack.c.bf16 %v5982, %v5982
        %v6016 = vunpack.c.l.b16 %v5983
        %v6017 = vunpack.c.h.b16 %v5983
        %v6018 = vunpack.c.l.b16 %v5984
        %v6019 = vunpack.c.h.b16 %v5984
        %v6020 = vunpack.c.l.b16 %v5985
        %v6021 = vunpack.c.h.b16 %v5985
        %v6022 = vunpack.c.l.b16 %v5986
        %v6023 = vunpack.c.h.b16 %v5986
        %v6024 = vunpack.c.l.b16 %v5987
        %v6025 = vunpack.c.h.b16 %v5987
        %v6026 = vunpack.c.l.b16 %v5988
        %v6027 = vunpack.c.h.b16 %v5988
        %v6028 = vunpack.c.l.b16 %v5989
        %v6029 = vunpack.c.h.b16 %v5989
        %v6030 = vunpack.c.l.b16 %v5990
        %v6031 = vunpack.c.h.b16 %v5990
        %v6032 = vunpack.c.l.b16 %v5991
        %v6033 = vunpack.c.h.b16 %v5991
        %v6034 = vunpack.c.l.b16 %v5992
        %v6035 = vunpack.c.h.b16 %v5992
        %v6036 = vunpack.c.l.b16 %v5993
        %v6037 = vunpack.c.h.b16 %v5993
        %v6038 = vunpack.c.l.b16 %v5994
        %v6039 = vunpack.c.h.b16 %v5994
        %v6040 = vunpack.c.l.b16 %v5995
        %v6041 = vunpack.c.h.b16 %v5995
        %v6042 = vunpack.c.l.b16 %v5996
        %v6043 = vunpack.c.h.b16 %v5996
        %v6044 = vunpack.c.l.b16 %v5997
        %v6045 = vunpack.c.h.b16 %v5997
        %v6046 = vunpack.c.l.b16 %v5998
        %v6047 = vunpack.c.h.b16 %v5998
        %v6048 = vpack.c.b16 %v6018, %v6016
        %v6049 = vpack.c.b16 %v6019, %v6017
        %v6050 = vpack.c.b16 %v6022, %v6020
        %v6051 = vpack.c.b16 %v6023, %v6021
        %v6052 = vpack.c.b16 %v6026, %v6024
        %v6053 = vpack.c.b16 %v6027, %v6025
        %v6054 = vpack.c.b16 %v6030, %v6028
        %v6055 = vpack.c.b16 %v6031, %v6029
        %v6056 = vpack.c.b16 %v6034, %v6032
        %v6057 = vpack.c.b16 %v6035, %v6033
        %v6058 = vpack.c.b16 %v6038, %v6036
        %v6059 = vpack.c.b16 %v6039, %v6037
        %v6060 = vpack.c.b16 %v6042, %v6040
        %v6061 = vpack.c.b16 %v6043, %v6041
        %v6062 = vpack.c.b16 %v6046, %v6044
        %v6063 = vpack.c.b16 %v6047, %v6045
        %6080 = vmatprep.subr.bf16.mxu0 %v6049
        %6081 = vmatpush1.bf16.msra.mxu0 %v6048
        %6082 = vmatprep.subr.bf16.mxu0 %v6051
        %6083 = vmatpush1.bf16.msra.mxu0 %v6050
        %6084 = vmatprep.subr.bf16.mxu0 %v6053
        %6085 = vmatpush1.bf16.msra.mxu0 %v6052
        %6086 = vmatprep.subr.bf16.mxu0 %v6055
        %6087 = vmatpush1.bf16.msra.mxu0 %v6054
        %6088 = vmatprep.subr.bf16.mxu0 %v6057
        %6089 = vmatpush1.bf16.msra.mxu0 %v6056
        %6090 = vmatprep.subr.bf16.mxu0 %v6059
        %6091 = vmatpush1.bf16.msra.mxu0 %v6058
        %6092 = vmatprep.subr.bf16.mxu0 %v6061
        %6093 = vmatpush1.bf16.msra.mxu0 %v6060
        %6094 = vmatprep.subr.bf16.mxu0 %v6063
        %6095 = vmatpush1.bf16.msra.mxu0 %v6062
        %6096 = vmatprep.subr.bf16.mxu0 0
        %6097 = vmatpush1.bf16.msra.mxu0 0
        %6098 = vmatprep.subr.bf16.mxu0 0
        %6099 = vmatpush1.bf16.msra.mxu0 0
        %6100 = vmatprep.subr.bf16.mxu0 0
        %6101 = vmatpush1.bf16.msra.mxu0 0
        %6102 = vmatprep.subr.bf16.mxu0 0
        %6103 = vmatpush1.bf16.msra.mxu0 0
        %6104 = vmatprep.subr.bf16.mxu0 0
        %6105 = vmatpush1.bf16.msra.mxu0 0
        %6106 = vmatprep.subr.bf16.mxu0 0
        %6107 = vmatpush1.bf16.msra.mxu0 0
        %6108 = vmatprep.subr.bf16.mxu0 0
        %6109 = vmatpush1.bf16.msra.mxu0 0
        %6110 = vmatprep.subr.bf16.mxu0 0
        %6111 = vmatpush1.bf16.msra.mxu0 0
        %6112 = vmatprep.mubr.bf16.mxu0 0
        %6113 = vmatmul.mubr.bf16.gmra.mrb[0].mxu0 %v5999
        %v6114 = vpop.f32.mrb[0].mxu0
        %v6115 = vadd.f32 0.0, %v6114
        %v6116 = vpop.f32.mrb[0].mxu0
        %v6117 = vadd.f32 0.0, %v6116
        %v6118 = vpop.f32.mrb[0].mxu0
        %v6119 = vpop.f32.mrb[0].mxu0
        %6120 = vdwg.mxu0
        %v6123 = vcombine.low %v6115, %v6117
        %v6125 = vunpack.c.l.s4 1966171168
        %v6126 = vunpack.c.0.s8 %v6125
        %v6127 = vlaneseq
        %v6128 = vshrl.u32 %v6127, 7
        %v6129 = vsub.s32 %v6126, %v6128
        %v6130 = vrot.slane %v6123, %v6129
        %v6132 = vunpack.c.l.s4 1966171168
        %v6133 = vunpack.c.0.s8 %v6132
        %v6134 = vlaneseq
        %v6135 = vshrl.u32 %v6134, 7
        %v6136 = vsub.s32 %v6133, %v6135
        %v6137 = vrot.slane %v6130, %v6136
        %v6139 = vadd.f32 %v5980, %v6137
        %s6140 = scalar_lea.vmem %s5822, 2 [#allocation4]
        %v6141 = vld [vmem:[%s6140] ss:$2 sm:$0x1]
        %v6142 = vld [vmem:[%s7 + $0x700] sm:$0xff]
        %v6143 = vld [vmem:[%s7 + $0x708] sm:$0xff]
        %v6144 = vld [vmem:[%s7 + $0x710] sm:$0xff]
        %v6145 = vld [vmem:[%s7 + $0x718] sm:$0xff]
        %v6146 = vld [vmem:[%s7 + $0x720] sm:$0xff]
        %v6147 = vld [vmem:[%s7 + $0x728] sm:$0xff]
        %v6148 = vld [vmem:[%s7 + $0x730] sm:$0xff]
        %v6149 = vld [vmem:[%s7 + $0x738] sm:$0xff]
        %v6150 = vld [vmem:[%s7 + $0x740] sm:$0xff]
        %v6151 = vld [vmem:[%s7 + $0x748] sm:$0xff]
        %v6152 = vld [vmem:[%s7 + $0x750] sm:$0xff]
        %v6153 = vld [vmem:[%s7 + $0x758] sm:$0xff]
        %v6154 = vld [vmem:[%s7 + $0x760] sm:$0xff]
        %v6155 = vld [vmem:[%s7 + $0x768] sm:$0xff]
        %v6156 = vld [vmem:[%s7 + $0x770] sm:$0xff]
        %v6157 = vld [vmem:[%s7 + $0x778] sm:$0xff]
        %v6158 = vpack.c.bf16 %v6141, %v6141
        %v6175 = vunpack.c.l.b16 %v6142
        %v6176 = vunpack.c.h.b16 %v6142
        %v6177 = vunpack.c.l.b16 %v6143
        %v6178 = vunpack.c.h.b16 %v6143
        %v6179 = vunpack.c.l.b16 %v6144
        %v6180 = vunpack.c.h.b16 %v6144
        %v6181 = vunpack.c.l.b16 %v6145
        %v6182 = vunpack.c.h.b16 %v6145
        %v6183 = vunpack.c.l.b16 %v6146
        %v6184 = vunpack.c.h.b16 %v6146
        %v6185 = vunpack.c.l.b16 %v6147
        %v6186 = vunpack.c.h.b16 %v6147
        %v6187 = vunpack.c.l.b16 %v6148
        %v6188 = vunpack.c.h.b16 %v6148
        %v6189 = vunpack.c.l.b16 %v6149
        %v6190 = vunpack.c.h.b16 %v6149
        %v6191 = vunpack.c.l.b16 %v6150
        %v6192 = vunpack.c.h.b16 %v6150
        %v6193 = vunpack.c.l.b16 %v6151
        %v6194 = vunpack.c.h.b16 %v6151
        %v6195 = vunpack.c.l.b16 %v6152
        %v6196 = vunpack.c.h.b16 %v6152
        %v6197 = vunpack.c.l.b16 %v6153
        %v6198 = vunpack.c.h.b16 %v6153
        %v6199 = vunpack.c.l.b16 %v6154
        %v6200 = vunpack.c.h.b16 %v6154
        %v6201 = vunpack.c.l.b16 %v6155
        %v6202 = vunpack.c.h.b16 %v6155
        %v6203 = vunpack.c.l.b16 %v6156
        %v6204 = vunpack.c.h.b16 %v6156
        %v6205 = vunpack.c.l.b16 %v6157
        %v6206 = vunpack.c.h.b16 %v6157
        %v6207 = vpack.c.b16 %v6177, %v6175
        %v6208 = vpack.c.b16 %v6178, %v6176
        %v6209 = vpack.c.b16 %v6181, %v6179
        %v6210 = vpack.c.b16 %v6182, %v6180
        %v6211 = vpack.c.b16 %v6185, %v6183
        %v6212 = vpack.c.b16 %v6186, %v6184
        %v6213 = vpack.c.b16 %v6189, %v6187
        %v6214 = vpack.c.b16 %v6190, %v6188
        %v6215 = vpack.c.b16 %v6193, %v6191
        %v6216 = vpack.c.b16 %v6194, %v6192
        %v6217 = vpack.c.b16 %v6197, %v6195
        %v6218 = vpack.c.b16 %v6198, %v6196
        %v6219 = vpack.c.b16 %v6201, %v6199
        %v6220 = vpack.c.b16 %v6202, %v6200
        %v6221 = vpack.c.b16 %v6205, %v6203
        %v6222 = vpack.c.b16 %v6206, %v6204
        %6239 = vmatprep.subr.bf16.mxu0 %v6208
        %6240 = vmatpush1.bf16.msra.mxu0 %v6207
        %6241 = vmatprep.subr.bf16.mxu0 %v6210
        %6242 = vmatpush1.bf16.msra.mxu0 %v6209
        %6243 = vmatprep.subr.bf16.mxu0 %v6212
        %6244 = vmatpush1.bf16.msra.mxu0 %v6211
        %6245 = vmatprep.subr.bf16.mxu0 %v6214
        %6246 = vmatpush1.bf16.msra.mxu0 %v6213
        %6247 = vmatprep.subr.bf16.mxu0 %v6216
        %6248 = vmatpush1.bf16.msra.mxu0 %v6215
        %6249 = vmatprep.subr.bf16.mxu0 %v6218
        %6250 = vmatpush1.bf16.msra.mxu0 %v6217
        %6251 = vmatprep.subr.bf16.mxu0 %v6220
        %6252 = vmatpush1.bf16.msra.mxu0 %v6219
        %6253 = vmatprep.subr.bf16.mxu0 %v6222
        %6254 = vmatpush1.bf16.msra.mxu0 %v6221
        %6255 = vmatprep.subr.bf16.mxu0 0
        %6256 = vmatpush1.bf16.msra.mxu0 0
        %6257 = vmatprep.subr.bf16.mxu0 0
        %6258 = vmatpush1.bf16.msra.mxu0 0
        %6259 = vmatprep.subr.bf16.mxu0 0
        %6260 = vmatpush1.bf16.msra.mxu0 0
        %6261 = vmatprep.subr.bf16.mxu0 0
        %6262 = vmatpush1.bf16.msra.mxu0 0
        %6263 = vmatprep.subr.bf16.mxu0 0
        %6264 = vmatpush1.bf16.msra.mxu0 0
        %6265 = vmatprep.subr.bf16.mxu0 0
        %6266 = vmatpush1.bf16.msra.mxu0 0
        %6267 = vmatprep.subr.bf16.mxu0 0
        %6268 = vmatpush1.bf16.msra.mxu0 0
        %6269 = vmatprep.subr.bf16.mxu0 0
        %6270 = vmatpush1.bf16.msra.mxu0 0
        %6271 = vmatprep.mubr.bf16.mxu0 0
        %6272 = vmatmul.mubr.bf16.gmra.mrb[0].mxu0 %v6158
        %v6273 = vpop.f32.mrb[0].mxu0
        %v6274 = vadd.f32 0.0, %v6273
        %v6275 = vpop.f32.mrb[0].mxu0
        %v6276 = vadd.f32 0.0, %v6275
        %v6277 = vpop.f32.mrb[0].mxu0
        %v6278 = vpop.f32.mrb[0].mxu0
        %6279 = vdwg.mxu0
        %v6282 = vcombine.low %v6274, %v6276
        %v6284 = vunpack.c.l.s4 1966171168
        %v6285 = vunpack.c.0.s8 %v6284
        %v6286 = vlaneseq
        %v6287 = vshrl.u32 %v6286, 7
        %v6288 = vsub.s32 %v6285, %v6287
        %v6289 = vrot.slane %v6282, %v6288
        %v6291 = vunpack.c.l.s4 1966171168
        %v6292 = vunpack.c.0.s8 %v6291
        %v6293 = vlaneseq
        %v6294 = vshrl.u32 %v6293, 7
        %v6295 = vsub.s32 %v6292, %v6294
        %v6296 = vrot.slane %v6289, %v6295
        %v6298 = vadd.f32 %v6139, %v6296
        %s6299 = scalar_lea.vmem %s5822, 3 [#allocation4]
        %v6300 = vld [vmem:[%s6299] ss:$2 sm:$0x1]
        %v6301 = vld [vmem:[%s7 + $0x780] sm:$0xff]
        %v6302 = vld [vmem:[%s7 + $0x788] sm:$0xff]
        %v6303 = vld [vmem:[%s7 + $0x790] sm:$0xff]
        %v6304 = vld [vmem:[%s7 + $0x798] sm:$0xff]
        %v6305 = vld [vmem:[%s7 + $0x7a0] sm:$0xff]
        %v6306 = vld [vmem:[%s7 + $0x7a8] sm:$0xff]
        %v6307 = vld [vmem:[%s7 + $0x7b0] sm:$0xff]
        %v6308 = vld [vmem:[%s7 + $0x7b8] sm:$0xff]
        %v6309 = vld [vmem:[%s7 + $0x7c0] sm:$0xff]
        %v6310 = vld [vmem:[%s7 + $0x7c8] sm:$0xff]
        %v6311 = vld [vmem:[%s7 + $0x7d0] sm:$0xff]
        %v6312 = vld [vmem:[%s7 + $0x7d8] sm:$0xff]
        %v6313 = vld [vmem:[%s7 + $0x7e0] sm:$0xff]
        %v6314 = vld [vmem:[%s7 + $0x7e8] sm:$0xff]
        %v6315 = vld [vmem:[%s7 + $0x7f0] sm:$0xff]
        %v6316 = vld [vmem:[%s7 + $0x7f8] sm:$0xff]
        %v6317 = vpack.c.bf16 %v6300, %v6300
        %v6334 = vunpack.c.l.b16 %v6301
        %v6335 = vunpack.c.h.b16 %v6301
        %v6336 = vunpack.c.l.b16 %v6302
        %v6337 = vunpack.c.h.b16 %v6302
        %v6338 = vunpack.c.l.b16 %v6303
        %v6339 = vunpack.c.h.b16 %v6303
        %v6340 = vunpack.c.l.b16 %v6304
        %v6341 = vunpack.c.h.b16 %v6304
        %v6342 = vunpack.c.l.b16 %v6305
        %v6343 = vunpack.c.h.b16 %v6305
        %v6344 = vunpack.c.l.b16 %v6306
        %v6345 = vunpack.c.h.b16 %v6306
        %v6346 = vunpack.c.l.b16 %v6307
        %v6347 = vunpack.c.h.b16 %v6307
        %v6348 = vunpack.c.l.b16 %v6308
        %v6349 = vunpack.c.h.b16 %v6308
        %v6350 = vunpack.c.l.b16 %v6309
        %v6351 = vunpack.c.h.b16 %v6309
        %v6352 = vunpack.c.l.b16 %v6310
        %v6353 = vunpack.c.h.b16 %v6310
        %v6354 = vunpack.c.l.b16 %v6311
        %v6355 = vunpack.c.h.b16 %v6311
        %v6356 = vunpack.c.l.b16 %v6312
        %v6357 = vunpack.c.h.b16 %v6312
        %v6358 = vunpack.c.l.b16 %v6313
        %v6359 = vunpack.c.h.b16 %v6313
        %v6360 = vunpack.c.l.b16 %v6314
        %v6361 = vunpack.c.h.b16 %v6314
        %v6362 = vunpack.c.l.b16 %v6315
        %v6363 = vunpack.c.h.b16 %v6315
        %v6364 = vunpack.c.l.b16 %v6316
        %v6365 = vunpack.c.h.b16 %v6316
        %v6366 = vpack.c.b16 %v6336, %v6334
        %v6367 = vpack.c.b16 %v6337, %v6335
        %v6368 = vpack.c.b16 %v6340, %v6338
        %v6369 = vpack.c.b16 %v6341, %v6339
        %v6370 = vpack.c.b16 %v6344, %v6342
        %v6371 = vpack.c.b16 %v6345, %v6343
        %v6372 = vpack.c.b16 %v6348, %v6346
        %v6373 = vpack.c.b16 %v6349, %v6347
        %v6374 = vpack.c.b16 %v6352, %v6350
        %v6375 = vpack.c.b16 %v6353, %v6351
        %v6376 = vpack.c.b16 %v6356, %v6354
        %v6377 = vpack.c.b16 %v6357, %v6355
        %v6378 = vpack.c.b16 %v6360, %v6358
        %v6379 = vpack.c.b16 %v6361, %v6359
        %v6380 = vpack.c.b16 %v6364, %v6362
        %v6381 = vpack.c.b16 %v6365, %v6363
        %6398 = vmatprep.subr.bf16.mxu0 %v6367
        %6399 = vmatpush1.bf16.msra.mxu0 %v6366
        %6400 = vmatprep.subr.bf16.mxu0 %v6369
        %6401 = vmatpush1.bf16.msra.mxu0 %v6368
        %6402 = vmatprep.subr.bf16.mxu0 %v6371
        %6403 = vmatpush1.bf16.msra.mxu0 %v6370
        %6404 = vmatprep.subr.bf16.mxu0 %v6373
        %6405 = vmatpush1.bf16.msra.mxu0 %v6372
        %6406 = vmatprep.subr.bf16.mxu0 %v6375
        %6407 = vmatpush1.bf16.msra.mxu0 %v6374
        %6408 = vmatprep.subr.bf16.mxu0 %v6377
        %6409 = vmatpush1.bf16.msra.mxu0 %v6376
        %6410 = vmatprep.subr.bf16.mxu0 %v6379
        %6411 = vmatpush1.bf16.msra.mxu0 %v6378
        %6412 = vmatprep.subr.bf16.mxu0 %v6381
        %6413 = vmatpush1.bf16.msra.mxu0 %v6380
        %6414 = vmatprep.subr.bf16.mxu0 0
        %6415 = vmatpush1.bf16.msra.mxu0 0
        %6416 = vmatprep.subr.bf16.mxu0 0
        %6417 = vmatpush1.bf16.msra.mxu0 0
        %6418 = vmatprep.subr.bf16.mxu0 0
        %6419 = vmatpush1.bf16.msra.mxu0 0
        %6420 = vmatprep.subr.bf16.mxu0 0
        %6421 = vmatpush1.bf16.msra.mxu0 0
        %6422 = vmatprep.subr.bf16.mxu0 0
        %6423 = vmatpush1.bf16.msra.mxu0 0
        %6424 = vmatprep.subr.bf16.mxu0 0
        %6425 = vmatpush1.bf16.msra.mxu0 0
        %6426 = vmatprep.subr.bf16.mxu0 0
        %6427 = vmatpush1.bf16.msra.mxu0 0
        %6428 = vmatprep.subr.bf16.mxu0 0
        %6429 = vmatpush1.bf16.msra.mxu0 0
        %6430 = vmatprep.mubr.bf16.mxu0 0
        %6431 = vmatmul.mubr.bf16.gmra.mrb[0].mxu0 %v6317
        %v6432 = vpop.f32.mrb[0].mxu0
        %v6433 = vadd.f32 0.0, %v6432
        %v6434 = vpop.f32.mrb[0].mxu0
        %v6435 = vadd.f32 0.0, %v6434
        %v6436 = vpop.f32.mrb[0].mxu0
        %v6437 = vpop.f32.mrb[0].mxu0
        %6438 = vdwg.mxu0
        %v6441 = vcombine.low %v6433, %v6435
        %v6443 = vunpack.c.l.s4 1966171168
        %v6444 = vunpack.c.0.s8 %v6443
        %v6445 = vlaneseq
        %v6446 = vshrl.u32 %v6445, 7
        %v6447 = vsub.s32 %v6444, %v6446
        %v6448 = vrot.slane %v6441, %v6447
        %v6450 = vunpack.c.l.s4 1966171168
        %v6451 = vunpack.c.0.s8 %v6450
        %v6452 = vlaneseq
        %v6453 = vshrl.u32 %v6452, 7
        %v6454 = vsub.s32 %v6451, %v6453
        %v6455 = vrot.slane %v6448, %v6454
        %v6457 = vadd.f32 %v6298, %v6455
        %v6458 = vmax.f32 %v6457, 0.0
        %v6459 = vlaneseq
        %vm6460 = vcmp.ge.s32.totalorder %v6459, 0
        %vm6461 = vcmp.lt.s32.totalorder %v6459, 256
        %vm6462 = vmand %vm6460, %vm6461
        %6463 = vst.msk [vmem:[#allocation5] sm:$0x3] %vm6462, %v6458
        %v6464 = vld [vmem:[#allocation5] sm:$0x3]
        %v6466 = vlaneseq
        %v6467 = vshrl.u32 %v6466, 7
        %v6468 = vsub.s32 0, %v6467
        %v6469 = vrot.slane %v6464, %v6468
        %v6470 = vlaneseq
        %v6471 = vshrl.u32 %v6470, 7
        %v6472 = vsub.s32 1, %v6471
        %v6473 = vrot.slane %v6464, %v6472
        %v6476 = vpack.c.bf16 %v6469, %v6469
        %v6477 = vpack.c.bf16 %v6473, %v6473
        %v6478 = vld [vmem:[%s9] sm:$0xf]
        %v6479 = vld [vmem:[%s9 + $0x4] sm:$0xf]
        %v6480 = vld [vmem:[%s9 + $0x8] sm:$0xf]
        %v6481 = vld [vmem:[%s9 + $0xc] sm:$0xf]
        %v6482 = vld [vmem:[%s9 + $0x10] sm:$0xf]
        %v6483 = vld [vmem:[%s9 + $0x14] sm:$0xf]
        %v6484 = vld [vmem:[%s9 + $0x18] sm:$0xf]
        %v6485 = vld [vmem:[%s9 + $0x1c] sm:$0xf]
        %v6486 = vld [vmem:[%s9 + $0x20] sm:$0xf]
        %v6487 = vld [vmem:[%s9 + $0x24] sm:$0xf]
        %v6488 = vld [vmem:[%s9 + $0x28] sm:$0xf]
        %v6489 = vld [vmem:[%s9 + $0x2c] sm:$0xf]
        %v6490 = vld [vmem:[%s9 + $0x30] sm:$0xf]
        %v6491 = vld [vmem:[%s9 + $0x34] sm:$0xf]
        %v6492 = vld [vmem:[%s9 + $0x38] sm:$0xf]
        %v6493 = vld [vmem:[%s9 + $0x3c] sm:$0xf]
        %v6494 = vld [vmem:[%s9 + $0x40] sm:$0xf]
        %v6495 = vld [vmem:[%s9 + $0x44] sm:$0xf]
        %v6496 = vld [vmem:[%s9 + $0x48] sm:$0xf]
        %v6497 = vld [vmem:[%s9 + $0x4c] sm:$0xf]
        %v6498 = vld [vmem:[%s9 + $0x50] sm:$0xf]
        %v6499 = vld [vmem:[%s9 + $0x54] sm:$0xf]
        %v6500 = vld [vmem:[%s9 + $0x58] sm:$0xf]
        %v6501 = vld [vmem:[%s9 + $0x5c] sm:$0xf]
        %v6502 = vld [vmem:[%s9 + $0x60] sm:$0xf]
        %v6503 = vld [vmem:[%s9 + $0x64] sm:$0xf]
        %v6504 = vld [vmem:[%s9 + $0x68] sm:$0xf]
        %v6505 = vld [vmem:[%s9 + $0x6c] sm:$0xf]
        %v6506 = vld [vmem:[%s9 + $0x70] sm:$0xf]
        %v6507 = vld [vmem:[%s9 + $0x74] sm:$0xf]
        %v6508 = vld [vmem:[%s9 + $0x78] sm:$0xf]
        %v6509 = vld [vmem:[%s9 + $0x7c] sm:$0xf]
        %v6510 = vld [vmem:[%s10] sm:$0x1]
        %v6543 = vunpack.c.l.b16 %v6478
        %v6544 = vunpack.c.l.b16 %v6479
        %v6545 = vunpack.c.l.b16 %v6480
        %v6546 = vunpack.c.l.b16 %v6481
        %v6547 = vunpack.c.l.b16 %v6482
        %v6548 = vunpack.c.l.b16 %v6483
        %v6549 = vunpack.c.l.b16 %v6484
        %v6550 = vunpack.c.l.b16 %v6485
        %v6551 = vunpack.c.l.b16 %v6486
        %v6552 = vunpack.c.l.b16 %v6487
        %v6553 = vunpack.c.l.b16 %v6488
        %v6554 = vunpack.c.l.b16 %v6489
        %v6555 = vunpack.c.l.b16 %v6490
        %v6556 = vunpack.c.l.b16 %v6491
        %v6557 = vunpack.c.l.b16 %v6492
        %v6558 = vunpack.c.l.b16 %v6493
        %v6559 = vunpack.c.l.b16 %v6494
        %v6560 = vunpack.c.l.b16 %v6495
        %v6561 = vunpack.c.l.b16 %v6496
        %v6562 = vunpack.c.l.b16 %v6497
        %v6563 = vunpack.c.l.b16 %v6498
        %v6564 = vunpack.c.l.b16 %v6499
        %v6565 = vunpack.c.l.b16 %v6500
        %v6566 = vunpack.c.l.b16 %v6501
        %v6567 = vunpack.c.l.b16 %v6502
        %v6568 = vunpack.c.l.b16 %v6503
        %v6569 = vunpack.c.l.b16 %v6504
        %v6570 = vunpack.c.l.b16 %v6505
        %v6571 = vunpack.c.l.b16 %v6506
        %v6572 = vunpack.c.l.b16 %v6507
        %v6573 = vunpack.c.l.b16 %v6508
        %v6574 = vunpack.c.l.b16 %v6509
        %v6575 = vpack.c.b16 %v6544, %v6543
        %v6576 = vpack.c.b16 %v6546, %v6545
        %v6577 = vpack.c.b16 %v6548, %v6547
        %v6578 = vpack.c.b16 %v6550, %v6549
        %v6579 = vpack.c.b16 %v6552, %v6551
        %v6580 = vpack.c.b16 %v6554, %v6553
        %v6581 = vpack.c.b16 %v6556, %v6555
        %v6582 = vpack.c.b16 %v6558, %v6557
        %v6583 = vpack.c.b16 %v6560, %v6559
        %v6584 = vpack.c.b16 %v6562, %v6561
        %v6585 = vpack.c.b16 %v6564, %v6563
        %v6586 = vpack.c.b16 %v6566, %v6565
        %v6587 = vpack.c.b16 %v6568, %v6567
        %v6588 = vpack.c.b16 %v6570, %v6569
        %v6589 = vpack.c.b16 %v6572, %v6571
        %v6590 = vpack.c.b16 %v6574, %v6573
        %6607 = vmatprep.subr.bf16.mxu0 0
        %6608 = vmatpush1.bf16.msra.mxu0 %v6575
        %6609 = vmatprep.subr.bf16.mxu0 0
        %6610 = vmatpush1.bf16.msra.mxu0 %v6576
        %6611 = vmatprep.subr.bf16.mxu0 0
        %6612 = vmatpush1.bf16.msra.mxu0 %v6577
        %6613 = vmatprep.subr.bf16.mxu0 0
        %6614 = vmatpush1.bf16.msra.mxu0 %v6578
        %6615 = vmatprep.subr.bf16.mxu0 0
        %6616 = vmatpush1.bf16.msra.mxu0 %v6579
        %6617 = vmatprep.subr.bf16.mxu0 0
        %6618 = vmatpush1.bf16.msra.mxu0 %v6580
        %6619 = vmatprep.subr.bf16.mxu0 0
        %6620 = vmatpush1.bf16.msra.mxu0 %v6581
        %6621 = vmatprep.subr.bf16.mxu0 0
        %6622 = vmatpush1.bf16.msra.mxu0 %v6582
        %6623 = vmatprep.subr.bf16.mxu0 0
        %6624 = vmatpush1.bf16.msra.mxu0 %v6583
        %6625 = vmatprep.subr.bf16.mxu0 0
        %6626 = vmatpush1.bf16.msra.mxu0 %v6584
        %6627 = vmatprep.subr.bf16.mxu0 0
        %6628 = vmatpush1.bf16.msra.mxu0 %v6585
        %6629 = vmatprep.subr.bf16.mxu0 0
        %6630 = vmatpush1.bf16.msra.mxu0 %v6586
        %6631 = vmatprep.subr.bf16.mxu0 0
        %6632 = vmatpush1.bf16.msra.mxu0 %v6587
        %6633 = vmatprep.subr.bf16.mxu0 0
        %6634 = vmatpush1.bf16.msra.mxu0 %v6588
        %6635 = vmatprep.subr.bf16.mxu0 0
        %6636 = vmatpush1.bf16.msra.mxu0 %v6589
        %6637 = vmatprep.subr.bf16.mxu0 0
        %6638 = vmatpush1.bf16.msra.mxu0 %v6590
        %6639 = vmatprep.mubr.bf16.mxu0 %v6477
        %6640 = vmatmul.mubr.bf16.gmra.mrb[0].mxu0 %v6476
        %v6641 = vpop.f32.mrb[0].mxu0
        %v6642 = vadd.f32 %v6510, %v6641
        %v6643 = vpop.f32.mrb[0].mxu0
        %v6644 = vpop.f32.mrb[0].mxu0
        %v6645 = vpop.f32.mrb[0].mxu0
        %6646 = vdwg.mxu0
        %vm6647 = vcmask 253952
        %6648 = vst.msk [vmem:[%s378] sm:$0x1] %vm6647, %v6642
        %s6649 = sand.u32 %s269, 1
        %s6650 = scalar_lea.sflag [#allocation7], %s6649
        %s6651 = sand.u32 %s269, 1
        %s6652 = scalar_lea.vmem [#allocation6], %s6651
        // Predicated region
        $region86: #{conv_encoder_forward.1} parent=63 // pred_check
          %p6653 = pneg %p279
        $region87: #{conv_encoder_forward.1} parent=63 // pred_check_branch
          %6655 = sbr.rel (%p6653) target = $region89
        $region88: #{conv_encoder_forward.1} parent=63 // pred_region
          %s6657 = ssub.s32 16, 16
          %6658 = vsyncadd %s6650, %s6657
          %s6659 = smul.addr %s25, 16
          %s6660 = scalar_lea.hbm %s11, %s6659
          %s6662 = sshll.u32 %s6652, 4
          %s6663 = int_to_ptr.vmem [resolvable:$true] %s6662
          %6665 = dma.vmem_to_hbm [thread:$0]  %s6663, 16, %s6660, %s6650
        $region89: #{conv_encoder_forward.1} parent=63 // pred_fallthru
          _
      $region64: #{conv_encoder_forward.1} parent=5 // pred_fallthru
        _
      %p6666 = scmp.le.s32.totalorder 2, %s20
      // Predicated region
      $region90: #{conv_encoder_forward.1} parent=5 // pred_check
        %p6667 = pneg %p6666
      $region91: #{conv_encoder_forward.1} parent=5 // pred_check_branch
        %6669 = sbr.rel (%p6667) target = $region93
      $region92: #{conv_encoder_forward.1} parent=5 // pred_region
        %s6670 = ssub.s32 %s20, 2
        // Predicated region
        $region94: #{conv_encoder_forward.1} parent=92 // pred_check
          %p6671 = pneg %p285
        $region95: #{conv_encoder_forward.1} parent=92 // pred_check_branch
          %6673 = sbr.rel (%p6671) target = $region97
        $region96: #{conv_encoder_forward.1} parent=92 // pred_region
          %s6674 = sand.u32 %s270, 1
          %s6675 = scalar_lea.sflag [#allocation7], %s6674
          %s6676 = sand.u32 %s270, 1
          %s6677 = scalar_lea.vmem [#allocation6], %s6676
          %6678 = dma.done %s6675, 16
        $region97: #{conv_encoder_forward.1} parent=92 // pred_fallthru
          _
      $region93: #{conv_encoder_forward.1} parent=5 // pred_fallthru
        _
    $region6: #{conv_encoder_forward.1} parent=1 // loop_footer
      %s24 = sadd.s32 1, %s20
    $region7: #{conv_encoder_forward.1} parent=1 // loop_footer_branch
      %19 = sbr.rel target = $region3
    $region8: #{conv_encoder_forward.1} parent=1 // loop_exit
      _
    %6679 = vsyncpa [#allocation7], 1
    %s6680 = scalar_lea.sflag [#allocation7], 1
    %6681 = vsyncpa %s6680, 1

</llo_original>
